<compile_context>
chip_gen: v7x
topology: tpu7x:2x2x1
jax: 0.10.0
libtpu: 0.0.40
codegen_flags: <defaults>
</compile_context>

<pallas_src>
import functools
import math

import jax
import jax.numpy as jnp
from jax.experimental import pallas as pl
from jax.experimental.pallas import tpu as pltpu

EPS = 1e-5  # nn.LayerNorm default eps


def _gelu_exact(x):
    # nn.GELU() default (approximate='none') -> exact erf formulation.
    return 0.5 * x * (1.0 + jax.lax.erf(x * (1.0 / math.sqrt(2.0))))


def _ln(x, w, b):
    mu = jnp.mean(x, axis=-1, keepdims=True)
    var = jnp.mean((x - mu) ** 2, axis=-1, keepdims=True)  # biased, like torch
    return (x - mu) * jax.lax.rsqrt(var + EPS) * w + b


# ----------------------------- fused kernel -----------------------------

def _attn(q, k, v, proj_w, proj_b, *, num_heads, scale):
    """Multi-head attention on already-projected full-width q/k/v.

    q: (N, C), k/v: (M, C).  Heads are static lane slices; per-head outputs are
    concatenated and sent through one (N,C)@(C,C) output projection (+bias).
    """
    n, c = q.shape
    d = c // num_heads
    heads = []
    for h in range(num_heads):  # static unroll
        sl = slice(h * d, (h + 1) * d)
        qh, kh, vh = q[:, sl], k[:, sl], v[:, sl]
        s = jax.lax.dot_general(qh, kh, (((1,), (1,)), ((), ())),
                                preferred_element_type=jnp.float32) * scale  # (N, M)
        s = s - jnp.max(s, axis=-1, keepdims=True)
        p = jnp.exp(s)
        # divide -> EUP approx reciprocal (frees the VALU slot)
        p = p * pl.reciprocal(jnp.sum(p, axis=-1, keepdims=True), approx=True)
        heads.append(jnp.dot(p, vh, preferred_element_type=jnp.float32))     # (N, D)
    cat = jnp.concatenate(heads, axis=-1)                                    # (N, C)
    return jnp.dot(cat, proj_w, preferred_element_type=jnp.float32) + proj_b


def _context_decoder_kernel(text_ref, vis_ref,
                            mem_ln1, mem_fc_w, mem_fc_b, mem_ln2,
                            txt_ln, txt_fc_w, txt_fc_b,
                            norms, sa_qkv_w, sa_proj_w, sa_proj_b,
                            ca_q_w, ca_kv_w, ca_proj_w, ca_proj_b,
                            f1_w, f1_b, f2_w, f2_b,
                            out_ln, out_fc_w, out_fc_b,
                            o_ref, *, num_heads, num_layers):
    f32 = jnp.float32
    text = text_ref[0].astype(f32)   # (Nt, Cv)
    vis = vis_ref[0].astype(f32)     # (Nv, Cv)
    W = mem_fc_w.shape[-1]
    D = W // num_heads
    scale = D ** (-0.5)

    # memory_proj: LN -> Linear -> LN        (mem stays VMEM-resident for all layers)
    m1 = mem_ln1[...]
    mem = _ln(vis, m1[0:1], m1[1:2])
    mem = jnp.dot(mem, mem_fc_w[...].astype(f32),
                  preferred_element_type=f32) + mem_fc_b[...]
    m2 = mem_ln2[...]
    mem = _ln(mem, m2[0:1], m2[1:2])         # (Nv, W)

    # text_proj: LN -> Linear
    t1 = txt_ln[...]
    x = _ln(text, t1[0:1], t1[1:2])
    x = jnp.dot(x, txt_fc_w[...].astype(f32),
                preferred_element_type=f32) + txt_fc_b[...]                  # (Nt, W)

    for l in range(num_layers):  # static unroll over layers
        nrm = norms[l]           # (6, W): [n1w, n1b, n2w, n2b, n3w, n3b]

        # --- self-attention (fused QKV projection) ---
        h = _ln(x, nrm[0:1], nrm[1:2])
        qkv = jnp.dot(h, sa_qkv_w[l].astype(f32),
                      preferred_element_type=f32)                            # (Nt, 3W)
        x = x + _attn(qkv[:, 0:W], qkv[:, W:2 * W], qkv[:, 2 * W:3 * W],
                      sa_proj_w[l].astype(f32), sa_proj_b[l],
                      num_heads=num_heads, scale=scale)

        # --- cross-attention (fused KV projection of mem) ---
        h = _ln(x, nrm[2:3], nrm[3:4])
        q = jnp.dot(h, ca_q_w[l].astype(f32), preferred_element_type=f32)    # (Nt, W)
        kv = jnp.dot(mem, ca_kv_w[l].astype(f32), preferred_element_type=f32)  # (Nv, 2W)
        x = x + _attn(q, kv[:, 0:W], kv[:, W:2 * W],
                      ca_proj_w[l].astype(f32), ca_proj_b[l],
                      num_heads=num_heads, scale=scale)

        # --- MLP (4W intermediate never leaves VMEM) ---
        h = _ln(x, nrm[4:5], nrm[5:6])
        m = _gelu_exact(jnp.dot(h, f1_w[l].astype(f32),
                                preferred_element_type=f32) + f1_b[l])
        x = x + jnp.dot(m, f2_w[l].astype(f32),
                        preferred_element_type=f32) + f2_b[l]

    # out_proj: LN -> Linear
    o1 = out_ln[...]
    y = _ln(x, o1[0:1], o1[1:2])
    y = jnp.dot(y, out_fc_w[...].astype(f32),
                preferred_element_type=f32) + out_fc_b[...]
    o_ref[0] = y.astype(o_ref.dtype)         # dropout = identity (inference)


# ----------------------------- wrapper -----------------------------

_WEIGHT_ORDER = ("mem_ln1", "mem_fc_w", "mem_fc_b", "mem_ln2",
                 "txt_ln", "txt_fc_w", "txt_fc_b",
                 "norms", "sa_qkv_w", "sa_proj_w", "sa_proj_b",
                 "ca_q_w", "ca_kv_w", "ca_proj_w", "ca_proj_b",
                 "f1_w", "f1_b", "f2_w", "f2_b",
                 "out_ln", "out_fc_w", "out_fc_b")


def pack_params(params):
    """One-time weight-storage transform (done outside jit):
    fuse QKV / KV weights, stack per-layer slabs into lane-dense (L, ...) arrays,
    store matmul weights in bf16, keep LayerNorm params / biases in f32."""
    bf = lambda a: a.astype(jnp.bfloat16)
    row = lambda a: a.reshape(1, -1)
    pair = lambda wb: jnp.stack([wb[0], wb[1]])
    layers = params["layers"]
    return {
        "mem_ln1": pair(params["mem_ln1"]),                       # (2, Cv) f32
        "mem_fc_w": bf(params["mem_fc"][0]),                      # (Cv, W) bf16
        "mem_fc_b": row(params["mem_fc"][1]),                     # (1, W)  f32
        "mem_ln2": pair(params["mem_ln2"]),                       # (2, W)  f32
        "txt_ln": pair(params["txt_ln"]),                         # (2, Cv) f32
        "txt_fc_w": bf(params["txt_fc"][0]),                      # (Cv, W) bf16
        "txt_fc_b": row(params["txt_fc"][1]),                     # (1, W)  f32
        "norms": jnp.stack([jnp.stack([*lp["norm1"], *lp["norm2"], *lp["norm3"]])
                            for lp in layers]),                   # (L, 6, W) f32
        "sa_qkv_w": jnp.stack([bf(jnp.concatenate(
            [lp["self_attn"]["q_w"], lp["self_attn"]["k_w"], lp["self_attn"]["v_w"]],
            axis=1)) for lp in layers]),                          # (L, W, 3W) bf16
        "sa_proj_w": jnp.stack([bf(lp["self_attn"]["proj_w"]) for lp in layers]),
        "sa_proj_b": jnp.stack([row(lp["self_attn"]["proj_b"]) for lp in layers]),
        "ca_q_w": jnp.stack([bf(lp["cross_attn"]["q_w"]) for lp in layers]),
        "ca_kv_w": jnp.stack([bf(jnp.concatenate(
            [lp["cross_attn"]["k_w"], lp["cross_attn"]["v_w"]], axis=1))
            for lp in layers]),                                   # (L, W, 2W) bf16
        "ca_proj_w": jnp.stack([bf(lp["cross_attn"]["proj_w"]) for lp in layers]),
        "ca_proj_b": jnp.stack([row(lp["cross_attn"]["proj_b"]) for lp in layers]),
        "f1_w": jnp.stack([bf(lp["mlp_fc1"][0]) for lp in layers]),   # (L, W, 4W)
        "f1_b": jnp.stack([row(lp["mlp_fc1"][1]) for lp in layers]),  # (L, 1, 4W)
        "f2_w": jnp.stack([bf(lp["mlp_fc2"][0]) for lp in layers]),   # (L, 4W, W)
        "f2_b": jnp.stack([row(lp["mlp_fc2"][1]) for lp in layers]),  # (L, 1, W)
        "out_ln": pair(params["out_ln"]),                         # (2, W)  f32
        "out_fc_w": bf(params["out_fc"][0]),                      # (W, Cv) bf16
        "out_fc_b": row(params["out_fc"][1]),                     # (1, Cv) f32
    }


def _const_spec(a):
    nd = a.ndim
    return pl.BlockSpec(a.shape, lambda b: (0,) * nd)


def context_decoder_pallas(packed, text, visual, *, num_heads, num_layers):
    B, Nt, Cv = text.shape
    _, Nv, _ = visual.shape
    weights = [packed[k] for k in _WEIGHT_ORDER]
    kernel = functools.partial(_context_decoder_kernel,
                               num_heads=num_heads, num_layers=num_layers)
    return pl.pallas_call(
        kernel,
        out_shape=jax.ShapeDtypeStruct((B, Nt, Cv), text.dtype),
        grid=(B,),
        in_specs=[pl.BlockSpec((1, Nt, Cv), lambda b: (b, 0, 0)),
                  pl.BlockSpec((1, Nv, Cv), lambda b: (b, 0, 0))]
                 + [_const_spec(a) for a in weights],
        out_specs=pl.BlockSpec((1, Nt, Cv), lambda b: (b, 0, 0)),
        compiler_params=pltpu.CompilerParams(
            dimension_semantics=("parallel",),       # both v7x TCs get a batch element
            vmem_limit_bytes=32 * 1024 * 1024),      # explicit guard (v7x has 64 MiB)
    )(text, visual, *weights)


# ------------------ pure-JAX reference (HIGHEST precision) ------------------

def _hdot(a, b):
    return jnp.dot(a, b, precision=jax.lax.Precision.HIGHEST)


def _q(w):
    # Simulate the kernel's bf16 weight storage so the tolerance check isolates
    # kernel-math error (default-precision matmuls, approx reciprocal).
    return w.astype(jnp.bfloat16).astype(jnp.float32)


def _attn_ref(ap, q_in, k_in, v_in, num_heads):
    B, N, C = q_in.shape
    M = k_in.shape[1]
    D = C // num_heads
    scale = D ** (-0.5)
    q = _hdot(q_in, _q(ap["q_w"])).reshape(B, N, num_heads, D)
    k = _hdot(k_in, _q(ap["k_w"])).reshape(B, M, num_heads, D)
    v = _hdot(v_in, _q(ap["v_w"])).reshape(B, M, num_heads, D)
    attn = jnp.einsum("bnkc,bmkc->bknm", q, k,
                      precision=jax.lax.Precision.HIGHEST) * scale
    attn = jax.nn.softmax(attn, axis=-1)
    x = jnp.einsum("bknm,bmkc->bnkc", attn, v,
                   precision=jax.lax.Precision.HIGHEST).reshape(B, N, C)
    return _hdot(x, _q(ap["proj_w"])) + ap["proj_b"]


def context_decoder_ref(params, text, visual, num_heads):
    mem = _ln(visual, *params["mem_ln1"])
    mem = _hdot(mem, _q(params["mem_fc"][0])) + params["mem_fc"][1]
    mem = _ln(mem, *params["mem_ln2"])
    x = _ln(text, *params["txt_ln"])
    x = _hdot(x, _q(params["txt_fc"][0])) + params["txt_fc"][1]
    for lp in params["layers"]:
        h = _ln(x, *lp["norm1"])
        x = x + _attn_ref(lp["self_attn"], h, h, h, num_heads)
        h = _ln(x, *lp["norm2"])
        x = x + _attn_ref(lp["cross_attn"], h, mem, mem, num_heads)
        h = _ln(x, *lp["norm3"])
        m = _gelu_exact(_hdot(h, _q(lp["mlp_fc1"][0])) + lp["mlp_fc1"][1])
        x = x + _hdot(m, _q(lp["mlp_fc2"][0])) + lp["mlp_fc2"][1]
    x = _ln(x, *params["out_ln"])
    return _hdot(x, _q(params["out_fc"][0])) + params["out_fc"][1]


# ------------------------ deterministic parameter init ------------------------

def _trunc_normal(key, shape, std=0.02):
    return std * jax.random.truncated_normal(key, -2.0, 2.0, shape, jnp.float32)


def init_params(key, visual_dim, width, num_layers):
    keys = iter(jax.random.split(key, 8 + 12 * num_layers))
    ones, zeros = jnp.ones, jnp.zeros
    p = {
        "mem_ln1": (ones(visual_dim), zeros(visual_dim)),
        "mem_fc":  (_trunc_normal(next(keys), (visual_dim, width)), zeros(width)),
        "mem_ln2": (ones(width), zeros(width)),
        "txt_ln":  (ones(visual_dim), zeros(visual_dim)),
        "txt_fc":  (_trunc_normal(next(keys), (visual_dim, width)), zeros(width)),
        "layers":  [],
    }
    for _ in range(num_layers):
        lp = {}
        for name in ("self_attn", "cross_attn"):
            lp[name] = {
                "q_w": _trunc_normal(next(keys), (width, width)),
                "k_w": _trunc_normal(next(keys), (width, width)),
                "v_w": _trunc_normal(next(keys), (width, width)),
                "proj_w": _trunc_normal(next(keys), (width, width)),
                "proj_b": zeros(width),
            }
        lp["norm1"] = (ones(width), zeros(width))
        lp["norm2"] = (ones(width), zeros(width))
        lp["norm3"] = (ones(width), zeros(width))
        lp["mlp_fc1"] = (_trunc_normal(next(keys), (width, 4 * width)), zeros(4 * width))
        lp["mlp_fc2"] = (_trunc_normal(next(keys), (4 * width, width)), zeros(width))
        p["layers"].append(lp)
    p["out_ln"] = (ones(width), zeros(width))
    p["out_fc"] = (_trunc_normal(next(keys), (width, visual_dim)), zeros(visual_dim))
    return p


if __name__ == "__main__":
    # Small, module-consistent config:
    #   ContextDecoder(transformer_width=32, transformer_heads=4,
    #                  transformer_layers=2, visual_dim=64)
    B, N_TEXT, N_VIS = 2, 8, 16
    VISUAL_DIM, WIDTH, HEADS, LAYERS = 64, 32, 4, 2

    root = jax.random.PRNGKey(0)
    k_params, k_text, k_vis = jax.random.split(root, 3)
    params = init_params(k_params, VISUAL_DIM, WIDTH, LAYERS)
    text = jax.random.normal(k_text, (B, N_TEXT, VISUAL_DIM), jnp.float32)
    visual = jax.random.normal(k_vis, (B, N_VIS, VISUAL_DIM), jnp.float32)

    packed = pack_params(params)  # one-time bf16 / fused-QKV weight storage transform
    fwd = jax.jit(functools.partial(context_decoder_pallas,
                                    num_heads=HEADS, num_layers=LAYERS))
    out = jax.block_until_ready(fwd(packed, text, visual))

    ref = context_decoder_ref(params, text, visual, HEADS)
    assert out.shape == (B, N_TEXT, VISUAL_DIM), out.shape
    max_err = float(jnp.max(jnp.abs(out - ref)))
    assert jnp.allclose(out, ref, rtol=2e-2, atol=2e-2), max_err
    print("KERNEL_OK")
</pallas_src>

<mosaic_0001>
module attributes {stable_mosaic.version = 11 : i64} {
  func.func @_context_decoder_kernel(%arg0: i32, %arg1: memref<1x8x64xf32, #tpu.memory_space<vmem>>, %arg2: memref<1x16x64xf32, #tpu.memory_space<vmem>>, %arg3: memref<2x64xf32, #tpu.memory_space<vmem>>, %arg4: memref<64x32xbf16, #tpu.memory_space<vmem>>, %arg5: memref<1x32xf32, #tpu.memory_space<vmem>>, %arg6: memref<2x32xf32, #tpu.memory_space<vmem>>, %arg7: memref<2x64xf32, #tpu.memory_space<vmem>>, %arg8: memref<64x32xbf16, #tpu.memory_space<vmem>>, %arg9: memref<1x32xf32, #tpu.memory_space<vmem>>, %arg10: memref<2x6x32xf32, #tpu.memory_space<vmem>>, %arg11: memref<2x32x96xbf16, #tpu.memory_space<vmem>>, %arg12: memref<2x32x32xbf16, #tpu.memory_space<vmem>>, %arg13: memref<2x1x32xf32, #tpu.memory_space<vmem>>, %arg14: memref<2x32x32xbf16, #tpu.memory_space<vmem>>, %arg15: memref<2x32x64xbf16, #tpu.memory_space<vmem>>, %arg16: memref<2x32x32xbf16, #tpu.memory_space<vmem>>, %arg17: memref<2x1x32xf32, #tpu.memory_space<vmem>>, %arg18: memref<2x32x128xbf16, #tpu.memory_space<vmem>>, %arg19: memref<2x1x128xf32, #tpu.memory_space<vmem>>, %arg20: memref<2x128x32xbf16, #tpu.memory_space<vmem>>, %arg21: memref<2x1x32xf32, #tpu.memory_space<vmem>>, %arg22: memref<2x32xf32, #tpu.memory_space<vmem>>, %arg23: memref<32x64xbf16, #tpu.memory_space<vmem>>, %arg24: memref<1x64xf32, #tpu.memory_space<vmem>>, %arg25: memref<1x8x64xf32, #tpu.memory_space<vmem>>) attributes {dimension_semantics = [#tpu.dimension_semantics<parallel>], iteration_bounds = array<i64: 2>, scalar_prefetch = 0 : i64, scratch_operands = 0 : i64, tpu.core_type = #tpu.core_type<tc>, window_params = [{transform_indices = @transform_0, window_bounds = array<i64: 1, 8, 64>}, {transform_indices = @transform_1, window_bounds = array<i64: 1, 16, 64>}, {pipeline_mode = #tpu.pipeline_mode<synchronous>, transform_indices = @transform_2, window_bounds = array<i64: 2, 64>}, {pipeline_mode = #tpu.pipeline_mode<synchronous>, transform_indices = @transform_3, window_bounds = array<i64: 64, 32>}, {pipeline_mode = #tpu.pipeline_mode<synchronous>, transform_indices = @transform_4, window_bounds = array<i64: 1, 32>}, {pipeline_mode = #tpu.pipeline_mode<synchronous>, transform_indices = @transform_5, window_bounds = array<i64: 2, 32>}, {pipeline_mode = #tpu.pipeline_mode<synchronous>, transform_indices = @transform_6, window_bounds = array<i64: 2, 64>}, {pipeline_mode = #tpu.pipeline_mode<synchronous>, transform_indices = @transform_7, window_bounds = array<i64: 64, 32>}, {pipeline_mode = #tpu.pipeline_mode<synchronous>, transform_indices = @transform_8, window_bounds = array<i64: 1, 32>}, {pipeline_mode = #tpu.pipeline_mode<synchronous>, transform_indices = @transform_9, window_bounds = array<i64: 2, 6, 32>}, {pipeline_mode = #tpu.pipeline_mode<synchronous>, transform_indices = @transform_10, window_bounds = array<i64: 2, 32, 96>}, {pipeline_mode = #tpu.pipeline_mode<synchronous>, transform_indices = @transform_11, window_bounds = array<i64: 2, 32, 32>}, {pipeline_mode = #tpu.pipeline_mode<synchronous>, transform_indices = @transform_12, window_bounds = array<i64: 2, 1, 32>}, {pipeline_mode = #tpu.pipeline_mode<synchronous>, transform_indices = @transform_13, window_bounds = array<i64: 2, 32, 32>}, {pipeline_mode = #tpu.pipeline_mode<synchronous>, transform_indices = @transform_14, window_bounds = array<i64: 2, 32, 64>}, {pipeline_mode = #tpu.pipeline_mode<synchronous>, transform_indices = @transform_15, window_bounds = array<i64: 2, 32, 32>}, {pipeline_mode = #tpu.pipeline_mode<synchronous>, transform_indices = @transform_16, window_bounds = array<i64: 2, 1, 32>}, {pipeline_mode = #tpu.pipeline_mode<synchronous>, transform_indices = @transform_17, window_bounds = array<i64: 2, 32, 128>}, {pipeline_mode = #tpu.pipeline_mode<synchronous>, transform_indices = @transform_18, window_bounds = array<i64: 2, 1, 128>}, {pipeline_mode = #tpu.pipeline_mode<synchronous>, transform_indices = @transform_19, window_bounds = array<i64: 2, 128, 32>}, {pipeline_mode = #tpu.pipeline_mode<synchronous>, transform_indices = @transform_20, window_bounds = array<i64: 2, 1, 32>}, {pipeline_mode = #tpu.pipeline_mode<synchronous>, transform_indices = @transform_21, window_bounds = array<i64: 2, 32>}, {pipeline_mode = #tpu.pipeline_mode<synchronous>, transform_indices = @transform_22, window_bounds = array<i64: 32, 64>}, {pipeline_mode = #tpu.pipeline_mode<synchronous>, transform_indices = @transform_23, window_bounds = array<i64: 1, 64>}, {transform_indices = @transform_24, window_bounds = array<i64: 1, 8, 64>}]} {
    %c0 = arith.constant 0 : index
    %c0_0 = arith.constant 0 : index
    %c0_1 = arith.constant 0 : index
    %0 = vector.load %arg1[%c0, %c0_0, %c0_1] : memref<1x8x64xf32, #tpu.memory_space<vmem>>, vector<1x8x64xf32>
    %1 = vector.shape_cast %0 : vector<1x8x64xf32> to vector<8x64xf32>
    %c0_2 = arith.constant 0 : index
    %c0_3 = arith.constant 0 : index
    %c0_4 = arith.constant 0 : index
    %2 = vector.load %arg2[%c0_2, %c0_3, %c0_4] : memref<1x16x64xf32, #tpu.memory_space<vmem>>, vector<1x16x64xf32>
    %3 = vector.shape_cast %2 : vector<1x16x64xf32> to vector<16x64xf32>
    %c0_5 = arith.constant 0 : index
    %c0_6 = arith.constant 0 : index
    %4 = vector.load %arg3[%c0_5, %c0_6] : memref<2x64xf32, #tpu.memory_space<vmem>>, vector<2x64xf32>
    %5 = vector.extract_strided_slice %4 {offsets = [0, 0], sizes = [1, 64], strides = [1, 1]} : vector<2x64xf32> to vector<1x64xf32>
    %6 = vector.extract_strided_slice %4 {offsets = [1, 0], sizes = [1, 64], strides = [1, 1]} : vector<2x64xf32> to vector<1x64xf32>
    %cst = arith.constant dense<0.000000e+00> : vector<16xf32>
    %7 = vector.multi_reduction <add>, %3, %cst [1] : vector<16x64xf32> to vector<16xf32>
    %8 = vector.shape_cast %7 : vector<16xf32> to vector<16x1xf32>
    %cst_7 = arith.constant 6.400000e+01 : f32
    %9 = vector.broadcast %cst_7 : f32 to vector<16x1xf32>
    %10 = arith.divf %8, %9 : vector<16x1xf32>
    %11 = vector.broadcast %10 : vector<16x1xf32> to vector<16x64xf32>
    %12 = arith.subf %3, %11 : vector<16x64xf32>
    %13 = arith.mulf %12, %12 : vector<16x64xf32>
    %cst_8 = arith.constant dense<0.000000e+00> : vector<16xf32>
    %14 = vector.multi_reduction <add>, %13, %cst_8 [1] : vector<16x64xf32> to vector<16xf32>
    %15 = vector.shape_cast %14 : vector<16xf32> to vector<16x1xf32>
    %cst_9 = arith.constant 6.400000e+01 : f32
    %16 = vector.broadcast %cst_9 : f32 to vector<16x1xf32>
    %17 = arith.divf %15, %16 : vector<16x1xf32>
    %18 = vector.broadcast %10 : vector<16x1xf32> to vector<16x64xf32>
    %19 = arith.subf %3, %18 : vector<16x64xf32>
    %cst_10 = arith.constant 9.99999974E-6 : f32
    %20 = vector.broadcast %cst_10 : f32 to vector<16x1xf32>
    %21 = arith.addf %17, %20 : vector<16x1xf32>
    %22 = math.rsqrt %21 : vector<16x1xf32>
    %23 = vector.broadcast %22 : vector<16x1xf32> to vector<16x64xf32>
    %24 = arith.mulf %19, %23 : vector<16x64xf32>
    %25 = vector.broadcast %5 : vector<1x64xf32> to vector<16x64xf32>
    %26 = arith.mulf %24, %25 : vector<16x64xf32>
    %27 = vector.broadcast %6 : vector<1x64xf32> to vector<16x64xf32>
    %28 = arith.addf %26, %27 : vector<16x64xf32>
    %c0_11 = arith.constant 0 : index
    %c0_12 = arith.constant 0 : index
    %29 = vector.load %arg4[%c0_11, %c0_12] : memref<64x32xbf16, #tpu.memory_space<vmem>>, vector<64x32xbf16>
    %30 = arith.extf %29 : vector<64x32xbf16> to vector<64x32xf32>
    %cst_13 = arith.constant dense<0.000000e+00> : vector<16x32xf32>
    %31 = tpu.matmul %28, %30, %cst_13 {dimension_numbers = #tpu.dot_dimension_numbers<[1], [0], [0], [1], [0, 0, 1, 1], [], []>} : vector<16x64xf32>, vector<64x32xf32>, vector<16x32xf32> -> vector<16x32xf32>
    %c0_14 = arith.constant 0 : index
    %c0_15 = arith.constant 0 : index
    %32 = vector.load %arg5[%c0_14, %c0_15] : memref<1x32xf32, #tpu.memory_space<vmem>>, vector<1x32xf32>
    %33 = vector.broadcast %32 : vector<1x32xf32> to vector<16x32xf32>
    %34 = arith.addf %31, %33 : vector<16x32xf32>
    %c0_16 = arith.constant 0 : index
    %c0_17 = arith.constant 0 : index
    %35 = vector.load %arg6[%c0_16, %c0_17] : memref<2x32xf32, #tpu.memory_space<vmem>>, vector<2x32xf32>
    %36 = vector.extract_strided_slice %35 {offsets = [0, 0], sizes = [1, 32], strides = [1, 1]} : vector<2x32xf32> to vector<1x32xf32>
    %37 = vector.extract_strided_slice %35 {offsets = [1, 0], sizes = [1, 32], strides = [1, 1]} : vector<2x32xf32> to vector<1x32xf32>
    %cst_18 = arith.constant dense<0.000000e+00> : vector<16xf32>
    %38 = vector.multi_reduction <add>, %34, %cst_18 [1] : vector<16x32xf32> to vector<16xf32>
    %39 = vector.shape_cast %38 : vector<16xf32> to vector<16x1xf32>
    %cst_19 = arith.constant 3.200000e+01 : f32
    %40 = vector.broadcast %cst_19 : f32 to vector<16x1xf32>
    %41 = arith.divf %39, %40 : vector<16x1xf32>
    %42 = vector.broadcast %41 : vector<16x1xf32> to vector<16x32xf32>
    %43 = arith.subf %34, %42 : vector<16x32xf32>
    %44 = arith.mulf %43, %43 : vector<16x32xf32>
    %cst_20 = arith.constant dense<0.000000e+00> : vector<16xf32>
    %45 = vector.multi_reduction <add>, %44, %cst_20 [1] : vector<16x32xf32> to vector<16xf32>
    %46 = vector.shape_cast %45 : vector<16xf32> to vector<16x1xf32>
    %cst_21 = arith.constant 3.200000e+01 : f32
    %47 = vector.broadcast %cst_21 : f32 to vector<16x1xf32>
    %48 = arith.divf %46, %47 : vector<16x1xf32>
    %49 = vector.broadcast %41 : vector<16x1xf32> to vector<16x32xf32>
    %50 = arith.subf %34, %49 : vector<16x32xf32>
    %cst_22 = arith.constant 9.99999974E-6 : f32
    %51 = vector.broadcast %cst_22 : f32 to vector<16x1xf32>
    %52 = arith.addf %48, %51 : vector<16x1xf32>
    %53 = math.rsqrt %52 : vector<16x1xf32>
    %54 = vector.broadcast %53 : vector<16x1xf32> to vector<16x32xf32>
    %55 = arith.mulf %50, %54 : vector<16x32xf32>
    %56 = vector.broadcast %36 : vector<1x32xf32> to vector<16x32xf32>
    %57 = arith.mulf %55, %56 : vector<16x32xf32>
    %58 = vector.broadcast %37 : vector<1x32xf32> to vector<16x32xf32>
    %59 = arith.addf %57, %58 : vector<16x32xf32>
    %c0_23 = arith.constant 0 : index
    %c0_24 = arith.constant 0 : index
    %60 = vector.load %arg7[%c0_23, %c0_24] : memref<2x64xf32, #tpu.memory_space<vmem>>, vector<2x64xf32>
    %61 = vector.extract_strided_slice %60 {offsets = [0, 0], sizes = [1, 64], strides = [1, 1]} : vector<2x64xf32> to vector<1x64xf32>
    %62 = vector.extract_strided_slice %60 {offsets = [1, 0], sizes = [1, 64], strides = [1, 1]} : vector<2x64xf32> to vector<1x64xf32>
    %cst_25 = arith.constant dense<0.000000e+00> : vector<8xf32>
    %63 = vector.multi_reduction <add>, %1, %cst_25 [1] : vector<8x64xf32> to vector<8xf32>
    %64 = vector.shape_cast %63 : vector<8xf32> to vector<8x1xf32>
    %cst_26 = arith.constant 6.400000e+01 : f32
    %65 = vector.broadcast %cst_26 : f32 to vector<8x1xf32>
    %66 = arith.divf %64, %65 : vector<8x1xf32>
    %67 = vector.broadcast %66 : vector<8x1xf32> to vector<8x64xf32>
    %68 = arith.subf %1, %67 : vector<8x64xf32>
    %69 = arith.mulf %68, %68 : vector<8x64xf32>
    %cst_27 = arith.constant dense<0.000000e+00> : vector<8xf32>
    %70 = vector.multi_reduction <add>, %69, %cst_27 [1] : vector<8x64xf32> to vector<8xf32>
    %71 = vector.shape_cast %70 : vector<8xf32> to vector<8x1xf32>
    %cst_28 = arith.constant 6.400000e+01 : f32
    %72 = vector.broadcast %cst_28 : f32 to vector<8x1xf32>
    %73 = arith.divf %71, %72 : vector<8x1xf32>
    %74 = vector.broadcast %66 : vector<8x1xf32> to vector<8x64xf32>
    %75 = arith.subf %1, %74 : vector<8x64xf32>
    %cst_29 = arith.constant 9.99999974E-6 : f32
    %76 = vector.broadcast %cst_29 : f32 to vector<8x1xf32>
    %77 = arith.addf %73, %76 : vector<8x1xf32>
    %78 = math.rsqrt %77 : vector<8x1xf32>
    %79 = vector.broadcast %78 : vector<8x1xf32> to vector<8x64xf32>
    %80 = arith.mulf %75, %79 : vector<8x64xf32>
    %81 = vector.broadcast %61 : vector<1x64xf32> to vector<8x64xf32>
    %82 = arith.mulf %80, %81 : vector<8x64xf32>
    %83 = vector.broadcast %62 : vector<1x64xf32> to vector<8x64xf32>
    %84 = arith.addf %82, %83 : vector<8x64xf32>
    %c0_30 = arith.constant 0 : index
    %c0_31 = arith.constant 0 : index
    %85 = vector.load %arg8[%c0_30, %c0_31] : memref<64x32xbf16, #tpu.memory_space<vmem>>, vector<64x32xbf16>
    %86 = arith.extf %85 : vector<64x32xbf16> to vector<64x32xf32>
    %cst_32 = arith.constant dense<0.000000e+00> : vector<8x32xf32>
    %87 = tpu.matmul %84, %86, %cst_32 {dimension_numbers = #tpu.dot_dimension_numbers<[1], [0], [0], [1], [0, 0, 1, 1], [], []>} : vector<8x64xf32>, vector<64x32xf32>, vector<8x32xf32> -> vector<8x32xf32>
    %c0_33 = arith.constant 0 : index
    %c0_34 = arith.constant 0 : index
    %88 = vector.load %arg9[%c0_33, %c0_34] : memref<1x32xf32, #tpu.memory_space<vmem>>, vector<1x32xf32>
    %89 = vector.broadcast %88 : vector<1x32xf32> to vector<8x32xf32>
    %90 = arith.addf %87, %89 : vector<8x32xf32>
    %c0_35 = arith.constant 0 : index
    %c0_36 = arith.constant 0 : index
    %c0_37 = arith.constant 0 : index
    %91 = vector.load %arg10[%c0_35, %c0_36, %c0_37] : memref<2x6x32xf32, #tpu.memory_space<vmem>>, vector<1x6x32xf32>
    %92 = vector.shape_cast %91 : vector<1x6x32xf32> to vector<6x32xf32>
    %93 = vector.extract_strided_slice %92 {offsets = [0, 0], sizes = [1, 32], strides = [1, 1]} : vector<6x32xf32> to vector<1x32xf32>
    %94 = vector.extract_strided_slice %92 {offsets = [1, 0], sizes = [1, 32], strides = [1, 1]} : vector<6x32xf32> to vector<1x32xf32>
    %cst_38 = arith.constant dense<0.000000e+00> : vector<8xf32>
    %95 = vector.multi_reduction <add>, %90, %cst_38 [1] : vector<8x32xf32> to vector<8xf32>
    %96 = vector.shape_cast %95 : vector<8xf32> to vector<8x1xf32>
    %cst_39 = arith.constant 3.200000e+01 : f32
    %97 = vector.broadcast %cst_39 : f32 to vector<8x1xf32>
    %98 = arith.divf %96, %97 : vector<8x1xf32>
    %99 = vector.broadcast %98 : vector<8x1xf32> to vector<8x32xf32>
    %100 = arith.subf %90, %99 : vector<8x32xf32>
    %101 = arith.mulf %100, %100 : vector<8x32xf32>
    %cst_40 = arith.constant dense<0.000000e+00> : vector<8xf32>
    %102 = vector.multi_reduction <add>, %101, %cst_40 [1] : vector<8x32xf32> to vector<8xf32>
    %103 = vector.shape_cast %102 : vector<8xf32> to vector<8x1xf32>
    %cst_41 = arith.constant 3.200000e+01 : f32
    %104 = vector.broadcast %cst_41 : f32 to vector<8x1xf32>
    %105 = arith.divf %103, %104 : vector<8x1xf32>
    %106 = vector.broadcast %98 : vector<8x1xf32> to vector<8x32xf32>
    %107 = arith.subf %90, %106 : vector<8x32xf32>
    %cst_42 = arith.constant 9.99999974E-6 : f32
    %108 = vector.broadcast %cst_42 : f32 to vector<8x1xf32>
    %109 = arith.addf %105, %108 : vector<8x1xf32>
    %110 = math.rsqrt %109 : vector<8x1xf32>
    %111 = vector.broadcast %110 : vector<8x1xf32> to vector<8x32xf32>
    %112 = arith.mulf %107, %111 : vector<8x32xf32>
    %113 = vector.broadcast %93 : vector<1x32xf32> to vector<8x32xf32>
    %114 = arith.mulf %112, %113 : vector<8x32xf32>
    %115 = vector.broadcast %94 : vector<1x32xf32> to vector<8x32xf32>
    %116 = arith.addf %114, %115 : vector<8x32xf32>
    %c0_43 = arith.constant 0 : index
    %c0_44 = arith.constant 0 : index
    %c0_45 = arith.constant 0 : index
    %117 = vector.load %arg11[%c0_43, %c0_44, %c0_45] : memref<2x32x96xbf16, #tpu.memory_space<vmem>>, vector<1x32x96xbf16>
    %118 = vector.shape_cast %117 : vector<1x32x96xbf16> to vector<32x96xbf16>
    %119 = arith.extf %118 : vector<32x96xbf16> to vector<32x96xf32>
    %cst_46 = arith.constant dense<0.000000e+00> : vector<8x96xf32>
    %120 = tpu.matmul %116, %119, %cst_46 {dimension_numbers = #tpu.dot_dimension_numbers<[1], [0], [0], [1], [0, 0, 1, 1], [], []>} : vector<8x32xf32>, vector<32x96xf32>, vector<8x96xf32> -> vector<8x96xf32>
    %121 = vector.extract_strided_slice %120 {offsets = [0, 0], sizes = [8, 32], strides = [1, 1]} : vector<8x96xf32> to vector<8x32xf32>
    %122 = vector.extract_strided_slice %120 {offsets = [0, 32], sizes = [8, 32], strides = [1, 1]} : vector<8x96xf32> to vector<8x32xf32>
    %123 = vector.extract_strided_slice %120 {offsets = [0, 64], sizes = [8, 32], strides = [1, 1]} : vector<8x96xf32> to vector<8x32xf32>
    %c0_47 = arith.constant 0 : index
    %c0_48 = arith.constant 0 : index
    %c0_49 = arith.constant 0 : index
    %124 = vector.load %arg12[%c0_47, %c0_48, %c0_49] : memref<2x32x32xbf16, #tpu.memory_space<vmem>>, vector<1x32x32xbf16>
    %125 = vector.shape_cast %124 : vector<1x32x32xbf16> to vector<32x32xbf16>
    %126 = arith.extf %125 : vector<32x32xbf16> to vector<32x32xf32>
    %c0_50 = arith.constant 0 : index
    %c0_51 = arith.constant 0 : index
    %c0_52 = arith.constant 0 : index
    %127 = vector.load %arg13[%c0_50, %c0_51, %c0_52] : memref<2x1x32xf32, #tpu.memory_space<vmem>>, vector<1x1x32xf32>
    %128 = vector.shape_cast %127 : vector<1x1x32xf32> to vector<1x32xf32>
    %129 = vector.extract_strided_slice %121 {offsets = [0, 0], sizes = [8, 8], strides = [1, 1]} : vector<8x32xf32> to vector<8x8xf32>
    %130 = vector.extract_strided_slice %122 {offsets = [0, 0], sizes = [8, 8], strides = [1, 1]} : vector<8x32xf32> to vector<8x8xf32>
    %131 = vector.extract_strided_slice %123 {offsets = [0, 0], sizes = [8, 8], strides = [1, 1]} : vector<8x32xf32> to vector<8x8xf32>
    %cst_53 = arith.constant dense<0.000000e+00> : vector<8x8xf32>
    %132 = tpu.matmul %129, %130, %cst_53 {dimension_numbers = #tpu.dot_dimension_numbers<[1], [1], [0], [0], [0, 0, 1, 0], [], []>} : vector<8x8xf32>, vector<8x8xf32>, vector<8x8xf32> -> vector<8x8xf32>
    %cst_54 = arith.constant 0.353553385 : f32
    %133 = vector.broadcast %cst_54 : f32 to vector<8x8xf32>
    %134 = arith.mulf %132, %133 : vector<8x8xf32>
    %cst_55 = arith.constant dense<0xFF800000> : vector<8xf32>
    %135 = vector.multi_reduction <maximumf>, %134, %cst_55 [1] : vector<8x8xf32> to vector<8xf32>
    %136 = vector.shape_cast %135 : vector<8xf32> to vector<8x1xf32>
    %137 = vector.broadcast %136 : vector<8x1xf32> to vector<8x8xf32>
    %138 = arith.subf %134, %137 : vector<8x8xf32>
    %139 = math.exp %138 : vector<8x8xf32>
    %cst_56 = arith.constant dense<0.000000e+00> : vector<8xf32>
    %140 = vector.multi_reduction <add>, %139, %cst_56 [1] : vector<8x8xf32> to vector<8xf32>
    %141 = vector.shape_cast %140 : vector<8xf32> to vector<8x1xf32>
    %142 = tpu.reciprocal %141 {approx = true} : vector<8x1xf32> -> vector<8x1xf32>
    %143 = vector.broadcast %142 : vector<8x1xf32> to vector<8x8xf32>
    %144 = arith.mulf %139, %143 : vector<8x8xf32>
    %cst_57 = arith.constant dense<0.000000e+00> : vector<8x8xf32>
    %145 = tpu.matmul %144, %131, %cst_57 {dimension_numbers = #tpu.dot_dimension_numbers<[1], [0], [0], [1], [0, 0, 1, 1], [], []>} : vector<8x8xf32>, vector<8x8xf32>, vector<8x8xf32> -> vector<8x8xf32>
    %146 = vector.extract_strided_slice %121 {offsets = [0, 8], sizes = [8, 8], strides = [1, 1]} : vector<8x32xf32> to vector<8x8xf32>
    %147 = vector.extract_strided_slice %122 {offsets = [0, 8], sizes = [8, 8], strides = [1, 1]} : vector<8x32xf32> to vector<8x8xf32>
    %148 = vector.extract_strided_slice %123 {offsets = [0, 8], sizes = [8, 8], strides = [1, 1]} : vector<8x32xf32> to vector<8x8xf32>
    %cst_58 = arith.constant dense<0.000000e+00> : vector<8x8xf32>
    %149 = tpu.matmul %146, %147, %cst_58 {dimension_numbers = #tpu.dot_dimension_numbers<[1], [1], [0], [0], [0, 0, 1, 0], [], []>} : vector<8x8xf32>, vector<8x8xf32>, vector<8x8xf32> -> vector<8x8xf32>
    %cst_59 = arith.constant 0.353553385 : f32
    %150 = vector.broadcast %cst_59 : f32 to vector<8x8xf32>
    %151 = arith.mulf %149, %150 : vector<8x8xf32>
    %cst_60 = arith.constant dense<0xFF800000> : vector<8xf32>
    %152 = vector.multi_reduction <maximumf>, %151, %cst_60 [1] : vector<8x8xf32> to vector<8xf32>
    %153 = vector.shape_cast %152 : vector<8xf32> to vector<8x1xf32>
    %154 = vector.broadcast %153 : vector<8x1xf32> to vector<8x8xf32>
    %155 = arith.subf %151, %154 : vector<8x8xf32>
    %156 = math.exp %155 : vector<8x8xf32>
    %cst_61 = arith.constant dense<0.000000e+00> : vector<8xf32>
    %157 = vector.multi_reduction <add>, %156, %cst_61 [1] : vector<8x8xf32> to vector<8xf32>
    %158 = vector.shape_cast %157 : vector<8xf32> to vector<8x1xf32>
    %159 = tpu.reciprocal %158 {approx = true} : vector<8x1xf32> -> vector<8x1xf32>
    %160 = vector.broadcast %159 : vector<8x1xf32> to vector<8x8xf32>
    %161 = arith.mulf %156, %160 : vector<8x8xf32>
    %cst_62 = arith.constant dense<0.000000e+00> : vector<8x8xf32>
    %162 = tpu.matmul %161, %148, %cst_62 {dimension_numbers = #tpu.dot_dimension_numbers<[1], [0], [0], [1], [0, 0, 1, 1], [], []>} : vector<8x8xf32>, vector<8x8xf32>, vector<8x8xf32> -> vector<8x8xf32>
    %163 = vector.extract_strided_slice %121 {offsets = [0, 16], sizes = [8, 8], strides = [1, 1]} : vector<8x32xf32> to vector<8x8xf32>
    %164 = vector.extract_strided_slice %122 {offsets = [0, 16], sizes = [8, 8], strides = [1, 1]} : vector<8x32xf32> to vector<8x8xf32>
    %165 = vector.extract_strided_slice %123 {offsets = [0, 16], sizes = [8, 8], strides = [1, 1]} : vector<8x32xf32> to vector<8x8xf32>
    %cst_63 = arith.constant dense<0.000000e+00> : vector<8x8xf32>
    %166 = tpu.matmul %163, %164, %cst_63 {dimension_numbers = #tpu.dot_dimension_numbers<[1], [1], [0], [0], [0, 0, 1, 0], [], []>} : vector<8x8xf32>, vector<8x8xf32>, vector<8x8xf32> -> vector<8x8xf32>
    %cst_64 = arith.constant 0.353553385 : f32
    %167 = vector.broadcast %cst_64 : f32 to vector<8x8xf32>
    %168 = arith.mulf %166, %167 : vector<8x8xf32>
    %cst_65 = arith.constant dense<0xFF800000> : vector<8xf32>
    %169 = vector.multi_reduction <maximumf>, %168, %cst_65 [1] : vector<8x8xf32> to vector<8xf32>
    %170 = vector.shape_cast %169 : vector<8xf32> to vector<8x1xf32>
    %171 = vector.broadcast %170 : vector<8x1xf32> to vector<8x8xf32>
    %172 = arith.subf %168, %171 : vector<8x8xf32>
    %173 = math.exp %172 : vector<8x8xf32>
    %cst_66 = arith.constant dense<0.000000e+00> : vector<8xf32>
    %174 = vector.multi_reduction <add>, %173, %cst_66 [1] : vector<8x8xf32> to vector<8xf32>
    %175 = vector.shape_cast %174 : vector<8xf32> to vector<8x1xf32>
    %176 = tpu.reciprocal %175 {approx = true} : vector<8x1xf32> -> vector<8x1xf32>
    %177 = vector.broadcast %176 : vector<8x1xf32> to vector<8x8xf32>
    %178 = arith.mulf %173, %177 : vector<8x8xf32>
    %cst_67 = arith.constant dense<0.000000e+00> : vector<8x8xf32>
    %179 = tpu.matmul %178, %165, %cst_67 {dimension_numbers = #tpu.dot_dimension_numbers<[1], [0], [0], [1], [0, 0, 1, 1], [], []>} : vector<8x8xf32>, vector<8x8xf32>, vector<8x8xf32> -> vector<8x8xf32>
    %180 = vector.extract_strided_slice %121 {offsets = [0, 24], sizes = [8, 8], strides = [1, 1]} : vector<8x32xf32> to vector<8x8xf32>
    %181 = vector.extract_strided_slice %122 {offsets = [0, 24], sizes = [8, 8], strides = [1, 1]} : vector<8x32xf32> to vector<8x8xf32>
    %182 = vector.extract_strided_slice %123 {offsets = [0, 24], sizes = [8, 8], strides = [1, 1]} : vector<8x32xf32> to vector<8x8xf32>
    %cst_68 = arith.constant dense<0.000000e+00> : vector<8x8xf32>
    %183 = tpu.matmul %180, %181, %cst_68 {dimension_numbers = #tpu.dot_dimension_numbers<[1], [1], [0], [0], [0, 0, 1, 0], [], []>} : vector<8x8xf32>, vector<8x8xf32>, vector<8x8xf32> -> vector<8x8xf32>
    %cst_69 = arith.constant 0.353553385 : f32
    %184 = vector.broadcast %cst_69 : f32 to vector<8x8xf32>
    %185 = arith.mulf %183, %184 : vector<8x8xf32>
    %cst_70 = arith.constant dense<0xFF800000> : vector<8xf32>
    %186 = vector.multi_reduction <maximumf>, %185, %cst_70 [1] : vector<8x8xf32> to vector<8xf32>
    %187 = vector.shape_cast %186 : vector<8xf32> to vector<8x1xf32>
    %188 = vector.broadcast %187 : vector<8x1xf32> to vector<8x8xf32>
    %189 = arith.subf %185, %188 : vector<8x8xf32>
    %190 = math.exp %189 : vector<8x8xf32>
    %cst_71 = arith.constant dense<0.000000e+00> : vector<8xf32>
    %191 = vector.multi_reduction <add>, %190, %cst_71 [1] : vector<8x8xf32> to vector<8xf32>
    %192 = vector.shape_cast %191 : vector<8xf32> to vector<8x1xf32>
    %193 = tpu.reciprocal %192 {approx = true} : vector<8x1xf32> -> vector<8x1xf32>
    %194 = vector.broadcast %193 : vector<8x1xf32> to vector<8x8xf32>
    %195 = arith.mulf %190, %194 : vector<8x8xf32>
    %cst_72 = arith.constant dense<0.000000e+00> : vector<8x8xf32>
    %196 = tpu.matmul %195, %182, %cst_72 {dimension_numbers = #tpu.dot_dimension_numbers<[1], [0], [0], [1], [0, 0, 1, 1], [], []>} : vector<8x8xf32>, vector<8x8xf32>, vector<8x8xf32> -> vector<8x8xf32>
    %197 = tpu.concatenate %145, %162, %179, %196 in 1 : vector<8x8xf32>, vector<8x8xf32>, vector<8x8xf32>, vector<8x8xf32> -> vector<8x32xf32>
    %cst_73 = arith.constant dense<0.000000e+00> : vector<8x32xf32>
    %198 = tpu.matmul %197, %126, %cst_73 {dimension_numbers = #tpu.dot_dimension_numbers<[1], [0], [0], [1], [0, 0, 1, 1], [], []>} : vector<8x32xf32>, vector<32x32xf32>, vector<8x32xf32> -> vector<8x32xf32>
    %199 = vector.broadcast %128 : vector<1x32xf32> to vector<8x32xf32>
    %200 = arith.addf %198, %199 : vector<8x32xf32>
    %201 = arith.addf %90, %200 : vector<8x32xf32>
    %202 = vector.extract_strided_slice %92 {offsets = [2, 0], sizes = [1, 32], strides = [1, 1]} : vector<6x32xf32> to vector<1x32xf32>
    %203 = vector.extract_strided_slice %92 {offsets = [3, 0], sizes = [1, 32], strides = [1, 1]} : vector<6x32xf32> to vector<1x32xf32>
    %cst_74 = arith.constant dense<0.000000e+00> : vector<8xf32>
    %204 = vector.multi_reduction <add>, %201, %cst_74 [1] : vector<8x32xf32> to vector<8xf32>
    %205 = vector.shape_cast %204 : vector<8xf32> to vector<8x1xf32>
    %cst_75 = arith.constant 3.200000e+01 : f32
    %206 = vector.broadcast %cst_75 : f32 to vector<8x1xf32>
    %207 = arith.divf %205, %206 : vector<8x1xf32>
    %208 = vector.broadcast %207 : vector<8x1xf32> to vector<8x32xf32>
    %209 = arith.subf %201, %208 : vector<8x32xf32>
    %210 = arith.mulf %209, %209 : vector<8x32xf32>
    %cst_76 = arith.constant dense<0.000000e+00> : vector<8xf32>
    %211 = vector.multi_reduction <add>, %210, %cst_76 [1] : vector<8x32xf32> to vector<8xf32>
    %212 = vector.shape_cast %211 : vector<8xf32> to vector<8x1xf32>
    %cst_77 = arith.constant 3.200000e+01 : f32
    %213 = vector.broadcast %cst_77 : f32 to vector<8x1xf32>
    %214 = arith.divf %212, %213 : vector<8x1xf32>
    %215 = vector.broadcast %207 : vector<8x1xf32> to vector<8x32xf32>
    %216 = arith.subf %201, %215 : vector<8x32xf32>
    %cst_78 = arith.constant 9.99999974E-6 : f32
    %217 = vector.broadcast %cst_78 : f32 to vector<8x1xf32>
    %218 = arith.addf %214, %217 : vector<8x1xf32>
    %219 = math.rsqrt %218 : vector<8x1xf32>
    %220 = vector.broadcast %219 : vector<8x1xf32> to vector<8x32xf32>
    %221 = arith.mulf %216, %220 : vector<8x32xf32>
    %222 = vector.broadcast %202 : vector<1x32xf32> to vector<8x32xf32>
    %223 = arith.mulf %221, %222 : vector<8x32xf32>
    %224 = vector.broadcast %203 : vector<1x32xf32> to vector<8x32xf32>
    %225 = arith.addf %223, %224 : vector<8x32xf32>
    %c0_79 = arith.constant 0 : index
    %c0_80 = arith.constant 0 : index
    %c0_81 = arith.constant 0 : index
    %226 = vector.load %arg14[%c0_79, %c0_80, %c0_81] : memref<2x32x32xbf16, #tpu.memory_space<vmem>>, vector<1x32x32xbf16>
    %227 = vector.shape_cast %226 : vector<1x32x32xbf16> to vector<32x32xbf16>
    %228 = arith.extf %227 : vector<32x32xbf16> to vector<32x32xf32>
    %cst_82 = arith.constant dense<0.000000e+00> : vector<8x32xf32>
    %229 = tpu.matmul %225, %228, %cst_82 {dimension_numbers = #tpu.dot_dimension_numbers<[1], [0], [0], [1], [0, 0, 1, 1], [], []>} : vector<8x32xf32>, vector<32x32xf32>, vector<8x32xf32> -> vector<8x32xf32>
    %c0_83 = arith.constant 0 : index
    %c0_84 = arith.constant 0 : index
    %c0_85 = arith.constant 0 : index
    %230 = vector.load %arg15[%c0_83, %c0_84, %c0_85] : memref<2x32x64xbf16, #tpu.memory_space<vmem>>, vector<1x32x64xbf16>
    %231 = vector.shape_cast %230 : vector<1x32x64xbf16> to vector<32x64xbf16>
    %232 = arith.extf %231 : vector<32x64xbf16> to vector<32x64xf32>
    %cst_86 = arith.constant dense<0.000000e+00> : vector<16x64xf32>
    %233 = tpu.matmul %59, %232, %cst_86 {dimension_numbers = #tpu.dot_dimension_numbers<[1], [0], [0], [1], [0, 0, 1, 1], [], []>} : vector<16x32xf32>, vector<32x64xf32>, vector<16x64xf32> -> vector<16x64xf32>
    %234 = vector.extract_strided_slice %233 {offsets = [0, 0], sizes = [16, 32], strides = [1, 1]} : vector<16x64xf32> to vector<16x32xf32>
    %235 = vector.extract_strided_slice %233 {offsets = [0, 32], sizes = [16, 32], strides = [1, 1]} : vector<16x64xf32> to vector<16x32xf32>
    %c0_87 = arith.constant 0 : index
    %c0_88 = arith.constant 0 : index
    %c0_89 = arith.constant 0 : index
    %236 = vector.load %arg16[%c0_87, %c0_88, %c0_89] : memref<2x32x32xbf16, #tpu.memory_space<vmem>>, vector<1x32x32xbf16>
    %237 = vector.shape_cast %236 : vector<1x32x32xbf16> to vector<32x32xbf16>
    %238 = arith.extf %237 : vector<32x32xbf16> to vector<32x32xf32>
    %c0_90 = arith.constant 0 : index
    %c0_91 = arith.constant 0 : index
    %c0_92 = arith.constant 0 : index
    %239 = vector.load %arg17[%c0_90, %c0_91, %c0_92] : memref<2x1x32xf32, #tpu.memory_space<vmem>>, vector<1x1x32xf32>
    %240 = vector.shape_cast %239 : vector<1x1x32xf32> to vector<1x32xf32>
    %241 = vector.extract_strided_slice %229 {offsets = [0, 0], sizes = [8, 8], strides = [1, 1]} : vector<8x32xf32> to vector<8x8xf32>
    %242 = vector.extract_strided_slice %234 {offsets = [0, 0], sizes = [16, 8], strides = [1, 1]} : vector<16x32xf32> to vector<16x8xf32>
    %243 = vector.extract_strided_slice %235 {offsets = [0, 0], sizes = [16, 8], strides = [1, 1]} : vector<16x32xf32> to vector<16x8xf32>
    %cst_93 = arith.constant dense<0.000000e+00> : vector<8x16xf32>
    %244 = tpu.matmul %241, %242, %cst_93 {dimension_numbers = #tpu.dot_dimension_numbers<[1], [1], [0], [0], [0, 0, 1, 0], [], []>} : vector<8x8xf32>, vector<16x8xf32>, vector<8x16xf32> -> vector<8x16xf32>
    %cst_94 = arith.constant 0.353553385 : f32
    %245 = vector.broadcast %cst_94 : f32 to vector<8x16xf32>
    %246 = arith.mulf %244, %245 : vector<8x16xf32>
    %cst_95 = arith.constant dense<0xFF800000> : vector<8xf32>
    %247 = vector.multi_reduction <maximumf>, %246, %cst_95 [1] : vector<8x16xf32> to vector<8xf32>
    %248 = vector.shape_cast %247 : vector<8xf32> to vector<8x1xf32>
    %249 = vector.broadcast %248 : vector<8x1xf32> to vector<8x16xf32>
    %250 = arith.subf %246, %249 : vector<8x16xf32>
    %251 = math.exp %250 : vector<8x16xf32>
    %cst_96 = arith.constant dense<0.000000e+00> : vector<8xf32>
    %252 = vector.multi_reduction <add>, %251, %cst_96 [1] : vector<8x16xf32> to vector<8xf32>
    %253 = vector.shape_cast %252 : vector<8xf32> to vector<8x1xf32>
    %254 = tpu.reciprocal %253 {approx = true} : vector<8x1xf32> -> vector<8x1xf32>
    %255 = vector.broadcast %254 : vector<8x1xf32> to vector<8x16xf32>
    %256 = arith.mulf %251, %255 : vector<8x16xf32>
    %cst_97 = arith.constant dense<0.000000e+00> : vector<8x8xf32>
    %257 = tpu.matmul %256, %243, %cst_97 {dimension_numbers = #tpu.dot_dimension_numbers<[1], [0], [0], [1], [0, 0, 1, 1], [], []>} : vector<8x16xf32>, vector<16x8xf32>, vector<8x8xf32> -> vector<8x8xf32>
    %258 = vector.extract_strided_slice %229 {offsets = [0, 8], sizes = [8, 8], strides = [1, 1]} : vector<8x32xf32> to vector<8x8xf32>
    %259 = vector.extract_strided_slice %234 {offsets = [0, 8], sizes = [16, 8], strides = [1, 1]} : vector<16x32xf32> to vector<16x8xf32>
    %260 = vector.extract_strided_slice %235 {offsets = [0, 8], sizes = [16, 8], strides = [1, 1]} : vector<16x32xf32> to vector<16x8xf32>
    %cst_98 = arith.constant dense<0.000000e+00> : vector<8x16xf32>
    %261 = tpu.matmul %258, %259, %cst_98 {dimension_numbers = #tpu.dot_dimension_numbers<[1], [1], [0], [0], [0, 0, 1, 0], [], []>} : vector<8x8xf32>, vector<16x8xf32>, vector<8x16xf32> -> vector<8x16xf32>
    %cst_99 = arith.constant 0.353553385 : f32
    %262 = vector.broadcast %cst_99 : f32 to vector<8x16xf32>
    %263 = arith.mulf %261, %262 : vector<8x16xf32>
    %cst_100 = arith.constant dense<0xFF800000> : vector<8xf32>
    %264 = vector.multi_reduction <maximumf>, %263, %cst_100 [1] : vector<8x16xf32> to vector<8xf32>
    %265 = vector.shape_cast %264 : vector<8xf32> to vector<8x1xf32>
    %266 = vector.broadcast %265 : vector<8x1xf32> to vector<8x16xf32>
    %267 = arith.subf %263, %266 : vector<8x16xf32>
    %268 = math.exp %267 : vector<8x16xf32>
    %cst_101 = arith.constant dense<0.000000e+00> : vector<8xf32>
    %269 = vector.multi_reduction <add>, %268, %cst_101 [1] : vector<8x16xf32> to vector<8xf32>
    %270 = vector.shape_cast %269 : vector<8xf32> to vector<8x1xf32>
    %271 = tpu.reciprocal %270 {approx = true} : vector<8x1xf32> -> vector<8x1xf32>
    %272 = vector.broadcast %271 : vector<8x1xf32> to vector<8x16xf32>
    %273 = arith.mulf %268, %272 : vector<8x16xf32>
    %cst_102 = arith.constant dense<0.000000e+00> : vector<8x8xf32>
    %274 = tpu.matmul %273, %260, %cst_102 {dimension_numbers = #tpu.dot_dimension_numbers<[1], [0], [0], [1], [0, 0, 1, 1], [], []>} : vector<8x16xf32>, vector<16x8xf32>, vector<8x8xf32> -> vector<8x8xf32>
    %275 = vector.extract_strided_slice %229 {offsets = [0, 16], sizes = [8, 8], strides = [1, 1]} : vector<8x32xf32> to vector<8x8xf32>
    %276 = vector.extract_strided_slice %234 {offsets = [0, 16], sizes = [16, 8], strides = [1, 1]} : vector<16x32xf32> to vector<16x8xf32>
    %277 = vector.extract_strided_slice %235 {offsets = [0, 16], sizes = [16, 8], strides = [1, 1]} : vector<16x32xf32> to vector<16x8xf32>
    %cst_103 = arith.constant dense<0.000000e+00> : vector<8x16xf32>
    %278 = tpu.matmul %275, %276, %cst_103 {dimension_numbers = #tpu.dot_dimension_numbers<[1], [1], [0], [0], [0, 0, 1, 0], [], []>} : vector<8x8xf32>, vector<16x8xf32>, vector<8x16xf32> -> vector<8x16xf32>
    %cst_104 = arith.constant 0.353553385 : f32
    %279 = vector.broadcast %cst_104 : f32 to vector<8x16xf32>
    %280 = arith.mulf %278, %279 : vector<8x16xf32>
    %cst_105 = arith.constant dense<0xFF800000> : vector<8xf32>
    %281 = vector.multi_reduction <maximumf>, %280, %cst_105 [1] : vector<8x16xf32> to vector<8xf32>
    %282 = vector.shape_cast %281 : vector<8xf32> to vector<8x1xf32>
    %283 = vector.broadcast %282 : vector<8x1xf32> to vector<8x16xf32>
    %284 = arith.subf %280, %283 : vector<8x16xf32>
    %285 = math.exp %284 : vector<8x16xf32>
    %cst_106 = arith.constant dense<0.000000e+00> : vector<8xf32>
    %286 = vector.multi_reduction <add>, %285, %cst_106 [1] : vector<8x16xf32> to vector<8xf32>
    %287 = vector.shape_cast %286 : vector<8xf32> to vector<8x1xf32>
    %288 = tpu.reciprocal %287 {approx = true} : vector<8x1xf32> -> vector<8x1xf32>
    %289 = vector.broadcast %288 : vector<8x1xf32> to vector<8x16xf32>
    %290 = arith.mulf %285, %289 : vector<8x16xf32>
    %cst_107 = arith.constant dense<0.000000e+00> : vector<8x8xf32>
    %291 = tpu.matmul %290, %277, %cst_107 {dimension_numbers = #tpu.dot_dimension_numbers<[1], [0], [0], [1], [0, 0, 1, 1], [], []>} : vector<8x16xf32>, vector<16x8xf32>, vector<8x8xf32> -> vector<8x8xf32>
    %292 = vector.extract_strided_slice %229 {offsets = [0, 24], sizes = [8, 8], strides = [1, 1]} : vector<8x32xf32> to vector<8x8xf32>
    %293 = vector.extract_strided_slice %234 {offsets = [0, 24], sizes = [16, 8], strides = [1, 1]} : vector<16x32xf32> to vector<16x8xf32>
    %294 = vector.extract_strided_slice %235 {offsets = [0, 24], sizes = [16, 8], strides = [1, 1]} : vector<16x32xf32> to vector<16x8xf32>
    %cst_108 = arith.constant dense<0.000000e+00> : vector<8x16xf32>
    %295 = tpu.matmul %292, %293, %cst_108 {dimension_numbers = #tpu.dot_dimension_numbers<[1], [1], [0], [0], [0, 0, 1, 0], [], []>} : vector<8x8xf32>, vector<16x8xf32>, vector<8x16xf32> -> vector<8x16xf32>
    %cst_109 = arith.constant 0.353553385 : f32
    %296 = vector.broadcast %cst_109 : f32 to vector<8x16xf32>
    %297 = arith.mulf %295, %296 : vector<8x16xf32>
    %cst_110 = arith.constant dense<0xFF800000> : vector<8xf32>
    %298 = vector.multi_reduction <maximumf>, %297, %cst_110 [1] : vector<8x16xf32> to vector<8xf32>
    %299 = vector.shape_cast %298 : vector<8xf32> to vector<8x1xf32>
    %300 = vector.broadcast %299 : vector<8x1xf32> to vector<8x16xf32>
    %301 = arith.subf %297, %300 : vector<8x16xf32>
    %302 = math.exp %301 : vector<8x16xf32>
    %cst_111 = arith.constant dense<0.000000e+00> : vector<8xf32>
    %303 = vector.multi_reduction <add>, %302, %cst_111 [1] : vector<8x16xf32> to vector<8xf32>
    %304 = vector.shape_cast %303 : vector<8xf32> to vector<8x1xf32>
    %305 = tpu.reciprocal %304 {approx = true} : vector<8x1xf32> -> vector<8x1xf32>
    %306 = vector.broadcast %305 : vector<8x1xf32> to vector<8x16xf32>
    %307 = arith.mulf %302, %306 : vector<8x16xf32>
    %cst_112 = arith.constant dense<0.000000e+00> : vector<8x8xf32>
    %308 = tpu.matmul %307, %294, %cst_112 {dimension_numbers = #tpu.dot_dimension_numbers<[1], [0], [0], [1], [0, 0, 1, 1], [], []>} : vector<8x16xf32>, vector<16x8xf32>, vector<8x8xf32> -> vector<8x8xf32>
    %309 = tpu.concatenate %257, %274, %291, %308 in 1 : vector<8x8xf32>, vector<8x8xf32>, vector<8x8xf32>, vector<8x8xf32> -> vector<8x32xf32>
    %cst_113 = arith.constant dense<0.000000e+00> : vector<8x32xf32>
    %310 = tpu.matmul %309, %238, %cst_113 {dimension_numbers = #tpu.dot_dimension_numbers<[1], [0], [0], [1], [0, 0, 1, 1], [], []>} : vector<8x32xf32>, vector<32x32xf32>, vector<8x32xf32> -> vector<8x32xf32>
    %311 = vector.broadcast %240 : vector<1x32xf32> to vector<8x32xf32>
    %312 = arith.addf %310, %311 : vector<8x32xf32>
    %313 = arith.addf %201, %312 : vector<8x32xf32>
    %314 = vector.extract_strided_slice %92 {offsets = [4, 0], sizes = [1, 32], strides = [1, 1]} : vector<6x32xf32> to vector<1x32xf32>
    %315 = vector.extract_strided_slice %92 {offsets = [5, 0], sizes = [1, 32], strides = [1, 1]} : vector<6x32xf32> to vector<1x32xf32>
    %cst_114 = arith.constant dense<0.000000e+00> : vector<8xf32>
    %316 = vector.multi_reduction <add>, %313, %cst_114 [1] : vector<8x32xf32> to vector<8xf32>
    %317 = vector.shape_cast %316 : vector<8xf32> to vector<8x1xf32>
    %cst_115 = arith.constant 3.200000e+01 : f32
    %318 = vector.broadcast %cst_115 : f32 to vector<8x1xf32>
    %319 = arith.divf %317, %318 : vector<8x1xf32>
    %320 = vector.broadcast %319 : vector<8x1xf32> to vector<8x32xf32>
    %321 = arith.subf %313, %320 : vector<8x32xf32>
    %322 = arith.mulf %321, %321 : vector<8x32xf32>
    %cst_116 = arith.constant dense<0.000000e+00> : vector<8xf32>
    %323 = vector.multi_reduction <add>, %322, %cst_116 [1] : vector<8x32xf32> to vector<8xf32>
    %324 = vector.shape_cast %323 : vector<8xf32> to vector<8x1xf32>
    %cst_117 = arith.constant 3.200000e+01 : f32
    %325 = vector.broadcast %cst_117 : f32 to vector<8x1xf32>
    %326 = arith.divf %324, %325 : vector<8x1xf32>
    %327 = vector.broadcast %319 : vector<8x1xf32> to vector<8x32xf32>
    %328 = arith.subf %313, %327 : vector<8x32xf32>
    %cst_118 = arith.constant 9.99999974E-6 : f32
    %329 = vector.broadcast %cst_118 : f32 to vector<8x1xf32>
    %330 = arith.addf %326, %329 : vector<8x1xf32>
    %331 = math.rsqrt %330 : vector<8x1xf32>
    %332 = vector.broadcast %331 : vector<8x1xf32> to vector<8x32xf32>
    %333 = arith.mulf %328, %332 : vector<8x32xf32>
    %334 = vector.broadcast %314 : vector<1x32xf32> to vector<8x32xf32>
    %335 = arith.mulf %333, %334 : vector<8x32xf32>
    %336 = vector.broadcast %315 : vector<1x32xf32> to vector<8x32xf32>
    %337 = arith.addf %335, %336 : vector<8x32xf32>
    %c0_119 = arith.constant 0 : index
    %c0_120 = arith.constant 0 : index
    %c0_121 = arith.constant 0 : index
    %338 = vector.load %arg18[%c0_119, %c0_120, %c0_121] : memref<2x32x128xbf16, #tpu.memory_space<vmem>>, vector<1x32x128xbf16>
    %339 = vector.shape_cast %338 : vector<1x32x128xbf16> to vector<32x128xbf16>
    %340 = arith.extf %339 : vector<32x128xbf16> to vector<32x128xf32>
    %cst_122 = arith.constant dense<0.000000e+00> : vector<8x128xf32>
    %341 = tpu.matmul %337, %340, %cst_122 {dimension_numbers = #tpu.dot_dimension_numbers<[1], [0], [0], [1], [0, 0, 1, 1], [], []>} : vector<8x32xf32>, vector<32x128xf32>, vector<8x128xf32> -> vector<8x128xf32>
    %c0_123 = arith.constant 0 : index
    %c0_124 = arith.constant 0 : index
    %c0_125 = arith.constant 0 : index
    %342 = vector.load %arg19[%c0_123, %c0_124, %c0_125] : memref<2x1x128xf32, #tpu.memory_space<vmem>>, vector<1x1x128xf32>
    %343 = vector.shape_cast %342 : vector<1x1x128xf32> to vector<1x128xf32>
    %344 = vector.broadcast %343 : vector<1x128xf32> to vector<8x128xf32>
    %345 = arith.addf %341, %344 : vector<8x128xf32>
    %cst_126 = arith.constant 5.000000e-01 : f32
    %346 = vector.broadcast %cst_126 : f32 to vector<8x128xf32>
    %347 = arith.mulf %346, %345 : vector<8x128xf32>
    %cst_127 = arith.constant 0.707106769 : f32
    %348 = vector.broadcast %cst_127 : f32 to vector<8x128xf32>
    %349 = arith.mulf %345, %348 : vector<8x128xf32>
    %350 = math.erf %349 : vector<8x128xf32>
    %cst_128 = arith.constant 1.000000e+00 : f32
    %351 = vector.broadcast %cst_128 : f32 to vector<8x128xf32>
    %352 = arith.addf %351, %350 : vector<8x128xf32>
    %353 = arith.mulf %347, %352 : vector<8x128xf32>
    %c0_129 = arith.constant 0 : index
    %c0_130 = arith.constant 0 : index
    %c0_131 = arith.constant 0 : index
    %354 = vector.load %arg20[%c0_129, %c0_130, %c0_131] : memref<2x128x32xbf16, #tpu.memory_space<vmem>>, vector<1x128x32xbf16>
    %355 = vector.shape_cast %354 : vector<1x128x32xbf16> to vector<128x32xbf16>
    %356 = arith.extf %355 : vector<128x32xbf16> to vector<128x32xf32>
    %cst_132 = arith.constant dense<0.000000e+00> : vector<8x32xf32>
    %357 = tpu.matmul %353, %356, %cst_132 {dimension_numbers = #tpu.dot_dimension_numbers<[1], [0], [0], [1], [0, 0, 1, 1], [], []>} : vector<8x128xf32>, vector<128x32xf32>, vector<8x32xf32> -> vector<8x32xf32>
    %358 = arith.addf %313, %357 : vector<8x32xf32>
    %c0_133 = arith.constant 0 : index
    %c0_134 = arith.constant 0 : index
    %c0_135 = arith.constant 0 : index
    %359 = vector.load %arg21[%c0_133, %c0_134, %c0_135] : memref<2x1x32xf32, #tpu.memory_space<vmem>>, vector<1x1x32xf32>
    %360 = vector.shape_cast %359 : vector<1x1x32xf32> to vector<1x32xf32>
    %361 = vector.broadcast %360 : vector<1x32xf32> to vector<8x32xf32>
    %362 = arith.addf %358, %361 : vector<8x32xf32>
    %c1 = arith.constant 1 : index
    %c0_136 = arith.constant 0 : index
    %c0_137 = arith.constant 0 : index
    %363 = vector.load %arg10[%c1, %c0_136, %c0_137] : memref<2x6x32xf32, #tpu.memory_space<vmem>>, vector<1x6x32xf32>
    %364 = vector.shape_cast %363 : vector<1x6x32xf32> to vector<6x32xf32>
    %365 = vector.extract_strided_slice %364 {offsets = [0, 0], sizes = [1, 32], strides = [1, 1]} : vector<6x32xf32> to vector<1x32xf32>
    %366 = vector.extract_strided_slice %364 {offsets = [1, 0], sizes = [1, 32], strides = [1, 1]} : vector<6x32xf32> to vector<1x32xf32>
    %cst_138 = arith.constant dense<0.000000e+00> : vector<8xf32>
    %367 = vector.multi_reduction <add>, %362, %cst_138 [1] : vector<8x32xf32> to vector<8xf32>
    %368 = vector.shape_cast %367 : vector<8xf32> to vector<8x1xf32>
    %cst_139 = arith.constant 3.200000e+01 : f32
    %369 = vector.broadcast %cst_139 : f32 to vector<8x1xf32>
    %370 = arith.divf %368, %369 : vector<8x1xf32>
    %371 = vector.broadcast %370 : vector<8x1xf32> to vector<8x32xf32>
    %372 = arith.subf %362, %371 : vector<8x32xf32>
    %373 = arith.mulf %372, %372 : vector<8x32xf32>
    %cst_140 = arith.constant dense<0.000000e+00> : vector<8xf32>
    %374 = vector.multi_reduction <add>, %373, %cst_140 [1] : vector<8x32xf32> to vector<8xf32>
    %375 = vector.shape_cast %374 : vector<8xf32> to vector<8x1xf32>
    %cst_141 = arith.constant 3.200000e+01 : f32
    %376 = vector.broadcast %cst_141 : f32 to vector<8x1xf32>
    %377 = arith.divf %375, %376 : vector<8x1xf32>
    %378 = vector.broadcast %370 : vector<8x1xf32> to vector<8x32xf32>
    %379 = arith.subf %362, %378 : vector<8x32xf32>
    %cst_142 = arith.constant 9.99999974E-6 : f32
    %380 = vector.broadcast %cst_142 : f32 to vector<8x1xf32>
    %381 = arith.addf %377, %380 : vector<8x1xf32>
    %382 = math.rsqrt %381 : vector<8x1xf32>
    %383 = vector.broadcast %382 : vector<8x1xf32> to vector<8x32xf32>
    %384 = arith.mulf %379, %383 : vector<8x32xf32>
    %385 = vector.broadcast %365 : vector<1x32xf32> to vector<8x32xf32>
    %386 = arith.mulf %384, %385 : vector<8x32xf32>
    %387 = vector.broadcast %366 : vector<1x32xf32> to vector<8x32xf32>
    %388 = arith.addf %386, %387 : vector<8x32xf32>
    %c1_143 = arith.constant 1 : index
    %c0_144 = arith.constant 0 : index
    %c0_145 = arith.constant 0 : index
    %389 = vector.load %arg11[%c1_143, %c0_144, %c0_145] : memref<2x32x96xbf16, #tpu.memory_space<vmem>>, vector<1x32x96xbf16>
    %390 = vector.shape_cast %389 : vector<1x32x96xbf16> to vector<32x96xbf16>
    %391 = arith.extf %390 : vector<32x96xbf16> to vector<32x96xf32>
    %cst_146 = arith.constant dense<0.000000e+00> : vector<8x96xf32>
    %392 = tpu.matmul %388, %391, %cst_146 {dimension_numbers = #tpu.dot_dimension_numbers<[1], [0], [0], [1], [0, 0, 1, 1], [], []>} : vector<8x32xf32>, vector<32x96xf32>, vector<8x96xf32> -> vector<8x96xf32>
    %393 = vector.extract_strided_slice %392 {offsets = [0, 0], sizes = [8, 32], strides = [1, 1]} : vector<8x96xf32> to vector<8x32xf32>
    %394 = vector.extract_strided_slice %392 {offsets = [0, 32], sizes = [8, 32], strides = [1, 1]} : vector<8x96xf32> to vector<8x32xf32>
    %395 = vector.extract_strided_slice %392 {offsets = [0, 64], sizes = [8, 32], strides = [1, 1]} : vector<8x96xf32> to vector<8x32xf32>
    %c1_147 = arith.constant 1 : index
    %c0_148 = arith.constant 0 : index
    %c0_149 = arith.constant 0 : index
    %396 = vector.load %arg12[%c1_147, %c0_148, %c0_149] : memref<2x32x32xbf16, #tpu.memory_space<vmem>>, vector<1x32x32xbf16>
    %397 = vector.shape_cast %396 : vector<1x32x32xbf16> to vector<32x32xbf16>
    %398 = arith.extf %397 : vector<32x32xbf16> to vector<32x32xf32>
    %c1_150 = arith.constant 1 : index
    %c0_151 = arith.constant 0 : index
    %c0_152 = arith.constant 0 : index
    %399 = vector.load %arg13[%c1_150, %c0_151, %c0_152] : memref<2x1x32xf32, #tpu.memory_space<vmem>>, vector<1x1x32xf32>
    %400 = vector.shape_cast %399 : vector<1x1x32xf32> to vector<1x32xf32>
    %401 = vector.extract_strided_slice %393 {offsets = [0, 0], sizes = [8, 8], strides = [1, 1]} : vector<8x32xf32> to vector<8x8xf32>
    %402 = vector.extract_strided_slice %394 {offsets = [0, 0], sizes = [8, 8], strides = [1, 1]} : vector<8x32xf32> to vector<8x8xf32>
    %403 = vector.extract_strided_slice %395 {offsets = [0, 0], sizes = [8, 8], strides = [1, 1]} : vector<8x32xf32> to vector<8x8xf32>
    %cst_153 = arith.constant dense<0.000000e+00> : vector<8x8xf32>
    %404 = tpu.matmul %401, %402, %cst_153 {dimension_numbers = #tpu.dot_dimension_numbers<[1], [1], [0], [0], [0, 0, 1, 0], [], []>} : vector<8x8xf32>, vector<8x8xf32>, vector<8x8xf32> -> vector<8x8xf32>
    %cst_154 = arith.constant 0.353553385 : f32
    %405 = vector.broadcast %cst_154 : f32 to vector<8x8xf32>
    %406 = arith.mulf %404, %405 : vector<8x8xf32>
    %cst_155 = arith.constant dense<0xFF800000> : vector<8xf32>
    %407 = vector.multi_reduction <maximumf>, %406, %cst_155 [1] : vector<8x8xf32> to vector<8xf32>
    %408 = vector.shape_cast %407 : vector<8xf32> to vector<8x1xf32>
    %409 = vector.broadcast %408 : vector<8x1xf32> to vector<8x8xf32>
    %410 = arith.subf %406, %409 : vector<8x8xf32>
    %411 = math.exp %410 : vector<8x8xf32>
    %cst_156 = arith.constant dense<0.000000e+00> : vector<8xf32>
    %412 = vector.multi_reduction <add>, %411, %cst_156 [1] : vector<8x8xf32> to vector<8xf32>
    %413 = vector.shape_cast %412 : vector<8xf32> to vector<8x1xf32>
    %414 = tpu.reciprocal %413 {approx = true} : vector<8x1xf32> -> vector<8x1xf32>
    %415 = vector.broadcast %414 : vector<8x1xf32> to vector<8x8xf32>
    %416 = arith.mulf %411, %415 : vector<8x8xf32>
    %cst_157 = arith.constant dense<0.000000e+00> : vector<8x8xf32>
    %417 = tpu.matmul %416, %403, %cst_157 {dimension_numbers = #tpu.dot_dimension_numbers<[1], [0], [0], [1], [0, 0, 1, 1], [], []>} : vector<8x8xf32>, vector<8x8xf32>, vector<8x8xf32> -> vector<8x8xf32>
    %418 = vector.extract_strided_slice %393 {offsets = [0, 8], sizes = [8, 8], strides = [1, 1]} : vector<8x32xf32> to vector<8x8xf32>
    %419 = vector.extract_strided_slice %394 {offsets = [0, 8], sizes = [8, 8], strides = [1, 1]} : vector<8x32xf32> to vector<8x8xf32>
    %420 = vector.extract_strided_slice %395 {offsets = [0, 8], sizes = [8, 8], strides = [1, 1]} : vector<8x32xf32> to vector<8x8xf32>
    %cst_158 = arith.constant dense<0.000000e+00> : vector<8x8xf32>
    %421 = tpu.matmul %418, %419, %cst_158 {dimension_numbers = #tpu.dot_dimension_numbers<[1], [1], [0], [0], [0, 0, 1, 0], [], []>} : vector<8x8xf32>, vector<8x8xf32>, vector<8x8xf32> -> vector<8x8xf32>
    %cst_159 = arith.constant 0.353553385 : f32
    %422 = vector.broadcast %cst_159 : f32 to vector<8x8xf32>
    %423 = arith.mulf %421, %422 : vector<8x8xf32>
    %cst_160 = arith.constant dense<0xFF800000> : vector<8xf32>
    %424 = vector.multi_reduction <maximumf>, %423, %cst_160 [1] : vector<8x8xf32> to vector<8xf32>
    %425 = vector.shape_cast %424 : vector<8xf32> to vector<8x1xf32>
    %426 = vector.broadcast %425 : vector<8x1xf32> to vector<8x8xf32>
    %427 = arith.subf %423, %426 : vector<8x8xf32>
    %428 = math.exp %427 : vector<8x8xf32>
    %cst_161 = arith.constant dense<0.000000e+00> : vector<8xf32>
    %429 = vector.multi_reduction <add>, %428, %cst_161 [1] : vector<8x8xf32> to vector<8xf32>
    %430 = vector.shape_cast %429 : vector<8xf32> to vector<8x1xf32>
    %431 = tpu.reciprocal %430 {approx = true} : vector<8x1xf32> -> vector<8x1xf32>
    %432 = vector.broadcast %431 : vector<8x1xf32> to vector<8x8xf32>
    %433 = arith.mulf %428, %432 : vector<8x8xf32>
    %cst_162 = arith.constant dense<0.000000e+00> : vector<8x8xf32>
    %434 = tpu.matmul %433, %420, %cst_162 {dimension_numbers = #tpu.dot_dimension_numbers<[1], [0], [0], [1], [0, 0, 1, 1], [], []>} : vector<8x8xf32>, vector<8x8xf32>, vector<8x8xf32> -> vector<8x8xf32>
    %435 = vector.extract_strided_slice %393 {offsets = [0, 16], sizes = [8, 8], strides = [1, 1]} : vector<8x32xf32> to vector<8x8xf32>
    %436 = vector.extract_strided_slice %394 {offsets = [0, 16], sizes = [8, 8], strides = [1, 1]} : vector<8x32xf32> to vector<8x8xf32>
    %437 = vector.extract_strided_slice %395 {offsets = [0, 16], sizes = [8, 8], strides = [1, 1]} : vector<8x32xf32> to vector<8x8xf32>
    %cst_163 = arith.constant dense<0.000000e+00> : vector<8x8xf32>
    %438 = tpu.matmul %435, %436, %cst_163 {dimension_numbers = #tpu.dot_dimension_numbers<[1], [1], [0], [0], [0, 0, 1, 0], [], []>} : vector<8x8xf32>, vector<8x8xf32>, vector<8x8xf32> -> vector<8x8xf32>
    %cst_164 = arith.constant 0.353553385 : f32
    %439 = vector.broadcast %cst_164 : f32 to vector<8x8xf32>
    %440 = arith.mulf %438, %439 : vector<8x8xf32>
    %cst_165 = arith.constant dense<0xFF800000> : vector<8xf32>
    %441 = vector.multi_reduction <maximumf>, %440, %cst_165 [1] : vector<8x8xf32> to vector<8xf32>
    %442 = vector.shape_cast %441 : vector<8xf32> to vector<8x1xf32>
    %443 = vector.broadcast %442 : vector<8x1xf32> to vector<8x8xf32>
    %444 = arith.subf %440, %443 : vector<8x8xf32>
    %445 = math.exp %444 : vector<8x8xf32>
    %cst_166 = arith.constant dense<0.000000e+00> : vector<8xf32>
    %446 = vector.multi_reduction <add>, %445, %cst_166 [1] : vector<8x8xf32> to vector<8xf32>
    %447 = vector.shape_cast %446 : vector<8xf32> to vector<8x1xf32>
    %448 = tpu.reciprocal %447 {approx = true} : vector<8x1xf32> -> vector<8x1xf32>
    %449 = vector.broadcast %448 : vector<8x1xf32> to vector<8x8xf32>
    %450 = arith.mulf %445, %449 : vector<8x8xf32>
    %cst_167 = arith.constant dense<0.000000e+00> : vector<8x8xf32>
    %451 = tpu.matmul %450, %437, %cst_167 {dimension_numbers = #tpu.dot_dimension_numbers<[1], [0], [0], [1], [0, 0, 1, 1], [], []>} : vector<8x8xf32>, vector<8x8xf32>, vector<8x8xf32> -> vector<8x8xf32>
    %452 = vector.extract_strided_slice %393 {offsets = [0, 24], sizes = [8, 8], strides = [1, 1]} : vector<8x32xf32> to vector<8x8xf32>
    %453 = vector.extract_strided_slice %394 {offsets = [0, 24], sizes = [8, 8], strides = [1, 1]} : vector<8x32xf32> to vector<8x8xf32>
    %454 = vector.extract_strided_slice %395 {offsets = [0, 24], sizes = [8, 8], strides = [1, 1]} : vector<8x32xf32> to vector<8x8xf32>
    %cst_168 = arith.constant dense<0.000000e+00> : vector<8x8xf32>
    %455 = tpu.matmul %452, %453, %cst_168 {dimension_numbers = #tpu.dot_dimension_numbers<[1], [1], [0], [0], [0, 0, 1, 0], [], []>} : vector<8x8xf32>, vector<8x8xf32>, vector<8x8xf32> -> vector<8x8xf32>
    %cst_169 = arith.constant 0.353553385 : f32
    %456 = vector.broadcast %cst_169 : f32 to vector<8x8xf32>
    %457 = arith.mulf %455, %456 : vector<8x8xf32>
    %cst_170 = arith.constant dense<0xFF800000> : vector<8xf32>
    %458 = vector.multi_reduction <maximumf>, %457, %cst_170 [1] : vector<8x8xf32> to vector<8xf32>
    %459 = vector.shape_cast %458 : vector<8xf32> to vector<8x1xf32>
    %460 = vector.broadcast %459 : vector<8x1xf32> to vector<8x8xf32>
    %461 = arith.subf %457, %460 : vector<8x8xf32>
    %462 = math.exp %461 : vector<8x8xf32>
    %cst_171 = arith.constant dense<0.000000e+00> : vector<8xf32>
    %463 = vector.multi_reduction <add>, %462, %cst_171 [1] : vector<8x8xf32> to vector<8xf32>
    %464 = vector.shape_cast %463 : vector<8xf32> to vector<8x1xf32>
    %465 = tpu.reciprocal %464 {approx = true} : vector<8x1xf32> -> vector<8x1xf32>
    %466 = vector.broadcast %465 : vector<8x1xf32> to vector<8x8xf32>
    %467 = arith.mulf %462, %466 : vector<8x8xf32>
    %cst_172 = arith.constant dense<0.000000e+00> : vector<8x8xf32>
    %468 = tpu.matmul %467, %454, %cst_172 {dimension_numbers = #tpu.dot_dimension_numbers<[1], [0], [0], [1], [0, 0, 1, 1], [], []>} : vector<8x8xf32>, vector<8x8xf32>, vector<8x8xf32> -> vector<8x8xf32>
    %469 = tpu.concatenate %417, %434, %451, %468 in 1 : vector<8x8xf32>, vector<8x8xf32>, vector<8x8xf32>, vector<8x8xf32> -> vector<8x32xf32>
    %cst_173 = arith.constant dense<0.000000e+00> : vector<8x32xf32>
    %470 = tpu.matmul %469, %398, %cst_173 {dimension_numbers = #tpu.dot_dimension_numbers<[1], [0], [0], [1], [0, 0, 1, 1], [], []>} : vector<8x32xf32>, vector<32x32xf32>, vector<8x32xf32> -> vector<8x32xf32>
    %471 = vector.broadcast %400 : vector<1x32xf32> to vector<8x32xf32>
    %472 = arith.addf %470, %471 : vector<8x32xf32>
    %473 = arith.addf %362, %472 : vector<8x32xf32>
    %474 = vector.extract_strided_slice %364 {offsets = [2, 0], sizes = [1, 32], strides = [1, 1]} : vector<6x32xf32> to vector<1x32xf32>
    %475 = vector.extract_strided_slice %364 {offsets = [3, 0], sizes = [1, 32], strides = [1, 1]} : vector<6x32xf32> to vector<1x32xf32>
    %cst_174 = arith.constant dense<0.000000e+00> : vector<8xf32>
    %476 = vector.multi_reduction <add>, %473, %cst_174 [1] : vector<8x32xf32> to vector<8xf32>
    %477 = vector.shape_cast %476 : vector<8xf32> to vector<8x1xf32>
    %cst_175 = arith.constant 3.200000e+01 : f32
    %478 = vector.broadcast %cst_175 : f32 to vector<8x1xf32>
    %479 = arith.divf %477, %478 : vector<8x1xf32>
    %480 = vector.broadcast %479 : vector<8x1xf32> to vector<8x32xf32>
    %481 = arith.subf %473, %480 : vector<8x32xf32>
    %482 = arith.mulf %481, %481 : vector<8x32xf32>
    %cst_176 = arith.constant dense<0.000000e+00> : vector<8xf32>
    %483 = vector.multi_reduction <add>, %482, %cst_176 [1] : vector<8x32xf32> to vector<8xf32>
    %484 = vector.shape_cast %483 : vector<8xf32> to vector<8x1xf32>
    %cst_177 = arith.constant 3.200000e+01 : f32
    %485 = vector.broadcast %cst_177 : f32 to vector<8x1xf32>
    %486 = arith.divf %484, %485 : vector<8x1xf32>
    %487 = vector.broadcast %479 : vector<8x1xf32> to vector<8x32xf32>
    %488 = arith.subf %473, %487 : vector<8x32xf32>
    %cst_178 = arith.constant 9.99999974E-6 : f32
    %489 = vector.broadcast %cst_178 : f32 to vector<8x1xf32>
    %490 = arith.addf %486, %489 : vector<8x1xf32>
    %491 = math.rsqrt %490 : vector<8x1xf32>
    %492 = vector.broadcast %491 : vector<8x1xf32> to vector<8x32xf32>
    %493 = arith.mulf %488, %492 : vector<8x32xf32>
    %494 = vector.broadcast %474 : vector<1x32xf32> to vector<8x32xf32>
    %495 = arith.mulf %493, %494 : vector<8x32xf32>
    %496 = vector.broadcast %475 : vector<1x32xf32> to vector<8x32xf32>
    %497 = arith.addf %495, %496 : vector<8x32xf32>
    %c1_179 = arith.constant 1 : index
    %c0_180 = arith.constant 0 : index
    %c0_181 = arith.constant 0 : index
    %498 = vector.load %arg14[%c1_179, %c0_180, %c0_181] : memref<2x32x32xbf16, #tpu.memory_space<vmem>>, vector<1x32x32xbf16>
    %499 = vector.shape_cast %498 : vector<1x32x32xbf16> to vector<32x32xbf16>
    %500 = arith.extf %499 : vector<32x32xbf16> to vector<32x32xf32>
    %cst_182 = arith.constant dense<0.000000e+00> : vector<8x32xf32>
    %501 = tpu.matmul %497, %500, %cst_182 {dimension_numbers = #tpu.dot_dimension_numbers<[1], [0], [0], [1], [0, 0, 1, 1], [], []>} : vector<8x32xf32>, vector<32x32xf32>, vector<8x32xf32> -> vector<8x32xf32>
    %c1_183 = arith.constant 1 : index
    %c0_184 = arith.constant 0 : index
    %c0_185 = arith.constant 0 : index
    %502 = vector.load %arg15[%c1_183, %c0_184, %c0_185] : memref<2x32x64xbf16, #tpu.memory_space<vmem>>, vector<1x32x64xbf16>
    %503 = vector.shape_cast %502 : vector<1x32x64xbf16> to vector<32x64xbf16>
    %504 = arith.extf %503 : vector<32x64xbf16> to vector<32x64xf32>
    %cst_186 = arith.constant dense<0.000000e+00> : vector<16x64xf32>
    %505 = tpu.matmul %59, %504, %cst_186 {dimension_numbers = #tpu.dot_dimension_numbers<[1], [0], [0], [1], [0, 0, 1, 1], [], []>} : vector<16x32xf32>, vector<32x64xf32>, vector<16x64xf32> -> vector<16x64xf32>
    %506 = vector.extract_strided_slice %505 {offsets = [0, 0], sizes = [16, 32], strides = [1, 1]} : vector<16x64xf32> to vector<16x32xf32>
    %507 = vector.extract_strided_slice %505 {offsets = [0, 32], sizes = [16, 32], strides = [1, 1]} : vector<16x64xf32> to vector<16x32xf32>
    %c1_187 = arith.constant 1 : index
    %c0_188 = arith.constant 0 : index
    %c0_189 = arith.constant 0 : index
    %508 = vector.load %arg16[%c1_187, %c0_188, %c0_189] : memref<2x32x32xbf16, #tpu.memory_space<vmem>>, vector<1x32x32xbf16>
    %509 = vector.shape_cast %508 : vector<1x32x32xbf16> to vector<32x32xbf16>
    %510 = arith.extf %509 : vector<32x32xbf16> to vector<32x32xf32>
    %c1_190 = arith.constant 1 : index
    %c0_191 = arith.constant 0 : index
    %c0_192 = arith.constant 0 : index
    %511 = vector.load %arg17[%c1_190, %c0_191, %c0_192] : memref<2x1x32xf32, #tpu.memory_space<vmem>>, vector<1x1x32xf32>
    %512 = vector.shape_cast %511 : vector<1x1x32xf32> to vector<1x32xf32>
    %513 = vector.extract_strided_slice %501 {offsets = [0, 0], sizes = [8, 8], strides = [1, 1]} : vector<8x32xf32> to vector<8x8xf32>
    %514 = vector.extract_strided_slice %506 {offsets = [0, 0], sizes = [16, 8], strides = [1, 1]} : vector<16x32xf32> to vector<16x8xf32>
    %515 = vector.extract_strided_slice %507 {offsets = [0, 0], sizes = [16, 8], strides = [1, 1]} : vector<16x32xf32> to vector<16x8xf32>
    %cst_193 = arith.constant dense<0.000000e+00> : vector<8x16xf32>
    %516 = tpu.matmul %513, %514, %cst_193 {dimension_numbers = #tpu.dot_dimension_numbers<[1], [1], [0], [0], [0, 0, 1, 0], [], []>} : vector<8x8xf32>, vector<16x8xf32>, vector<8x16xf32> -> vector<8x16xf32>
    %cst_194 = arith.constant 0.353553385 : f32
    %517 = vector.broadcast %cst_194 : f32 to vector<8x16xf32>
    %518 = arith.mulf %516, %517 : vector<8x16xf32>
    %cst_195 = arith.constant dense<0xFF800000> : vector<8xf32>
    %519 = vector.multi_reduction <maximumf>, %518, %cst_195 [1] : vector<8x16xf32> to vector<8xf32>
    %520 = vector.shape_cast %519 : vector<8xf32> to vector<8x1xf32>
    %521 = vector.broadcast %520 : vector<8x1xf32> to vector<8x16xf32>
    %522 = arith.subf %518, %521 : vector<8x16xf32>
    %523 = math.exp %522 : vector<8x16xf32>
    %cst_196 = arith.constant dense<0.000000e+00> : vector<8xf32>
    %524 = vector.multi_reduction <add>, %523, %cst_196 [1] : vector<8x16xf32> to vector<8xf32>
    %525 = vector.shape_cast %524 : vector<8xf32> to vector<8x1xf32>
    %526 = tpu.reciprocal %525 {approx = true} : vector<8x1xf32> -> vector<8x1xf32>
    %527 = vector.broadcast %526 : vector<8x1xf32> to vector<8x16xf32>
    %528 = arith.mulf %523, %527 : vector<8x16xf32>
    %cst_197 = arith.constant dense<0.000000e+00> : vector<8x8xf32>
    %529 = tpu.matmul %528, %515, %cst_197 {dimension_numbers = #tpu.dot_dimension_numbers<[1], [0], [0], [1], [0, 0, 1, 1], [], []>} : vector<8x16xf32>, vector<16x8xf32>, vector<8x8xf32> -> vector<8x8xf32>
    %530 = vector.extract_strided_slice %501 {offsets = [0, 8], sizes = [8, 8], strides = [1, 1]} : vector<8x32xf32> to vector<8x8xf32>
    %531 = vector.extract_strided_slice %506 {offsets = [0, 8], sizes = [16, 8], strides = [1, 1]} : vector<16x32xf32> to vector<16x8xf32>
    %532 = vector.extract_strided_slice %507 {offsets = [0, 8], sizes = [16, 8], strides = [1, 1]} : vector<16x32xf32> to vector<16x8xf32>
    %cst_198 = arith.constant dense<0.000000e+00> : vector<8x16xf32>
    %533 = tpu.matmul %530, %531, %cst_198 {dimension_numbers = #tpu.dot_dimension_numbers<[1], [1], [0], [0], [0, 0, 1, 0], [], []>} : vector<8x8xf32>, vector<16x8xf32>, vector<8x16xf32> -> vector<8x16xf32>
    %cst_199 = arith.constant 0.353553385 : f32
    %534 = vector.broadcast %cst_199 : f32 to vector<8x16xf32>
    %535 = arith.mulf %533, %534 : vector<8x16xf32>
    %cst_200 = arith.constant dense<0xFF800000> : vector<8xf32>
    %536 = vector.multi_reduction <maximumf>, %535, %cst_200 [1] : vector<8x16xf32> to vector<8xf32>
    %537 = vector.shape_cast %536 : vector<8xf32> to vector<8x1xf32>
    %538 = vector.broadcast %537 : vector<8x1xf32> to vector<8x16xf32>
    %539 = arith.subf %535, %538 : vector<8x16xf32>
    %540 = math.exp %539 : vector<8x16xf32>
    %cst_201 = arith.constant dense<0.000000e+00> : vector<8xf32>
    %541 = vector.multi_reduction <add>, %540, %cst_201 [1] : vector<8x16xf32> to vector<8xf32>
    %542 = vector.shape_cast %541 : vector<8xf32> to vector<8x1xf32>
    %543 = tpu.reciprocal %542 {approx = true} : vector<8x1xf32> -> vector<8x1xf32>
    %544 = vector.broadcast %543 : vector<8x1xf32> to vector<8x16xf32>
    %545 = arith.mulf %540, %544 : vector<8x16xf32>
    %cst_202 = arith.constant dense<0.000000e+00> : vector<8x8xf32>
    %546 = tpu.matmul %545, %532, %cst_202 {dimension_numbers = #tpu.dot_dimension_numbers<[1], [0], [0], [1], [0, 0, 1, 1], [], []>} : vector<8x16xf32>, vector<16x8xf32>, vector<8x8xf32> -> vector<8x8xf32>
    %547 = vector.extract_strided_slice %501 {offsets = [0, 16], sizes = [8, 8], strides = [1, 1]} : vector<8x32xf32> to vector<8x8xf32>
    %548 = vector.extract_strided_slice %506 {offsets = [0, 16], sizes = [16, 8], strides = [1, 1]} : vector<16x32xf32> to vector<16x8xf32>
    %549 = vector.extract_strided_slice %507 {offsets = [0, 16], sizes = [16, 8], strides = [1, 1]} : vector<16x32xf32> to vector<16x8xf32>
    %cst_203 = arith.constant dense<0.000000e+00> : vector<8x16xf32>
    %550 = tpu.matmul %547, %548, %cst_203 {dimension_numbers = #tpu.dot_dimension_numbers<[1], [1], [0], [0], [0, 0, 1, 0], [], []>} : vector<8x8xf32>, vector<16x8xf32>, vector<8x16xf32> -> vector<8x16xf32>
    %cst_204 = arith.constant 0.353553385 : f32
    %551 = vector.broadcast %cst_204 : f32 to vector<8x16xf32>
    %552 = arith.mulf %550, %551 : vector<8x16xf32>
    %cst_205 = arith.constant dense<0xFF800000> : vector<8xf32>
    %553 = vector.multi_reduction <maximumf>, %552, %cst_205 [1] : vector<8x16xf32> to vector<8xf32>
    %554 = vector.shape_cast %553 : vector<8xf32> to vector<8x1xf32>
    %555 = vector.broadcast %554 : vector<8x1xf32> to vector<8x16xf32>
    %556 = arith.subf %552, %555 : vector<8x16xf32>
    %557 = math.exp %556 : vector<8x16xf32>
    %cst_206 = arith.constant dense<0.000000e+00> : vector<8xf32>
    %558 = vector.multi_reduction <add>, %557, %cst_206 [1] : vector<8x16xf32> to vector<8xf32>
    %559 = vector.shape_cast %558 : vector<8xf32> to vector<8x1xf32>
    %560 = tpu.reciprocal %559 {approx = true} : vector<8x1xf32> -> vector<8x1xf32>
    %561 = vector.broadcast %560 : vector<8x1xf32> to vector<8x16xf32>
    %562 = arith.mulf %557, %561 : vector<8x16xf32>
    %cst_207 = arith.constant dense<0.000000e+00> : vector<8x8xf32>
    %563 = tpu.matmul %562, %549, %cst_207 {dimension_numbers = #tpu.dot_dimension_numbers<[1], [0], [0], [1], [0, 0, 1, 1], [], []>} : vector<8x16xf32>, vector<16x8xf32>, vector<8x8xf32> -> vector<8x8xf32>
    %564 = vector.extract_strided_slice %501 {offsets = [0, 24], sizes = [8, 8], strides = [1, 1]} : vector<8x32xf32> to vector<8x8xf32>
    %565 = vector.extract_strided_slice %506 {offsets = [0, 24], sizes = [16, 8], strides = [1, 1]} : vector<16x32xf32> to vector<16x8xf32>
    %566 = vector.extract_strided_slice %507 {offsets = [0, 24], sizes = [16, 8], strides = [1, 1]} : vector<16x32xf32> to vector<16x8xf32>
    %cst_208 = arith.constant dense<0.000000e+00> : vector<8x16xf32>
    %567 = tpu.matmul %564, %565, %cst_208 {dimension_numbers = #tpu.dot_dimension_numbers<[1], [1], [0], [0], [0, 0, 1, 0], [], []>} : vector<8x8xf32>, vector<16x8xf32>, vector<8x16xf32> -> vector<8x16xf32>
    %cst_209 = arith.constant 0.353553385 : f32
    %568 = vector.broadcast %cst_209 : f32 to vector<8x16xf32>
    %569 = arith.mulf %567, %568 : vector<8x16xf32>
    %cst_210 = arith.constant dense<0xFF800000> : vector<8xf32>
    %570 = vector.multi_reduction <maximumf>, %569, %cst_210 [1] : vector<8x16xf32> to vector<8xf32>
    %571 = vector.shape_cast %570 : vector<8xf32> to vector<8x1xf32>
    %572 = vector.broadcast %571 : vector<8x1xf32> to vector<8x16xf32>
    %573 = arith.subf %569, %572 : vector<8x16xf32>
    %574 = math.exp %573 : vector<8x16xf32>
    %cst_211 = arith.constant dense<0.000000e+00> : vector<8xf32>
    %575 = vector.multi_reduction <add>, %574, %cst_211 [1] : vector<8x16xf32> to vector<8xf32>
    %576 = vector.shape_cast %575 : vector<8xf32> to vector<8x1xf32>
    %577 = tpu.reciprocal %576 {approx = true} : vector<8x1xf32> -> vector<8x1xf32>
    %578 = vector.broadcast %577 : vector<8x1xf32> to vector<8x16xf32>
    %579 = arith.mulf %574, %578 : vector<8x16xf32>
    %cst_212 = arith.constant dense<0.000000e+00> : vector<8x8xf32>
    %580 = tpu.matmul %579, %566, %cst_212 {dimension_numbers = #tpu.dot_dimension_numbers<[1], [0], [0], [1], [0, 0, 1, 1], [], []>} : vector<8x16xf32>, vector<16x8xf32>, vector<8x8xf32> -> vector<8x8xf32>
    %581 = tpu.concatenate %529, %546, %563, %580 in 1 : vector<8x8xf32>, vector<8x8xf32>, vector<8x8xf32>, vector<8x8xf32> -> vector<8x32xf32>
    %cst_213 = arith.constant dense<0.000000e+00> : vector<8x32xf32>
    %582 = tpu.matmul %581, %510, %cst_213 {dimension_numbers = #tpu.dot_dimension_numbers<[1], [0], [0], [1], [0, 0, 1, 1], [], []>} : vector<8x32xf32>, vector<32x32xf32>, vector<8x32xf32> -> vector<8x32xf32>
    %583 = vector.broadcast %512 : vector<1x32xf32> to vector<8x32xf32>
    %584 = arith.addf %582, %583 : vector<8x32xf32>
    %585 = arith.addf %473, %584 : vector<8x32xf32>
    %586 = vector.extract_strided_slice %364 {offsets = [4, 0], sizes = [1, 32], strides = [1, 1]} : vector<6x32xf32> to vector<1x32xf32>
    %587 = vector.extract_strided_slice %364 {offsets = [5, 0], sizes = [1, 32], strides = [1, 1]} : vector<6x32xf32> to vector<1x32xf32>
    %cst_214 = arith.constant dense<0.000000e+00> : vector<8xf32>
    %588 = vector.multi_reduction <add>, %585, %cst_214 [1] : vector<8x32xf32> to vector<8xf32>
    %589 = vector.shape_cast %588 : vector<8xf32> to vector<8x1xf32>
    %cst_215 = arith.constant 3.200000e+01 : f32
    %590 = vector.broadcast %cst_215 : f32 to vector<8x1xf32>
    %591 = arith.divf %589, %590 : vector<8x1xf32>
    %592 = vector.broadcast %591 : vector<8x1xf32> to vector<8x32xf32>
    %593 = arith.subf %585, %592 : vector<8x32xf32>
    %594 = arith.mulf %593, %593 : vector<8x32xf32>
    %cst_216 = arith.constant dense<0.000000e+00> : vector<8xf32>
    %595 = vector.multi_reduction <add>, %594, %cst_216 [1] : vector<8x32xf32> to vector<8xf32>
    %596 = vector.shape_cast %595 : vector<8xf32> to vector<8x1xf32>
    %cst_217 = arith.constant 3.200000e+01 : f32
    %597 = vector.broadcast %cst_217 : f32 to vector<8x1xf32>
    %598 = arith.divf %596, %597 : vector<8x1xf32>
    %599 = vector.broadcast %591 : vector<8x1xf32> to vector<8x32xf32>
    %600 = arith.subf %585, %599 : vector<8x32xf32>
    %cst_218 = arith.constant 9.99999974E-6 : f32
    %601 = vector.broadcast %cst_218 : f32 to vector<8x1xf32>
    %602 = arith.addf %598, %601 : vector<8x1xf32>
    %603 = math.rsqrt %602 : vector<8x1xf32>
    %604 = vector.broadcast %603 : vector<8x1xf32> to vector<8x32xf32>
    %605 = arith.mulf %600, %604 : vector<8x32xf32>
    %606 = vector.broadcast %586 : vector<1x32xf32> to vector<8x32xf32>
    %607 = arith.mulf %605, %606 : vector<8x32xf32>
    %608 = vector.broadcast %587 : vector<1x32xf32> to vector<8x32xf32>
    %609 = arith.addf %607, %608 : vector<8x32xf32>
    %c1_219 = arith.constant 1 : index
    %c0_220 = arith.constant 0 : index
    %c0_221 = arith.constant 0 : index
    %610 = vector.load %arg18[%c1_219, %c0_220, %c0_221] : memref<2x32x128xbf16, #tpu.memory_space<vmem>>, vector<1x32x128xbf16>
    %611 = vector.shape_cast %610 : vector<1x32x128xbf16> to vector<32x128xbf16>
    %612 = arith.extf %611 : vector<32x128xbf16> to vector<32x128xf32>
    %cst_222 = arith.constant dense<0.000000e+00> : vector<8x128xf32>
    %613 = tpu.matmul %609, %612, %cst_222 {dimension_numbers = #tpu.dot_dimension_numbers<[1], [0], [0], [1], [0, 0, 1, 1], [], []>} : vector<8x32xf32>, vector<32x128xf32>, vector<8x128xf32> -> vector<8x128xf32>
    %c1_223 = arith.constant 1 : index
    %c0_224 = arith.constant 0 : index
    %c0_225 = arith.constant 0 : index
    %614 = vector.load %arg19[%c1_223, %c0_224, %c0_225] : memref<2x1x128xf32, #tpu.memory_space<vmem>>, vector<1x1x128xf32>
    %615 = vector.shape_cast %614 : vector<1x1x128xf32> to vector<1x128xf32>
    %616 = vector.broadcast %615 : vector<1x128xf32> to vector<8x128xf32>
    %617 = arith.addf %613, %616 : vector<8x128xf32>
    %cst_226 = arith.constant 5.000000e-01 : f32
    %618 = vector.broadcast %cst_226 : f32 to vector<8x128xf32>
    %619 = arith.mulf %618, %617 : vector<8x128xf32>
    %cst_227 = arith.constant 0.707106769 : f32
    %620 = vector.broadcast %cst_227 : f32 to vector<8x128xf32>
    %621 = arith.mulf %617, %620 : vector<8x128xf32>
    %622 = math.erf %621 : vector<8x128xf32>
    %cst_228 = arith.constant 1.000000e+00 : f32
    %623 = vector.broadcast %cst_228 : f32 to vector<8x128xf32>
    %624 = arith.addf %623, %622 : vector<8x128xf32>
    %625 = arith.mulf %619, %624 : vector<8x128xf32>
    %c1_229 = arith.constant 1 : index
    %c0_230 = arith.constant 0 : index
    %c0_231 = arith.constant 0 : index
    %626 = vector.load %arg20[%c1_229, %c0_230, %c0_231] : memref<2x128x32xbf16, #tpu.memory_space<vmem>>, vector<1x128x32xbf16>
    %627 = vector.shape_cast %626 : vector<1x128x32xbf16> to vector<128x32xbf16>
    %628 = arith.extf %627 : vector<128x32xbf16> to vector<128x32xf32>
    %cst_232 = arith.constant dense<0.000000e+00> : vector<8x32xf32>
    %629 = tpu.matmul %625, %628, %cst_232 {dimension_numbers = #tpu.dot_dimension_numbers<[1], [0], [0], [1], [0, 0, 1, 1], [], []>} : vector<8x128xf32>, vector<128x32xf32>, vector<8x32xf32> -> vector<8x32xf32>
    %630 = arith.addf %585, %629 : vector<8x32xf32>
    %c1_233 = arith.constant 1 : index
    %c0_234 = arith.constant 0 : index
    %c0_235 = arith.constant 0 : index
    %631 = vector.load %arg21[%c1_233, %c0_234, %c0_235] : memref<2x1x32xf32, #tpu.memory_space<vmem>>, vector<1x1x32xf32>
    %632 = vector.shape_cast %631 : vector<1x1x32xf32> to vector<1x32xf32>
    %633 = vector.broadcast %632 : vector<1x32xf32> to vector<8x32xf32>
    %634 = arith.addf %630, %633 : vector<8x32xf32>
    %c0_236 = arith.constant 0 : index
    %c0_237 = arith.constant 0 : index
    %635 = vector.load %arg22[%c0_236, %c0_237] : memref<2x32xf32, #tpu.memory_space<vmem>>, vector<2x32xf32>
    %636 = vector.extract_strided_slice %635 {offsets = [0, 0], sizes = [1, 32], strides = [1, 1]} : vector<2x32xf32> to vector<1x32xf32>
    %637 = vector.extract_strided_slice %635 {offsets = [1, 0], sizes = [1, 32], strides = [1, 1]} : vector<2x32xf32> to vector<1x32xf32>
    %cst_238 = arith.constant dense<0.000000e+00> : vector<8xf32>
    %638 = vector.multi_reduction <add>, %634, %cst_238 [1] : vector<8x32xf32> to vector<8xf32>
    %639 = vector.shape_cast %638 : vector<8xf32> to vector<8x1xf32>
    %cst_239 = arith.constant 3.200000e+01 : f32
    %640 = vector.broadcast %cst_239 : f32 to vector<8x1xf32>
    %641 = arith.divf %639, %640 : vector<8x1xf32>
    %642 = vector.broadcast %641 : vector<8x1xf32> to vector<8x32xf32>
    %643 = arith.subf %634, %642 : vector<8x32xf32>
    %644 = arith.mulf %643, %643 : vector<8x32xf32>
    %cst_240 = arith.constant dense<0.000000e+00> : vector<8xf32>
    %645 = vector.multi_reduction <add>, %644, %cst_240 [1] : vector<8x32xf32> to vector<8xf32>
    %646 = vector.shape_cast %645 : vector<8xf32> to vector<8x1xf32>
    %cst_241 = arith.constant 3.200000e+01 : f32
    %647 = vector.broadcast %cst_241 : f32 to vector<8x1xf32>
    %648 = arith.divf %646, %647 : vector<8x1xf32>
    %649 = vector.broadcast %641 : vector<8x1xf32> to vector<8x32xf32>
    %650 = arith.subf %634, %649 : vector<8x32xf32>
    %cst_242 = arith.constant 9.99999974E-6 : f32
    %651 = vector.broadcast %cst_242 : f32 to vector<8x1xf32>
    %652 = arith.addf %648, %651 : vector<8x1xf32>
    %653 = math.rsqrt %652 : vector<8x1xf32>
    %654 = vector.broadcast %653 : vector<8x1xf32> to vector<8x32xf32>
    %655 = arith.mulf %650, %654 : vector<8x32xf32>
    %656 = vector.broadcast %636 : vector<1x32xf32> to vector<8x32xf32>
    %657 = arith.mulf %655, %656 : vector<8x32xf32>
    %658 = vector.broadcast %637 : vector<1x32xf32> to vector<8x32xf32>
    %659 = arith.addf %657, %658 : vector<8x32xf32>
    %c0_243 = arith.constant 0 : index
    %c0_244 = arith.constant 0 : index
    %660 = vector.load %arg23[%c0_243, %c0_244] : memref<32x64xbf16, #tpu.memory_space<vmem>>, vector<32x64xbf16>
    %661 = arith.extf %660 : vector<32x64xbf16> to vector<32x64xf32>
    %cst_245 = arith.constant dense<0.000000e+00> : vector<8x64xf32>
    %662 = tpu.matmul %659, %661, %cst_245 {dimension_numbers = #tpu.dot_dimension_numbers<[1], [0], [0], [1], [0, 0, 1, 1], [], []>} : vector<8x32xf32>, vector<32x64xf32>, vector<8x64xf32> -> vector<8x64xf32>
    %c0_246 = arith.constant 0 : index
    %c0_247 = arith.constant 0 : index
    %663 = vector.load %arg24[%c0_246, %c0_247] : memref<1x64xf32, #tpu.memory_space<vmem>>, vector<1x64xf32>
    %664 = vector.broadcast %663 : vector<1x64xf32> to vector<8x64xf32>
    %665 = arith.addf %662, %664 : vector<8x64xf32>
    %c0_248 = arith.constant 0 : index
    %c0_249 = arith.constant 0 : index
    %c0_250 = arith.constant 0 : index
    %666 = vector.load %arg25[%c0_248, %c0_249, %c0_250] : memref<1x8x64xf32, #tpu.memory_space<vmem>>, vector<1x8x64xf32>
    %667 = vector.shape_cast %666 : vector<1x8x64xf32> to vector<8x64xf32>
    %668 = vector.shape_cast %665 : vector<8x64xf32> to vector<1x8x64xf32>
    tpu.vector_store %arg25[%c0_248, %c0_249, %c0_250], %668 {strides = array<i32>} : memref<1x8x64xf32, #tpu.memory_space<vmem>>, vector<1x8x64xf32>,
    return
  }
  func.func @transform_0(%arg0: i32) -> (i32, i32, i32) {
    %c0_i32 = arith.constant 0 : i32
    %c0_i32_0 = arith.constant 0 : i32
    %c0_i32_1 = arith.constant 0 : i32
    return %arg0, %c0_i32, %c0_i32_0 : i32, i32, i32
  }
  func.func @transform_1(%arg0: i32) -> (i32, i32, i32) {
    %c0_i32 = arith.constant 0 : i32
    %c0_i32_0 = arith.constant 0 : i32
    %c0_i32_1 = arith.constant 0 : i32
    return %arg0, %c0_i32, %c0_i32_0 : i32, i32, i32
  }
  func.func @transform_2(%arg0: i32) -> (i32, i32) {
    %c0_i32 = arith.constant 0 : i32
    %c0_i32_0 = arith.constant 0 : i32
    %c0_i32_1 = arith.constant 0 : i32
    return %c0_i32, %c0_i32_0 : i32, i32
  }
  func.func @transform_3(%arg0: i32) -> (i32, i32) {
    %c0_i32 = arith.constant 0 : i32
    %c0_i32_0 = arith.constant 0 : i32
    %c0_i32_1 = arith.constant 0 : i32
    return %c0_i32, %c0_i32_0 : i32, i32
  }
  func.func @transform_4(%arg0: i32) -> (i32, i32) {
    %c0_i32 = arith.constant 0 : i32
    %c0_i32_0 = arith.constant 0 : i32
    %c0_i32_1 = arith.constant 0 : i32
    return %c0_i32, %c0_i32_0 : i32, i32
  }
  func.func @transform_5(%arg0: i32) -> (i32, i32) {
    %c0_i32 = arith.constant 0 : i32
    %c0_i32_0 = arith.constant 0 : i32
    %c0_i32_1 = arith.constant 0 : i32
    return %c0_i32, %c0_i32_0 : i32, i32
  }
  func.func @transform_6(%arg0: i32) -> (i32, i32) {
    %c0_i32 = arith.constant 0 : i32
    %c0_i32_0 = arith.constant 0 : i32
    %c0_i32_1 = arith.constant 0 : i32
    return %c0_i32, %c0_i32_0 : i32, i32
  }
  func.func @transform_7(%arg0: i32) -> (i32, i32) {
    %c0_i32 = arith.constant 0 : i32
    %c0_i32_0 = arith.constant 0 : i32
    %c0_i32_1 = arith.constant 0 : i32
    return %c0_i32, %c0_i32_0 : i32, i32
  }
  func.func @transform_8(%arg0: i32) -> (i32, i32) {
    %c0_i32 = arith.constant 0 : i32
    %c0_i32_0 = arith.constant 0 : i32
    %c0_i32_1 = arith.constant 0 : i32
    return %c0_i32, %c0_i32_0 : i32, i32
  }
  func.func @transform_9(%arg0: i32) -> (i32, i32, i32) {
    %c0_i32 = arith.constant 0 : i32
    %c0_i32_0 = arith.constant 0 : i32
    %c0_i32_1 = arith.constant 0 : i32
    %c0_i32_2 = arith.constant 0 : i32
    return %c0_i32, %c0_i32_0, %c0_i32_1 : i32, i32, i32
  }
  func.func @transform_10(%arg0: i32) -> (i32, i32, i32) {
    %c0_i32 = arith.constant 0 : i32
    %c0_i32_0 = arith.constant 0 : i32
    %c0_i32_1 = arith.constant 0 : i32
    %c0_i32_2 = arith.constant 0 : i32
    return %c0_i32, %c0_i32_0, %c0_i32_1 : i32, i32, i32
  }
  func.func @transform_11(%arg0: i32) -> (i32, i32, i32) {
    %c0_i32 = arith.constant 0 : i32
    %c0_i32_0 = arith.constant 0 : i32
    %c0_i32_1 = arith.constant 0 : i32
    %c0_i32_2 = arith.constant 0 : i32
    return %c0_i32, %c0_i32_0, %c0_i32_1 : i32, i32, i32
  }
  func.func @transform_12(%arg0: i32) -> (i32, i32, i32) {
    %c0_i32 = arith.constant 0 : i32
    %c0_i32_0 = arith.constant 0 : i32
    %c0_i32_1 = arith.constant 0 : i32
    %c0_i32_2 = arith.constant 0 : i32
    return %c0_i32, %c0_i32_0, %c0_i32_1 : i32, i32, i32
  }
  func.func @transform_13(%arg0: i32) -> (i32, i32, i32) {
    %c0_i32 = arith.constant 0 : i32
    %c0_i32_0 = arith.constant 0 : i32
    %c0_i32_1 = arith.constant 0 : i32
    %c0_i32_2 = arith.constant 0 : i32
    return %c0_i32, %c0_i32_0, %c0_i32_1 : i32, i32, i32
  }
  func.func @transform_14(%arg0: i32) -> (i32, i32, i32) {
    %c0_i32 = arith.constant 0 : i32
    %c0_i32_0 = arith.constant 0 : i32
    %c0_i32_1 = arith.constant 0 : i32
    %c0_i32_2 = arith.constant 0 : i32
    return %c0_i32, %c0_i32_0, %c0_i32_1 : i32, i32, i32
  }
  func.func @transform_15(%arg0: i32) -> (i32, i32, i32) {
    %c0_i32 = arith.constant 0 : i32
    %c0_i32_0 = arith.constant 0 : i32
    %c0_i32_1 = arith.constant 0 : i32
    %c0_i32_2 = arith.constant 0 : i32
    return %c0_i32, %c0_i32_0, %c0_i32_1 : i32, i32, i32
  }
  func.func @transform_16(%arg0: i32) -> (i32, i32, i32) {
    %c0_i32 = arith.constant 0 : i32
    %c0_i32_0 = arith.constant 0 : i32
    %c0_i32_1 = arith.constant 0 : i32
    %c0_i32_2 = arith.constant 0 : i32
    return %c0_i32, %c0_i32_0, %c0_i32_1 : i32, i32, i32
  }
  func.func @transform_17(%arg0: i32) -> (i32, i32, i32) {
    %c0_i32 = arith.constant 0 : i32
    %c0_i32_0 = arith.constant 0 : i32
    %c0_i32_1 = arith.constant 0 : i32
    %c0_i32_2 = arith.constant 0 : i32
    return %c0_i32, %c0_i32_0, %c0_i32_1 : i32, i32, i32
  }
  func.func @transform_18(%arg0: i32) -> (i32, i32, i32) {
    %c0_i32 = arith.constant 0 : i32
    %c0_i32_0 = arith.constant 0 : i32
    %c0_i32_1 = arith.constant 0 : i32
    %c0_i32_2 = arith.constant 0 : i32
    return %c0_i32, %c0_i32_0, %c0_i32_1 : i32, i32, i32
  }
  func.func @transform_19(%arg0: i32) -> (i32, i32, i32) {
    %c0_i32 = arith.constant 0 : i32
    %c0_i32_0 = arith.constant 0 : i32
    %c0_i32_1 = arith.constant 0 : i32
    %c0_i32_2 = arith.constant 0 : i32
    return %c0_i32, %c0_i32_0, %c0_i32_1 : i32, i32, i32
  }
  func.func @transform_20(%arg0: i32) -> (i32, i32, i32) {
    %c0_i32 = arith.constant 0 : i32
    %c0_i32_0 = arith.constant 0 : i32
    %c0_i32_1 = arith.constant 0 : i32
    %c0_i32_2 = arith.constant 0 : i32
    return %c0_i32, %c0_i32_0, %c0_i32_1 : i32, i32, i32
  }
  func.func @transform_21(%arg0: i32) -> (i32, i32) {
    %c0_i32 = arith.constant 0 : i32
    %c0_i32_0 = arith.constant 0 : i32
    %c0_i32_1 = arith.constant 0 : i32
    return %c0_i32, %c0_i32_0 : i32, i32
  }
  func.func @transform_22(%arg0: i32) -> (i32, i32) {
    %c0_i32 = arith.constant 0 : i32
    %c0_i32_0 = arith.constant 0 : i32
    %c0_i32_1 = arith.constant 0 : i32
    return %c0_i32, %c0_i32_0 : i32, i32
  }
  func.func @transform_23(%arg0: i32) -> (i32, i32) {
    %c0_i32 = arith.constant 0 : i32
    %c0_i32_0 = arith.constant 0 : i32
    %c0_i32_1 = arith.constant 0 : i32
    return %c0_i32, %c0_i32_0 : i32, i32
  }
  func.func @transform_24(%arg0: i32) -> (i32, i32, i32) {
    %c0_i32 = arith.constant 0 : i32
    %c0_i32_0 = arith.constant 0 : i32
    %c0_i32_1 = arith.constant 0 : i32
    return %arg0, %c0_i32, %c0_i32_0 : i32, i32, i32
  }
}

</mosaic_0001>

<llo_original>
// kernel: context_decoder_pallas.1
$region0: #{context_decoder_pallas.1}
  #allocation0 [shape = 'u32[]', space=smem, size = 0x4, offset = 0x4, fixed_abs, tag = 'smem constant byte address 0x4 - core index']
  #allocation1 [shape = 'u32[144,128]{1,0:T(1,128)}', space=vmem, size = 0x12000, scoped, tag = 'internal scratch']
  %s0 = inlined_call_operand.vmem [shape: f32[2,8,64], index: 0, kind: input, shape index: {}]
  %s1 = inlined_call_operand.vmem [shape: f32[2,16,64], index: 1, kind: input, shape index: {}]
  %s2 = inlined_call_operand.hbm [shape: f32[2,64], index: 2, kind: input, shape index: {}]
  %s3 = inlined_call_operand.vmem [shape: bf16[64,32], index: 3, kind: input, shape index: {}]
  %s4 = inlined_call_operand.vmem [shape: f32[1,32], index: 4, kind: input, shape index: {}]
  %s5 = inlined_call_operand.vmem [shape: f32[2,32], index: 5, kind: input, shape index: {}]
  %s6 = inlined_call_operand.vmem [shape: f32[2,64], index: 6, kind: input, shape index: {}]
  %s7 = inlined_call_operand.vmem [shape: bf16[64,32], index: 7, kind: input, shape index: {}]
  %s8 = inlined_call_operand.vmem [shape: f32[1,32], index: 8, kind: input, shape index: {}]
  %s9 = inlined_call_operand.vmem [shape: f32[2,6,32], index: 9, kind: input, shape index: {}]
  %s10 = inlined_call_operand.vmem [shape: bf16[2,32,96], index: 10, kind: input, shape index: {}]
  %s11 = inlined_call_operand.vmem [shape: bf16[2,32,32], index: 11, kind: input, shape index: {}]
  %s12 = inlined_call_operand.vmem [shape: f32[2,1,32], index: 12, kind: input, shape index: {}]
  %s13 = inlined_call_operand.vmem [shape: bf16[2,32,32], index: 13, kind: input, shape index: {}]
  %s14 = inlined_call_operand.vmem [shape: bf16[2,32,64], index: 14, kind: input, shape index: {}]
  %s15 = inlined_call_operand.vmem [shape: bf16[2,32,32], index: 15, kind: input, shape index: {}]
  %s16 = inlined_call_operand.hbm [shape: f32[2,1,32], index: 16, kind: input, shape index: {}]
  %s17 = inlined_call_operand.vmem [shape: bf16[2,32,128], index: 17, kind: input, shape index: {}]
  %s18 = inlined_call_operand.hbm [shape: f32[2,1,128], index: 18, kind: input, shape index: {}]
  %s19 = inlined_call_operand.vmem [shape: bf16[2,128,32], index: 19, kind: input, shape index: {}]
  %s20 = inlined_call_operand.hbm [shape: f32[2,1,32], index: 20, kind: input, shape index: {}]
  %s21 = inlined_call_operand.vmem [shape: f32[2,32], index: 21, kind: input, shape index: {}]
  %s22 = inlined_call_operand.vmem [shape: bf16[32,64], index: 22, kind: input, shape index: {}]
  %s23 = inlined_call_operand.vmem [shape: f32[1,64], index: 23, kind: input, shape index: {}]
  %s24 = inlined_call_operand.hbm [shape: f32[2,8,64], index: 24, kind: output, shape index: {}]
  %s25 = sld [smem:[#allocation0]]
  $region145: #{context_decoder_pallas.1} parent=0
    _
  %s27 = ssub.s32 1, %s25
  %s28 = scalar_select 0, %s27, %s25
  $region1: #{context_decoder_pallas.1} parent=0
    #allocation2 [shape = 'u8[1024]{0}', space=vmem, size = 0x400, scoped, tag = 'input window, operand 2, single buffered']
    #allocation3 [shape = 's32[2]{0}', space=sflag, size = 0x8, scoped, tag = 'scoped memory for context_decoder_pallas.1']
    #allocation4 [shape = 's32[2]{0}', space=sflag, size = 0x8, scoped, tag = 'scoped memory for context_decoder_pallas.1']
    #allocation5 [shape = 'u8[1024]{0}', space=vmem, size = 0x400, scoped, tag = 'input window, operand 16, single buffered']
    #allocation6 [shape = 's32[1]{0}', space=sflag, size = 0x4, scoped, tag = 'scoped memory for context_decoder_pallas.1']
    #allocation7 [shape = 'u8[1024]{0}', space=vmem, size = 0x400, scoped, tag = 'input window, operand 18, single buffered']
    #allocation8 [shape = 'u8[1024]{0}', space=vmem, size = 0x400, scoped, tag = 'input window, operand 20, single buffered']
    #allocation9 [shape = 's32[1]{0}', space=sflag, size = 0x4, scoped, tag = 'scoped memory for context_decoder_pallas.1']
    #allocation10 [shape = 'u8[8192]{0}', space=vmem, size = 0x2000, scoped, tag = 'output window, operand 0']
    %29 = vsyncpa [#allocation3], 0
    %30 = vsyncpa [#allocation6], 0
    %31 = vsyncpa [#allocation9], 0
    %32 = vsyncpa [#allocation4], 0
    %s33 = scalar_lea.sflag [#allocation4], 1
    %34 = vsyncpa %s33, 0
    loop: start=0, step=1, limit=4
    $region2: #{context_decoder_pallas.1} parent=1 // loop_pre_header
      _
    $region3: #{context_decoder_pallas.1} parent=1 // loop_header
      %s36 = sphi 0, %s40
      %p37 = scmp.ge.s32.totalorder %s36, 4
      %s46 = sphi 0, %s48
      %s49 = sphi 0, %s46
      %s50 = sphi 0, %s49
      %s66 = sphi 0, %s50
      %s72 = sphi 0, %s74
      %s75 = sphi 0, %s72
      %s76 = sphi 0, %s75
      %s92 = sphi 0, %s76
      %s96 = sphi 0, %s96
      %s98 = sphi 0, %s96
      %s99 = sphi 0, %s98
      %s113 = sphi 0, %s99
      %s117 = sphi 0, %s117
      %s119 = sphi 0, %s117
      %s120 = sphi 0, %s119
      %s134 = sphi 0, %s120
      %s138 = sphi 0, %s138
      %s140 = sphi 0, %s138
      %s141 = sphi 0, %s140
      %s155 = sphi 0, %s141
      %s159 = sphi 0, %s159
      %s161 = sphi 0, %s159
      %s162 = sphi 0, %s161
      %s176 = sphi 0, %s162
      %s180 = sphi 0, %s180
      %s182 = sphi 0, %s180
      %s183 = sphi 0, %s182
      %s197 = sphi 0, %s183
      %s201 = sphi 0, %s201
      %s203 = sphi 0, %s201
      %s204 = sphi 0, %s203
      %s218 = sphi 0, %s204
      %s222 = sphi 0, %s222
      %s224 = sphi 0, %s222
      %s225 = sphi 0, %s224
      %s239 = sphi 0, %s225
      %s243 = sphi 0, %s243
      %s245 = sphi 0, %s243
      %s246 = sphi 0, %s245
      %s260 = sphi 0, %s246
      %s264 = sphi 0, %s264
      %s266 = sphi 0, %s264
      %s267 = sphi 0, %s266
      %s281 = sphi 0, %s267
      %s285 = sphi 0, %s285
      %s287 = sphi 0, %s285
      %s288 = sphi 0, %s287
      %s302 = sphi 0, %s288
      %s306 = sphi 0, %s306
      %s308 = sphi 0, %s306
      %s309 = sphi 0, %s308
      %s323 = sphi 0, %s309
      %s327 = sphi 0, %s327
      %s329 = sphi 0, %s327
      %s330 = sphi 0, %s329
      %s344 = sphi 0, %s330
      %s348 = sphi 0, %s348
      %s350 = sphi 0, %s348
      %s351 = sphi 0, %s350
      %s365 = sphi 0, %s351
      %s369 = sphi 0, %s369
      %s371 = sphi 0, %s369
      %s372 = sphi 0, %s371
      %s386 = sphi 0, %s372
      %s390 = sphi 0, %s390
      %s392 = sphi 0, %s390
      %s393 = sphi 0, %s392
      %s407 = sphi 0, %s393
      %s411 = sphi 0, %s411
      %s413 = sphi 0, %s411
      %s414 = sphi 0, %s413
      %s428 = sphi 0, %s414
      %s432 = sphi 0, %s432
      %s434 = sphi 0, %s432
      %s435 = sphi 0, %s434
      %s449 = sphi 0, %s435
      %s453 = sphi 0, %s453
      %s455 = sphi 0, %s453
      %s456 = sphi 0, %s455
      %s470 = sphi 0, %s456
      %s474 = sphi 0, %s474
      %s476 = sphi 0, %s474
      %s477 = sphi 0, %s476
      %s491 = sphi 0, %s477
      %s495 = sphi 0, %s495
      %s497 = sphi 0, %s495
      %s498 = sphi 0, %s497
      %s512 = sphi 0, %s498
      %s516 = sphi 0, %s516
      %s518 = sphi 0, %s516
      %s519 = sphi 0, %s518
      %s533 = sphi 0, %s519
      %s537 = sphi 0, %s537
      %s539 = sphi 0, %s537
      %s540 = sphi 0, %s539
      %s554 = sphi 0, %s540
      %s560 = sphi 0, %s562
      %s563 = sphi 0, %s560
      %s564 = sphi 0, %s563
      %s580 = sphi 0, %s564
    $region4: #{context_decoder_pallas.1} parent=1 // loop_header_branch
      %39 = sbr.rel (%p37) target = $region8
    $region5: #{context_decoder_pallas.1} parent=1 // loop_body
      %s41 = ssub.s32 %s36, 1
      %s42 = ssub.s32 %s36, 2
      %s43 = sadd.s32 %s36, 1
      %s44 = ssub.s32 %s36, %s43
      %p45 = scmp.eq.s32.totalorder %s44, 0
      %s47 = sadd.s32 %s46, 1
      %s48 = scalar_select %p45, %s46, %s47
      %p51 = pneg %p45
      %p52 = scmp.eq.s32.totalorder %s36, 1
      %p53 = por %p51, %p52
      %p54 = scmp.ne.s32.totalorder %s46, %s49
      %p55 = scmp.eq.s32.totalorder %s36, 0
      %p56 = por %p54, %p55
      %p57 = scmp.ne.s32.totalorder %s46, %s49
      %p58 = scmp.eq.s32.totalorder %s41, 1
      %p59 = por %p57, %p58
      %p60 = scmp.ne.s32.totalorder %s49, %s50
      %p61 = scmp.eq.s32.totalorder %s41, 0
      %p62 = por %p60, %p61
      %p63 = scmp.ne.s32.totalorder %s49, %s50
      %p64 = scmp.eq.s32.totalorder %s42, 1
      %p65 = por %p63, %p64
      %p67 = scmp.ne.s32.totalorder %s50, %s66
      %p68 = scmp.eq.s32.totalorder %s42, 0
      %p69 = por %p67, %p68
      %s70 = ssub.s32 %s36, %s43
      %p71 = scmp.eq.s32.totalorder %s70, 0
      %s73 = sadd.s32 %s72, 1
      %s74 = scalar_select %p71, %s72, %s73
      %p77 = pneg %p71
      %p78 = scmp.eq.s32.totalorder %s36, 1
      %p79 = por %p77, %p78
      %p80 = scmp.ne.s32.totalorder %s72, %s75
      %p81 = scmp.eq.s32.totalorder %s36, 0
      %p82 = por %p80, %p81
      %p83 = scmp.ne.s32.totalorder %s72, %s75
      %p84 = scmp.eq.s32.totalorder %s41, 1
      %p85 = por %p83, %p84
      %p86 = scmp.ne.s32.totalorder %s75, %s76
      %p87 = scmp.eq.s32.totalorder %s41, 0
      %p88 = por %p86, %p87
      %p89 = scmp.ne.s32.totalorder %s75, %s76
      %p90 = scmp.eq.s32.totalorder %s42, 1
      %p91 = por %p89, %p90
      %p93 = scmp.ne.s32.totalorder %s76, %s92
      %p94 = scmp.eq.s32.totalorder %s42, 0
      %p95 = por %p93, %p94
      %s97 = sadd.s32 %s96, 1
      %p100 = scmp.eq.s32.totalorder %s36, 1
      %p101 = scmp.ne.s32.totalorder %s96, %s98
      %p102 = scmp.eq.s32.totalorder %s36, 0
      %p103 = por %p101, %p102
      %p104 = scmp.ne.s32.totalorder %s96, %s98
      %p105 = scmp.eq.s32.totalorder %s41, 1
      %p106 = por %p104, %p105
      %p107 = scmp.ne.s32.totalorder %s98, %s99
      %p108 = scmp.eq.s32.totalorder %s41, 0
      %p109 = por %p107, %p108
      %p110 = scmp.ne.s32.totalorder %s98, %s99
      %p111 = scmp.eq.s32.totalorder %s42, 1
      %p112 = por %p110, %p111
      %p114 = scmp.ne.s32.totalorder %s99, %s113
      %p115 = scmp.eq.s32.totalorder %s42, 0
      %p116 = por %p114, %p115
      %s118 = sadd.s32 %s117, 1
      %p121 = scmp.eq.s32.totalorder %s36, 1
      %p122 = scmp.ne.s32.totalorder %s117, %s119
      %p123 = scmp.eq.s32.totalorder %s36, 0
      %p124 = por %p122, %p123
      %p125 = scmp.ne.s32.totalorder %s117, %s119
      %p126 = scmp.eq.s32.totalorder %s41, 1
      %p127 = por %p125, %p126
      %p128 = scmp.ne.s32.totalorder %s119, %s120
      %p129 = scmp.eq.s32.totalorder %s41, 0
      %p130 = por %p128, %p129
      %p131 = scmp.ne.s32.totalorder %s119, %s120
      %p132 = scmp.eq.s32.totalorder %s42, 1
      %p133 = por %p131, %p132
      %p135 = scmp.ne.s32.totalorder %s120, %s134
      %p136 = scmp.eq.s32.totalorder %s42, 0
      %p137 = por %p135, %p136
      %s139 = sadd.s32 %s138, 1
      %p142 = scmp.eq.s32.totalorder %s36, 1
      %p143 = scmp.ne.s32.totalorder %s138, %s140
      %p144 = scmp.eq.s32.totalorder %s36, 0
      %p145 = por %p143, %p144
      %p146 = scmp.ne.s32.totalorder %s138, %s140
      %p147 = scmp.eq.s32.totalorder %s41, 1
      %p148 = por %p146, %p147
      %p149 = scmp.ne.s32.totalorder %s140, %s141
      %p150 = scmp.eq.s32.totalorder %s41, 0
      %p151 = por %p149, %p150
      %p152 = scmp.ne.s32.totalorder %s140, %s141
      %p153 = scmp.eq.s32.totalorder %s42, 1
      %p154 = por %p152, %p153
      %p156 = scmp.ne.s32.totalorder %s141, %s155
      %p157 = scmp.eq.s32.totalorder %s42, 0
      %p158 = por %p156, %p157
      %s160 = sadd.s32 %s159, 1
      %p163 = scmp.eq.s32.totalorder %s36, 1
      %p164 = scmp.ne.s32.totalorder %s159, %s161
      %p165 = scmp.eq.s32.totalorder %s36, 0
      %p166 = por %p164, %p165
      %p167 = scmp.ne.s32.totalorder %s159, %s161
      %p168 = scmp.eq.s32.totalorder %s41, 1
      %p169 = por %p167, %p168
      %p170 = scmp.ne.s32.totalorder %s161, %s162
      %p171 = scmp.eq.s32.totalorder %s41, 0
      %p172 = por %p170, %p171
      %p173 = scmp.ne.s32.totalorder %s161, %s162
      %p174 = scmp.eq.s32.totalorder %s42, 1
      %p175 = por %p173, %p174
      %p177 = scmp.ne.s32.totalorder %s162, %s176
      %p178 = scmp.eq.s32.totalorder %s42, 0
      %p179 = por %p177, %p178
      %s181 = sadd.s32 %s180, 1
      %p184 = scmp.eq.s32.totalorder %s36, 1
      %p185 = scmp.ne.s32.totalorder %s180, %s182
      %p186 = scmp.eq.s32.totalorder %s36, 0
      %p187 = por %p185, %p186
      %p188 = scmp.ne.s32.totalorder %s180, %s182
      %p189 = scmp.eq.s32.totalorder %s41, 1
      %p190 = por %p188, %p189
      %p191 = scmp.ne.s32.totalorder %s182, %s183
      %p192 = scmp.eq.s32.totalorder %s41, 0
      %p193 = por %p191, %p192
      %p194 = scmp.ne.s32.totalorder %s182, %s183
      %p195 = scmp.eq.s32.totalorder %s42, 1
      %p196 = por %p194, %p195
      %p198 = scmp.ne.s32.totalorder %s183, %s197
      %p199 = scmp.eq.s32.totalorder %s42, 0
      %p200 = por %p198, %p199
      %s202 = sadd.s32 %s201, 1
      %p205 = scmp.eq.s32.totalorder %s36, 1
      %p206 = scmp.ne.s32.totalorder %s201, %s203
      %p207 = scmp.eq.s32.totalorder %s36, 0
      %p208 = por %p206, %p207
      %p209 = scmp.ne.s32.totalorder %s201, %s203
      %p210 = scmp.eq.s32.totalorder %s41, 1
      %p211 = por %p209, %p210
      %p212 = scmp.ne.s32.totalorder %s203, %s204
      %p213 = scmp.eq.s32.totalorder %s41, 0
      %p214 = por %p212, %p213
      %p215 = scmp.ne.s32.totalorder %s203, %s204
      %p216 = scmp.eq.s32.totalorder %s42, 1
      %p217 = por %p215, %p216
      %p219 = scmp.ne.s32.totalorder %s204, %s218
      %p220 = scmp.eq.s32.totalorder %s42, 0
      %p221 = por %p219, %p220
      %s223 = sadd.s32 %s222, 1
      %p226 = scmp.eq.s32.totalorder %s36, 1
      %p227 = scmp.ne.s32.totalorder %s222, %s224
      %p228 = scmp.eq.s32.totalorder %s36, 0
      %p229 = por %p227, %p228
      %p230 = scmp.ne.s32.totalorder %s222, %s224
      %p231 = scmp.eq.s32.totalorder %s41, 1
      %p232 = por %p230, %p231
      %p233 = scmp.ne.s32.totalorder %s224, %s225
      %p234 = scmp.eq.s32.totalorder %s41, 0
      %p235 = por %p233, %p234
      %p236 = scmp.ne.s32.totalorder %s224, %s225
      %p237 = scmp.eq.s32.totalorder %s42, 1
      %p238 = por %p236, %p237
      %p240 = scmp.ne.s32.totalorder %s225, %s239
      %p241 = scmp.eq.s32.totalorder %s42, 0
      %p242 = por %p240, %p241
      %s244 = sadd.s32 %s243, 1
      %p247 = scmp.eq.s32.totalorder %s36, 1
      %p248 = scmp.ne.s32.totalorder %s243, %s245
      %p249 = scmp.eq.s32.totalorder %s36, 0
      %p250 = por %p248, %p249
      %p251 = scmp.ne.s32.totalorder %s243, %s245
      %p252 = scmp.eq.s32.totalorder %s41, 1
      %p253 = por %p251, %p252
      %p254 = scmp.ne.s32.totalorder %s245, %s246
      %p255 = scmp.eq.s32.totalorder %s41, 0
      %p256 = por %p254, %p255
      %p257 = scmp.ne.s32.totalorder %s245, %s246
      %p258 = scmp.eq.s32.totalorder %s42, 1
      %p259 = por %p257, %p258
      %p261 = scmp.ne.s32.totalorder %s246, %s260
      %p262 = scmp.eq.s32.totalorder %s42, 0
      %p263 = por %p261, %p262
      %s265 = sadd.s32 %s264, 1
      %p268 = scmp.eq.s32.totalorder %s36, 1
      %p269 = scmp.ne.s32.totalorder %s264, %s266
      %p270 = scmp.eq.s32.totalorder %s36, 0
      %p271 = por %p269, %p270
      %p272 = scmp.ne.s32.totalorder %s264, %s266
      %p273 = scmp.eq.s32.totalorder %s41, 1
      %p274 = por %p272, %p273
      %p275 = scmp.ne.s32.totalorder %s266, %s267
      %p276 = scmp.eq.s32.totalorder %s41, 0
      %p277 = por %p275, %p276
      %p278 = scmp.ne.s32.totalorder %s266, %s267
      %p279 = scmp.eq.s32.totalorder %s42, 1
      %p280 = por %p278, %p279
      %p282 = scmp.ne.s32.totalorder %s267, %s281
      %p283 = scmp.eq.s32.totalorder %s42, 0
      %p284 = por %p282, %p283
      %s286 = sadd.s32 %s285, 1
      %p289 = scmp.eq.s32.totalorder %s36, 1
      %p290 = scmp.ne.s32.totalorder %s285, %s287
      %p291 = scmp.eq.s32.totalorder %s36, 0
      %p292 = por %p290, %p291
      %p293 = scmp.ne.s32.totalorder %s285, %s287
      %p294 = scmp.eq.s32.totalorder %s41, 1
      %p295 = por %p293, %p294
      %p296 = scmp.ne.s32.totalorder %s287, %s288
      %p297 = scmp.eq.s32.totalorder %s41, 0
      %p298 = por %p296, %p297
      %p299 = scmp.ne.s32.totalorder %s287, %s288
      %p300 = scmp.eq.s32.totalorder %s42, 1
      %p301 = por %p299, %p300
      %p303 = scmp.ne.s32.totalorder %s288, %s302
      %p304 = scmp.eq.s32.totalorder %s42, 0
      %p305 = por %p303, %p304
      %s307 = sadd.s32 %s306, 1
      %p310 = scmp.eq.s32.totalorder %s36, 1
      %p311 = scmp.ne.s32.totalorder %s306, %s308
      %p312 = scmp.eq.s32.totalorder %s36, 0
      %p313 = por %p311, %p312
      %p314 = scmp.ne.s32.totalorder %s306, %s308
      %p315 = scmp.eq.s32.totalorder %s41, 1
      %p316 = por %p314, %p315
      %p317 = scmp.ne.s32.totalorder %s308, %s309
      %p318 = scmp.eq.s32.totalorder %s41, 0
      %p319 = por %p317, %p318
      %p320 = scmp.ne.s32.totalorder %s308, %s309
      %p321 = scmp.eq.s32.totalorder %s42, 1
      %p322 = por %p320, %p321
      %p324 = scmp.ne.s32.totalorder %s309, %s323
      %p325 = scmp.eq.s32.totalorder %s42, 0
      %p326 = por %p324, %p325
      %s328 = sadd.s32 %s327, 1
      %p331 = scmp.eq.s32.totalorder %s36, 1
      %p332 = scmp.ne.s32.totalorder %s327, %s329
      %p333 = scmp.eq.s32.totalorder %s36, 0
      %p334 = por %p332, %p333
      %p335 = scmp.ne.s32.totalorder %s327, %s329
      %p336 = scmp.eq.s32.totalorder %s41, 1
      %p337 = por %p335, %p336
      %p338 = scmp.ne.s32.totalorder %s329, %s330
      %p339 = scmp.eq.s32.totalorder %s41, 0
      %p340 = por %p338, %p339
      %p341 = scmp.ne.s32.totalorder %s329, %s330
      %p342 = scmp.eq.s32.totalorder %s42, 1
      %p343 = por %p341, %p342
      %p345 = scmp.ne.s32.totalorder %s330, %s344
      %p346 = scmp.eq.s32.totalorder %s42, 0
      %p347 = por %p345, %p346
      %s349 = sadd.s32 %s348, 1
      %p352 = scmp.eq.s32.totalorder %s36, 1
      %p353 = scmp.ne.s32.totalorder %s348, %s350
      %p354 = scmp.eq.s32.totalorder %s36, 0
      %p355 = por %p353, %p354
      %p356 = scmp.ne.s32.totalorder %s348, %s350
      %p357 = scmp.eq.s32.totalorder %s41, 1
      %p358 = por %p356, %p357
      %p359 = scmp.ne.s32.totalorder %s350, %s351
      %p360 = scmp.eq.s32.totalorder %s41, 0
      %p361 = por %p359, %p360
      %p362 = scmp.ne.s32.totalorder %s350, %s351
      %p363 = scmp.eq.s32.totalorder %s42, 1
      %p364 = por %p362, %p363
      %p366 = scmp.ne.s32.totalorder %s351, %s365
      %p367 = scmp.eq.s32.totalorder %s42, 0
      %p368 = por %p366, %p367
      %s370 = sadd.s32 %s369, 1
      %p373 = scmp.eq.s32.totalorder %s36, 1
      %p374 = scmp.ne.s32.totalorder %s369, %s371
      %p375 = scmp.eq.s32.totalorder %s36, 0
      %p376 = por %p374, %p375
      %p377 = scmp.ne.s32.totalorder %s369, %s371
      %p378 = scmp.eq.s32.totalorder %s41, 1
      %p379 = por %p377, %p378
      %p380 = scmp.ne.s32.totalorder %s371, %s372
      %p381 = scmp.eq.s32.totalorder %s41, 0
      %p382 = por %p380, %p381
      %p383 = scmp.ne.s32.totalorder %s371, %s372
      %p384 = scmp.eq.s32.totalorder %s42, 1
      %p385 = por %p383, %p384
      %p387 = scmp.ne.s32.totalorder %s372, %s386
      %p388 = scmp.eq.s32.totalorder %s42, 0
      %p389 = por %p387, %p388
      %s391 = sadd.s32 %s390, 1
      %p394 = scmp.eq.s32.totalorder %s36, 1
      %p395 = scmp.ne.s32.totalorder %s390, %s392
      %p396 = scmp.eq.s32.totalorder %s36, 0
      %p397 = por %p395, %p396
      %p398 = scmp.ne.s32.totalorder %s390, %s392
      %p399 = scmp.eq.s32.totalorder %s41, 1
      %p400 = por %p398, %p399
      %p401 = scmp.ne.s32.totalorder %s392, %s393
      %p402 = scmp.eq.s32.totalorder %s41, 0
      %p403 = por %p401, %p402
      %p404 = scmp.ne.s32.totalorder %s392, %s393
      %p405 = scmp.eq.s32.totalorder %s42, 1
      %p406 = por %p404, %p405
      %p408 = scmp.ne.s32.totalorder %s393, %s407
      %p409 = scmp.eq.s32.totalorder %s42, 0
      %p410 = por %p408, %p409
      %s412 = sadd.s32 %s411, 1
      %p415 = scmp.eq.s32.totalorder %s36, 1
      %p416 = scmp.ne.s32.totalorder %s411, %s413
      %p417 = scmp.eq.s32.totalorder %s36, 0
      %p418 = por %p416, %p417
      %p419 = scmp.ne.s32.totalorder %s411, %s413
      %p420 = scmp.eq.s32.totalorder %s41, 1
      %p421 = por %p419, %p420
      %p422 = scmp.ne.s32.totalorder %s413, %s414
      %p423 = scmp.eq.s32.totalorder %s41, 0
      %p424 = por %p422, %p423
      %p425 = scmp.ne.s32.totalorder %s413, %s414
      %p426 = scmp.eq.s32.totalorder %s42, 1
      %p427 = por %p425, %p426
      %p429 = scmp.ne.s32.totalorder %s414, %s428
      %p430 = scmp.eq.s32.totalorder %s42, 0
      %p431 = por %p429, %p430
      %s433 = sadd.s32 %s432, 1
      %p436 = scmp.eq.s32.totalorder %s36, 1
      %p437 = scmp.ne.s32.totalorder %s432, %s434
      %p438 = scmp.eq.s32.totalorder %s36, 0
      %p439 = por %p437, %p438
      %p440 = scmp.ne.s32.totalorder %s432, %s434
      %p441 = scmp.eq.s32.totalorder %s41, 1
      %p442 = por %p440, %p441
      %p443 = scmp.ne.s32.totalorder %s434, %s435
      %p444 = scmp.eq.s32.totalorder %s41, 0
      %p445 = por %p443, %p444
      %p446 = scmp.ne.s32.totalorder %s434, %s435
      %p447 = scmp.eq.s32.totalorder %s42, 1
      %p448 = por %p446, %p447
      %p450 = scmp.ne.s32.totalorder %s435, %s449
      %p451 = scmp.eq.s32.totalorder %s42, 0
      %p452 = por %p450, %p451
      %s454 = sadd.s32 %s453, 1
      %p457 = scmp.eq.s32.totalorder %s36, 1
      %p458 = scmp.ne.s32.totalorder %s453, %s455
      %p459 = scmp.eq.s32.totalorder %s36, 0
      %p460 = por %p458, %p459
      %p461 = scmp.ne.s32.totalorder %s453, %s455
      %p462 = scmp.eq.s32.totalorder %s41, 1
      %p463 = por %p461, %p462
      %p464 = scmp.ne.s32.totalorder %s455, %s456
      %p465 = scmp.eq.s32.totalorder %s41, 0
      %p466 = por %p464, %p465
      %p467 = scmp.ne.s32.totalorder %s455, %s456
      %p468 = scmp.eq.s32.totalorder %s42, 1
      %p469 = por %p467, %p468
      %p471 = scmp.ne.s32.totalorder %s456, %s470
      %p472 = scmp.eq.s32.totalorder %s42, 0
      %p473 = por %p471, %p472
      %s475 = sadd.s32 %s474, 1
      %p478 = scmp.eq.s32.totalorder %s36, 1
      %p479 = scmp.ne.s32.totalorder %s474, %s476
      %p480 = scmp.eq.s32.totalorder %s36, 0
      %p481 = por %p479, %p480
      %p482 = scmp.ne.s32.totalorder %s474, %s476
      %p483 = scmp.eq.s32.totalorder %s41, 1
      %p484 = por %p482, %p483
      %p485 = scmp.ne.s32.totalorder %s476, %s477
      %p486 = scmp.eq.s32.totalorder %s41, 0
      %p487 = por %p485, %p486
      %p488 = scmp.ne.s32.totalorder %s476, %s477
      %p489 = scmp.eq.s32.totalorder %s42, 1
      %p490 = por %p488, %p489
      %p492 = scmp.ne.s32.totalorder %s477, %s491
      %p493 = scmp.eq.s32.totalorder %s42, 0
      %p494 = por %p492, %p493
      %s496 = sadd.s32 %s495, 1
      %p499 = scmp.eq.s32.totalorder %s36, 1
      %p500 = scmp.ne.s32.totalorder %s495, %s497
      %p501 = scmp.eq.s32.totalorder %s36, 0
      %p502 = por %p500, %p501
      %p503 = scmp.ne.s32.totalorder %s495, %s497
      %p504 = scmp.eq.s32.totalorder %s41, 1
      %p505 = por %p503, %p504
      %p506 = scmp.ne.s32.totalorder %s497, %s498
      %p507 = scmp.eq.s32.totalorder %s41, 0
      %p508 = por %p506, %p507
      %p509 = scmp.ne.s32.totalorder %s497, %s498
      %p510 = scmp.eq.s32.totalorder %s42, 1
      %p511 = por %p509, %p510
      %p513 = scmp.ne.s32.totalorder %s498, %s512
      %p514 = scmp.eq.s32.totalorder %s42, 0
      %p515 = por %p513, %p514
      %s517 = sadd.s32 %s516, 1
      %p520 = scmp.eq.s32.totalorder %s36, 1
      %p521 = scmp.ne.s32.totalorder %s516, %s518
      %p522 = scmp.eq.s32.totalorder %s36, 0
      %p523 = por %p521, %p522
      %p524 = scmp.ne.s32.totalorder %s516, %s518
      %p525 = scmp.eq.s32.totalorder %s41, 1
      %p526 = por %p524, %p525
      %p527 = scmp.ne.s32.totalorder %s518, %s519
      %p528 = scmp.eq.s32.totalorder %s41, 0
      %p529 = por %p527, %p528
      %p530 = scmp.ne.s32.totalorder %s518, %s519
      %p531 = scmp.eq.s32.totalorder %s42, 1
      %p532 = por %p530, %p531
      %p534 = scmp.ne.s32.totalorder %s519, %s533
      %p535 = scmp.eq.s32.totalorder %s42, 0
      %p536 = por %p534, %p535
      %s538 = sadd.s32 %s537, 1
      %p541 = scmp.eq.s32.totalorder %s36, 1
      %p542 = scmp.ne.s32.totalorder %s537, %s539
      %p543 = scmp.eq.s32.totalorder %s36, 0
      %p544 = por %p542, %p543
      %p545 = scmp.ne.s32.totalorder %s537, %s539
      %p546 = scmp.eq.s32.totalorder %s41, 1
      %p547 = por %p545, %p546
      %p548 = scmp.ne.s32.totalorder %s539, %s540
      %p549 = scmp.eq.s32.totalorder %s41, 0
      %p550 = por %p548, %p549
      %p551 = scmp.ne.s32.totalorder %s539, %s540
      %p552 = scmp.eq.s32.totalorder %s42, 1
      %p553 = por %p551, %p552
      %p555 = scmp.ne.s32.totalorder %s540, %s554
      %p556 = scmp.eq.s32.totalorder %s42, 0
      %p557 = por %p555, %p556
      %s558 = ssub.s32 %s36, %s43
      %p559 = scmp.eq.s32.totalorder %s558, 0
      %s561 = sadd.s32 %s560, 1
      %s562 = scalar_select %p559, %s560, %s561
      %p565 = pneg %p559
      %p566 = scmp.eq.s32.totalorder %s36, 1
      %p567 = por %p565, %p566
      %p568 = scmp.ne.s32.totalorder %s560, %s563
      %p569 = scmp.eq.s32.totalorder %s36, 0
      %p570 = por %p568, %p569
      %p571 = scmp.ne.s32.totalorder %s560, %s563
      %p572 = scmp.eq.s32.totalorder %s41, 1
      %p573 = por %p571, %p572
      %p574 = scmp.ne.s32.totalorder %s563, %s564
      %p575 = scmp.eq.s32.totalorder %s41, 0
      %p576 = por %p574, %p575
      %p577 = scmp.ne.s32.totalorder %s563, %s564
      %p578 = scmp.eq.s32.totalorder %s42, 1
      %p579 = por %p577, %p578
      %p581 = scmp.ne.s32.totalorder %s564, %s580
      %p582 = scmp.eq.s32.totalorder %s42, 0
      %p583 = por %p581, %p582
      %p584 = scmp.le.s32.totalorder 1, %s36
      %p585 = scmp.lt.s32.totalorder %s36, 3
      %p586 = pnand %p584, %p585
      %p587 = pneg %p586
      // Predicated region
      $region9: #{context_decoder_pallas.1} parent=5 // pred_check
        _
      $region10: #{context_decoder_pallas.1} parent=5 // pred_check_branch
        %589 = sbr.rel (%p586) target = $region12
      $region11: #{context_decoder_pallas.1} parent=5 // pred_region
        %s590 = ssub.s32 %s36, 1
        // Predicated region
        $region13: #{context_decoder_pallas.1} parent=11 // pred_check
          %p591 = pneg %p109
        $region14: #{context_decoder_pallas.1} parent=11 // pred_check_branch
          %593 = sbr.rel (%p591) target = $region16
        $region15: #{context_decoder_pallas.1} parent=11 // pred_region
          %s595 = ssub.s32 32, 32
          %596 = vsyncadd [#allocation3], %s595
          %s598 = sshll.u32 [#allocation2], 4
          %s599 = int_to_ptr.vmem [resolvable:$true] %s598
          %601 = dma.hbm_to_vmem [thread:$0]  %s2, 32, %s599, [#allocation3]
        $region16: #{context_decoder_pallas.1} parent=11 // pred_fallthru
          _
        // Predicated region
        $region17: #{context_decoder_pallas.1} parent=11 // pred_check
          %p602 = pneg %p130
        $region18: #{context_decoder_pallas.1} parent=11 // pred_check_branch
          %604 = sbr.rel (%p602) target = $region20
        $region19: #{context_decoder_pallas.1} parent=11 // pred_region
          _
        $region20: #{context_decoder_pallas.1} parent=11 // pred_fallthru
          _
        // Predicated region
        $region21: #{context_decoder_pallas.1} parent=11 // pred_check
          %p605 = pneg %p151
        $region22: #{context_decoder_pallas.1} parent=11 // pred_check_branch
          %607 = sbr.rel (%p605) target = $region24
        $region23: #{context_decoder_pallas.1} parent=11 // pred_region
          _
        $region24: #{context_decoder_pallas.1} parent=11 // pred_fallthru
          _
        // Predicated region
        $region25: #{context_decoder_pallas.1} parent=11 // pred_check
          %p608 = pneg %p172
        $region26: #{context_decoder_pallas.1} parent=11 // pred_check_branch
          %610 = sbr.rel (%p608) target = $region28
        $region27: #{context_decoder_pallas.1} parent=11 // pred_region
          _
        $region28: #{context_decoder_pallas.1} parent=11 // pred_fallthru
          _
        // Predicated region
        $region29: #{context_decoder_pallas.1} parent=11 // pred_check
          %p611 = pneg %p193
        $region30: #{context_decoder_pallas.1} parent=11 // pred_check_branch
          %613 = sbr.rel (%p611) target = $region32
        $region31: #{context_decoder_pallas.1} parent=11 // pred_region
          _
        $region32: #{context_decoder_pallas.1} parent=11 // pred_fallthru
          _
        // Predicated region
        $region33: #{context_decoder_pallas.1} parent=11 // pred_check
          %p614 = pneg %p214
        $region34: #{context_decoder_pallas.1} parent=11 // pred_check_branch
          %616 = sbr.rel (%p614) target = $region36
        $region35: #{context_decoder_pallas.1} parent=11 // pred_region
          _
        $region36: #{context_decoder_pallas.1} parent=11 // pred_fallthru
          _
        // Predicated region
        $region37: #{context_decoder_pallas.1} parent=11 // pred_check
          %p617 = pneg %p235
        $region38: #{context_decoder_pallas.1} parent=11 // pred_check_branch
          %619 = sbr.rel (%p617) target = $region40
        $region39: #{context_decoder_pallas.1} parent=11 // pred_region
          _
        $region40: #{context_decoder_pallas.1} parent=11 // pred_fallthru
          _
        // Predicated region
        $region41: #{context_decoder_pallas.1} parent=11 // pred_check
          %p620 = pneg %p256
        $region42: #{context_decoder_pallas.1} parent=11 // pred_check_branch
          %622 = sbr.rel (%p620) target = $region44
        $region43: #{context_decoder_pallas.1} parent=11 // pred_region
          _
        $region44: #{context_decoder_pallas.1} parent=11 // pred_fallthru
          _
        // Predicated region
        $region45: #{context_decoder_pallas.1} parent=11 // pred_check
          %p623 = pneg %p277
        $region46: #{context_decoder_pallas.1} parent=11 // pred_check_branch
          %625 = sbr.rel (%p623) target = $region48
        $region47: #{context_decoder_pallas.1} parent=11 // pred_region
          _
        $region48: #{context_decoder_pallas.1} parent=11 // pred_fallthru
          _
        // Predicated region
        $region49: #{context_decoder_pallas.1} parent=11 // pred_check
          %p626 = pneg %p298
        $region50: #{context_decoder_pallas.1} parent=11 // pred_check_branch
          %628 = sbr.rel (%p626) target = $region52
        $region51: #{context_decoder_pallas.1} parent=11 // pred_region
          _
        $region52: #{context_decoder_pallas.1} parent=11 // pred_fallthru
          _
        // Predicated region
        $region53: #{context_decoder_pallas.1} parent=11 // pred_check
          %p629 = pneg %p319
        $region54: #{context_decoder_pallas.1} parent=11 // pred_check_branch
          %631 = sbr.rel (%p629) target = $region56
        $region55: #{context_decoder_pallas.1} parent=11 // pred_region
          _
        $region56: #{context_decoder_pallas.1} parent=11 // pred_fallthru
          _
        // Predicated region
        $region57: #{context_decoder_pallas.1} parent=11 // pred_check
          %p632 = pneg %p340
        $region58: #{context_decoder_pallas.1} parent=11 // pred_check_branch
          %634 = sbr.rel (%p632) target = $region60
        $region59: #{context_decoder_pallas.1} parent=11 // pred_region
          _
        $region60: #{context_decoder_pallas.1} parent=11 // pred_fallthru
          _
        // Predicated region
        $region61: #{context_decoder_pallas.1} parent=11 // pred_check
          %p635 = pneg %p361
        $region62: #{context_decoder_pallas.1} parent=11 // pred_check_branch
          %637 = sbr.rel (%p635) target = $region64
        $region63: #{context_decoder_pallas.1} parent=11 // pred_region
          _
        $region64: #{context_decoder_pallas.1} parent=11 // pred_fallthru
          _
        // Predicated region
        $region65: #{context_decoder_pallas.1} parent=11 // pred_check
          %p638 = pneg %p382
        $region66: #{context_decoder_pallas.1} parent=11 // pred_check_branch
          %640 = sbr.rel (%p638) target = $region68
        $region67: #{context_decoder_pallas.1} parent=11 // pred_region
          _
        $region68: #{context_decoder_pallas.1} parent=11 // pred_fallthru
          _
        // Predicated region
        $region69: #{context_decoder_pallas.1} parent=11 // pred_check
          %p641 = pneg %p403
        $region70: #{context_decoder_pallas.1} parent=11 // pred_check_branch
          %643 = sbr.rel (%p641) target = $region72
        $region71: #{context_decoder_pallas.1} parent=11 // pred_region
          %s645 = ssub.s32 32, 32
          %646 = vsyncadd [#allocation6], %s645
          %s647 = sshll.u32 [#allocation5], 4
          %s648 = int_to_ptr.vmem [resolvable:$true] %s647
          %653 = dma.hbm_to_vmem [thread:$0]  %s16, 32, %s648, [#allocation6], 16, 16, 1
        $region72: #{context_decoder_pallas.1} parent=11 // pred_fallthru
          _
        // Predicated region
        $region73: #{context_decoder_pallas.1} parent=11 // pred_check
          %p654 = pneg %p424
        $region74: #{context_decoder_pallas.1} parent=11 // pred_check_branch
          %656 = sbr.rel (%p654) target = $region76
        $region75: #{context_decoder_pallas.1} parent=11 // pred_region
          _
        $region76: #{context_decoder_pallas.1} parent=11 // pred_fallthru
          _
        // Predicated region
        $region77: #{context_decoder_pallas.1} parent=11 // pred_check
          %p657 = pneg %p445
        $region78: #{context_decoder_pallas.1} parent=11 // pred_check_branch
          %659 = sbr.rel (%p657) target = $region80
        $region79: #{context_decoder_pallas.1} parent=11 // pred_region
          %s661 = ssub.s32 32, 32
          %662 = vsyncadd [#allocation6], %s661
          %s663 = sshll.u32 [#allocation7], 4
          %s664 = int_to_ptr.vmem [resolvable:$true] %s663
          %669 = dma.hbm_to_vmem [thread:$0]  %s18, 32, %s664, [#allocation6], 16, 16, 1
        $region80: #{context_decoder_pallas.1} parent=11 // pred_fallthru
          _
        // Predicated region
        $region81: #{context_decoder_pallas.1} parent=11 // pred_check
          %p670 = pneg %p466
        $region82: #{context_decoder_pallas.1} parent=11 // pred_check_branch
          %672 = sbr.rel (%p670) target = $region84
        $region83: #{context_decoder_pallas.1} parent=11 // pred_region
          _
        $region84: #{context_decoder_pallas.1} parent=11 // pred_fallthru
          _
        // Predicated region
        $region85: #{context_decoder_pallas.1} parent=11 // pred_check
          %p673 = pneg %p487
        $region86: #{context_decoder_pallas.1} parent=11 // pred_check_branch
          %675 = sbr.rel (%p673) target = $region88
        $region87: #{context_decoder_pallas.1} parent=11 // pred_region
          %s677 = ssub.s32 32, 32
          %678 = vsyncadd [#allocation9], %s677
          %s679 = sshll.u32 [#allocation8], 4
          %s680 = int_to_ptr.vmem [resolvable:$true] %s679
          %685 = dma.hbm_to_vmem [thread:$0]  %s20, 32, %s680, [#allocation9], 16, 16, 1
        $region88: #{context_decoder_pallas.1} parent=11 // pred_fallthru
          _
        // Predicated region
        $region89: #{context_decoder_pallas.1} parent=11 // pred_check
          %p686 = pneg %p508
        $region90: #{context_decoder_pallas.1} parent=11 // pred_check_branch
          %688 = sbr.rel (%p686) target = $region92
        $region91: #{context_decoder_pallas.1} parent=11 // pred_region
          _
        $region92: #{context_decoder_pallas.1} parent=11 // pred_fallthru
          _
        // Predicated region
        $region93: #{context_decoder_pallas.1} parent=11 // pred_check
          %p689 = pneg %p529
        $region94: #{context_decoder_pallas.1} parent=11 // pred_check_branch
          %691 = sbr.rel (%p689) target = $region96
        $region95: #{context_decoder_pallas.1} parent=11 // pred_region
          _
        $region96: #{context_decoder_pallas.1} parent=11 // pred_fallthru
          _
        // Predicated region
        $region97: #{context_decoder_pallas.1} parent=11 // pred_check
          %p692 = pneg %p550
        $region98: #{context_decoder_pallas.1} parent=11 // pred_check_branch
          %694 = sbr.rel (%p692) target = $region100
        $region99: #{context_decoder_pallas.1} parent=11 // pred_region
          _
        $region100: #{context_decoder_pallas.1} parent=11 // pred_fallthru
          _
      $region12: #{context_decoder_pallas.1} parent=5 // pred_fallthru
        _
      %p695 = scmp.lt.s32.totalorder %s36, 2
      // Predicated region
      $region101: #{context_decoder_pallas.1} parent=5 // pred_check
        %p696 = pneg %p695
      $region102: #{context_decoder_pallas.1} parent=5 // pred_check_branch
        %698 = sbr.rel (%p696) target = $region104
      $region103: #{context_decoder_pallas.1} parent=5 // pred_region
        // Predicated region
        $region105: #{context_decoder_pallas.1} parent=103 // pred_check
          %p699 = pneg %p56
        $region106: #{context_decoder_pallas.1} parent=103 // pred_check_branch
          %701 = sbr.rel (%p699) target = $region108
        $region107: #{context_decoder_pallas.1} parent=103 // pred_region
          %p702 = scmp.lt.s32.totalorder %s36, 1
          %s703 = scalar_select %p702, %s36, 1
          %s704 = smul.addr %s703, 8
          %s705 = scalar_lea.vmem %s0, %s704
        $region108: #{context_decoder_pallas.1} parent=103 // pred_fallthru
          _
        // Predicated region
        $region109: #{context_decoder_pallas.1} parent=103 // pred_check
          %p706 = pneg %p82
        $region110: #{context_decoder_pallas.1} parent=103 // pred_check_branch
          %708 = sbr.rel (%p706) target = $region112
        $region111: #{context_decoder_pallas.1} parent=103 // pred_region
          %p709 = scmp.lt.s32.totalorder %s36, 1
          %s710 = scalar_select %p709, %s36, 1
          %s711 = smul.addr %s710, 2
          %s712 = smul.addr %s711, 8
          %s713 = scalar_lea.vmem %s1, %s712
        $region112: #{context_decoder_pallas.1} parent=103 // pred_fallthru
          _
      $region104: #{context_decoder_pallas.1} parent=5 // pred_fallthru
        _
      %p714 = scmp.le.s32.totalorder 1, %s36
      %p715 = scmp.lt.s32.totalorder %s36, 3
      %p716 = pnand %p714, %p715
      %p717 = pneg %p716
      // Predicated region
      $region113: #{context_decoder_pallas.1} parent=5 // pred_check
        _
      $region114: #{context_decoder_pallas.1} parent=5 // pred_check_branch
        %719 = sbr.rel (%p716) target = $region116
      $region115: #{context_decoder_pallas.1} parent=5 // pred_region
        %s720 = ssub.s32 %s36, 1
        // Predicated region
        $region117: #{context_decoder_pallas.1} parent=115 // pred_check
          %p721 = pneg %p109
        $region118: #{context_decoder_pallas.1} parent=115 // pred_check_branch
          %723 = sbr.rel (%p721) target = $region120
        $region119: #{context_decoder_pallas.1} parent=115 // pred_region
          %724 = dma.done [#allocation3], 32
        $region120: #{context_decoder_pallas.1} parent=115 // pred_fallthru
          _
        // Predicated region
        $region121: #{context_decoder_pallas.1} parent=115 // pred_check
          %p725 = pneg %p403
        $region122: #{context_decoder_pallas.1} parent=115 // pred_check_branch
          %727 = sbr.rel (%p725) target = $region124
        $region123: #{context_decoder_pallas.1} parent=115 // pred_region
          %728 = dma.done [#allocation6], 32
        $region124: #{context_decoder_pallas.1} parent=115 // pred_fallthru
          _
        // Predicated region
        $region125: #{context_decoder_pallas.1} parent=115 // pred_check
          %p729 = pneg %p445
        $region126: #{context_decoder_pallas.1} parent=115 // pred_check_branch
          %731 = sbr.rel (%p729) target = $region128
        $region127: #{context_decoder_pallas.1} parent=115 // pred_region
          %732 = dma.done [#allocation6], 32
        $region128: #{context_decoder_pallas.1} parent=115 // pred_fallthru
          _
        // Predicated region
        $region129: #{context_decoder_pallas.1} parent=115 // pred_check
          %p733 = pneg %p487
        $region130: #{context_decoder_pallas.1} parent=115 // pred_check_branch
          %735 = sbr.rel (%p733) target = $region132
        $region131: #{context_decoder_pallas.1} parent=115 // pred_region
          %736 = dma.done [#allocation9], 32
        $region132: #{context_decoder_pallas.1} parent=115 // pred_fallthru
          _
        %p737 = scmp.lt.s32.totalorder %s41, 1
        %s738 = scalar_select %p737, %s41, 1
        %s739 = smul.addr %s738, 8
        %s740 = scalar_lea.vmem %s0, %s739
        %p741 = pneg %p62
        %p742 = pneg %p59
        %p743 = scmp.lt.s32.totalorder %s41, 1
        %s744 = scalar_select %p743, %s41, 1
        %s745 = smul.addr %s744, 2
        %s746 = smul.addr %s745, 8
        %s747 = scalar_lea.vmem %s1, %s746
        %p748 = pneg %p88
        %p749 = pneg %p85
        %p750 = pneg %p109
        %p751 = pneg %p106
        %p752 = pneg %p130
        %p753 = pneg %p127
        %p754 = pneg %p151
        %p755 = pneg %p148
        %p756 = pneg %p172
        %p757 = pneg %p169
        %p758 = pneg %p193
        %p759 = pneg %p190
        %p760 = pneg %p214
        %p761 = pneg %p211
        %p762 = pneg %p235
        %p763 = pneg %p232
        %p764 = pneg %p256
        %p765 = pneg %p253
        %p766 = pneg %p277
        %p767 = pneg %p274
        %p768 = pneg %p298
        %p769 = pneg %p295
        %p770 = pneg %p319
        %p771 = pneg %p316
        %p772 = pneg %p340
        %p773 = pneg %p337
        %p774 = pneg %p361
        %p775 = pneg %p358
        %p776 = pneg %p382
        %p777 = pneg %p379
        %p778 = pneg %p403
        %p779 = pneg %p400
        %p780 = pneg %p424
        %p781 = pneg %p421
        %p782 = pneg %p445
        %p783 = pneg %p442
        %p784 = pneg %p466
        %p785 = pneg %p463
        %p786 = pneg %p487
        %p787 = pneg %p484
        %p788 = pneg %p508
        %p789 = pneg %p505
        %p790 = pneg %p529
        %p791 = pneg %p526
        %p792 = pneg %p550
        %p793 = pneg %p547
        %p794 = pneg %p576
        %p795 = pneg %p573
        %s796 = sand.u32 %s563, 1
        %s797 = scalar_lea.sflag [#allocation4], %s796
        %s798 = sand.u32 %s563, 1
        %s799 = smul.addr %s798, 8
        %s800 = scalar_lea.vmem [#allocation10], %s799
        %p801 = scmp.lt.s32.totalorder %s41, 1
        %s802 = scalar_select %p801, %s41, 1
        %s803 = smul.addr %s802, 8
        %s804 = scalar_lea.vmem %s0, %s803
        %p805 = scmp.lt.s32.totalorder %s41, 1
        %s806 = scalar_select %p805, %s41, 1
        %s807 = smul.addr %s806, 2
        %s808 = smul.addr %s807, 8
        %s809 = scalar_lea.vmem %s1, %s808
        %v810 = vld [vmem:[%s804] sm:$0xff]
        %v811 = vld [vmem:[%s809] sm:$0xff]
        %v812 = vld [vmem:[%s809 + $0x8] sm:$0xff]
        %v813 = vld [vmem:[#allocation2] sm:$0x3]
        %vm814 = vcmask 523264
        %v815 = vsel %vm814, %v811, 0.0
        %816 = vadd.xlane.f32.xlu0 %v815
        %v817 = vpop.xlane.xlu0 %816
        %v818 = vsel %vm814, %v812, 0.0
        %819 = vadd.xlane.f32.xlu0 %v818
        %v820 = vpop.xlane.xlu0 %819
        %v821 = vrcp.pop 64.0
        %v822 = vmul.f32 %v817, %v821
        %v823 = vmul.f32 %v820, %v821
        %v824 = vsub.f32 %v811, %v822
        %v825 = vsub.f32 %v812, %v823
        %v826 = vmul.f32 %v824, %v824
        %v827 = vmul.f32 %v825, %v825
        %v828 = vsel %vm814, %v826, 0.0
        %829 = vadd.xlane.f32.xlu0 %v828
        %v830 = vpop.xlane.xlu0 %829
        %v831 = vsel %vm814, %v827, 0.0
        %832 = vadd.xlane.f32.xlu0 %v831
        %v833 = vpop.xlane.xlu0 %832
        %v834 = vmul.f32 %v830, %v821
        %v835 = vmul.f32 %v833, %v821
        %v836 = vadd.f32 %v834, 1e-05
        %v837 = vadd.f32 %v835, 1e-05
        %v838 = vrsqrt.pop %v836
        %v839 = vrsqrt.pop %v837
        %v840 = vmul.f32 %v824, %v838
        %v841 = vmul.f32 %v825, %v839
        %v842 = vlaneseq
        %v843 = vshrl.u32 %v842, 7
        %v844 = vsub.s32 0, %v843
        %v845 = vrot.slane %v813, %v844
        %v846 = vmul.f32 %v840, %v845
        %v847 = vmul.f32 %v841, %v845
        %v848 = vlaneseq
        %v849 = vshrl.u32 %v848, 7
        %v850 = vsub.s32 1, %v849
        %v851 = vrot.slane %v813, %v850
        %v852 = vadd.f32 %v846, %v851
        %v853 = vadd.f32 %v847, %v851
        %v854 = vld [vmem:[%s3] sm:$0xf]
        %v855 = vld [vmem:[%s3 + $0x4] sm:$0xf]
        %v856 = vld [vmem:[%s3 + $0x8] sm:$0xf]
        %v857 = vld [vmem:[%s3 + $0xc] sm:$0xf]
        %v858 = vld [vmem:[%s3 + $0x10] sm:$0xf]
        %v859 = vld [vmem:[%s3 + $0x14] sm:$0xf]
        %v860 = vld [vmem:[%s3 + $0x18] sm:$0xf]
        %v861 = vld [vmem:[%s3 + $0x1c] sm:$0xf]
        %v862 = vunpack.c.l.bf16 %v854
        %v863 = vunpack.c.l.bf16 %v855
        %v864 = vunpack.c.l.bf16 %v856
        %v865 = vunpack.c.l.bf16 %v857
        %v866 = vunpack.c.l.bf16 %v858
        %v867 = vunpack.c.l.bf16 %v859
        %v868 = vunpack.c.l.bf16 %v860
        %v869 = vunpack.c.l.bf16 %v861
        %v870 = vld [vmem:[%s4] sm:$0x1]
        %v872 = vlaneseq
        %v873 = vshrl.u32 %v872, 7
        %v874 = vsub.s32 0, %v873
        %v875 = vrot.slane %v870, %v874
        %v878 = vsel %vm814, %v852, 0
        %v881 = vsel %vm814, %v853, 0
        %883 = vmatprep.subr.mxu0 0.0
        %884 = vmatpush1.msra.mxu0 %v862
        %885 = vmatprep.subr.mxu0 0.0
        %886 = vmatpush1.msra.mxu0 %v863
        %887 = vmatprep.subr.mxu0 0.0
        %888 = vmatpush1.msra.mxu0 %v864
        %889 = vmatprep.subr.mxu0 0.0
        %890 = vmatpush1.msra.mxu0 %v865
        %891 = vmatprep.subr.mxu0 0.0
        %892 = vmatpush1.msra.mxu0 %v866
        %893 = vmatprep.subr.mxu0 0.0
        %894 = vmatpush1.msra.mxu0 %v867
        %895 = vmatprep.subr.mxu0 0.0
        %896 = vmatpush1.msra.mxu0 %v868
        %897 = vmatprep.subr.mxu0 0.0
        %898 = vmatpush1.msra.mxu0 %v869
        %899 = vmatprep.subr.mxu0 0.0
        %900 = vmatpush1.msra.mxu0 0.0
        %901 = vmatprep.subr.mxu0 0.0
        %902 = vmatpush1.msra.mxu0 0.0
        %903 = vmatprep.subr.mxu0 0.0
        %904 = vmatpush1.msra.mxu0 0.0
        %905 = vmatprep.subr.mxu0 0.0
        %906 = vmatpush1.msra.mxu0 0.0
        %907 = vmatprep.subr.mxu0 0.0
        %908 = vmatpush1.msra.mxu0 0.0
        %909 = vmatprep.subr.mxu0 0.0
        %910 = vmatpush1.msra.mxu0 0.0
        %911 = vmatprep.subr.mxu0 0.0
        %912 = vmatpush1.msra.mxu0 0.0
        %913 = vmatprep.subr.mxu0 0.0
        %914 = vmatpush1.msra.mxu0 0.0
        %915 = vmatprep.subr.mxu0 0.0
        %916 = vmatpush1.msra.mxu0 0.0
        %917 = vmatprep.subr.mxu0 0.0
        %918 = vmatpush1.msra.mxu0 0.0
        %919 = vmatprep.subr.mxu0 0.0
        %920 = vmatpush1.msra.mxu0 0.0
        %921 = vmatprep.subr.mxu0 0.0
        %922 = vmatpush1.msra.mxu0 0.0
        %923 = vmatprep.subr.mxu0 0.0
        %924 = vmatpush1.msra.mxu0 0.0
        %925 = vmatprep.subr.mxu0 0.0
        %926 = vmatpush1.msra.mxu0 0.0
        %927 = vmatprep.subr.mxu0 0.0
        %928 = vmatpush1.msra.mxu0 0.0
        %929 = vmatprep.subr.mxu0 0.0
        %930 = vmatpush1.msra.mxu0 0.0
        %931 = vmatprep.subr.mxu0 0.0
        %932 = vmatpush1.msra.mxu0 0.0
        %933 = vmatprep.subr.mxu0 0.0
        %934 = vmatpush1.msra.mxu0 0.0
        %935 = vmatprep.subr.mxu0 0.0
        %936 = vmatpush1.msra.mxu0 0.0
        %937 = vmatprep.subr.mxu0 0.0
        %938 = vmatpush1.msra.mxu0 0.0
        %939 = vmatprep.subr.mxu0 0.0
        %940 = vmatpush1.msra.mxu0 0.0
        %941 = vmatprep.subr.mxu0 0.0
        %942 = vmatpush1.msra.mxu0 0.0
        %943 = vmatprep.subr.mxu0 0.0
        %944 = vmatpush1.msra.mxu0 0.0
        %945 = vmatprep.subr.mxu0 0.0
        %946 = vmatpush1.msra.mxu0 0.0
        %947 = vmatprep.mubr.f32.mxu0 0.0
        %948 = vmatmul.mubr.f32.gmra.mrb[0].mxu0 %v878
        %v949 = vpop.f32.mrb[0].mxu0
        %v950 = vadd.f32 %v875, %v949
        %v951 = vpop.f32.mrb[0].mxu0
        %952 = vmatprep.mubr.f32.mxu0 0.0
        %953 = vmatmul.mubr.f32.gmra.mrb[0].mxu0 %v881
        %v954 = vpop.f32.mrb[0].mxu0
        %v955 = vadd.f32 %v875, %v954
        %v956 = vpop.f32.mrb[0].mxu0
        %957 = vdwg.mxu0
        %v958 = vld [vmem:[%s5] sm:$0x3]
        %vm959 = vcmask 261120
        %v960 = vsel %vm959, %v950, 0.0
        %961 = vadd.xlane.f32.xlu0 %v960
        %v962 = vpop.xlane.xlu0 %961
        %v963 = vsel %vm959, %v955, 0.0
        %964 = vadd.xlane.f32.xlu0 %v963
        %v965 = vpop.xlane.xlu0 %964
        %v966 = vrcp.pop 32.0
        %v967 = vmul.f32 %v962, %v966
        %v968 = vmul.f32 %v965, %v966
        %v969 = vsub.f32 %v950, %v967
        %v970 = vsub.f32 %v955, %v968
        %v971 = vmul.f32 %v969, %v969
        %v972 = vmul.f32 %v970, %v970
        %v973 = vsel %vm959, %v971, 0.0
        %974 = vadd.xlane.f32.xlu0 %v973
        %v975 = vpop.xlane.xlu0 %974
        %v976 = vsel %vm959, %v972, 0.0
        %977 = vadd.xlane.f32.xlu0 %v976
        %v978 = vpop.xlane.xlu0 %977
        %v979 = vmul.f32 %v975, %v966
        %v980 = vmul.f32 %v978, %v966
        %v981 = vadd.f32 %v979, 1e-05
        %v982 = vadd.f32 %v980, 1e-05
        %v983 = vrsqrt.pop %v981
        %v984 = vrsqrt.pop %v982
        %v985 = vmul.f32 %v969, %v983
        %v986 = vmul.f32 %v970, %v984
        %v987 = vlaneseq
        %v988 = vshrl.u32 %v987, 7
        %v989 = vsub.s32 0, %v988
        %v990 = vrot.slane %v958, %v989
        %v991 = vmul.f32 %v985, %v990
        %v992 = vmul.f32 %v986, %v990
        %v993 = vlaneseq
        %v994 = vshrl.u32 %v993, 7
        %v995 = vsub.s32 1, %v994
        %v996 = vrot.slane %v958, %v995
        %v997 = vadd.f32 %v991, %v996
        %v998 = vadd.f32 %v992, %v996
        %v999 = vld [vmem:[%s6] sm:$0x3]
        %v1000 = vsel %vm814, %v810, 0.0
        %1001 = vadd.xlane.f32.xlu0 %v1000
        %v1002 = vpop.xlane.xlu0 %1001
        %v1003 = vmul.f32 %v1002, %v821
        %v1004 = vsub.f32 %v810, %v1003
        %v1005 = vmul.f32 %v1004, %v1004
        %v1006 = vsel %vm814, %v1005, 0.0
        %1007 = vadd.xlane.f32.xlu0 %v1006
        %v1008 = vpop.xlane.xlu0 %1007
        %v1009 = vmul.f32 %v1008, %v821
        %v1010 = vadd.f32 %v1009, 1e-05
        %v1011 = vrsqrt.pop %v1010
        %v1012 = vmul.f32 %v1004, %v1011
        %v1013 = vlaneseq
        %v1014 = vshrl.u32 %v1013, 7
        %v1015 = vsub.s32 0, %v1014
        %v1016 = vrot.slane %v999, %v1015
        %v1017 = vmul.f32 %v1012, %v1016
        %v1018 = vlaneseq
        %v1019 = vshrl.u32 %v1018, 7
        %v1020 = vsub.s32 1, %v1019
        %v1021 = vrot.slane %v999, %v1020
        %v1022 = vadd.f32 %v1017, %v1021
        %v1023 = vld [vmem:[%s7] sm:$0xf]
        %v1024 = vld [vmem:[%s7 + $0x4] sm:$0xf]
        %v1025 = vld [vmem:[%s7 + $0x8] sm:$0xf]
        %v1026 = vld [vmem:[%s7 + $0xc] sm:$0xf]
        %v1027 = vld [vmem:[%s7 + $0x10] sm:$0xf]
        %v1028 = vld [vmem:[%s7 + $0x14] sm:$0xf]
        %v1029 = vld [vmem:[%s7 + $0x18] sm:$0xf]
        %v1030 = vld [vmem:[%s7 + $0x1c] sm:$0xf]
        %v1031 = vunpack.c.l.bf16 %v1023
        %v1032 = vunpack.c.l.bf16 %v1024
        %v1033 = vunpack.c.l.bf16 %v1025
        %v1034 = vunpack.c.l.bf16 %v1026
        %v1035 = vunpack.c.l.bf16 %v1027
        %v1036 = vunpack.c.l.bf16 %v1028
        %v1037 = vunpack.c.l.bf16 %v1029
        %v1038 = vunpack.c.l.bf16 %v1030
        %v1039 = vld [vmem:[%s8] sm:$0x1]
        %v1041 = vlaneseq
        %v1042 = vshrl.u32 %v1041, 7
        %v1043 = vsub.s32 0, %v1042
        %v1044 = vrot.slane %v1039, %v1043
        %v1047 = vsel %vm814, %v1022, 0
        %1049 = vmatprep.subr.mxu0 0.0
        %1050 = vmatpush1.msra.mxu0 %v1031
        %1051 = vmatprep.subr.mxu0 0.0
        %1052 = vmatpush1.msra.mxu0 %v1032
        %1053 = vmatprep.subr.mxu0 0.0
        %1054 = vmatpush1.msra.mxu0 %v1033
        %1055 = vmatprep.subr.mxu0 0.0
        %1056 = vmatpush1.msra.mxu0 %v1034
        %1057 = vmatprep.subr.mxu0 0.0
        %1058 = vmatpush1.msra.mxu0 %v1035
        %1059 = vmatprep.subr.mxu0 0.0
        %1060 = vmatpush1.msra.mxu0 %v1036
        %1061 = vmatprep.subr.mxu0 0.0
        %1062 = vmatpush1.msra.mxu0 %v1037
        %1063 = vmatprep.subr.mxu0 0.0
        %1064 = vmatpush1.msra.mxu0 %v1038
        %1065 = vmatprep.subr.mxu0 0.0
        %1066 = vmatpush1.msra.mxu0 0.0
        %1067 = vmatprep.subr.mxu0 0.0
        %1068 = vmatpush1.msra.mxu0 0.0
        %1069 = vmatprep.subr.mxu0 0.0
        %1070 = vmatpush1.msra.mxu0 0.0
        %1071 = vmatprep.subr.mxu0 0.0
        %1072 = vmatpush1.msra.mxu0 0.0
        %1073 = vmatprep.subr.mxu0 0.0
        %1074 = vmatpush1.msra.mxu0 0.0
        %1075 = vmatprep.subr.mxu0 0.0
        %1076 = vmatpush1.msra.mxu0 0.0
        %1077 = vmatprep.subr.mxu0 0.0
        %1078 = vmatpush1.msra.mxu0 0.0
        %1079 = vmatprep.subr.mxu0 0.0
        %1080 = vmatpush1.msra.mxu0 0.0
        %1081 = vmatprep.subr.mxu0 0.0
        %1082 = vmatpush1.msra.mxu0 0.0
        %1083 = vmatprep.subr.mxu0 0.0
        %1084 = vmatpush1.msra.mxu0 0.0
        %1085 = vmatprep.subr.mxu0 0.0
        %1086 = vmatpush1.msra.mxu0 0.0
        %1087 = vmatprep.subr.mxu0 0.0
        %1088 = vmatpush1.msra.mxu0 0.0
        %1089 = vmatprep.subr.mxu0 0.0
        %1090 = vmatpush1.msra.mxu0 0.0
        %1091 = vmatprep.subr.mxu0 0.0
        %1092 = vmatpush1.msra.mxu0 0.0
        %1093 = vmatprep.subr.mxu0 0.0
        %1094 = vmatpush1.msra.mxu0 0.0
        %1095 = vmatprep.subr.mxu0 0.0
        %1096 = vmatpush1.msra.mxu0 0.0
        %1097 = vmatprep.subr.mxu0 0.0
        %1098 = vmatpush1.msra.mxu0 0.0
        %1099 = vmatprep.subr.mxu0 0.0
        %1100 = vmatpush1.msra.mxu0 0.0
        %1101 = vmatprep.subr.mxu0 0.0
        %1102 = vmatpush1.msra.mxu0 0.0
        %1103 = vmatprep.subr.mxu0 0.0
        %1104 = vmatpush1.msra.mxu0 0.0
        %1105 = vmatprep.subr.mxu0 0.0
        %1106 = vmatpush1.msra.mxu0 0.0
        %1107 = vmatprep.subr.mxu0 0.0
        %1108 = vmatpush1.msra.mxu0 0.0
        %1109 = vmatprep.subr.mxu0 0.0
        %1110 = vmatpush1.msra.mxu0 0.0
        %1111 = vmatprep.subr.mxu0 0.0
        %1112 = vmatpush1.msra.mxu0 0.0
        %1113 = vmatprep.mubr.f32.mxu0 0.0
        %1114 = vmatmul.mubr.f32.gmra.mrb[0].mxu0 %v1047
        %v1115 = vpop.f32.mrb[0].mxu0
        %v1116 = vadd.f32 %v1044, %v1115
        %v1117 = vpop.f32.mrb[0].mxu0
        %1118 = vdwg.mxu0
        %v1119 = vld [vmem:[%s9] sm:$0x3f]
        %v1120 = vsel %vm959, %v1116, 0.0
        %1121 = vadd.xlane.f32.xlu0 %v1120
        %v1122 = vpop.xlane.xlu0 %1121
        %v1123 = vmul.f32 %v1122, %v966
        %v1124 = vsub.f32 %v1116, %v1123
        %v1125 = vmul.f32 %v1124, %v1124
        %v1126 = vsel %vm959, %v1125, 0.0
        %1127 = vadd.xlane.f32.xlu0 %v1126
        %v1128 = vpop.xlane.xlu0 %1127
        %v1129 = vmul.f32 %v1128, %v966
        %v1130 = vadd.f32 %v1129, 1e-05
        %v1131 = vrsqrt.pop %v1130
        %v1132 = vmul.f32 %v1124, %v1131
        %v1133 = vlaneseq
        %v1134 = vshrl.u32 %v1133, 7
        %v1135 = vsub.s32 0, %v1134
        %v1136 = vrot.slane %v1119, %v1135
        %v1137 = vmul.f32 %v1132, %v1136
        %v1138 = vlaneseq
        %v1139 = vshrl.u32 %v1138, 7
        %v1140 = vsub.s32 1, %v1139
        %v1141 = vrot.slane %v1119, %v1140
        %v1142 = vadd.f32 %v1137, %v1141
        %v1143 = vld [vmem:[%s10] sm:$0xf]
        %v1144 = vld [vmem:[%s10 + $0x4] sm:$0xf]
        %v1145 = vld [vmem:[%s10 + $0x8] sm:$0xf]
        %v1146 = vld [vmem:[%s10 + $0xc] sm:$0xf]
        %v1147 = vunpack.c.l.bf16 %v1143
        %v1148 = vunpack.c.l.bf16 %v1144
        %v1149 = vunpack.c.l.bf16 %v1145
        %v1150 = vunpack.c.l.bf16 %v1146
        %v1152 = vsel %vm959, %v1142, 0
        %1154 = vmatprep.subr.mxu0 0.0
        %1155 = vmatpush1.msra.mxu0 %v1147
        %1156 = vmatprep.subr.mxu0 0.0
        %1157 = vmatpush1.msra.mxu0 %v1148
        %1158 = vmatprep.subr.mxu0 0.0
        %1159 = vmatpush1.msra.mxu0 %v1149
        %1160 = vmatprep.subr.mxu0 0.0
        %1161 = vmatpush1.msra.mxu0 %v1150
        %1162 = vmatprep.subr.mxu0 0.0
        %1163 = vmatpush1.msra.mxu0 0.0
        %1164 = vmatprep.subr.mxu0 0.0
        %1165 = vmatpush1.msra.mxu0 0.0
        %1166 = vmatprep.subr.mxu0 0.0
        %1167 = vmatpush1.msra.mxu0 0.0
        %1168 = vmatprep.subr.mxu0 0.0
        %1169 = vmatpush1.msra.mxu0 0.0
        %1170 = vmatprep.subr.mxu0 0.0
        %1171 = vmatpush1.msra.mxu0 0.0
        %1172 = vmatprep.subr.mxu0 0.0
        %1173 = vmatpush1.msra.mxu0 0.0
        %1174 = vmatprep.subr.mxu0 0.0
        %1175 = vmatpush1.msra.mxu0 0.0
        %1176 = vmatprep.subr.mxu0 0.0
        %1177 = vmatpush1.msra.mxu0 0.0
        %1178 = vmatprep.subr.mxu0 0.0
        %1179 = vmatpush1.msra.mxu0 0.0
        %1180 = vmatprep.subr.mxu0 0.0
        %1181 = vmatpush1.msra.mxu0 0.0
        %1182 = vmatprep.subr.mxu0 0.0
        %1183 = vmatpush1.msra.mxu0 0.0
        %1184 = vmatprep.subr.mxu0 0.0
        %1185 = vmatpush1.msra.mxu0 0.0
        %1186 = vmatprep.subr.mxu0 0.0
        %1187 = vmatpush1.msra.mxu0 0.0
        %1188 = vmatprep.subr.mxu0 0.0
        %1189 = vmatpush1.msra.mxu0 0.0
        %1190 = vmatprep.subr.mxu0 0.0
        %1191 = vmatpush1.msra.mxu0 0.0
        %1192 = vmatprep.subr.mxu0 0.0
        %1193 = vmatpush1.msra.mxu0 0.0
        %1194 = vmatprep.subr.mxu0 0.0
        %1195 = vmatpush1.msra.mxu0 0.0
        %1196 = vmatprep.subr.mxu0 0.0
        %1197 = vmatpush1.msra.mxu0 0.0
        %1198 = vmatprep.subr.mxu0 0.0
        %1199 = vmatpush1.msra.mxu0 0.0
        %1200 = vmatprep.subr.mxu0 0.0
        %1201 = vmatpush1.msra.mxu0 0.0
        %1202 = vmatprep.subr.mxu0 0.0
        %1203 = vmatpush1.msra.mxu0 0.0
        %1204 = vmatprep.subr.mxu0 0.0
        %1205 = vmatpush1.msra.mxu0 0.0
        %1206 = vmatprep.subr.mxu0 0.0
        %1207 = vmatpush1.msra.mxu0 0.0
        %1208 = vmatprep.subr.mxu0 0.0
        %1209 = vmatpush1.msra.mxu0 0.0
        %1210 = vmatprep.subr.mxu0 0.0
        %1211 = vmatpush1.msra.mxu0 0.0
        %1212 = vmatprep.subr.mxu0 0.0
        %1213 = vmatpush1.msra.mxu0 0.0
        %1214 = vmatprep.subr.mxu0 0.0
        %1215 = vmatpush1.msra.mxu0 0.0
        %1216 = vmatprep.subr.mxu0 0.0
        %1217 = vmatpush1.msra.mxu0 0.0
        %1218 = vmatprep.mubr.f32.mxu0 0.0
        %1219 = vmatmul.mubr.f32.gmra.mrb[0].mxu0 %v1152
        %v1220 = vpop.f32.mrb[0].mxu0
        %v1221 = vadd.f32 0.0, %v1220
        %v1222 = vpop.f32.mrb[0].mxu0
        %1223 = vdwg.mxu0
        %v1224 = vld [vmem:[%s11] sm:$0xf]
        %v1225 = vld [vmem:[%s11 + $0x4] sm:$0xf]
        %v1226 = vld [vmem:[%s11 + $0x8] sm:$0xf]
        %v1227 = vld [vmem:[%s11 + $0xc] sm:$0xf]
        %v1228 = vunpack.c.l.bf16 %v1224
        %v1229 = vunpack.c.l.bf16 %v1225
        %v1230 = vunpack.c.l.bf16 %v1226
        %v1231 = vunpack.c.l.bf16 %v1227
        %v1232 = vld [vmem:[%s12] sm:$0x1]
        %1234 = vrot.lane.b32.xlu0 %v1221, 96
        %v1235 = vpop.permute.xlu0 %1234
        %vm1236 = vcmask 64512
        %v1237 = vsel %vm1236, %v1221, 0
        %v1239 = vsel %vm1236, %v1235, 0
        %1241 = vmatprep.subr.mxu0 0.0
        %1242 = vmatpush1.xpose.msra.mxu0 %v1239
        %1243 = vmatprep.subr.mxu0 0.0
        %1244 = vmatpush1.xpose.msra.mxu0 0.0
        %1245 = vmatprep.subr.mxu0 0.0
        %1246 = vmatpush1.xpose.msra.mxu0 0.0
        %1247 = vmatprep.subr.mxu0 0.0
        %1248 = vmatpush1.xpose.msra.mxu0 0.0
        %1249 = vmatprep.subr.mxu0 0.0
        %1250 = vmatpush1.xpose.msra.mxu0 0.0
        %1251 = vmatprep.subr.mxu0 0.0
        %1252 = vmatpush1.xpose.msra.mxu0 0.0
        %1253 = vmatprep.subr.mxu0 0.0
        %1254 = vmatpush1.xpose.msra.mxu0 0.0
        %1255 = vmatprep.subr.mxu0 0.0
        %1256 = vmatpush1.xpose.msra.mxu0 0.0
        %1257 = vmatprep.subr.mxu0 0.0
        %1258 = vmatpush1.xpose.msra.mxu0 0.0
        %1259 = vmatprep.subr.mxu0 0.0
        %1260 = vmatpush1.xpose.msra.mxu0 0.0
        %1261 = vmatprep.subr.mxu0 0.0
        %1262 = vmatpush1.xpose.msra.mxu0 0.0
        %1263 = vmatprep.subr.mxu0 0.0
        %1264 = vmatpush1.xpose.msra.mxu0 0.0
        %1265 = vmatprep.subr.mxu0 0.0
        %1266 = vmatpush1.xpose.msra.mxu0 0.0
        %1267 = vmatprep.subr.mxu0 0.0
        %1268 = vmatpush1.xpose.msra.mxu0 0.0
        %1269 = vmatprep.subr.mxu0 0.0
        %1270 = vmatpush1.xpose.msra.mxu0 0.0
        %1271 = vmatprep.subr.mxu0 0.0
        %1272 = vmatpush1.xpose.msra.mxu0 0.0
        %1273 = vmatprep.subr.mxu0 0.0
        %1274 = vmatpush1.xpose.msra.mxu0 0.0
        %1275 = vmatprep.subr.mxu0 0.0
        %1276 = vmatpush1.xpose.msra.mxu0 0.0
        %1277 = vmatprep.subr.mxu0 0.0
        %1278 = vmatpush1.xpose.msra.mxu0 0.0
        %1279 = vmatprep.subr.mxu0 0.0
        %1280 = vmatpush1.xpose.msra.mxu0 0.0
        %1281 = vmatprep.subr.mxu0 0.0
        %1282 = vmatpush1.xpose.msra.mxu0 0.0
        %1283 = vmatprep.subr.mxu0 0.0
        %1284 = vmatpush1.xpose.msra.mxu0 0.0
        %1285 = vmatprep.subr.mxu0 0.0
        %1286 = vmatpush1.xpose.msra.mxu0 0.0
        %1287 = vmatprep.subr.mxu0 0.0
        %1288 = vmatpush1.xpose.msra.mxu0 0.0
        %1289 = vmatprep.subr.mxu0 0.0
        %1290 = vmatpush1.xpose.msra.mxu0 0.0
        %1291 = vmatprep.subr.mxu0 0.0
        %1292 = vmatpush1.xpose.msra.mxu0 0.0
        %1293 = vmatprep.subr.mxu0 0.0
        %1294 = vmatpush1.xpose.msra.mxu0 0.0
        %1295 = vmatprep.subr.mxu0 0.0
        %1296 = vmatpush1.xpose.msra.mxu0 0.0
        %1297 = vmatprep.subr.mxu0 0.0
        %1298 = vmatpush1.xpose.msra.mxu0 0.0
        %1299 = vmatprep.subr.mxu0 0.0
        %1300 = vmatpush1.xpose.msra.mxu0 0.0
        %1301 = vmatprep.subr.mxu0 0.0
        %1302 = vmatpush1.xpose.msra.mxu0 0.0
        %1303 = vmatprep.subr.mxu0 0.0
        %1304 = vmatpush1.xpose.msra.mxu0 0.0
        %1305 = vmatprep.mubr.f32.mxu0 0.0
        %1306 = vmatmul.mubr.f32.gmra.mrb[0].mxu0 %v1237
        %v1307 = vpop.f32.mrb[0].mxu0
        %v1308 = vadd.f32 0.0, %v1307
        %v1309 = vpop.f32.mrb[0].mxu0
        %1310 = vdwg.mxu0
        %v1311 = vmul.f32 %v1308, 0.35355338
        %v1312 = vsel %vm1236, %v1311, -inf
        %1313 = vmax.xlane.f32.xlu0 %v1312
        %v1314 = vpop.xlane.xlu0 %1313
        %v1315 = vsub.f32 %v1311, %v1314
        %v1316 = vmul.f32 %v1315, 1.442695
        %v1317 = vpow.pop %v1316
        %v1318 = vsel %vm1236, %v1317, 0.0
        %1319 = vadd.xlane.f32.xlu0 %v1318
        %v1320 = vpop.xlane.xlu0 %1319
        %v1321 = vrcp.pop %v1320
        %v1322 = vmul.f32 %v1317, %v1321
        %1323 = vrot.lane.b32.xlu0 %v1221, 64
        %v1324 = vpop.permute.xlu0 %1323
        %v1327 = vsel %vm1236, %v1322, 0
        %1329 = vmatprep.subr.mxu0 0.0
        %1330 = vmatpush1.msra.mxu0 %v1324
        %1331 = vmatprep.subr.mxu0 0.0
        %1332 = vmatpush1.msra.mxu0 0.0
        %1333 = vmatprep.subr.mxu0 0.0
        %1334 = vmatpush1.msra.mxu0 0.0
        %1335 = vmatprep.subr.mxu0 0.0
        %1336 = vmatpush1.msra.mxu0 0.0
        %1337 = vmatprep.subr.mxu0 0.0
        %1338 = vmatpush1.msra.mxu0 0.0
        %1339 = vmatprep.subr.mxu0 0.0
        %1340 = vmatpush1.msra.mxu0 0.0
        %1341 = vmatprep.subr.mxu0 0.0
        %1342 = vmatpush1.msra.mxu0 0.0
        %1343 = vmatprep.subr.mxu0 0.0
        %1344 = vmatpush1.msra.mxu0 0.0
        %1345 = vmatprep.subr.mxu0 0.0
        %1346 = vmatpush1.msra.mxu0 0.0
        %1347 = vmatprep.subr.mxu0 0.0
        %1348 = vmatpush1.msra.mxu0 0.0
        %1349 = vmatprep.subr.mxu0 0.0
        %1350 = vmatpush1.msra.mxu0 0.0
        %1351 = vmatprep.subr.mxu0 0.0
        %1352 = vmatpush1.msra.mxu0 0.0
        %1353 = vmatprep.subr.mxu0 0.0
        %1354 = vmatpush1.msra.mxu0 0.0
        %1355 = vmatprep.subr.mxu0 0.0
        %1356 = vmatpush1.msra.mxu0 0.0
        %1357 = vmatprep.subr.mxu0 0.0
        %1358 = vmatpush1.msra.mxu0 0.0
        %1359 = vmatprep.subr.mxu0 0.0
        %1360 = vmatpush1.msra.mxu0 0.0
        %1361 = vmatprep.subr.mxu0 0.0
        %1362 = vmatpush1.msra.mxu0 0.0
        %1363 = vmatprep.subr.mxu0 0.0
        %1364 = vmatpush1.msra.mxu0 0.0
        %1365 = vmatprep.subr.mxu0 0.0
        %1366 = vmatpush1.msra.mxu0 0.0
        %1367 = vmatprep.subr.mxu0 0.0
        %1368 = vmatpush1.msra.mxu0 0.0
        %1369 = vmatprep.subr.mxu0 0.0
        %1370 = vmatpush1.msra.mxu0 0.0
        %1371 = vmatprep.subr.mxu0 0.0
        %1372 = vmatpush1.msra.mxu0 0.0
        %1373 = vmatprep.subr.mxu0 0.0
        %1374 = vmatpush1.msra.mxu0 0.0
        %1375 = vmatprep.subr.mxu0 0.0
        %1376 = vmatpush1.msra.mxu0 0.0
        %1377 = vmatprep.subr.mxu0 0.0
        %1378 = vmatpush1.msra.mxu0 0.0
        %1379 = vmatprep.subr.mxu0 0.0
        %1380 = vmatpush1.msra.mxu0 0.0
        %1381 = vmatprep.subr.mxu0 0.0
        %1382 = vmatpush1.msra.mxu0 0.0
        %1383 = vmatprep.subr.mxu0 0.0
        %1384 = vmatpush1.msra.mxu0 0.0
        %1385 = vmatprep.subr.mxu0 0.0
        %1386 = vmatpush1.msra.mxu0 0.0
        %1387 = vmatprep.subr.mxu0 0.0
        %1388 = vmatpush1.msra.mxu0 0.0
        %1389 = vmatprep.subr.mxu0 0.0
        %1390 = vmatpush1.msra.mxu0 0.0
        %1391 = vmatprep.subr.mxu0 0.0
        %1392 = vmatpush1.msra.mxu0 0.0
        %1393 = vmatprep.mubr.f32.mxu0 0.0
        %1394 = vmatmul.mubr.f32.gmra.mrb[0].mxu0 %v1327
        %v1395 = vpop.f32.mrb[0].mxu0
        %v1396 = vadd.f32 0.0, %v1395
        %v1397 = vpop.f32.mrb[0].mxu0
        %1398 = vdwg.mxu0
        %1399 = vrot.lane.b32.xlu0 %v1221, 120
        %v1400 = vpop.permute.xlu0 %1399
        %1401 = vrot.lane.b32.xlu0 %v1221, 88
        %v1402 = vpop.permute.xlu0 %1401
        %v1403 = vsel %vm1236, %v1400, 0
        %v1405 = vsel %vm1236, %v1402, 0
        %1407 = vmatprep.subr.mxu0 0.0
        %1408 = vmatpush1.xpose.msra.mxu0 %v1405
        %1409 = vmatprep.subr.mxu0 0.0
        %1410 = vmatpush1.xpose.msra.mxu0 0.0
        %1411 = vmatprep.subr.mxu0 0.0
        %1412 = vmatpush1.xpose.msra.mxu0 0.0
        %1413 = vmatprep.subr.mxu0 0.0
        %1414 = vmatpush1.xpose.msra.mxu0 0.0
        %1415 = vmatprep.subr.mxu0 0.0
        %1416 = vmatpush1.xpose.msra.mxu0 0.0
        %1417 = vmatprep.subr.mxu0 0.0
        %1418 = vmatpush1.xpose.msra.mxu0 0.0
        %1419 = vmatprep.subr.mxu0 0.0
        %1420 = vmatpush1.xpose.msra.mxu0 0.0
        %1421 = vmatprep.subr.mxu0 0.0
        %1422 = vmatpush1.xpose.msra.mxu0 0.0
        %1423 = vmatprep.subr.mxu0 0.0
        %1424 = vmatpush1.xpose.msra.mxu0 0.0
        %1425 = vmatprep.subr.mxu0 0.0
        %1426 = vmatpush1.xpose.msra.mxu0 0.0
        %1427 = vmatprep.subr.mxu0 0.0
        %1428 = vmatpush1.xpose.msra.mxu0 0.0
        %1429 = vmatprep.subr.mxu0 0.0
        %1430 = vmatpush1.xpose.msra.mxu0 0.0
        %1431 = vmatprep.subr.mxu0 0.0
        %1432 = vmatpush1.xpose.msra.mxu0 0.0
        %1433 = vmatprep.subr.mxu0 0.0
        %1434 = vmatpush1.xpose.msra.mxu0 0.0
        %1435 = vmatprep.subr.mxu0 0.0
        %1436 = vmatpush1.xpose.msra.mxu0 0.0
        %1437 = vmatprep.subr.mxu0 0.0
        %1438 = vmatpush1.xpose.msra.mxu0 0.0
        %1439 = vmatprep.subr.mxu0 0.0
        %1440 = vmatpush1.xpose.msra.mxu0 0.0
        %1441 = vmatprep.subr.mxu0 0.0
        %1442 = vmatpush1.xpose.msra.mxu0 0.0
        %1443 = vmatprep.subr.mxu0 0.0
        %1444 = vmatpush1.xpose.msra.mxu0 0.0
        %1445 = vmatprep.subr.mxu0 0.0
        %1446 = vmatpush1.xpose.msra.mxu0 0.0
        %1447 = vmatprep.subr.mxu0 0.0
        %1448 = vmatpush1.xpose.msra.mxu0 0.0
        %1449 = vmatprep.subr.mxu0 0.0
        %1450 = vmatpush1.xpose.msra.mxu0 0.0
        %1451 = vmatprep.subr.mxu0 0.0
        %1452 = vmatpush1.xpose.msra.mxu0 0.0
        %1453 = vmatprep.subr.mxu0 0.0
        %1454 = vmatpush1.xpose.msra.mxu0 0.0
        %1455 = vmatprep.subr.mxu0 0.0
        %1456 = vmatpush1.xpose.msra.mxu0 0.0
        %1457 = vmatprep.subr.mxu0 0.0
        %1458 = vmatpush1.xpose.msra.mxu0 0.0
        %1459 = vmatprep.subr.mxu0 0.0
        %1460 = vmatpush1.xpose.msra.mxu0 0.0
        %1461 = vmatprep.subr.mxu0 0.0
        %1462 = vmatpush1.xpose.msra.mxu0 0.0
        %1463 = vmatprep.subr.mxu0 0.0
        %1464 = vmatpush1.xpose.msra.mxu0 0.0
        %1465 = vmatprep.subr.mxu0 0.0
        %1466 = vmatpush1.xpose.msra.mxu0 0.0
        %1467 = vmatprep.subr.mxu0 0.0
        %1468 = vmatpush1.xpose.msra.mxu0 0.0
        %1469 = vmatprep.subr.mxu0 0.0
        %1470 = vmatpush1.xpose.msra.mxu0 0.0
        %1471 = vmatprep.mubr.f32.mxu0 0.0
        %1472 = vmatmul.mubr.f32.gmra.mrb[0].mxu0 %v1403
        %v1473 = vpop.f32.mrb[0].mxu0
        %v1474 = vadd.f32 0.0, %v1473
        %v1475 = vpop.f32.mrb[0].mxu0
        %1476 = vdwg.mxu0
        %v1477 = vmul.f32 %v1474, 0.35355338
        %v1478 = vsel %vm1236, %v1477, -inf
        %1479 = vmax.xlane.f32.xlu0 %v1478
        %v1480 = vpop.xlane.xlu0 %1479
        %v1481 = vsub.f32 %v1477, %v1480
        %v1482 = vmul.f32 %v1481, 1.442695
        %v1483 = vpow.pop %v1482
        %v1484 = vsel %vm1236, %v1483, 0.0
        %1485 = vadd.xlane.f32.xlu0 %v1484
        %v1486 = vpop.xlane.xlu0 %1485
        %v1487 = vrcp.pop %v1486
        %v1488 = vmul.f32 %v1483, %v1487
        %1489 = vrot.lane.b32.xlu0 %v1221, 56
        %v1490 = vpop.permute.xlu0 %1489
        %v1493 = vsel %vm1236, %v1488, 0
        %1495 = vmatprep.subr.mxu0 0.0
        %1496 = vmatpush1.msra.mxu0 %v1490
        %1497 = vmatprep.subr.mxu0 0.0
        %1498 = vmatpush1.msra.mxu0 0.0
        %1499 = vmatprep.subr.mxu0 0.0
        %1500 = vmatpush1.msra.mxu0 0.0
        %1501 = vmatprep.subr.mxu0 0.0
        %1502 = vmatpush1.msra.mxu0 0.0
        %1503 = vmatprep.subr.mxu0 0.0
        %1504 = vmatpush1.msra.mxu0 0.0
        %1505 = vmatprep.subr.mxu0 0.0
        %1506 = vmatpush1.msra.mxu0 0.0
        %1507 = vmatprep.subr.mxu0 0.0
        %1508 = vmatpush1.msra.mxu0 0.0
        %1509 = vmatprep.subr.mxu0 0.0
        %1510 = vmatpush1.msra.mxu0 0.0
        %1511 = vmatprep.subr.mxu0 0.0
        %1512 = vmatpush1.msra.mxu0 0.0
        %1513 = vmatprep.subr.mxu0 0.0
        %1514 = vmatpush1.msra.mxu0 0.0
        %1515 = vmatprep.subr.mxu0 0.0
        %1516 = vmatpush1.msra.mxu0 0.0
        %1517 = vmatprep.subr.mxu0 0.0
        %1518 = vmatpush1.msra.mxu0 0.0
        %1519 = vmatprep.subr.mxu0 0.0
        %1520 = vmatpush1.msra.mxu0 0.0
        %1521 = vmatprep.subr.mxu0 0.0
        %1522 = vmatpush1.msra.mxu0 0.0
        %1523 = vmatprep.subr.mxu0 0.0
        %1524 = vmatpush1.msra.mxu0 0.0
        %1525 = vmatprep.subr.mxu0 0.0
        %1526 = vmatpush1.msra.mxu0 0.0
        %1527 = vmatprep.subr.mxu0 0.0
        %1528 = vmatpush1.msra.mxu0 0.0
        %1529 = vmatprep.subr.mxu0 0.0
        %1530 = vmatpush1.msra.mxu0 0.0
        %1531 = vmatprep.subr.mxu0 0.0
        %1532 = vmatpush1.msra.mxu0 0.0
        %1533 = vmatprep.subr.mxu0 0.0
        %1534 = vmatpush1.msra.mxu0 0.0
        %1535 = vmatprep.subr.mxu0 0.0
        %1536 = vmatpush1.msra.mxu0 0.0
        %1537 = vmatprep.subr.mxu0 0.0
        %1538 = vmatpush1.msra.mxu0 0.0
        %1539 = vmatprep.subr.mxu0 0.0
        %1540 = vmatpush1.msra.mxu0 0.0
        %1541 = vmatprep.subr.mxu0 0.0
        %1542 = vmatpush1.msra.mxu0 0.0
        %1543 = vmatprep.subr.mxu0 0.0
        %1544 = vmatpush1.msra.mxu0 0.0
        %1545 = vmatprep.subr.mxu0 0.0
        %1546 = vmatpush1.msra.mxu0 0.0
        %1547 = vmatprep.subr.mxu0 0.0
        %1548 = vmatpush1.msra.mxu0 0.0
        %1549 = vmatprep.subr.mxu0 0.0
        %1550 = vmatpush1.msra.mxu0 0.0
        %1551 = vmatprep.subr.mxu0 0.0
        %1552 = vmatpush1.msra.mxu0 0.0
        %1553 = vmatprep.subr.mxu0 0.0
        %1554 = vmatpush1.msra.mxu0 0.0
        %1555 = vmatprep.subr.mxu0 0.0
        %1556 = vmatpush1.msra.mxu0 0.0
        %1557 = vmatprep.subr.mxu0 0.0
        %1558 = vmatpush1.msra.mxu0 0.0
        %1559 = vmatprep.mubr.f32.mxu0 0.0
        %1560 = vmatmul.mubr.f32.gmra.mrb[0].mxu0 %v1493
        %v1561 = vpop.f32.mrb[0].mxu0
        %v1562 = vadd.f32 0.0, %v1561
        %v1563 = vpop.f32.mrb[0].mxu0
        %1564 = vdwg.mxu0
        %1565 = vrot.lane.b32.xlu0 %v1221, 112
        %v1566 = vpop.permute.xlu0 %1565
        %1567 = vrot.lane.b32.xlu0 %v1221, 80
        %v1568 = vpop.permute.xlu0 %1567
        %v1569 = vsel %vm1236, %v1566, 0
        %v1571 = vsel %vm1236, %v1568, 0
        %1573 = vmatprep.subr.mxu0 0.0
        %1574 = vmatpush1.xpose.msra.mxu0 %v1571
        %1575 = vmatprep.subr.mxu0 0.0
        %1576 = vmatpush1.xpose.msra.mxu0 0.0
        %1577 = vmatprep.subr.mxu0 0.0
        %1578 = vmatpush1.xpose.msra.mxu0 0.0
        %1579 = vmatprep.subr.mxu0 0.0
        %1580 = vmatpush1.xpose.msra.mxu0 0.0
        %1581 = vmatprep.subr.mxu0 0.0
        %1582 = vmatpush1.xpose.msra.mxu0 0.0
        %1583 = vmatprep.subr.mxu0 0.0
        %1584 = vmatpush1.xpose.msra.mxu0 0.0
        %1585 = vmatprep.subr.mxu0 0.0
        %1586 = vmatpush1.xpose.msra.mxu0 0.0
        %1587 = vmatprep.subr.mxu0 0.0
        %1588 = vmatpush1.xpose.msra.mxu0 0.0
        %1589 = vmatprep.subr.mxu0 0.0
        %1590 = vmatpush1.xpose.msra.mxu0 0.0
        %1591 = vmatprep.subr.mxu0 0.0
        %1592 = vmatpush1.xpose.msra.mxu0 0.0
        %1593 = vmatprep.subr.mxu0 0.0
        %1594 = vmatpush1.xpose.msra.mxu0 0.0
        %1595 = vmatprep.subr.mxu0 0.0
        %1596 = vmatpush1.xpose.msra.mxu0 0.0
        %1597 = vmatprep.subr.mxu0 0.0
        %1598 = vmatpush1.xpose.msra.mxu0 0.0
        %1599 = vmatprep.subr.mxu0 0.0
        %1600 = vmatpush1.xpose.msra.mxu0 0.0
        %1601 = vmatprep.subr.mxu0 0.0
        %1602 = vmatpush1.xpose.msra.mxu0 0.0
        %1603 = vmatprep.subr.mxu0 0.0
        %1604 = vmatpush1.xpose.msra.mxu0 0.0
        %1605 = vmatprep.subr.mxu0 0.0
        %1606 = vmatpush1.xpose.msra.mxu0 0.0
        %1607 = vmatprep.subr.mxu0 0.0
        %1608 = vmatpush1.xpose.msra.mxu0 0.0
        %1609 = vmatprep.subr.mxu0 0.0
        %1610 = vmatpush1.xpose.msra.mxu0 0.0
        %1611 = vmatprep.subr.mxu0 0.0
        %1612 = vmatpush1.xpose.msra.mxu0 0.0
        %1613 = vmatprep.subr.mxu0 0.0
        %1614 = vmatpush1.xpose.msra.mxu0 0.0
        %1615 = vmatprep.subr.mxu0 0.0
        %1616 = vmatpush1.xpose.msra.mxu0 0.0
        %1617 = vmatprep.subr.mxu0 0.0
        %1618 = vmatpush1.xpose.msra.mxu0 0.0
        %1619 = vmatprep.subr.mxu0 0.0
        %1620 = vmatpush1.xpose.msra.mxu0 0.0
        %1621 = vmatprep.subr.mxu0 0.0
        %1622 = vmatpush1.xpose.msra.mxu0 0.0
        %1623 = vmatprep.subr.mxu0 0.0
        %1624 = vmatpush1.xpose.msra.mxu0 0.0
        %1625 = vmatprep.subr.mxu0 0.0
        %1626 = vmatpush1.xpose.msra.mxu0 0.0
        %1627 = vmatprep.subr.mxu0 0.0
        %1628 = vmatpush1.xpose.msra.mxu0 0.0
        %1629 = vmatprep.subr.mxu0 0.0
        %1630 = vmatpush1.xpose.msra.mxu0 0.0
        %1631 = vmatprep.subr.mxu0 0.0
        %1632 = vmatpush1.xpose.msra.mxu0 0.0
        %1633 = vmatprep.subr.mxu0 0.0
        %1634 = vmatpush1.xpose.msra.mxu0 0.0
        %1635 = vmatprep.subr.mxu0 0.0
        %1636 = vmatpush1.xpose.msra.mxu0 0.0
        %1637 = vmatprep.mubr.f32.mxu0 0.0
        %1638 = vmatmul.mubr.f32.gmra.mrb[0].mxu0 %v1569
        %v1639 = vpop.f32.mrb[0].mxu0
        %v1640 = vadd.f32 0.0, %v1639
        %v1641 = vpop.f32.mrb[0].mxu0
        %1642 = vdwg.mxu0
        %v1643 = vmul.f32 %v1640, 0.35355338
        %v1644 = vsel %vm1236, %v1643, -inf
        %1645 = vmax.xlane.f32.xlu0 %v1644
        %v1646 = vpop.xlane.xlu0 %1645
        %v1647 = vsub.f32 %v1643, %v1646
        %v1648 = vmul.f32 %v1647, 1.442695
        %v1649 = vpow.pop %v1648
        %v1650 = vsel %vm1236, %v1649, 0.0
        %1651 = vadd.xlane.f32.xlu0 %v1650
        %v1652 = vpop.xlane.xlu0 %1651
        %v1653 = vrcp.pop %v1652
        %v1654 = vmul.f32 %v1649, %v1653
        %1655 = vrot.lane.b32.xlu0 %v1221, 48
        %v1656 = vpop.permute.xlu0 %1655
        %v1659 = vsel %vm1236, %v1654, 0
        %1661 = vmatprep.subr.mxu0 0.0
        %1662 = vmatpush1.msra.mxu0 %v1656
        %1663 = vmatprep.subr.mxu0 0.0
        %1664 = vmatpush1.msra.mxu0 0.0
        %1665 = vmatprep.subr.mxu0 0.0
        %1666 = vmatpush1.msra.mxu0 0.0
        %1667 = vmatprep.subr.mxu0 0.0
        %1668 = vmatpush1.msra.mxu0 0.0
        %1669 = vmatprep.subr.mxu0 0.0
        %1670 = vmatpush1.msra.mxu0 0.0
        %1671 = vmatprep.subr.mxu0 0.0
        %1672 = vmatpush1.msra.mxu0 0.0
        %1673 = vmatprep.subr.mxu0 0.0
        %1674 = vmatpush1.msra.mxu0 0.0
        %1675 = vmatprep.subr.mxu0 0.0
        %1676 = vmatpush1.msra.mxu0 0.0
        %1677 = vmatprep.subr.mxu0 0.0
        %1678 = vmatpush1.msra.mxu0 0.0
        %1679 = vmatprep.subr.mxu0 0.0
        %1680 = vmatpush1.msra.mxu0 0.0
        %1681 = vmatprep.subr.mxu0 0.0
        %1682 = vmatpush1.msra.mxu0 0.0
        %1683 = vmatprep.subr.mxu0 0.0
        %1684 = vmatpush1.msra.mxu0 0.0
        %1685 = vmatprep.subr.mxu0 0.0
        %1686 = vmatpush1.msra.mxu0 0.0
        %1687 = vmatprep.subr.mxu0 0.0
        %1688 = vmatpush1.msra.mxu0 0.0
        %1689 = vmatprep.subr.mxu0 0.0
        %1690 = vmatpush1.msra.mxu0 0.0
        %1691 = vmatprep.subr.mxu0 0.0
        %1692 = vmatpush1.msra.mxu0 0.0
        %1693 = vmatprep.subr.mxu0 0.0
        %1694 = vmatpush1.msra.mxu0 0.0
        %1695 = vmatprep.subr.mxu0 0.0
        %1696 = vmatpush1.msra.mxu0 0.0
        %1697 = vmatprep.subr.mxu0 0.0
        %1698 = vmatpush1.msra.mxu0 0.0
        %1699 = vmatprep.subr.mxu0 0.0
        %1700 = vmatpush1.msra.mxu0 0.0
        %1701 = vmatprep.subr.mxu0 0.0
        %1702 = vmatpush1.msra.mxu0 0.0
        %1703 = vmatprep.subr.mxu0 0.0
        %1704 = vmatpush1.msra.mxu0 0.0
        %1705 = vmatprep.subr.mxu0 0.0
        %1706 = vmatpush1.msra.mxu0 0.0
        %1707 = vmatprep.subr.mxu0 0.0
        %1708 = vmatpush1.msra.mxu0 0.0
        %1709 = vmatprep.subr.mxu0 0.0
        %1710 = vmatpush1.msra.mxu0 0.0
        %1711 = vmatprep.subr.mxu0 0.0
        %1712 = vmatpush1.msra.mxu0 0.0
        %1713 = vmatprep.subr.mxu0 0.0
        %1714 = vmatpush1.msra.mxu0 0.0
        %1715 = vmatprep.subr.mxu0 0.0
        %1716 = vmatpush1.msra.mxu0 0.0
        %1717 = vmatprep.subr.mxu0 0.0
        %1718 = vmatpush1.msra.mxu0 0.0
        %1719 = vmatprep.subr.mxu0 0.0
        %1720 = vmatpush1.msra.mxu0 0.0
        %1721 = vmatprep.subr.mxu0 0.0
        %1722 = vmatpush1.msra.mxu0 0.0
        %1723 = vmatprep.subr.mxu0 0.0
        %1724 = vmatpush1.msra.mxu0 0.0
        %1725 = vmatprep.mubr.f32.mxu0 0.0
        %1726 = vmatmul.mubr.f32.gmra.mrb[0].mxu0 %v1659
        %v1727 = vpop.f32.mrb[0].mxu0
        %v1728 = vadd.f32 0.0, %v1727
        %v1729 = vpop.f32.mrb[0].mxu0
        %1730 = vdwg.mxu0
        %1731 = vrot.lane.b32.xlu0 %v1221, 104
        %v1732 = vpop.permute.xlu0 %1731
        %1733 = vrot.lane.b32.xlu0 %v1221, 72
        %v1734 = vpop.permute.xlu0 %1733
        %v1735 = vsel %vm1236, %v1732, 0
        %v1737 = vsel %vm1236, %v1734, 0
        %1739 = vmatprep.subr.mxu0 0.0
        %1740 = vmatpush1.xpose.msra.mxu0 %v1737
        %1741 = vmatprep.subr.mxu0 0.0
        %1742 = vmatpush1.xpose.msra.mxu0 0.0
        %1743 = vmatprep.subr.mxu0 0.0
        %1744 = vmatpush1.xpose.msra.mxu0 0.0
        %1745 = vmatprep.subr.mxu0 0.0
        %1746 = vmatpush1.xpose.msra.mxu0 0.0
        %1747 = vmatprep.subr.mxu0 0.0
        %1748 = vmatpush1.xpose.msra.mxu0 0.0
        %1749 = vmatprep.subr.mxu0 0.0
        %1750 = vmatpush1.xpose.msra.mxu0 0.0
        %1751 = vmatprep.subr.mxu0 0.0
        %1752 = vmatpush1.xpose.msra.mxu0 0.0
        %1753 = vmatprep.subr.mxu0 0.0
        %1754 = vmatpush1.xpose.msra.mxu0 0.0
        %1755 = vmatprep.subr.mxu0 0.0
        %1756 = vmatpush1.xpose.msra.mxu0 0.0
        %1757 = vmatprep.subr.mxu0 0.0
        %1758 = vmatpush1.xpose.msra.mxu0 0.0
        %1759 = vmatprep.subr.mxu0 0.0
        %1760 = vmatpush1.xpose.msra.mxu0 0.0
        %1761 = vmatprep.subr.mxu0 0.0
        %1762 = vmatpush1.xpose.msra.mxu0 0.0
        %1763 = vmatprep.subr.mxu0 0.0
        %1764 = vmatpush1.xpose.msra.mxu0 0.0
        %1765 = vmatprep.subr.mxu0 0.0
        %1766 = vmatpush1.xpose.msra.mxu0 0.0
        %1767 = vmatprep.subr.mxu0 0.0
        %1768 = vmatpush1.xpose.msra.mxu0 0.0
        %1769 = vmatprep.subr.mxu0 0.0
        %1770 = vmatpush1.xpose.msra.mxu0 0.0
        %1771 = vmatprep.subr.mxu0 0.0
        %1772 = vmatpush1.xpose.msra.mxu0 0.0
        %1773 = vmatprep.subr.mxu0 0.0
        %1774 = vmatpush1.xpose.msra.mxu0 0.0
        %1775 = vmatprep.subr.mxu0 0.0
        %1776 = vmatpush1.xpose.msra.mxu0 0.0
        %1777 = vmatprep.subr.mxu0 0.0
        %1778 = vmatpush1.xpose.msra.mxu0 0.0
        %1779 = vmatprep.subr.mxu0 0.0
        %1780 = vmatpush1.xpose.msra.mxu0 0.0
        %1781 = vmatprep.subr.mxu0 0.0
        %1782 = vmatpush1.xpose.msra.mxu0 0.0
        %1783 = vmatprep.subr.mxu0 0.0
        %1784 = vmatpush1.xpose.msra.mxu0 0.0
        %1785 = vmatprep.subr.mxu0 0.0
        %1786 = vmatpush1.xpose.msra.mxu0 0.0
        %1787 = vmatprep.subr.mxu0 0.0
        %1788 = vmatpush1.xpose.msra.mxu0 0.0
        %1789 = vmatprep.subr.mxu0 0.0
        %1790 = vmatpush1.xpose.msra.mxu0 0.0
        %1791 = vmatprep.subr.mxu0 0.0
        %1792 = vmatpush1.xpose.msra.mxu0 0.0
        %1793 = vmatprep.subr.mxu0 0.0
        %1794 = vmatpush1.xpose.msra.mxu0 0.0
        %1795 = vmatprep.subr.mxu0 0.0
        %1796 = vmatpush1.xpose.msra.mxu0 0.0
        %1797 = vmatprep.subr.mxu0 0.0
        %1798 = vmatpush1.xpose.msra.mxu0 0.0
        %1799 = vmatprep.subr.mxu0 0.0
        %1800 = vmatpush1.xpose.msra.mxu0 0.0
        %1801 = vmatprep.subr.mxu0 0.0
        %1802 = vmatpush1.xpose.msra.mxu0 0.0
        %1803 = vmatprep.mubr.f32.mxu0 0.0
        %1804 = vmatmul.mubr.f32.gmra.mrb[0].mxu0 %v1735
        %v1805 = vpop.f32.mrb[0].mxu0
        %v1806 = vadd.f32 0.0, %v1805
        %v1807 = vpop.f32.mrb[0].mxu0
        %1808 = vdwg.mxu0
        %v1809 = vmul.f32 %v1806, 0.35355338
        %v1810 = vsel %vm1236, %v1809, -inf
        %1811 = vmax.xlane.f32.xlu0 %v1810
        %v1812 = vpop.xlane.xlu0 %1811
        %v1813 = vsub.f32 %v1809, %v1812
        %v1814 = vmul.f32 %v1813, 1.442695
        %v1815 = vpow.pop %v1814
        %v1816 = vsel %vm1236, %v1815, 0.0
        %1817 = vadd.xlane.f32.xlu0 %v1816
        %v1818 = vpop.xlane.xlu0 %1817
        %v1819 = vrcp.pop %v1818
        %v1820 = vmul.f32 %v1815, %v1819
        %1821 = vrot.lane.b32.xlu0 %v1221, 40
        %v1822 = vpop.permute.xlu0 %1821
        %v1825 = vsel %vm1236, %v1820, 0
        %1827 = vmatprep.subr.mxu0 0.0
        %1828 = vmatpush1.msra.mxu0 %v1822
        %1829 = vmatprep.subr.mxu0 0.0
        %1830 = vmatpush1.msra.mxu0 0.0
        %1831 = vmatprep.subr.mxu0 0.0
        %1832 = vmatpush1.msra.mxu0 0.0
        %1833 = vmatprep.subr.mxu0 0.0
        %1834 = vmatpush1.msra.mxu0 0.0
        %1835 = vmatprep.subr.mxu0 0.0
        %1836 = vmatpush1.msra.mxu0 0.0
        %1837 = vmatprep.subr.mxu0 0.0
        %1838 = vmatpush1.msra.mxu0 0.0
        %1839 = vmatprep.subr.mxu0 0.0
        %1840 = vmatpush1.msra.mxu0 0.0
        %1841 = vmatprep.subr.mxu0 0.0
        %1842 = vmatpush1.msra.mxu0 0.0
        %1843 = vmatprep.subr.mxu0 0.0
        %1844 = vmatpush1.msra.mxu0 0.0
        %1845 = vmatprep.subr.mxu0 0.0
        %1846 = vmatpush1.msra.mxu0 0.0
        %1847 = vmatprep.subr.mxu0 0.0
        %1848 = vmatpush1.msra.mxu0 0.0
        %1849 = vmatprep.subr.mxu0 0.0
        %1850 = vmatpush1.msra.mxu0 0.0
        %1851 = vmatprep.subr.mxu0 0.0
        %1852 = vmatpush1.msra.mxu0 0.0
        %1853 = vmatprep.subr.mxu0 0.0
        %1854 = vmatpush1.msra.mxu0 0.0
        %1855 = vmatprep.subr.mxu0 0.0
        %1856 = vmatpush1.msra.mxu0 0.0
        %1857 = vmatprep.subr.mxu0 0.0
        %1858 = vmatpush1.msra.mxu0 0.0
        %1859 = vmatprep.subr.mxu0 0.0
        %1860 = vmatpush1.msra.mxu0 0.0
        %1861 = vmatprep.subr.mxu0 0.0
        %1862 = vmatpush1.msra.mxu0 0.0
        %1863 = vmatprep.subr.mxu0 0.0
        %1864 = vmatpush1.msra.mxu0 0.0
        %1865 = vmatprep.subr.mxu0 0.0
        %1866 = vmatpush1.msra.mxu0 0.0
        %1867 = vmatprep.subr.mxu0 0.0
        %1868 = vmatpush1.msra.mxu0 0.0
        %1869 = vmatprep.subr.mxu0 0.0
        %1870 = vmatpush1.msra.mxu0 0.0
        %1871 = vmatprep.subr.mxu0 0.0
        %1872 = vmatpush1.msra.mxu0 0.0
        %1873 = vmatprep.subr.mxu0 0.0
        %1874 = vmatpush1.msra.mxu0 0.0
        %1875 = vmatprep.subr.mxu0 0.0
        %1876 = vmatpush1.msra.mxu0 0.0
        %1877 = vmatprep.subr.mxu0 0.0
        %1878 = vmatpush1.msra.mxu0 0.0
        %1879 = vmatprep.subr.mxu0 0.0
        %1880 = vmatpush1.msra.mxu0 0.0
        %1881 = vmatprep.subr.mxu0 0.0
        %1882 = vmatpush1.msra.mxu0 0.0
        %1883 = vmatprep.subr.mxu0 0.0
        %1884 = vmatpush1.msra.mxu0 0.0
        %1885 = vmatprep.subr.mxu0 0.0
        %1886 = vmatpush1.msra.mxu0 0.0
        %1887 = vmatprep.subr.mxu0 0.0
        %1888 = vmatpush1.msra.mxu0 0.0
        %1889 = vmatprep.subr.mxu0 0.0
        %1890 = vmatpush1.msra.mxu0 0.0
        %1891 = vmatprep.mubr.f32.mxu0 0.0
        %1892 = vmatmul.mubr.f32.gmra.mrb[0].mxu0 %v1825
        %v1893 = vpop.f32.mrb[0].mxu0
        %v1894 = vadd.f32 0.0, %v1893
        %v1895 = vpop.f32.mrb[0].mxu0
        %1896 = vdwg.mxu0
        %1898 = vrot.lane.b32.xlu0 %v1562, 8
        %v1899 = vpop.permute.xlu0 %1898
        %1902 = vrot.lane.b32.xlu0 %v1728, 16
        %v1903 = vpop.permute.xlu0 %1902
        %1906 = vrot.lane.b32.xlu0 %v1894, 24
        %v1907 = vpop.permute.xlu0 %1906
        %v1909 = vsel %vm1236, %v1396, %v1899
        %vm1910 = vcmask 130048
        %v1911 = vsel %vm1910, %v1909, %v1903
        %vm1912 = vcmask 195584
        %v1913 = vsel %vm1912, %v1911, %v1907
        %v1915 = vlaneseq
        %v1916 = vshrl.u32 %v1915, 7
        %v1917 = vsub.s32 0, %v1916
        %v1918 = vrot.slane %v1232, %v1917
        %v1921 = vsel %vm959, %v1913, 0
        %1923 = vmatprep.subr.mxu0 0.0
        %1924 = vmatpush1.msra.mxu0 %v1228
        %1925 = vmatprep.subr.mxu0 0.0
        %1926 = vmatpush1.msra.mxu0 %v1229
        %1927 = vmatprep.subr.mxu0 0.0
        %1928 = vmatpush1.msra.mxu0 %v1230
        %1929 = vmatprep.subr.mxu0 0.0
        %1930 = vmatpush1.msra.mxu0 %v1231
        %1931 = vmatprep.subr.mxu0 0.0
        %1932 = vmatpush1.msra.mxu0 0.0
        %1933 = vmatprep.subr.mxu0 0.0
        %1934 = vmatpush1.msra.mxu0 0.0
        %1935 = vmatprep.subr.mxu0 0.0
        %1936 = vmatpush1.msra.mxu0 0.0
        %1937 = vmatprep.subr.mxu0 0.0
        %1938 = vmatpush1.msra.mxu0 0.0
        %1939 = vmatprep.subr.mxu0 0.0
        %1940 = vmatpush1.msra.mxu0 0.0
        %1941 = vmatprep.subr.mxu0 0.0
        %1942 = vmatpush1.msra.mxu0 0.0
        %1943 = vmatprep.subr.mxu0 0.0
        %1944 = vmatpush1.msra.mxu0 0.0
        %1945 = vmatprep.subr.mxu0 0.0
        %1946 = vmatpush1.msra.mxu0 0.0
        %1947 = vmatprep.subr.mxu0 0.0
        %1948 = vmatpush1.msra.mxu0 0.0
        %1949 = vmatprep.subr.mxu0 0.0
        %1950 = vmatpush1.msra.mxu0 0.0
        %1951 = vmatprep.subr.mxu0 0.0
        %1952 = vmatpush1.msra.mxu0 0.0
        %1953 = vmatprep.subr.mxu0 0.0
        %1954 = vmatpush1.msra.mxu0 0.0
        %1955 = vmatprep.subr.mxu0 0.0
        %1956 = vmatpush1.msra.mxu0 0.0
        %1957 = vmatprep.subr.mxu0 0.0
        %1958 = vmatpush1.msra.mxu0 0.0
        %1959 = vmatprep.subr.mxu0 0.0
        %1960 = vmatpush1.msra.mxu0 0.0
        %1961 = vmatprep.subr.mxu0 0.0
        %1962 = vmatpush1.msra.mxu0 0.0
        %1963 = vmatprep.subr.mxu0 0.0
        %1964 = vmatpush1.msra.mxu0 0.0
        %1965 = vmatprep.subr.mxu0 0.0
        %1966 = vmatpush1.msra.mxu0 0.0
        %1967 = vmatprep.subr.mxu0 0.0
        %1968 = vmatpush1.msra.mxu0 0.0
        %1969 = vmatprep.subr.mxu0 0.0
        %1970 = vmatpush1.msra.mxu0 0.0
        %1971 = vmatprep.subr.mxu0 0.0
        %1972 = vmatpush1.msra.mxu0 0.0
        %1973 = vmatprep.subr.mxu0 0.0
        %1974 = vmatpush1.msra.mxu0 0.0
        %1975 = vmatprep.subr.mxu0 0.0
        %1976 = vmatpush1.msra.mxu0 0.0
        %1977 = vmatprep.subr.mxu0 0.0
        %1978 = vmatpush1.msra.mxu0 0.0
        %1979 = vmatprep.subr.mxu0 0.0
        %1980 = vmatpush1.msra.mxu0 0.0
        %1981 = vmatprep.subr.mxu0 0.0
        %1982 = vmatpush1.msra.mxu0 0.0
        %1983 = vmatprep.subr.mxu0 0.0
        %1984 = vmatpush1.msra.mxu0 0.0
        %1985 = vmatprep.subr.mxu0 0.0
        %1986 = vmatpush1.msra.mxu0 0.0
        %1987 = vmatprep.mubr.f32.mxu0 0.0
        %1988 = vmatmul.mubr.f32.gmra.mrb[0].mxu0 %v1921
        %v1989 = vpop.f32.mrb[0].mxu0
        %v1990 = vadd.f32 %v1918, %v1989
        %v1991 = vpop.f32.mrb[0].mxu0
        %1992 = vdwg.mxu0
        %v1993 = vadd.f32 %v1116, %v1990
        %v1994 = vsel %vm959, %v1993, 0.0
        %1995 = vadd.xlane.f32.xlu0 %v1994
        %v1996 = vpop.xlane.xlu0 %1995
        %v1997 = vmul.f32 %v1996, %v966
        %v1998 = vsub.f32 %v1993, %v1997
        %v1999 = vmul.f32 %v1998, %v1998
        %v2000 = vsel %vm959, %v1999, 0.0
        %2001 = vadd.xlane.f32.xlu0 %v2000
        %v2002 = vpop.xlane.xlu0 %2001
        %v2003 = vmul.f32 %v2002, %v966
        %v2004 = vadd.f32 %v2003, 1e-05
        %v2005 = vrsqrt.pop %v2004
        %v2006 = vmul.f32 %v1998, %v2005
        %v2007 = vlaneseq
        %v2008 = vshrl.u32 %v2007, 7
        %v2009 = vsub.s32 2, %v2008
        %v2010 = vrot.slane %v1119, %v2009
        %v2011 = vmul.f32 %v2006, %v2010
        %v2012 = vlaneseq
        %v2013 = vshrl.u32 %v2012, 7
        %v2014 = vsub.s32 3, %v2013
        %v2015 = vrot.slane %v1119, %v2014
        %v2016 = vadd.f32 %v2011, %v2015
        %v2017 = vld [vmem:[%s13] sm:$0xf]
        %v2018 = vld [vmem:[%s13 + $0x4] sm:$0xf]
        %v2019 = vld [vmem:[%s13 + $0x8] sm:$0xf]
        %v2020 = vld [vmem:[%s13 + $0xc] sm:$0xf]
        %v2021 = vunpack.c.l.bf16 %v2017
        %v2022 = vunpack.c.l.bf16 %v2018
        %v2023 = vunpack.c.l.bf16 %v2019
        %v2024 = vunpack.c.l.bf16 %v2020
        %v2026 = vsel %vm959, %v2016, 0
        %2028 = vmatprep.subr.mxu0 0.0
        %2029 = vmatpush1.msra.mxu0 %v2021
        %2030 = vmatprep.subr.mxu0 0.0
        %2031 = vmatpush1.msra.mxu0 %v2022
        %2032 = vmatprep.subr.mxu0 0.0
        %2033 = vmatpush1.msra.mxu0 %v2023
        %2034 = vmatprep.subr.mxu0 0.0
        %2035 = vmatpush1.msra.mxu0 %v2024
        %2036 = vmatprep.subr.mxu0 0.0
        %2037 = vmatpush1.msra.mxu0 0.0
        %2038 = vmatprep.subr.mxu0 0.0
        %2039 = vmatpush1.msra.mxu0 0.0
        %2040 = vmatprep.subr.mxu0 0.0
        %2041 = vmatpush1.msra.mxu0 0.0
        %2042 = vmatprep.subr.mxu0 0.0
        %2043 = vmatpush1.msra.mxu0 0.0
        %2044 = vmatprep.subr.mxu0 0.0
        %2045 = vmatpush1.msra.mxu0 0.0
        %2046 = vmatprep.subr.mxu0 0.0
        %2047 = vmatpush1.msra.mxu0 0.0
        %2048 = vmatprep.subr.mxu0 0.0
        %2049 = vmatpush1.msra.mxu0 0.0
        %2050 = vmatprep.subr.mxu0 0.0
        %2051 = vmatpush1.msra.mxu0 0.0
        %2052 = vmatprep.subr.mxu0 0.0
        %2053 = vmatpush1.msra.mxu0 0.0
        %2054 = vmatprep.subr.mxu0 0.0
        %2055 = vmatpush1.msra.mxu0 0.0
        %2056 = vmatprep.subr.mxu0 0.0
        %2057 = vmatpush1.msra.mxu0 0.0
        %2058 = vmatprep.subr.mxu0 0.0
        %2059 = vmatpush1.msra.mxu0 0.0
        %2060 = vmatprep.subr.mxu0 0.0
        %2061 = vmatpush1.msra.mxu0 0.0
        %2062 = vmatprep.subr.mxu0 0.0
        %2063 = vmatpush1.msra.mxu0 0.0
        %2064 = vmatprep.subr.mxu0 0.0
        %2065 = vmatpush1.msra.mxu0 0.0
        %2066 = vmatprep.subr.mxu0 0.0
        %2067 = vmatpush1.msra.mxu0 0.0
        %2068 = vmatprep.subr.mxu0 0.0
        %2069 = vmatpush1.msra.mxu0 0.0
        %2070 = vmatprep.subr.mxu0 0.0
        %2071 = vmatpush1.msra.mxu0 0.0
        %2072 = vmatprep.subr.mxu0 0.0
        %2073 = vmatpush1.msra.mxu0 0.0
        %2074 = vmatprep.subr.mxu0 0.0
        %2075 = vmatpush1.msra.mxu0 0.0
        %2076 = vmatprep.subr.mxu0 0.0
        %2077 = vmatpush1.msra.mxu0 0.0
        %2078 = vmatprep.subr.mxu0 0.0
        %2079 = vmatpush1.msra.mxu0 0.0
        %2080 = vmatprep.subr.mxu0 0.0
        %2081 = vmatpush1.msra.mxu0 0.0
        %2082 = vmatprep.subr.mxu0 0.0
        %2083 = vmatpush1.msra.mxu0 0.0
        %2084 = vmatprep.subr.mxu0 0.0
        %2085 = vmatpush1.msra.mxu0 0.0
        %2086 = vmatprep.subr.mxu0 0.0
        %2087 = vmatpush1.msra.mxu0 0.0
        %2088 = vmatprep.subr.mxu0 0.0
        %2089 = vmatpush1.msra.mxu0 0.0
        %2090 = vmatprep.subr.mxu0 0.0
        %2091 = vmatpush1.msra.mxu0 0.0
        %2092 = vmatprep.mubr.f32.mxu0 0.0
        %2093 = vmatmul.mubr.f32.gmra.mrb[0].mxu0 %v2026
        %v2094 = vpop.f32.mrb[0].mxu0
        %v2095 = vadd.f32 0.0, %v2094
        %v2096 = vpop.f32.mrb[0].mxu0
        %2097 = vdwg.mxu0
        %v2098 = vld [vmem:[%s14] sm:$0xf]
        %v2099 = vld [vmem:[%s14 + $0x4] sm:$0xf]
        %v2100 = vld [vmem:[%s14 + $0x8] sm:$0xf]
        %v2101 = vld [vmem:[%s14 + $0xc] sm:$0xf]
        %v2102 = vunpack.c.l.bf16 %v2098
        %v2103 = vunpack.c.l.bf16 %v2099
        %v2104 = vunpack.c.l.bf16 %v2100
        %v2105 = vunpack.c.l.bf16 %v2101
        %v2107 = vsel %vm959, %v997, 0
        %v2110 = vsel %vm959, %v998, 0
        %2112 = vmatprep.subr.mxu0 0.0
        %2113 = vmatpush1.msra.mxu0 %v2102
        %2114 = vmatprep.subr.mxu0 0.0
        %2115 = vmatpush1.msra.mxu0 %v2103
        %2116 = vmatprep.subr.mxu0 0.0
        %2117 = vmatpush1.msra.mxu0 %v2104
        %2118 = vmatprep.subr.mxu0 0.0
        %2119 = vmatpush1.msra.mxu0 %v2105
        %2120 = vmatprep.subr.mxu0 0.0
        %2121 = vmatpush1.msra.mxu0 0.0
        %2122 = vmatprep.subr.mxu0 0.0
        %2123 = vmatpush1.msra.mxu0 0.0
        %2124 = vmatprep.subr.mxu0 0.0
        %2125 = vmatpush1.msra.mxu0 0.0
        %2126 = vmatprep.subr.mxu0 0.0
        %2127 = vmatpush1.msra.mxu0 0.0
        %2128 = vmatprep.subr.mxu0 0.0
        %2129 = vmatpush1.msra.mxu0 0.0
        %2130 = vmatprep.subr.mxu0 0.0
        %2131 = vmatpush1.msra.mxu0 0.0
        %2132 = vmatprep.subr.mxu0 0.0
        %2133 = vmatpush1.msra.mxu0 0.0
        %2134 = vmatprep.subr.mxu0 0.0
        %2135 = vmatpush1.msra.mxu0 0.0
        %2136 = vmatprep.subr.mxu0 0.0
        %2137 = vmatpush1.msra.mxu0 0.0
        %2138 = vmatprep.subr.mxu0 0.0
        %2139 = vmatpush1.msra.mxu0 0.0
        %2140 = vmatprep.subr.mxu0 0.0
        %2141 = vmatpush1.msra.mxu0 0.0
        %2142 = vmatprep.subr.mxu0 0.0
        %2143 = vmatpush1.msra.mxu0 0.0
        %2144 = vmatprep.subr.mxu0 0.0
        %2145 = vmatpush1.msra.mxu0 0.0
        %2146 = vmatprep.subr.mxu0 0.0
        %2147 = vmatpush1.msra.mxu0 0.0
        %2148 = vmatprep.subr.mxu0 0.0
        %2149 = vmatpush1.msra.mxu0 0.0
        %2150 = vmatprep.subr.mxu0 0.0
        %2151 = vmatpush1.msra.mxu0 0.0
        %2152 = vmatprep.subr.mxu0 0.0
        %2153 = vmatpush1.msra.mxu0 0.0
        %2154 = vmatprep.subr.mxu0 0.0
        %2155 = vmatpush1.msra.mxu0 0.0
        %2156 = vmatprep.subr.mxu0 0.0
        %2157 = vmatpush1.msra.mxu0 0.0
        %2158 = vmatprep.subr.mxu0 0.0
        %2159 = vmatpush1.msra.mxu0 0.0
        %2160 = vmatprep.subr.mxu0 0.0
        %2161 = vmatpush1.msra.mxu0 0.0
        %2162 = vmatprep.subr.mxu0 0.0
        %2163 = vmatpush1.msra.mxu0 0.0
        %2164 = vmatprep.subr.mxu0 0.0
        %2165 = vmatpush1.msra.mxu0 0.0
        %2166 = vmatprep.subr.mxu0 0.0
        %2167 = vmatpush1.msra.mxu0 0.0
        %2168 = vmatprep.subr.mxu0 0.0
        %2169 = vmatpush1.msra.mxu0 0.0
        %2170 = vmatprep.subr.mxu0 0.0
        %2171 = vmatpush1.msra.mxu0 0.0
        %2172 = vmatprep.subr.mxu0 0.0
        %2173 = vmatpush1.msra.mxu0 0.0
        %2174 = vmatprep.subr.mxu0 0.0
        %2175 = vmatpush1.msra.mxu0 0.0
        %2176 = vmatprep.mubr.f32.mxu0 0.0
        %2177 = vmatmul.mubr.f32.gmra.mrb[0].mxu0 %v2107
        %v2178 = vpop.f32.mrb[0].mxu0
        %v2179 = vadd.f32 0.0, %v2178
        %v2180 = vpop.f32.mrb[0].mxu0
        %2181 = vmatprep.mubr.f32.mxu0 0.0
        %2182 = vmatmul.mubr.f32.gmra.mrb[0].mxu0 %v2110
        %v2183 = vpop.f32.mrb[0].mxu0
        %v2184 = vadd.f32 0.0, %v2183
        %v2185 = vpop.f32.mrb[0].mxu0
        %2186 = vdwg.mxu0
        %v2187 = vld [vmem:[%s15] sm:$0xf]
        %v2188 = vld [vmem:[%s15 + $0x4] sm:$0xf]
        %v2189 = vld [vmem:[%s15 + $0x8] sm:$0xf]
        %v2190 = vld [vmem:[%s15 + $0xc] sm:$0xf]
        %v2191 = vunpack.c.l.bf16 %v2187
        %v2192 = vunpack.c.l.bf16 %v2188
        %v2193 = vunpack.c.l.bf16 %v2189
        %v2194 = vunpack.c.l.bf16 %v2190
        %v2195 = vld [vmem:[#allocation5] sm:$0x1]
        %v2197 = vsel %vm1236, %v2095, 0
        %v2200 = vsel %vm1236, %v2179, 0
        %v2203 = vsel %vm1236, %v2184, 0
        %2205 = vmatprep.subr.mxu0 0.0
        %2206 = vmatpush1.xpose.msra.mxu0 %v2200
        %2207 = vmatprep.subr.mxu0 0.0
        %2208 = vmatpush1.xpose.msra.mxu0 %v2203
        %2209 = vmatprep.subr.mxu0 0.0
        %2210 = vmatpush1.xpose.msra.mxu0 0.0
        %2211 = vmatprep.subr.mxu0 0.0
        %2212 = vmatpush1.xpose.msra.mxu0 0.0
        %2213 = vmatprep.subr.mxu0 0.0
        %2214 = vmatpush1.xpose.msra.mxu0 0.0
        %2215 = vmatprep.subr.mxu0 0.0
        %2216 = vmatpush1.xpose.msra.mxu0 0.0
        %2217 = vmatprep.subr.mxu0 0.0
        %2218 = vmatpush1.xpose.msra.mxu0 0.0
        %2219 = vmatprep.subr.mxu0 0.0
        %2220 = vmatpush1.xpose.msra.mxu0 0.0
        %2221 = vmatprep.subr.mxu0 0.0
        %2222 = vmatpush1.xpose.msra.mxu0 0.0
        %2223 = vmatprep.subr.mxu0 0.0
        %2224 = vmatpush1.xpose.msra.mxu0 0.0
        %2225 = vmatprep.subr.mxu0 0.0
        %2226 = vmatpush1.xpose.msra.mxu0 0.0
        %2227 = vmatprep.subr.mxu0 0.0
        %2228 = vmatpush1.xpose.msra.mxu0 0.0
        %2229 = vmatprep.subr.mxu0 0.0
        %2230 = vmatpush1.xpose.msra.mxu0 0.0
        %2231 = vmatprep.subr.mxu0 0.0
        %2232 = vmatpush1.xpose.msra.mxu0 0.0
        %2233 = vmatprep.subr.mxu0 0.0
        %2234 = vmatpush1.xpose.msra.mxu0 0.0
        %2235 = vmatprep.subr.mxu0 0.0
        %2236 = vmatpush1.xpose.msra.mxu0 0.0
        %2237 = vmatprep.subr.mxu0 0.0
        %2238 = vmatpush1.xpose.msra.mxu0 0.0
        %2239 = vmatprep.subr.mxu0 0.0
        %2240 = vmatpush1.xpose.msra.mxu0 0.0
        %2241 = vmatprep.subr.mxu0 0.0
        %2242 = vmatpush1.xpose.msra.mxu0 0.0
        %2243 = vmatprep.subr.mxu0 0.0
        %2244 = vmatpush1.xpose.msra.mxu0 0.0
        %2245 = vmatprep.subr.mxu0 0.0
        %2246 = vmatpush1.xpose.msra.mxu0 0.0
        %2247 = vmatprep.subr.mxu0 0.0
        %2248 = vmatpush1.xpose.msra.mxu0 0.0
        %2249 = vmatprep.subr.mxu0 0.0
        %2250 = vmatpush1.xpose.msra.mxu0 0.0
        %2251 = vmatprep.subr.mxu0 0.0
        %2252 = vmatpush1.xpose.msra.mxu0 0.0
        %2253 = vmatprep.subr.mxu0 0.0
        %2254 = vmatpush1.xpose.msra.mxu0 0.0
        %2255 = vmatprep.subr.mxu0 0.0
        %2256 = vmatpush1.xpose.msra.mxu0 0.0
        %2257 = vmatprep.subr.mxu0 0.0
        %2258 = vmatpush1.xpose.msra.mxu0 0.0
        %2259 = vmatprep.subr.mxu0 0.0
        %2260 = vmatpush1.xpose.msra.mxu0 0.0
        %2261 = vmatprep.subr.mxu0 0.0
        %2262 = vmatpush1.xpose.msra.mxu0 0.0
        %2263 = vmatprep.subr.mxu0 0.0
        %2264 = vmatpush1.xpose.msra.mxu0 0.0
        %2265 = vmatprep.subr.mxu0 0.0
        %2266 = vmatpush1.xpose.msra.mxu0 0.0
        %2267 = vmatprep.subr.mxu0 0.0
        %2268 = vmatpush1.xpose.msra.mxu0 0.0
        %2269 = vmatprep.mubr.f32.mxu0 0.0
        %2270 = vmatmul.mubr.f32.gmra.mrb[0].mxu0 %v2197
        %v2271 = vpop.f32.mrb[0].mxu0
        %v2272 = vadd.f32 0.0, %v2271
        %v2273 = vpop.f32.mrb[0].mxu0
        %2274 = vdwg.mxu0
        %v2275 = vmul.f32 %v2272, 0.35355338
        %v2276 = vsel %vm1910, %v2275, -inf
        %2277 = vmax.xlane.f32.xlu0 %v2276
        %v2278 = vpop.xlane.xlu0 %2277
        %v2279 = vsub.f32 %v2275, %v2278
        %v2280 = vmul.f32 %v2279, 1.442695
        %v2281 = vpow.pop %v2280
        %v2282 = vsel %vm1910, %v2281, 0.0
        %2283 = vadd.xlane.f32.xlu0 %v2282
        %v2284 = vpop.xlane.xlu0 %2283
        %v2285 = vrcp.pop %v2284
        %v2286 = vmul.f32 %v2281, %v2285
        %2287 = vrot.lane.b32.xlu0 %v2179, 96
        %v2288 = vpop.permute.xlu0 %2287
        %2289 = vrot.lane.b32.xlu0 %v2184, 96
        %v2290 = vpop.permute.xlu0 %2289
        %v2294 = vsel %vm1910, %v2286, 0
        %2296 = vmatprep.subr.mxu0 0.0
        %2297 = vmatpush1.msra.mxu0 %v2288
        %2298 = vmatprep.subr.mxu0 0.0
        %2299 = vmatpush1.msra.mxu0 %v2290
        %2300 = vmatprep.subr.mxu0 0.0
        %2301 = vmatpush1.msra.mxu0 0.0
        %2302 = vmatprep.subr.mxu0 0.0
        %2303 = vmatpush1.msra.mxu0 0.0
        %2304 = vmatprep.subr.mxu0 0.0
        %2305 = vmatpush1.msra.mxu0 0.0
        %2306 = vmatprep.subr.mxu0 0.0
        %2307 = vmatpush1.msra.mxu0 0.0
        %2308 = vmatprep.subr.mxu0 0.0
        %2309 = vmatpush1.msra.mxu0 0.0
        %2310 = vmatprep.subr.mxu0 0.0
        %2311 = vmatpush1.msra.mxu0 0.0
        %2312 = vmatprep.subr.mxu0 0.0
        %2313 = vmatpush1.msra.mxu0 0.0
        %2314 = vmatprep.subr.mxu0 0.0
        %2315 = vmatpush1.msra.mxu0 0.0
        %2316 = vmatprep.subr.mxu0 0.0
        %2317 = vmatpush1.msra.mxu0 0.0
        %2318 = vmatprep.subr.mxu0 0.0
        %2319 = vmatpush1.msra.mxu0 0.0
        %2320 = vmatprep.subr.mxu0 0.0
        %2321 = vmatpush1.msra.mxu0 0.0
        %2322 = vmatprep.subr.mxu0 0.0
        %2323 = vmatpush1.msra.mxu0 0.0
        %2324 = vmatprep.subr.mxu0 0.0
        %2325 = vmatpush1.msra.mxu0 0.0
        %2326 = vmatprep.subr.mxu0 0.0
        %2327 = vmatpush1.msra.mxu0 0.0
        %2328 = vmatprep.subr.mxu0 0.0
        %2329 = vmatpush1.msra.mxu0 0.0
        %2330 = vmatprep.subr.mxu0 0.0
        %2331 = vmatpush1.msra.mxu0 0.0
        %2332 = vmatprep.subr.mxu0 0.0
        %2333 = vmatpush1.msra.mxu0 0.0
        %2334 = vmatprep.subr.mxu0 0.0
        %2335 = vmatpush1.msra.mxu0 0.0
        %2336 = vmatprep.subr.mxu0 0.0
        %2337 = vmatpush1.msra.mxu0 0.0
        %2338 = vmatprep.subr.mxu0 0.0
        %2339 = vmatpush1.msra.mxu0 0.0
        %2340 = vmatprep.subr.mxu0 0.0
        %2341 = vmatpush1.msra.mxu0 0.0
        %2342 = vmatprep.subr.mxu0 0.0
        %2343 = vmatpush1.msra.mxu0 0.0
        %2344 = vmatprep.subr.mxu0 0.0
        %2345 = vmatpush1.msra.mxu0 0.0
        %2346 = vmatprep.subr.mxu0 0.0
        %2347 = vmatpush1.msra.mxu0 0.0
        %2348 = vmatprep.subr.mxu0 0.0
        %2349 = vmatpush1.msra.mxu0 0.0
        %2350 = vmatprep.subr.mxu0 0.0
        %2351 = vmatpush1.msra.mxu0 0.0
        %2352 = vmatprep.subr.mxu0 0.0
        %2353 = vmatpush1.msra.mxu0 0.0
        %2354 = vmatprep.subr.mxu0 0.0
        %2355 = vmatpush1.msra.mxu0 0.0
        %2356 = vmatprep.subr.mxu0 0.0
        %2357 = vmatpush1.msra.mxu0 0.0
        %2358 = vmatprep.subr.mxu0 0.0
        %2359 = vmatpush1.msra.mxu0 0.0
        %2360 = vmatprep.mubr.f32.mxu0 0.0
        %2361 = vmatmul.mubr.f32.gmra.mrb[0].mxu0 %v2294
        %v2362 = vpop.f32.mrb[0].mxu0
        %v2363 = vadd.f32 0.0, %v2362
        %v2364 = vpop.f32.mrb[0].mxu0
        %2365 = vdwg.mxu0
        %2366 = vrot.lane.b32.xlu0 %v2095, 120
        %v2367 = vpop.permute.xlu0 %2366
        %2368 = vrot.lane.b32.xlu0 %v2179, 120
        %v2369 = vpop.permute.xlu0 %2368
        %2370 = vrot.lane.b32.xlu0 %v2184, 120
        %v2371 = vpop.permute.xlu0 %2370
        %v2372 = vsel %vm1236, %v2367, 0
        %v2374 = vsel %vm1236, %v2369, 0
        %v2376 = vsel %vm1236, %v2371, 0
        %2378 = vmatprep.subr.mxu0 0.0
        %2379 = vmatpush1.xpose.msra.mxu0 %v2374
        %2380 = vmatprep.subr.mxu0 0.0
        %2381 = vmatpush1.xpose.msra.mxu0 %v2376
        %2382 = vmatprep.subr.mxu0 0.0
        %2383 = vmatpush1.xpose.msra.mxu0 0.0
        %2384 = vmatprep.subr.mxu0 0.0
        %2385 = vmatpush1.xpose.msra.mxu0 0.0
        %2386 = vmatprep.subr.mxu0 0.0
        %2387 = vmatpush1.xpose.msra.mxu0 0.0
        %2388 = vmatprep.subr.mxu0 0.0
        %2389 = vmatpush1.xpose.msra.mxu0 0.0
        %2390 = vmatprep.subr.mxu0 0.0
        %2391 = vmatpush1.xpose.msra.mxu0 0.0
        %2392 = vmatprep.subr.mxu0 0.0
        %2393 = vmatpush1.xpose.msra.mxu0 0.0
        %2394 = vmatprep.subr.mxu0 0.0
        %2395 = vmatpush1.xpose.msra.mxu0 0.0
        %2396 = vmatprep.subr.mxu0 0.0
        %2397 = vmatpush1.xpose.msra.mxu0 0.0
        %2398 = vmatprep.subr.mxu0 0.0
        %2399 = vmatpush1.xpose.msra.mxu0 0.0
        %2400 = vmatprep.subr.mxu0 0.0
        %2401 = vmatpush1.xpose.msra.mxu0 0.0
        %2402 = vmatprep.subr.mxu0 0.0
        %2403 = vmatpush1.xpose.msra.mxu0 0.0
        %2404 = vmatprep.subr.mxu0 0.0
        %2405 = vmatpush1.xpose.msra.mxu0 0.0
        %2406 = vmatprep.subr.mxu0 0.0
        %2407 = vmatpush1.xpose.msra.mxu0 0.0
        %2408 = vmatprep.subr.mxu0 0.0
        %2409 = vmatpush1.xpose.msra.mxu0 0.0
        %2410 = vmatprep.subr.mxu0 0.0
        %2411 = vmatpush1.xpose.msra.mxu0 0.0
        %2412 = vmatprep.subr.mxu0 0.0
        %2413 = vmatpush1.xpose.msra.mxu0 0.0
        %2414 = vmatprep.subr.mxu0 0.0
        %2415 = vmatpush1.xpose.msra.mxu0 0.0
        %2416 = vmatprep.subr.mxu0 0.0
        %2417 = vmatpush1.xpose.msra.mxu0 0.0
        %2418 = vmatprep.subr.mxu0 0.0
        %2419 = vmatpush1.xpose.msra.mxu0 0.0
        %2420 = vmatprep.subr.mxu0 0.0
        %2421 = vmatpush1.xpose.msra.mxu0 0.0
        %2422 = vmatprep.subr.mxu0 0.0
        %2423 = vmatpush1.xpose.msra.mxu0 0.0
        %2424 = vmatprep.subr.mxu0 0.0
        %2425 = vmatpush1.xpose.msra.mxu0 0.0
        %2426 = vmatprep.subr.mxu0 0.0
        %2427 = vmatpush1.xpose.msra.mxu0 0.0
        %2428 = vmatprep.subr.mxu0 0.0
        %2429 = vmatpush1.xpose.msra.mxu0 0.0
        %2430 = vmatprep.subr.mxu0 0.0
        %2431 = vmatpush1.xpose.msra.mxu0 0.0
        %2432 = vmatprep.subr.mxu0 0.0
        %2433 = vmatpush1.xpose.msra.mxu0 0.0
        %2434 = vmatprep.subr.mxu0 0.0
        %2435 = vmatpush1.xpose.msra.mxu0 0.0
        %2436 = vmatprep.subr.mxu0 0.0
        %2437 = vmatpush1.xpose.msra.mxu0 0.0
        %2438 = vmatprep.subr.mxu0 0.0
        %2439 = vmatpush1.xpose.msra.mxu0 0.0
        %2440 = vmatprep.subr.mxu0 0.0
        %2441 = vmatpush1.xpose.msra.mxu0 0.0
        %2442 = vmatprep.mubr.f32.mxu0 0.0
        %2443 = vmatmul.mubr.f32.gmra.mrb[0].mxu0 %v2372
        %v2444 = vpop.f32.mrb[0].mxu0
        %v2445 = vadd.f32 0.0, %v2444
        %v2446 = vpop.f32.mrb[0].mxu0
        %2447 = vdwg.mxu0
        %v2448 = vmul.f32 %v2445, 0.35355338
        %v2449 = vsel %vm1910, %v2448, -inf
        %2450 = vmax.xlane.f32.xlu0 %v2449
        %v2451 = vpop.xlane.xlu0 %2450
        %v2452 = vsub.f32 %v2448, %v2451
        %v2453 = vmul.f32 %v2452, 1.442695
        %v2454 = vpow.pop %v2453
        %v2455 = vsel %vm1910, %v2454, 0.0
        %2456 = vadd.xlane.f32.xlu0 %v2455
        %v2457 = vpop.xlane.xlu0 %2456
        %v2458 = vrcp.pop %v2457
        %v2459 = vmul.f32 %v2454, %v2458
        %2460 = vrot.lane.b32.xlu0 %v2179, 88
        %v2461 = vpop.permute.xlu0 %2460
        %2462 = vrot.lane.b32.xlu0 %v2184, 88
        %v2463 = vpop.permute.xlu0 %2462
        %v2467 = vsel %vm1910, %v2459, 0
        %2469 = vmatprep.subr.mxu0 0.0
        %2470 = vmatpush1.msra.mxu0 %v2461
        %2471 = vmatprep.subr.mxu0 0.0
        %2472 = vmatpush1.msra.mxu0 %v2463
        %2473 = vmatprep.subr.mxu0 0.0
        %2474 = vmatpush1.msra.mxu0 0.0
        %2475 = vmatprep.subr.mxu0 0.0
        %2476 = vmatpush1.msra.mxu0 0.0
        %2477 = vmatprep.subr.mxu0 0.0
        %2478 = vmatpush1.msra.mxu0 0.0
        %2479 = vmatprep.subr.mxu0 0.0
        %2480 = vmatpush1.msra.mxu0 0.0
        %2481 = vmatprep.subr.mxu0 0.0
        %2482 = vmatpush1.msra.mxu0 0.0
        %2483 = vmatprep.subr.mxu0 0.0
        %2484 = vmatpush1.msra.mxu0 0.0
        %2485 = vmatprep.subr.mxu0 0.0
        %2486 = vmatpush1.msra.mxu0 0.0
        %2487 = vmatprep.subr.mxu0 0.0
        %2488 = vmatpush1.msra.mxu0 0.0
        %2489 = vmatprep.subr.mxu0 0.0
        %2490 = vmatpush1.msra.mxu0 0.0
        %2491 = vmatprep.subr.mxu0 0.0
        %2492 = vmatpush1.msra.mxu0 0.0
        %2493 = vmatprep.subr.mxu0 0.0
        %2494 = vmatpush1.msra.mxu0 0.0
        %2495 = vmatprep.subr.mxu0 0.0
        %2496 = vmatpush1.msra.mxu0 0.0
        %2497 = vmatprep.subr.mxu0 0.0
        %2498 = vmatpush1.msra.mxu0 0.0
        %2499 = vmatprep.subr.mxu0 0.0
        %2500 = vmatpush1.msra.mxu0 0.0
        %2501 = vmatprep.subr.mxu0 0.0
        %2502 = vmatpush1.msra.mxu0 0.0
        %2503 = vmatprep.subr.mxu0 0.0
        %2504 = vmatpush1.msra.mxu0 0.0
        %2505 = vmatprep.subr.mxu0 0.0
        %2506 = vmatpush1.msra.mxu0 0.0
        %2507 = vmatprep.subr.mxu0 0.0
        %2508 = vmatpush1.msra.mxu0 0.0
        %2509 = vmatprep.subr.mxu0 0.0
        %2510 = vmatpush1.msra.mxu0 0.0
        %2511 = vmatprep.subr.mxu0 0.0
        %2512 = vmatpush1.msra.mxu0 0.0
        %2513 = vmatprep.subr.mxu0 0.0
        %2514 = vmatpush1.msra.mxu0 0.0
        %2515 = vmatprep.subr.mxu0 0.0
        %2516 = vmatpush1.msra.mxu0 0.0
        %2517 = vmatprep.subr.mxu0 0.0
        %2518 = vmatpush1.msra.mxu0 0.0
        %2519 = vmatprep.subr.mxu0 0.0
        %2520 = vmatpush1.msra.mxu0 0.0
        %2521 = vmatprep.subr.mxu0 0.0
        %2522 = vmatpush1.msra.mxu0 0.0
        %2523 = vmatprep.subr.mxu0 0.0
        %2524 = vmatpush1.msra.mxu0 0.0
        %2525 = vmatprep.subr.mxu0 0.0
        %2526 = vmatpush1.msra.mxu0 0.0
        %2527 = vmatprep.subr.mxu0 0.0
        %2528 = vmatpush1.msra.mxu0 0.0
        %2529 = vmatprep.subr.mxu0 0.0
        %2530 = vmatpush1.msra.mxu0 0.0
        %2531 = vmatprep.subr.mxu0 0.0
        %2532 = vmatpush1.msra.mxu0 0.0
        %2533 = vmatprep.mubr.f32.mxu0 0.0
        %2534 = vmatmul.mubr.f32.gmra.mrb[0].mxu0 %v2467
        %v2535 = vpop.f32.mrb[0].mxu0
        %v2536 = vadd.f32 0.0, %v2535
        %v2537 = vpop.f32.mrb[0].mxu0
        %2538 = vdwg.mxu0
        %2539 = vrot.lane.b32.xlu0 %v2095, 112
        %v2540 = vpop.permute.xlu0 %2539
        %2541 = vrot.lane.b32.xlu0 %v2179, 112
        %v2542 = vpop.permute.xlu0 %2541
        %2543 = vrot.lane.b32.xlu0 %v2184, 112
        %v2544 = vpop.permute.xlu0 %2543
        %v2545 = vsel %vm1236, %v2540, 0
        %v2547 = vsel %vm1236, %v2542, 0
        %v2549 = vsel %vm1236, %v2544, 0
        %2551 = vmatprep.subr.mxu0 0.0
        %2552 = vmatpush1.xpose.msra.mxu0 %v2547
        %2553 = vmatprep.subr.mxu0 0.0
        %2554 = vmatpush1.xpose.msra.mxu0 %v2549
        %2555 = vmatprep.subr.mxu0 0.0
        %2556 = vmatpush1.xpose.msra.mxu0 0.0
        %2557 = vmatprep.subr.mxu0 0.0
        %2558 = vmatpush1.xpose.msra.mxu0 0.0
        %2559 = vmatprep.subr.mxu0 0.0
        %2560 = vmatpush1.xpose.msra.mxu0 0.0
        %2561 = vmatprep.subr.mxu0 0.0
        %2562 = vmatpush1.xpose.msra.mxu0 0.0
        %2563 = vmatprep.subr.mxu0 0.0
        %2564 = vmatpush1.xpose.msra.mxu0 0.0
        %2565 = vmatprep.subr.mxu0 0.0
        %2566 = vmatpush1.xpose.msra.mxu0 0.0
        %2567 = vmatprep.subr.mxu0 0.0
        %2568 = vmatpush1.xpose.msra.mxu0 0.0
        %2569 = vmatprep.subr.mxu0 0.0
        %2570 = vmatpush1.xpose.msra.mxu0 0.0
        %2571 = vmatprep.subr.mxu0 0.0
        %2572 = vmatpush1.xpose.msra.mxu0 0.0
        %2573 = vmatprep.subr.mxu0 0.0
        %2574 = vmatpush1.xpose.msra.mxu0 0.0
        %2575 = vmatprep.subr.mxu0 0.0
        %2576 = vmatpush1.xpose.msra.mxu0 0.0
        %2577 = vmatprep.subr.mxu0 0.0
        %2578 = vmatpush1.xpose.msra.mxu0 0.0
        %2579 = vmatprep.subr.mxu0 0.0
        %2580 = vmatpush1.xpose.msra.mxu0 0.0
        %2581 = vmatprep.subr.mxu0 0.0
        %2582 = vmatpush1.xpose.msra.mxu0 0.0
        %2583 = vmatprep.subr.mxu0 0.0
        %2584 = vmatpush1.xpose.msra.mxu0 0.0
        %2585 = vmatprep.subr.mxu0 0.0
        %2586 = vmatpush1.xpose.msra.mxu0 0.0
        %2587 = vmatprep.subr.mxu0 0.0
        %2588 = vmatpush1.xpose.msra.mxu0 0.0
        %2589 = vmatprep.subr.mxu0 0.0
        %2590 = vmatpush1.xpose.msra.mxu0 0.0
        %2591 = vmatprep.subr.mxu0 0.0
        %2592 = vmatpush1.xpose.msra.mxu0 0.0
        %2593 = vmatprep.subr.mxu0 0.0
        %2594 = vmatpush1.xpose.msra.mxu0 0.0
        %2595 = vmatprep.subr.mxu0 0.0
        %2596 = vmatpush1.xpose.msra.mxu0 0.0
        %2597 = vmatprep.subr.mxu0 0.0
        %2598 = vmatpush1.xpose.msra.mxu0 0.0
        %2599 = vmatprep.subr.mxu0 0.0
        %2600 = vmatpush1.xpose.msra.mxu0 0.0
        %2601 = vmatprep.subr.mxu0 0.0
        %2602 = vmatpush1.xpose.msra.mxu0 0.0
        %2603 = vmatprep.subr.mxu0 0.0
        %2604 = vmatpush1.xpose.msra.mxu0 0.0
        %2605 = vmatprep.subr.mxu0 0.0
        %2606 = vmatpush1.xpose.msra.mxu0 0.0
        %2607 = vmatprep.subr.mxu0 0.0
        %2608 = vmatpush1.xpose.msra.mxu0 0.0
        %2609 = vmatprep.subr.mxu0 0.0
        %2610 = vmatpush1.xpose.msra.mxu0 0.0
        %2611 = vmatprep.subr.mxu0 0.0
        %2612 = vmatpush1.xpose.msra.mxu0 0.0
        %2613 = vmatprep.subr.mxu0 0.0
        %2614 = vmatpush1.xpose.msra.mxu0 0.0
        %2615 = vmatprep.mubr.f32.mxu0 0.0
        %2616 = vmatmul.mubr.f32.gmra.mrb[0].mxu0 %v2545
        %v2617 = vpop.f32.mrb[0].mxu0
        %v2618 = vadd.f32 0.0, %v2617
        %v2619 = vpop.f32.mrb[0].mxu0
        %2620 = vdwg.mxu0
        %v2621 = vmul.f32 %v2618, 0.35355338
        %v2622 = vsel %vm1910, %v2621, -inf
        %2623 = vmax.xlane.f32.xlu0 %v2622
        %v2624 = vpop.xlane.xlu0 %2623
        %v2625 = vsub.f32 %v2621, %v2624
        %v2626 = vmul.f32 %v2625, 1.442695
        %v2627 = vpow.pop %v2626
        %v2628 = vsel %vm1910, %v2627, 0.0
        %2629 = vadd.xlane.f32.xlu0 %v2628
        %v2630 = vpop.xlane.xlu0 %2629
        %v2631 = vrcp.pop %v2630
        %v2632 = vmul.f32 %v2627, %v2631
        %2633 = vrot.lane.b32.xlu0 %v2179, 80
        %v2634 = vpop.permute.xlu0 %2633
        %2635 = vrot.lane.b32.xlu0 %v2184, 80
        %v2636 = vpop.permute.xlu0 %2635
        %v2640 = vsel %vm1910, %v2632, 0
        %2642 = vmatprep.subr.mxu0 0.0
        %2643 = vmatpush1.msra.mxu0 %v2634
        %2644 = vmatprep.subr.mxu0 0.0
        %2645 = vmatpush1.msra.mxu0 %v2636
        %2646 = vmatprep.subr.mxu0 0.0
        %2647 = vmatpush1.msra.mxu0 0.0
        %2648 = vmatprep.subr.mxu0 0.0
        %2649 = vmatpush1.msra.mxu0 0.0
        %2650 = vmatprep.subr.mxu0 0.0
        %2651 = vmatpush1.msra.mxu0 0.0
        %2652 = vmatprep.subr.mxu0 0.0
        %2653 = vmatpush1.msra.mxu0 0.0
        %2654 = vmatprep.subr.mxu0 0.0
        %2655 = vmatpush1.msra.mxu0 0.0
        %2656 = vmatprep.subr.mxu0 0.0
        %2657 = vmatpush1.msra.mxu0 0.0
        %2658 = vmatprep.subr.mxu0 0.0
        %2659 = vmatpush1.msra.mxu0 0.0
        %2660 = vmatprep.subr.mxu0 0.0
        %2661 = vmatpush1.msra.mxu0 0.0
        %2662 = vmatprep.subr.mxu0 0.0
        %2663 = vmatpush1.msra.mxu0 0.0
        %2664 = vmatprep.subr.mxu0 0.0
        %2665 = vmatpush1.msra.mxu0 0.0
        %2666 = vmatprep.subr.mxu0 0.0
        %2667 = vmatpush1.msra.mxu0 0.0
        %2668 = vmatprep.subr.mxu0 0.0
        %2669 = vmatpush1.msra.mxu0 0.0
        %2670 = vmatprep.subr.mxu0 0.0
        %2671 = vmatpush1.msra.mxu0 0.0
        %2672 = vmatprep.subr.mxu0 0.0
        %2673 = vmatpush1.msra.mxu0 0.0
        %2674 = vmatprep.subr.mxu0 0.0
        %2675 = vmatpush1.msra.mxu0 0.0
        %2676 = vmatprep.subr.mxu0 0.0
        %2677 = vmatpush1.msra.mxu0 0.0
        %2678 = vmatprep.subr.mxu0 0.0
        %2679 = vmatpush1.msra.mxu0 0.0
        %2680 = vmatprep.subr.mxu0 0.0
        %2681 = vmatpush1.msra.mxu0 0.0
        %2682 = vmatprep.subr.mxu0 0.0
        %2683 = vmatpush1.msra.mxu0 0.0
        %2684 = vmatprep.subr.mxu0 0.0
        %2685 = vmatpush1.msra.mxu0 0.0
        %2686 = vmatprep.subr.mxu0 0.0
        %2687 = vmatpush1.msra.mxu0 0.0
        %2688 = vmatprep.subr.mxu0 0.0
        %2689 = vmatpush1.msra.mxu0 0.0
        %2690 = vmatprep.subr.mxu0 0.0
        %2691 = vmatpush1.msra.mxu0 0.0
        %2692 = vmatprep.subr.mxu0 0.0
        %2693 = vmatpush1.msra.mxu0 0.0
        %2694 = vmatprep.subr.mxu0 0.0
        %2695 = vmatpush1.msra.mxu0 0.0
        %2696 = vmatprep.subr.mxu0 0.0
        %2697 = vmatpush1.msra.mxu0 0.0
        %2698 = vmatprep.subr.mxu0 0.0
        %2699 = vmatpush1.msra.mxu0 0.0
        %2700 = vmatprep.subr.mxu0 0.0
        %2701 = vmatpush1.msra.mxu0 0.0
        %2702 = vmatprep.subr.mxu0 0.0
        %2703 = vmatpush1.msra.mxu0 0.0
        %2704 = vmatprep.subr.mxu0 0.0
        %2705 = vmatpush1.msra.mxu0 0.0
        %2706 = vmatprep.mubr.f32.mxu0 0.0
        %2707 = vmatmul.mubr.f32.gmra.mrb[0].mxu0 %v2640
        %v2708 = vpop.f32.mrb[0].mxu0
        %v2709 = vadd.f32 0.0, %v2708
        %v2710 = vpop.f32.mrb[0].mxu0
        %2711 = vdwg.mxu0
        %2712 = vrot.lane.b32.xlu0 %v2095, 104
        %v2713 = vpop.permute.xlu0 %2712
        %2714 = vrot.lane.b32.xlu0 %v2179, 104
        %v2715 = vpop.permute.xlu0 %2714
        %2716 = vrot.lane.b32.xlu0 %v2184, 104
        %v2717 = vpop.permute.xlu0 %2716
        %v2718 = vsel %vm1236, %v2713, 0
        %v2720 = vsel %vm1236, %v2715, 0
        %v2722 = vsel %vm1236, %v2717, 0
        %2724 = vmatprep.subr.mxu0 0.0
        %2725 = vmatpush1.xpose.msra.mxu0 %v2720
        %2726 = vmatprep.subr.mxu0 0.0
        %2727 = vmatpush1.xpose.msra.mxu0 %v2722
        %2728 = vmatprep.subr.mxu0 0.0
        %2729 = vmatpush1.xpose.msra.mxu0 0.0
        %2730 = vmatprep.subr.mxu0 0.0
        %2731 = vmatpush1.xpose.msra.mxu0 0.0
        %2732 = vmatprep.subr.mxu0 0.0
        %2733 = vmatpush1.xpose.msra.mxu0 0.0
        %2734 = vmatprep.subr.mxu0 0.0
        %2735 = vmatpush1.xpose.msra.mxu0 0.0
        %2736 = vmatprep.subr.mxu0 0.0
        %2737 = vmatpush1.xpose.msra.mxu0 0.0
        %2738 = vmatprep.subr.mxu0 0.0
        %2739 = vmatpush1.xpose.msra.mxu0 0.0
        %2740 = vmatprep.subr.mxu0 0.0
        %2741 = vmatpush1.xpose.msra.mxu0 0.0
        %2742 = vmatprep.subr.mxu0 0.0
        %2743 = vmatpush1.xpose.msra.mxu0 0.0
        %2744 = vmatprep.subr.mxu0 0.0
        %2745 = vmatpush1.xpose.msra.mxu0 0.0
        %2746 = vmatprep.subr.mxu0 0.0
        %2747 = vmatpush1.xpose.msra.mxu0 0.0
        %2748 = vmatprep.subr.mxu0 0.0
        %2749 = vmatpush1.xpose.msra.mxu0 0.0
        %2750 = vmatprep.subr.mxu0 0.0
        %2751 = vmatpush1.xpose.msra.mxu0 0.0
        %2752 = vmatprep.subr.mxu0 0.0
        %2753 = vmatpush1.xpose.msra.mxu0 0.0
        %2754 = vmatprep.subr.mxu0 0.0
        %2755 = vmatpush1.xpose.msra.mxu0 0.0
        %2756 = vmatprep.subr.mxu0 0.0
        %2757 = vmatpush1.xpose.msra.mxu0 0.0
        %2758 = vmatprep.subr.mxu0 0.0
        %2759 = vmatpush1.xpose.msra.mxu0 0.0
        %2760 = vmatprep.subr.mxu0 0.0
        %2761 = vmatpush1.xpose.msra.mxu0 0.0
        %2762 = vmatprep.subr.mxu0 0.0
        %2763 = vmatpush1.xpose.msra.mxu0 0.0
        %2764 = vmatprep.subr.mxu0 0.0
        %2765 = vmatpush1.xpose.msra.mxu0 0.0
        %2766 = vmatprep.subr.mxu0 0.0
        %2767 = vmatpush1.xpose.msra.mxu0 0.0
        %2768 = vmatprep.subr.mxu0 0.0
        %2769 = vmatpush1.xpose.msra.mxu0 0.0
        %2770 = vmatprep.subr.mxu0 0.0
        %2771 = vmatpush1.xpose.msra.mxu0 0.0
        %2772 = vmatprep.subr.mxu0 0.0
        %2773 = vmatpush1.xpose.msra.mxu0 0.0
        %2774 = vmatprep.subr.mxu0 0.0
        %2775 = vmatpush1.xpose.msra.mxu0 0.0
        %2776 = vmatprep.subr.mxu0 0.0
        %2777 = vmatpush1.xpose.msra.mxu0 0.0
        %2778 = vmatprep.subr.mxu0 0.0
        %2779 = vmatpush1.xpose.msra.mxu0 0.0
        %2780 = vmatprep.subr.mxu0 0.0
        %2781 = vmatpush1.xpose.msra.mxu0 0.0
        %2782 = vmatprep.subr.mxu0 0.0
        %2783 = vmatpush1.xpose.msra.mxu0 0.0
        %2784 = vmatprep.subr.mxu0 0.0
        %2785 = vmatpush1.xpose.msra.mxu0 0.0
        %2786 = vmatprep.subr.mxu0 0.0
        %2787 = vmatpush1.xpose.msra.mxu0 0.0
        %2788 = vmatprep.mubr.f32.mxu0 0.0
        %2789 = vmatmul.mubr.f32.gmra.mrb[0].mxu0 %v2718
        %v2790 = vpop.f32.mrb[0].mxu0
        %v2791 = vadd.f32 0.0, %v2790
        %v2792 = vpop.f32.mrb[0].mxu0
        %2793 = vdwg.mxu0
        %v2794 = vmul.f32 %v2791, 0.35355338
        %v2795 = vsel %vm1910, %v2794, -inf
        %2796 = vmax.xlane.f32.xlu0 %v2795
        %v2797 = vpop.xlane.xlu0 %2796
        %v2798 = vsub.f32 %v2794, %v2797
        %v2799 = vmul.f32 %v2798, 1.442695
        %v2800 = vpow.pop %v2799
        %v2801 = vsel %vm1910, %v2800, 0.0
        %2802 = vadd.xlane.f32.xlu0 %v2801
        %v2803 = vpop.xlane.xlu0 %2802
        %v2804 = vrcp.pop %v2803
        %v2805 = vmul.f32 %v2800, %v2804
        %2806 = vrot.lane.b32.xlu0 %v2179, 72
        %v2807 = vpop.permute.xlu0 %2806
        %2808 = vrot.lane.b32.xlu0 %v2184, 72
        %v2809 = vpop.permute.xlu0 %2808
        %v2813 = vsel %vm1910, %v2805, 0
        %2815 = vmatprep.subr.mxu0 0.0
        %2816 = vmatpush1.msra.mxu0 %v2807
        %2817 = vmatprep.subr.mxu0 0.0
        %2818 = vmatpush1.msra.mxu0 %v2809
        %2819 = vmatprep.subr.mxu0 0.0
        %2820 = vmatpush1.msra.mxu0 0.0
        %2821 = vmatprep.subr.mxu0 0.0
        %2822 = vmatpush1.msra.mxu0 0.0
        %2823 = vmatprep.subr.mxu0 0.0
        %2824 = vmatpush1.msra.mxu0 0.0
        %2825 = vmatprep.subr.mxu0 0.0
        %2826 = vmatpush1.msra.mxu0 0.0
        %2827 = vmatprep.subr.mxu0 0.0
        %2828 = vmatpush1.msra.mxu0 0.0
        %2829 = vmatprep.subr.mxu0 0.0
        %2830 = vmatpush1.msra.mxu0 0.0
        %2831 = vmatprep.subr.mxu0 0.0
        %2832 = vmatpush1.msra.mxu0 0.0
        %2833 = vmatprep.subr.mxu0 0.0
        %2834 = vmatpush1.msra.mxu0 0.0
        %2835 = vmatprep.subr.mxu0 0.0
        %2836 = vmatpush1.msra.mxu0 0.0
        %2837 = vmatprep.subr.mxu0 0.0
        %2838 = vmatpush1.msra.mxu0 0.0
        %2839 = vmatprep.subr.mxu0 0.0
        %2840 = vmatpush1.msra.mxu0 0.0
        %2841 = vmatprep.subr.mxu0 0.0
        %2842 = vmatpush1.msra.mxu0 0.0
        %2843 = vmatprep.subr.mxu0 0.0
        %2844 = vmatpush1.msra.mxu0 0.0
        %2845 = vmatprep.subr.mxu0 0.0
        %2846 = vmatpush1.msra.mxu0 0.0
        %2847 = vmatprep.subr.mxu0 0.0
        %2848 = vmatpush1.msra.mxu0 0.0
        %2849 = vmatprep.subr.mxu0 0.0
        %2850 = vmatpush1.msra.mxu0 0.0
        %2851 = vmatprep.subr.mxu0 0.0
        %2852 = vmatpush1.msra.mxu0 0.0
        %2853 = vmatprep.subr.mxu0 0.0
        %2854 = vmatpush1.msra.mxu0 0.0
        %2855 = vmatprep.subr.mxu0 0.0
        %2856 = vmatpush1.msra.mxu0 0.0
        %2857 = vmatprep.subr.mxu0 0.0
        %2858 = vmatpush1.msra.mxu0 0.0
        %2859 = vmatprep.subr.mxu0 0.0
        %2860 = vmatpush1.msra.mxu0 0.0
        %2861 = vmatprep.subr.mxu0 0.0
        %2862 = vmatpush1.msra.mxu0 0.0
        %2863 = vmatprep.subr.mxu0 0.0
        %2864 = vmatpush1.msra.mxu0 0.0
        %2865 = vmatprep.subr.mxu0 0.0
        %2866 = vmatpush1.msra.mxu0 0.0
        %2867 = vmatprep.subr.mxu0 0.0
        %2868 = vmatpush1.msra.mxu0 0.0
        %2869 = vmatprep.subr.mxu0 0.0
        %2870 = vmatpush1.msra.mxu0 0.0
        %2871 = vmatprep.subr.mxu0 0.0
        %2872 = vmatpush1.msra.mxu0 0.0
        %2873 = vmatprep.subr.mxu0 0.0
        %2874 = vmatpush1.msra.mxu0 0.0
        %2875 = vmatprep.subr.mxu0 0.0
        %2876 = vmatpush1.msra.mxu0 0.0
        %2877 = vmatprep.subr.mxu0 0.0
        %2878 = vmatpush1.msra.mxu0 0.0
        %2879 = vmatprep.mubr.f32.mxu0 0.0
        %2880 = vmatmul.mubr.f32.gmra.mrb[0].mxu0 %v2813
        %v2881 = vpop.f32.mrb[0].mxu0
        %v2882 = vadd.f32 0.0, %v2881
        %v2883 = vpop.f32.mrb[0].mxu0
        %2884 = vdwg.mxu0
        %2886 = vrot.lane.b32.xlu0 %v2536, 8
        %v2887 = vpop.permute.xlu0 %2886
        %2890 = vrot.lane.b32.xlu0 %v2709, 16
        %v2891 = vpop.permute.xlu0 %2890
        %2894 = vrot.lane.b32.xlu0 %v2882, 24
        %v2895 = vpop.permute.xlu0 %2894
        %v2897 = vsel %vm1236, %v2363, %v2887
        %v2898 = vsel %vm1910, %v2897, %v2891
        %v2899 = vsel %vm1912, %v2898, %v2895
        %v2901 = vlaneseq
        %v2902 = vshrl.u32 %v2901, 7
        %v2903 = vsub.s32 0, %v2902
        %v2904 = vrot.slane %v2195, %v2903
        %v2907 = vsel %vm959, %v2899, 0
        %2909 = vmatprep.subr.mxu0 0.0
        %2910 = vmatpush1.msra.mxu0 %v2191
        %2911 = vmatprep.subr.mxu0 0.0
        %2912 = vmatpush1.msra.mxu0 %v2192
        %2913 = vmatprep.subr.mxu0 0.0
        %2914 = vmatpush1.msra.mxu0 %v2193
        %2915 = vmatprep.subr.mxu0 0.0
        %2916 = vmatpush1.msra.mxu0 %v2194
        %2917 = vmatprep.subr.mxu0 0.0
        %2918 = vmatpush1.msra.mxu0 0.0
        %2919 = vmatprep.subr.mxu0 0.0
        %2920 = vmatpush1.msra.mxu0 0.0
        %2921 = vmatprep.subr.mxu0 0.0
        %2922 = vmatpush1.msra.mxu0 0.0
        %2923 = vmatprep.subr.mxu0 0.0
        %2924 = vmatpush1.msra.mxu0 0.0
        %2925 = vmatprep.subr.mxu0 0.0
        %2926 = vmatpush1.msra.mxu0 0.0
        %2927 = vmatprep.subr.mxu0 0.0
        %2928 = vmatpush1.msra.mxu0 0.0
        %2929 = vmatprep.subr.mxu0 0.0
        %2930 = vmatpush1.msra.mxu0 0.0
        %2931 = vmatprep.subr.mxu0 0.0
        %2932 = vmatpush1.msra.mxu0 0.0
        %2933 = vmatprep.subr.mxu0 0.0
        %2934 = vmatpush1.msra.mxu0 0.0
        %2935 = vmatprep.subr.mxu0 0.0
        %2936 = vmatpush1.msra.mxu0 0.0
        %2937 = vmatprep.subr.mxu0 0.0
        %2938 = vmatpush1.msra.mxu0 0.0
        %2939 = vmatprep.subr.mxu0 0.0
        %2940 = vmatpush1.msra.mxu0 0.0
        %2941 = vmatprep.subr.mxu0 0.0
        %2942 = vmatpush1.msra.mxu0 0.0
        %2943 = vmatprep.subr.mxu0 0.0
        %2944 = vmatpush1.msra.mxu0 0.0
        %2945 = vmatprep.subr.mxu0 0.0
        %2946 = vmatpush1.msra.mxu0 0.0
        %2947 = vmatprep.subr.mxu0 0.0
        %2948 = vmatpush1.msra.mxu0 0.0
        %2949 = vmatprep.subr.mxu0 0.0
        %2950 = vmatpush1.msra.mxu0 0.0
        %2951 = vmatprep.subr.mxu0 0.0
        %2952 = vmatpush1.msra.mxu0 0.0
        %2953 = vmatprep.subr.mxu0 0.0
        %2954 = vmatpush1.msra.mxu0 0.0
        %2955 = vmatprep.subr.mxu0 0.0
        %2956 = vmatpush1.msra.mxu0 0.0
        %2957 = vmatprep.subr.mxu0 0.0
        %2958 = vmatpush1.msra.mxu0 0.0
        %2959 = vmatprep.subr.mxu0 0.0
        %2960 = vmatpush1.msra.mxu0 0.0
        %2961 = vmatprep.subr.mxu0 0.0
        %2962 = vmatpush1.msra.mxu0 0.0
        %2963 = vmatprep.subr.mxu0 0.0
        %2964 = vmatpush1.msra.mxu0 0.0
        %2965 = vmatprep.subr.mxu0 0.0
        %2966 = vmatpush1.msra.mxu0 0.0
        %2967 = vmatprep.subr.mxu0 0.0
        %2968 = vmatpush1.msra.mxu0 0.0
        %2969 = vmatprep.subr.mxu0 0.0
        %2970 = vmatpush1.msra.mxu0 0.0
        %2971 = vmatprep.subr.mxu0 0.0
        %2972 = vmatpush1.msra.mxu0 0.0
        %2973 = vmatprep.mubr.f32.mxu0 0.0
        %2974 = vmatmul.mubr.f32.gmra.mrb[0].mxu0 %v2907
        %v2975 = vpop.f32.mrb[0].mxu0
        %v2976 = vadd.f32 %v2904, %v2975
        %v2977 = vpop.f32.mrb[0].mxu0
        %2978 = vdwg.mxu0
        %v2979 = vadd.f32 %v1993, %v2976
        %v2980 = vsel %vm959, %v2979, 0.0
        %2981 = vadd.xlane.f32.xlu0 %v2980
        %v2982 = vpop.xlane.xlu0 %2981
        %v2983 = vmul.f32 %v2982, %v966
        %v2984 = vsub.f32 %v2979, %v2983
        %v2985 = vmul.f32 %v2984, %v2984
        %v2986 = vsel %vm959, %v2985, 0.0
        %2987 = vadd.xlane.f32.xlu0 %v2986
        %v2988 = vpop.xlane.xlu0 %2987
        %v2989 = vmul.f32 %v2988, %v966
        %v2990 = vadd.f32 %v2989, 1e-05
        %v2991 = vrsqrt.pop %v2990
        %v2992 = vmul.f32 %v2984, %v2991
        %v2993 = vlaneseq
        %v2994 = vshrl.u32 %v2993, 7
        %v2995 = vsub.s32 4, %v2994
        %v2996 = vrot.slane %v1119, %v2995
        %v2997 = vmul.f32 %v2992, %v2996
        %v2998 = vlaneseq
        %v2999 = vshrl.u32 %v2998, 7
        %v3000 = vsub.s32 5, %v2999
        %v3001 = vrot.slane %v1119, %v3000
        %v3002 = vadd.f32 %v2997, %v3001
        %v3003 = vld [vmem:[%s17] sm:$0xf]
        %v3004 = vld [vmem:[%s17 + $0x4] sm:$0xf]
        %v3005 = vld [vmem:[%s17 + $0x8] sm:$0xf]
        %v3006 = vld [vmem:[%s17 + $0xc] sm:$0xf]
        %v3007 = vunpack.c.l.bf16 %v3003
        %v3008 = vunpack.c.l.bf16 %v3004
        %v3009 = vunpack.c.l.bf16 %v3005
        %v3010 = vunpack.c.l.bf16 %v3006
        %v3011 = vld [vmem:[#allocation7] sm:$0x1]
        %v3013 = vlaneseq
        %v3014 = vshrl.u32 %v3013, 7
        %v3015 = vsub.s32 0, %v3014
        %v3016 = vrot.slane %v3011, %v3015
        %v3019 = vsel %vm959, %v3002, 0
        %3021 = vmatprep.subr.mxu0 0.0
        %3022 = vmatpush1.msra.mxu0 %v3007
        %3023 = vmatprep.subr.mxu0 0.0
        %3024 = vmatpush1.msra.mxu0 %v3008
        %3025 = vmatprep.subr.mxu0 0.0
        %3026 = vmatpush1.msra.mxu0 %v3009
        %3027 = vmatprep.subr.mxu0 0.0
        %3028 = vmatpush1.msra.mxu0 %v3010
        %3029 = vmatprep.subr.mxu0 0.0
        %3030 = vmatpush1.msra.mxu0 0.0
        %3031 = vmatprep.subr.mxu0 0.0
        %3032 = vmatpush1.msra.mxu0 0.0
        %3033 = vmatprep.subr.mxu0 0.0
        %3034 = vmatpush1.msra.mxu0 0.0
        %3035 = vmatprep.subr.mxu0 0.0
        %3036 = vmatpush1.msra.mxu0 0.0
        %3037 = vmatprep.subr.mxu0 0.0
        %3038 = vmatpush1.msra.mxu0 0.0
        %3039 = vmatprep.subr.mxu0 0.0
        %3040 = vmatpush1.msra.mxu0 0.0
        %3041 = vmatprep.subr.mxu0 0.0
        %3042 = vmatpush1.msra.mxu0 0.0
        %3043 = vmatprep.subr.mxu0 0.0
        %3044 = vmatpush1.msra.mxu0 0.0
        %3045 = vmatprep.subr.mxu0 0.0
        %3046 = vmatpush1.msra.mxu0 0.0
        %3047 = vmatprep.subr.mxu0 0.0
        %3048 = vmatpush1.msra.mxu0 0.0
        %3049 = vmatprep.subr.mxu0 0.0
        %3050 = vmatpush1.msra.mxu0 0.0
        %3051 = vmatprep.subr.mxu0 0.0
        %3052 = vmatpush1.msra.mxu0 0.0
        %3053 = vmatprep.subr.mxu0 0.0
        %3054 = vmatpush1.msra.mxu0 0.0
        %3055 = vmatprep.subr.mxu0 0.0
        %3056 = vmatpush1.msra.mxu0 0.0
        %3057 = vmatprep.subr.mxu0 0.0
        %3058 = vmatpush1.msra.mxu0 0.0
        %3059 = vmatprep.subr.mxu0 0.0
        %3060 = vmatpush1.msra.mxu0 0.0
        %3061 = vmatprep.subr.mxu0 0.0
        %3062 = vmatpush1.msra.mxu0 0.0
        %3063 = vmatprep.subr.mxu0 0.0
        %3064 = vmatpush1.msra.mxu0 0.0
        %3065 = vmatprep.subr.mxu0 0.0
        %3066 = vmatpush1.msra.mxu0 0.0
        %3067 = vmatprep.subr.mxu0 0.0
        %3068 = vmatpush1.msra.mxu0 0.0
        %3069 = vmatprep.subr.mxu0 0.0
        %3070 = vmatpush1.msra.mxu0 0.0
        %3071 = vmatprep.subr.mxu0 0.0
        %3072 = vmatpush1.msra.mxu0 0.0
        %3073 = vmatprep.subr.mxu0 0.0
        %3074 = vmatpush1.msra.mxu0 0.0
        %3075 = vmatprep.subr.mxu0 0.0
        %3076 = vmatpush1.msra.mxu0 0.0
        %3077 = vmatprep.subr.mxu0 0.0
        %3078 = vmatpush1.msra.mxu0 0.0
        %3079 = vmatprep.subr.mxu0 0.0
        %3080 = vmatpush1.msra.mxu0 0.0
        %3081 = vmatprep.subr.mxu0 0.0
        %3082 = vmatpush1.msra.mxu0 0.0
        %3083 = vmatprep.subr.mxu0 0.0
        %3084 = vmatpush1.msra.mxu0 0.0
        %3085 = vmatprep.mubr.f32.mxu0 0.0
        %3086 = vmatmul.mubr.f32.gmra.mrb[0].mxu0 %v3019
        %v3087 = vpop.f32.mrb[0].mxu0
        %v3088 = vadd.f32 %v3016, %v3087
        %v3089 = vpop.f32.mrb[0].mxu0
        %3090 = vdwg.mxu0
        %v3091 = vmul.f32 %v3088, 0.5
        %v3092 = vmul.f32 %v3088, 0.70710677
        %v3093 = verf.f32.pop %v3092
        %v3094 = vadd.f32 %v3093, 1.0
        %v3095 = vmul.f32 %v3091, %v3094
        %v3096 = vld [vmem:[%s19] sm:$0xf]
        %v3097 = vld [vmem:[%s19 + $0x4] sm:$0xf]
        %v3098 = vld [vmem:[%s19 + $0x8] sm:$0xf]
        %v3099 = vld [vmem:[%s19 + $0xc] sm:$0xf]
        %v3100 = vld [vmem:[%s19 + $0x10] sm:$0xf]
        %v3101 = vld [vmem:[%s19 + $0x14] sm:$0xf]
        %v3102 = vld [vmem:[%s19 + $0x18] sm:$0xf]
        %v3103 = vld [vmem:[%s19 + $0x1c] sm:$0xf]
        %v3104 = vld [vmem:[%s19 + $0x20] sm:$0xf]
        %v3105 = vld [vmem:[%s19 + $0x24] sm:$0xf]
        %v3106 = vld [vmem:[%s19 + $0x28] sm:$0xf]
        %v3107 = vld [vmem:[%s19 + $0x2c] sm:$0xf]
        %v3108 = vld [vmem:[%s19 + $0x30] sm:$0xf]
        %v3109 = vld [vmem:[%s19 + $0x34] sm:$0xf]
        %v3110 = vld [vmem:[%s19 + $0x38] sm:$0xf]
        %v3111 = vld [vmem:[%s19 + $0x3c] sm:$0xf]
        %v3112 = vunpack.c.l.bf16 %v3096
        %v3113 = vunpack.c.l.bf16 %v3097
        %v3114 = vunpack.c.l.bf16 %v3098
        %v3115 = vunpack.c.l.bf16 %v3099
        %v3116 = vunpack.c.l.bf16 %v3100
        %v3117 = vunpack.c.l.bf16 %v3101
        %v3118 = vunpack.c.l.bf16 %v3102
        %v3119 = vunpack.c.l.bf16 %v3103
        %v3120 = vunpack.c.l.bf16 %v3104
        %v3121 = vunpack.c.l.bf16 %v3105
        %v3122 = vunpack.c.l.bf16 %v3106
        %v3123 = vunpack.c.l.bf16 %v3107
        %v3124 = vunpack.c.l.bf16 %v3108
        %v3125 = vunpack.c.l.bf16 %v3109
        %v3126 = vunpack.c.l.bf16 %v3110
        %v3127 = vunpack.c.l.bf16 %v3111
        %3128 = vmatprep.subr.mxu0 0.0
        %3129 = vmatpush1.msra.mxu0 %v3112
        %3130 = vmatprep.subr.mxu0 0.0
        %3131 = vmatpush1.msra.mxu0 %v3113
        %3132 = vmatprep.subr.mxu0 0.0
        %3133 = vmatpush1.msra.mxu0 %v3114
        %3134 = vmatprep.subr.mxu0 0.0
        %3135 = vmatpush1.msra.mxu0 %v3115
        %3136 = vmatprep.subr.mxu0 0.0
        %3137 = vmatpush1.msra.mxu0 %v3116
        %3138 = vmatprep.subr.mxu0 0.0
        %3139 = vmatpush1.msra.mxu0 %v3117
        %3140 = vmatprep.subr.mxu0 0.0
        %3141 = vmatpush1.msra.mxu0 %v3118
        %3142 = vmatprep.subr.mxu0 0.0
        %3143 = vmatpush1.msra.mxu0 %v3119
        %3144 = vmatprep.subr.mxu0 0.0
        %3145 = vmatpush1.msra.mxu0 %v3120
        %3146 = vmatprep.subr.mxu0 0.0
        %3147 = vmatpush1.msra.mxu0 %v3121
        %3148 = vmatprep.subr.mxu0 0.0
        %3149 = vmatpush1.msra.mxu0 %v3122
        %3150 = vmatprep.subr.mxu0 0.0
        %3151 = vmatpush1.msra.mxu0 %v3123
        %3152 = vmatprep.subr.mxu0 0.0
        %3153 = vmatpush1.msra.mxu0 %v3124
        %3154 = vmatprep.subr.mxu0 0.0
        %3155 = vmatpush1.msra.mxu0 %v3125
        %3156 = vmatprep.subr.mxu0 0.0
        %3157 = vmatpush1.msra.mxu0 %v3126
        %3158 = vmatprep.subr.mxu0 0.0
        %3159 = vmatpush1.msra.mxu0 %v3127
        %3160 = vmatprep.subr.mxu0 0.0
        %3161 = vmatpush1.msra.mxu0 0.0
        %3162 = vmatprep.subr.mxu0 0.0
        %3163 = vmatpush1.msra.mxu0 0.0
        %3164 = vmatprep.subr.mxu0 0.0
        %3165 = vmatpush1.msra.mxu0 0.0
        %3166 = vmatprep.subr.mxu0 0.0
        %3167 = vmatpush1.msra.mxu0 0.0
        %3168 = vmatprep.subr.mxu0 0.0
        %3169 = vmatpush1.msra.mxu0 0.0
        %3170 = vmatprep.subr.mxu0 0.0
        %3171 = vmatpush1.msra.mxu0 0.0
        %3172 = vmatprep.subr.mxu0 0.0
        %3173 = vmatpush1.msra.mxu0 0.0
        %3174 = vmatprep.subr.mxu0 0.0
        %3175 = vmatpush1.msra.mxu0 0.0
        %3176 = vmatprep.subr.mxu0 0.0
        %3177 = vmatpush1.msra.mxu0 0.0
        %3178 = vmatprep.subr.mxu0 0.0
        %3179 = vmatpush1.msra.mxu0 0.0
        %3180 = vmatprep.subr.mxu0 0.0
        %3181 = vmatpush1.msra.mxu0 0.0
        %3182 = vmatprep.subr.mxu0 0.0
        %3183 = vmatpush1.msra.mxu0 0.0
        %3184 = vmatprep.subr.mxu0 0.0
        %3185 = vmatpush1.msra.mxu0 0.0
        %3186 = vmatprep.subr.mxu0 0.0
        %3187 = vmatpush1.msra.mxu0 0.0
        %3188 = vmatprep.subr.mxu0 0.0
        %3189 = vmatpush1.msra.mxu0 0.0
        %3190 = vmatprep.subr.mxu0 0.0
        %3191 = vmatpush1.msra.mxu0 0.0
        %3192 = vmatprep.mubr.f32.mxu0 0.0
        %3193 = vmatmul.mubr.f32.gmra.mrb[0].mxu0 %v3095
        %v3194 = vpop.f32.mrb[0].mxu0
        %v3195 = vadd.f32 0.0, %v3194
        %v3196 = vpop.f32.mrb[0].mxu0
        %3197 = vdwg.mxu0
        %v3198 = vadd.f32 %v2979, %v3195
        %v3199 = vld [vmem:[#allocation8] sm:$0x1]
        %v3201 = vlaneseq
        %v3202 = vshrl.u32 %v3201, 7
        %v3203 = vsub.s32 0, %v3202
        %v3204 = vrot.slane %v3199, %v3203
        %v3206 = vadd.f32 %v3198, %v3204
        %s3207 = scalar_lea.vmem %s9, 8
        %v3208 = vld [vmem:[%s3207] sm:$0x3f]
        %v3209 = vsel %vm959, %v3206, 0.0
        %3210 = vadd.xlane.f32.xlu0 %v3209
        %v3211 = vpop.xlane.xlu0 %3210
        %v3212 = vmul.f32 %v3211, %v966
        %v3213 = vsub.f32 %v3206, %v3212
        %v3214 = vmul.f32 %v3213, %v3213
        %v3215 = vsel %vm959, %v3214, 0.0
        %3216 = vadd.xlane.f32.xlu0 %v3215
        %v3217 = vpop.xlane.xlu0 %3216
        %v3218 = vmul.f32 %v3217, %v966
        %v3219 = vadd.f32 %v3218, 1e-05
        %v3220 = vrsqrt.pop %v3219
        %v3221 = vmul.f32 %v3213, %v3220
        %v3222 = vlaneseq
        %v3223 = vshrl.u32 %v3222, 7
        %v3224 = vsub.s32 0, %v3223
        %v3225 = vrot.slane %v3208, %v3224
        %v3226 = vmul.f32 %v3221, %v3225
        %v3227 = vlaneseq
        %v3228 = vshrl.u32 %v3227, 7
        %v3229 = vsub.s32 1, %v3228
        %v3230 = vrot.slane %v3208, %v3229
        %v3231 = vadd.f32 %v3226, %v3230
        %s3232 = scalar_lea.vmem %s10, 16
        %v3233 = vld [vmem:[%s3232] sm:$0xf]
        %v3234 = vld [vmem:[%s3232 + $0x4] sm:$0xf]
        %v3235 = vld [vmem:[%s3232 + $0x8] sm:$0xf]
        %v3236 = vld [vmem:[%s3232 + $0xc] sm:$0xf]
        %v3237 = vunpack.c.l.bf16 %v3233
        %v3238 = vunpack.c.l.bf16 %v3234
        %v3239 = vunpack.c.l.bf16 %v3235
        %v3240 = vunpack.c.l.bf16 %v3236
        %v3242 = vsel %vm959, %v3231, 0
        %3244 = vmatprep.subr.mxu0 0.0
        %3245 = vmatpush1.msra.mxu0 %v3237
        %3246 = vmatprep.subr.mxu0 0.0
        %3247 = vmatpush1.msra.mxu0 %v3238
        %3248 = vmatprep.subr.mxu0 0.0
        %3249 = vmatpush1.msra.mxu0 %v3239
        %3250 = vmatprep.subr.mxu0 0.0
        %3251 = vmatpush1.msra.mxu0 %v3240
        %3252 = vmatprep.subr.mxu0 0.0
        %3253 = vmatpush1.msra.mxu0 0.0
        %3254 = vmatprep.subr.mxu0 0.0
        %3255 = vmatpush1.msra.mxu0 0.0
        %3256 = vmatprep.subr.mxu0 0.0
        %3257 = vmatpush1.msra.mxu0 0.0
        %3258 = vmatprep.subr.mxu0 0.0
        %3259 = vmatpush1.msra.mxu0 0.0
        %3260 = vmatprep.subr.mxu0 0.0
        %3261 = vmatpush1.msra.mxu0 0.0
        %3262 = vmatprep.subr.mxu0 0.0
        %3263 = vmatpush1.msra.mxu0 0.0
        %3264 = vmatprep.subr.mxu0 0.0
        %3265 = vmatpush1.msra.mxu0 0.0
        %3266 = vmatprep.subr.mxu0 0.0
        %3267 = vmatpush1.msra.mxu0 0.0
        %3268 = vmatprep.subr.mxu0 0.0
        %3269 = vmatpush1.msra.mxu0 0.0
        %3270 = vmatprep.subr.mxu0 0.0
        %3271 = vmatpush1.msra.mxu0 0.0
        %3272 = vmatprep.subr.mxu0 0.0
        %3273 = vmatpush1.msra.mxu0 0.0
        %3274 = vmatprep.subr.mxu0 0.0
        %3275 = vmatpush1.msra.mxu0 0.0
        %3276 = vmatprep.subr.mxu0 0.0
        %3277 = vmatpush1.msra.mxu0 0.0
        %3278 = vmatprep.subr.mxu0 0.0
        %3279 = vmatpush1.msra.mxu0 0.0
        %3280 = vmatprep.subr.mxu0 0.0
        %3281 = vmatpush1.msra.mxu0 0.0
        %3282 = vmatprep.subr.mxu0 0.0
        %3283 = vmatpush1.msra.mxu0 0.0
        %3284 = vmatprep.subr.mxu0 0.0
        %3285 = vmatpush1.msra.mxu0 0.0
        %3286 = vmatprep.subr.mxu0 0.0
        %3287 = vmatpush1.msra.mxu0 0.0
        %3288 = vmatprep.subr.mxu0 0.0
        %3289 = vmatpush1.msra.mxu0 0.0
        %3290 = vmatprep.subr.mxu0 0.0
        %3291 = vmatpush1.msra.mxu0 0.0
        %3292 = vmatprep.subr.mxu0 0.0
        %3293 = vmatpush1.msra.mxu0 0.0
        %3294 = vmatprep.subr.mxu0 0.0
        %3295 = vmatpush1.msra.mxu0 0.0
        %3296 = vmatprep.subr.mxu0 0.0
        %3297 = vmatpush1.msra.mxu0 0.0
        %3298 = vmatprep.subr.mxu0 0.0
        %3299 = vmatpush1.msra.mxu0 0.0
        %3300 = vmatprep.subr.mxu0 0.0
        %3301 = vmatpush1.msra.mxu0 0.0
        %3302 = vmatprep.subr.mxu0 0.0
        %3303 = vmatpush1.msra.mxu0 0.0
        %3304 = vmatprep.subr.mxu0 0.0
        %3305 = vmatpush1.msra.mxu0 0.0
        %3306 = vmatprep.subr.mxu0 0.0
        %3307 = vmatpush1.msra.mxu0 0.0
        %3308 = vmatprep.mubr.f32.mxu0 0.0
        %3309 = vmatmul.mubr.f32.gmra.mrb[0].mxu0 %v3242
        %v3310 = vpop.f32.mrb[0].mxu0
        %v3311 = vadd.f32 0.0, %v3310
        %v3312 = vpop.f32.mrb[0].mxu0
        %3313 = vdwg.mxu0
        %s3314 = scalar_lea.vmem %s11, 16
        %v3315 = vld [vmem:[%s3314] sm:$0xf]
        %v3316 = vld [vmem:[%s3314 + $0x4] sm:$0xf]
        %v3317 = vld [vmem:[%s3314 + $0x8] sm:$0xf]
        %v3318 = vld [vmem:[%s3314 + $0xc] sm:$0xf]
        %v3319 = vunpack.c.l.bf16 %v3315
        %v3320 = vunpack.c.l.bf16 %v3316
        %v3321 = vunpack.c.l.bf16 %v3317
        %v3322 = vunpack.c.l.bf16 %v3318
        %s3323 = scalar_lea.vmem %s12, 1
        %v3324 = vld [vmem:[%s3323] sm:$0x1]
        %3326 = vrot.lane.b32.xlu0 %v3311, 96
        %v3327 = vpop.permute.xlu0 %3326
        %v3328 = vsel %vm1236, %v3311, 0
        %v3330 = vsel %vm1236, %v3327, 0
        %3332 = vmatprep.subr.mxu0 0.0
        %3333 = vmatpush1.xpose.msra.mxu0 %v3330
        %3334 = vmatprep.subr.mxu0 0.0
        %3335 = vmatpush1.xpose.msra.mxu0 0.0
        %3336 = vmatprep.subr.mxu0 0.0
        %3337 = vmatpush1.xpose.msra.mxu0 0.0
        %3338 = vmatprep.subr.mxu0 0.0
        %3339 = vmatpush1.xpose.msra.mxu0 0.0
        %3340 = vmatprep.subr.mxu0 0.0
        %3341 = vmatpush1.xpose.msra.mxu0 0.0
        %3342 = vmatprep.subr.mxu0 0.0
        %3343 = vmatpush1.xpose.msra.mxu0 0.0
        %3344 = vmatprep.subr.mxu0 0.0
        %3345 = vmatpush1.xpose.msra.mxu0 0.0
        %3346 = vmatprep.subr.mxu0 0.0
        %3347 = vmatpush1.xpose.msra.mxu0 0.0
        %3348 = vmatprep.subr.mxu0 0.0
        %3349 = vmatpush1.xpose.msra.mxu0 0.0
        %3350 = vmatprep.subr.mxu0 0.0
        %3351 = vmatpush1.xpose.msra.mxu0 0.0
        %3352 = vmatprep.subr.mxu0 0.0
        %3353 = vmatpush1.xpose.msra.mxu0 0.0
        %3354 = vmatprep.subr.mxu0 0.0
        %3355 = vmatpush1.xpose.msra.mxu0 0.0
        %3356 = vmatprep.subr.mxu0 0.0
        %3357 = vmatpush1.xpose.msra.mxu0 0.0
        %3358 = vmatprep.subr.mxu0 0.0
        %3359 = vmatpush1.xpose.msra.mxu0 0.0
        %3360 = vmatprep.subr.mxu0 0.0
        %3361 = vmatpush1.xpose.msra.mxu0 0.0
        %3362 = vmatprep.subr.mxu0 0.0
        %3363 = vmatpush1.xpose.msra.mxu0 0.0
        %3364 = vmatprep.subr.mxu0 0.0
        %3365 = vmatpush1.xpose.msra.mxu0 0.0
        %3366 = vmatprep.subr.mxu0 0.0
        %3367 = vmatpush1.xpose.msra.mxu0 0.0
        %3368 = vmatprep.subr.mxu0 0.0
        %3369 = vmatpush1.xpose.msra.mxu0 0.0
        %3370 = vmatprep.subr.mxu0 0.0
        %3371 = vmatpush1.xpose.msra.mxu0 0.0
        %3372 = vmatprep.subr.mxu0 0.0
        %3373 = vmatpush1.xpose.msra.mxu0 0.0
        %3374 = vmatprep.subr.mxu0 0.0
        %3375 = vmatpush1.xpose.msra.mxu0 0.0
        %3376 = vmatprep.subr.mxu0 0.0
        %3377 = vmatpush1.xpose.msra.mxu0 0.0
        %3378 = vmatprep.subr.mxu0 0.0
        %3379 = vmatpush1.xpose.msra.mxu0 0.0
        %3380 = vmatprep.subr.mxu0 0.0
        %3381 = vmatpush1.xpose.msra.mxu0 0.0
        %3382 = vmatprep.subr.mxu0 0.0
        %3383 = vmatpush1.xpose.msra.mxu0 0.0
        %3384 = vmatprep.subr.mxu0 0.0
        %3385 = vmatpush1.xpose.msra.mxu0 0.0
        %3386 = vmatprep.subr.mxu0 0.0
        %3387 = vmatpush1.xpose.msra.mxu0 0.0
        %3388 = vmatprep.subr.mxu0 0.0
        %3389 = vmatpush1.xpose.msra.mxu0 0.0
        %3390 = vmatprep.subr.mxu0 0.0
        %3391 = vmatpush1.xpose.msra.mxu0 0.0
        %3392 = vmatprep.subr.mxu0 0.0
        %3393 = vmatpush1.xpose.msra.mxu0 0.0
        %3394 = vmatprep.subr.mxu0 0.0
        %3395 = vmatpush1.xpose.msra.mxu0 0.0
        %3396 = vmatprep.mubr.f32.mxu0 0.0
        %3397 = vmatmul.mubr.f32.gmra.mrb[0].mxu0 %v3328
        %v3398 = vpop.f32.mrb[0].mxu0
        %v3399 = vadd.f32 0.0, %v3398
        %v3400 = vpop.f32.mrb[0].mxu0
        %3401 = vdwg.mxu0
        %v3402 = vmul.f32 %v3399, 0.35355338
        %v3403 = vsel %vm1236, %v3402, -inf
        %3404 = vmax.xlane.f32.xlu0 %v3403
        %v3405 = vpop.xlane.xlu0 %3404
        %v3406 = vsub.f32 %v3402, %v3405
        %v3407 = vmul.f32 %v3406, 1.442695
        %v3408 = vpow.pop %v3407
        %v3409 = vsel %vm1236, %v3408, 0.0
        %3410 = vadd.xlane.f32.xlu0 %v3409
        %v3411 = vpop.xlane.xlu0 %3410
        %v3412 = vrcp.pop %v3411
        %v3413 = vmul.f32 %v3408, %v3412
        %3414 = vrot.lane.b32.xlu0 %v3311, 64
        %v3415 = vpop.permute.xlu0 %3414
        %v3418 = vsel %vm1236, %v3413, 0
        %3420 = vmatprep.subr.mxu0 0.0
        %3421 = vmatpush1.msra.mxu0 %v3415
        %3422 = vmatprep.subr.mxu0 0.0
        %3423 = vmatpush1.msra.mxu0 0.0
        %3424 = vmatprep.subr.mxu0 0.0
        %3425 = vmatpush1.msra.mxu0 0.0
        %3426 = vmatprep.subr.mxu0 0.0
        %3427 = vmatpush1.msra.mxu0 0.0
        %3428 = vmatprep.subr.mxu0 0.0
        %3429 = vmatpush1.msra.mxu0 0.0
        %3430 = vmatprep.subr.mxu0 0.0
        %3431 = vmatpush1.msra.mxu0 0.0
        %3432 = vmatprep.subr.mxu0 0.0
        %3433 = vmatpush1.msra.mxu0 0.0
        %3434 = vmatprep.subr.mxu0 0.0
        %3435 = vmatpush1.msra.mxu0 0.0
        %3436 = vmatprep.subr.mxu0 0.0
        %3437 = vmatpush1.msra.mxu0 0.0
        %3438 = vmatprep.subr.mxu0 0.0
        %3439 = vmatpush1.msra.mxu0 0.0
        %3440 = vmatprep.subr.mxu0 0.0
        %3441 = vmatpush1.msra.mxu0 0.0
        %3442 = vmatprep.subr.mxu0 0.0
        %3443 = vmatpush1.msra.mxu0 0.0
        %3444 = vmatprep.subr.mxu0 0.0
        %3445 = vmatpush1.msra.mxu0 0.0
        %3446 = vmatprep.subr.mxu0 0.0
        %3447 = vmatpush1.msra.mxu0 0.0
        %3448 = vmatprep.subr.mxu0 0.0
        %3449 = vmatpush1.msra.mxu0 0.0
        %3450 = vmatprep.subr.mxu0 0.0
        %3451 = vmatpush1.msra.mxu0 0.0
        %3452 = vmatprep.subr.mxu0 0.0
        %3453 = vmatpush1.msra.mxu0 0.0
        %3454 = vmatprep.subr.mxu0 0.0
        %3455 = vmatpush1.msra.mxu0 0.0
        %3456 = vmatprep.subr.mxu0 0.0
        %3457 = vmatpush1.msra.mxu0 0.0
        %3458 = vmatprep.subr.mxu0 0.0
        %3459 = vmatpush1.msra.mxu0 0.0
        %3460 = vmatprep.subr.mxu0 0.0
        %3461 = vmatpush1.msra.mxu0 0.0
        %3462 = vmatprep.subr.mxu0 0.0
        %3463 = vmatpush1.msra.mxu0 0.0
        %3464 = vmatprep.subr.mxu0 0.0
        %3465 = vmatpush1.msra.mxu0 0.0
        %3466 = vmatprep.subr.mxu0 0.0
        %3467 = vmatpush1.msra.mxu0 0.0
        %3468 = vmatprep.subr.mxu0 0.0
        %3469 = vmatpush1.msra.mxu0 0.0
        %3470 = vmatprep.subr.mxu0 0.0
        %3471 = vmatpush1.msra.mxu0 0.0
        %3472 = vmatprep.subr.mxu0 0.0
        %3473 = vmatpush1.msra.mxu0 0.0
        %3474 = vmatprep.subr.mxu0 0.0
        %3475 = vmatpush1.msra.mxu0 0.0
        %3476 = vmatprep.subr.mxu0 0.0
        %3477 = vmatpush1.msra.mxu0 0.0
        %3478 = vmatprep.subr.mxu0 0.0
        %3479 = vmatpush1.msra.mxu0 0.0
        %3480 = vmatprep.subr.mxu0 0.0
        %3481 = vmatpush1.msra.mxu0 0.0
        %3482 = vmatprep.subr.mxu0 0.0
        %3483 = vmatpush1.msra.mxu0 0.0
        %3484 = vmatprep.mubr.f32.mxu0 0.0
        %3485 = vmatmul.mubr.f32.gmra.mrb[0].mxu0 %v3418
        %v3486 = vpop.f32.mrb[0].mxu0
        %v3487 = vadd.f32 0.0, %v3486
        %v3488 = vpop.f32.mrb[0].mxu0
        %3489 = vdwg.mxu0
        %3490 = vrot.lane.b32.xlu0 %v3311, 120
        %v3491 = vpop.permute.xlu0 %3490
        %3492 = vrot.lane.b32.xlu0 %v3311, 88
        %v3493 = vpop.permute.xlu0 %3492
        %v3494 = vsel %vm1236, %v3491, 0
        %v3496 = vsel %vm1236, %v3493, 0
        %3498 = vmatprep.subr.mxu0 0.0
        %3499 = vmatpush1.xpose.msra.mxu0 %v3496
        %3500 = vmatprep.subr.mxu0 0.0
        %3501 = vmatpush1.xpose.msra.mxu0 0.0
        %3502 = vmatprep.subr.mxu0 0.0
        %3503 = vmatpush1.xpose.msra.mxu0 0.0
        %3504 = vmatprep.subr.mxu0 0.0
        %3505 = vmatpush1.xpose.msra.mxu0 0.0
        %3506 = vmatprep.subr.mxu0 0.0
        %3507 = vmatpush1.xpose.msra.mxu0 0.0
        %3508 = vmatprep.subr.mxu0 0.0
        %3509 = vmatpush1.xpose.msra.mxu0 0.0
        %3510 = vmatprep.subr.mxu0 0.0
        %3511 = vmatpush1.xpose.msra.mxu0 0.0
        %3512 = vmatprep.subr.mxu0 0.0
        %3513 = vmatpush1.xpose.msra.mxu0 0.0
        %3514 = vmatprep.subr.mxu0 0.0
        %3515 = vmatpush1.xpose.msra.mxu0 0.0
        %3516 = vmatprep.subr.mxu0 0.0
        %3517 = vmatpush1.xpose.msra.mxu0 0.0
        %3518 = vmatprep.subr.mxu0 0.0
        %3519 = vmatpush1.xpose.msra.mxu0 0.0
        %3520 = vmatprep.subr.mxu0 0.0
        %3521 = vmatpush1.xpose.msra.mxu0 0.0
        %3522 = vmatprep.subr.mxu0 0.0
        %3523 = vmatpush1.xpose.msra.mxu0 0.0
        %3524 = vmatprep.subr.mxu0 0.0
        %3525 = vmatpush1.xpose.msra.mxu0 0.0
        %3526 = vmatprep.subr.mxu0 0.0
        %3527 = vmatpush1.xpose.msra.mxu0 0.0
        %3528 = vmatprep.subr.mxu0 0.0
        %3529 = vmatpush1.xpose.msra.mxu0 0.0
        %3530 = vmatprep.subr.mxu0 0.0
        %3531 = vmatpush1.xpose.msra.mxu0 0.0
        %3532 = vmatprep.subr.mxu0 0.0
        %3533 = vmatpush1.xpose.msra.mxu0 0.0
        %3534 = vmatprep.subr.mxu0 0.0
        %3535 = vmatpush1.xpose.msra.mxu0 0.0
        %3536 = vmatprep.subr.mxu0 0.0
        %3537 = vmatpush1.xpose.msra.mxu0 0.0
        %3538 = vmatprep.subr.mxu0 0.0
        %3539 = vmatpush1.xpose.msra.mxu0 0.0
        %3540 = vmatprep.subr.mxu0 0.0
        %3541 = vmatpush1.xpose.msra.mxu0 0.0
        %3542 = vmatprep.subr.mxu0 0.0
        %3543 = vmatpush1.xpose.msra.mxu0 0.0
        %3544 = vmatprep.subr.mxu0 0.0
        %3545 = vmatpush1.xpose.msra.mxu0 0.0
        %3546 = vmatprep.subr.mxu0 0.0
        %3547 = vmatpush1.xpose.msra.mxu0 0.0
        %3548 = vmatprep.subr.mxu0 0.0
        %3549 = vmatpush1.xpose.msra.mxu0 0.0
        %3550 = vmatprep.subr.mxu0 0.0
        %3551 = vmatpush1.xpose.msra.mxu0 0.0
        %3552 = vmatprep.subr.mxu0 0.0
        %3553 = vmatpush1.xpose.msra.mxu0 0.0
        %3554 = vmatprep.subr.mxu0 0.0
        %3555 = vmatpush1.xpose.msra.mxu0 0.0
        %3556 = vmatprep.subr.mxu0 0.0
        %3557 = vmatpush1.xpose.msra.mxu0 0.0
        %3558 = vmatprep.subr.mxu0 0.0
        %3559 = vmatpush1.xpose.msra.mxu0 0.0
        %3560 = vmatprep.subr.mxu0 0.0
        %3561 = vmatpush1.xpose.msra.mxu0 0.0
        %3562 = vmatprep.mubr.f32.mxu0 0.0
        %3563 = vmatmul.mubr.f32.gmra.mrb[0].mxu0 %v3494
        %v3564 = vpop.f32.mrb[0].mxu0
        %v3565 = vadd.f32 0.0, %v3564
        %v3566 = vpop.f32.mrb[0].mxu0
        %3567 = vdwg.mxu0
        %v3568 = vmul.f32 %v3565, 0.35355338
        %v3569 = vsel %vm1236, %v3568, -inf
        %3570 = vmax.xlane.f32.xlu0 %v3569
        %v3571 = vpop.xlane.xlu0 %3570
        %v3572 = vsub.f32 %v3568, %v3571
        %v3573 = vmul.f32 %v3572, 1.442695
        %v3574 = vpow.pop %v3573
        %v3575 = vsel %vm1236, %v3574, 0.0
        %3576 = vadd.xlane.f32.xlu0 %v3575
        %v3577 = vpop.xlane.xlu0 %3576
        %v3578 = vrcp.pop %v3577
        %v3579 = vmul.f32 %v3574, %v3578
        %3580 = vrot.lane.b32.xlu0 %v3311, 56
        %v3581 = vpop.permute.xlu0 %3580
        %v3584 = vsel %vm1236, %v3579, 0
        %3586 = vmatprep.subr.mxu0 0.0
        %3587 = vmatpush1.msra.mxu0 %v3581
        %3588 = vmatprep.subr.mxu0 0.0
        %3589 = vmatpush1.msra.mxu0 0.0
        %3590 = vmatprep.subr.mxu0 0.0
        %3591 = vmatpush1.msra.mxu0 0.0
        %3592 = vmatprep.subr.mxu0 0.0
        %3593 = vmatpush1.msra.mxu0 0.0
        %3594 = vmatprep.subr.mxu0 0.0
        %3595 = vmatpush1.msra.mxu0 0.0
        %3596 = vmatprep.subr.mxu0 0.0
        %3597 = vmatpush1.msra.mxu0 0.0
        %3598 = vmatprep.subr.mxu0 0.0
        %3599 = vmatpush1.msra.mxu0 0.0
        %3600 = vmatprep.subr.mxu0 0.0
        %3601 = vmatpush1.msra.mxu0 0.0
        %3602 = vmatprep.subr.mxu0 0.0
        %3603 = vmatpush1.msra.mxu0 0.0
        %3604 = vmatprep.subr.mxu0 0.0
        %3605 = vmatpush1.msra.mxu0 0.0
        %3606 = vmatprep.subr.mxu0 0.0
        %3607 = vmatpush1.msra.mxu0 0.0
        %3608 = vmatprep.subr.mxu0 0.0
        %3609 = vmatpush1.msra.mxu0 0.0
        %3610 = vmatprep.subr.mxu0 0.0
        %3611 = vmatpush1.msra.mxu0 0.0
        %3612 = vmatprep.subr.mxu0 0.0
        %3613 = vmatpush1.msra.mxu0 0.0
        %3614 = vmatprep.subr.mxu0 0.0
        %3615 = vmatpush1.msra.mxu0 0.0
        %3616 = vmatprep.subr.mxu0 0.0
        %3617 = vmatpush1.msra.mxu0 0.0
        %3618 = vmatprep.subr.mxu0 0.0
        %3619 = vmatpush1.msra.mxu0 0.0
        %3620 = vmatprep.subr.mxu0 0.0
        %3621 = vmatpush1.msra.mxu0 0.0
        %3622 = vmatprep.subr.mxu0 0.0
        %3623 = vmatpush1.msra.mxu0 0.0
        %3624 = vmatprep.subr.mxu0 0.0
        %3625 = vmatpush1.msra.mxu0 0.0
        %3626 = vmatprep.subr.mxu0 0.0
        %3627 = vmatpush1.msra.mxu0 0.0
        %3628 = vmatprep.subr.mxu0 0.0
        %3629 = vmatpush1.msra.mxu0 0.0
        %3630 = vmatprep.subr.mxu0 0.0
        %3631 = vmatpush1.msra.mxu0 0.0
        %3632 = vmatprep.subr.mxu0 0.0
        %3633 = vmatpush1.msra.mxu0 0.0
        %3634 = vmatprep.subr.mxu0 0.0
        %3635 = vmatpush1.msra.mxu0 0.0
        %3636 = vmatprep.subr.mxu0 0.0
        %3637 = vmatpush1.msra.mxu0 0.0
        %3638 = vmatprep.subr.mxu0 0.0
        %3639 = vmatpush1.msra.mxu0 0.0
        %3640 = vmatprep.subr.mxu0 0.0
        %3641 = vmatpush1.msra.mxu0 0.0
        %3642 = vmatprep.subr.mxu0 0.0
        %3643 = vmatpush1.msra.mxu0 0.0
        %3644 = vmatprep.subr.mxu0 0.0
        %3645 = vmatpush1.msra.mxu0 0.0
        %3646 = vmatprep.subr.mxu0 0.0
        %3647 = vmatpush1.msra.mxu0 0.0
        %3648 = vmatprep.subr.mxu0 0.0
        %3649 = vmatpush1.msra.mxu0 0.0
        %3650 = vmatprep.mubr.f32.mxu0 0.0
        %3651 = vmatmul.mubr.f32.gmra.mrb[0].mxu0 %v3584
        %v3652 = vpop.f32.mrb[0].mxu0
        %v3653 = vadd.f32 0.0, %v3652
        %v3654 = vpop.f32.mrb[0].mxu0
        %3655 = vdwg.mxu0
        %3656 = vrot.lane.b32.xlu0 %v3311, 112
        %v3657 = vpop.permute.xlu0 %3656
        %3658 = vrot.lane.b32.xlu0 %v3311, 80
        %v3659 = vpop.permute.xlu0 %3658
        %v3660 = vsel %vm1236, %v3657, 0
        %v3662 = vsel %vm1236, %v3659, 0
        %3664 = vmatprep.subr.mxu0 0.0
        %3665 = vmatpush1.xpose.msra.mxu0 %v3662
        %3666 = vmatprep.subr.mxu0 0.0
        %3667 = vmatpush1.xpose.msra.mxu0 0.0
        %3668 = vmatprep.subr.mxu0 0.0
        %3669 = vmatpush1.xpose.msra.mxu0 0.0
        %3670 = vmatprep.subr.mxu0 0.0
        %3671 = vmatpush1.xpose.msra.mxu0 0.0
        %3672 = vmatprep.subr.mxu0 0.0
        %3673 = vmatpush1.xpose.msra.mxu0 0.0
        %3674 = vmatprep.subr.mxu0 0.0
        %3675 = vmatpush1.xpose.msra.mxu0 0.0
        %3676 = vmatprep.subr.mxu0 0.0
        %3677 = vmatpush1.xpose.msra.mxu0 0.0
        %3678 = vmatprep.subr.mxu0 0.0
        %3679 = vmatpush1.xpose.msra.mxu0 0.0
        %3680 = vmatprep.subr.mxu0 0.0
        %3681 = vmatpush1.xpose.msra.mxu0 0.0
        %3682 = vmatprep.subr.mxu0 0.0
        %3683 = vmatpush1.xpose.msra.mxu0 0.0
        %3684 = vmatprep.subr.mxu0 0.0
        %3685 = vmatpush1.xpose.msra.mxu0 0.0
        %3686 = vmatprep.subr.mxu0 0.0
        %3687 = vmatpush1.xpose.msra.mxu0 0.0
        %3688 = vmatprep.subr.mxu0 0.0
        %3689 = vmatpush1.xpose.msra.mxu0 0.0
        %3690 = vmatprep.subr.mxu0 0.0
        %3691 = vmatpush1.xpose.msra.mxu0 0.0
        %3692 = vmatprep.subr.mxu0 0.0
        %3693 = vmatpush1.xpose.msra.mxu0 0.0
        %3694 = vmatprep.subr.mxu0 0.0
        %3695 = vmatpush1.xpose.msra.mxu0 0.0
        %3696 = vmatprep.subr.mxu0 0.0
        %3697 = vmatpush1.xpose.msra.mxu0 0.0
        %3698 = vmatprep.subr.mxu0 0.0
        %3699 = vmatpush1.xpose.msra.mxu0 0.0
        %3700 = vmatprep.subr.mxu0 0.0
        %3701 = vmatpush1.xpose.msra.mxu0 0.0
        %3702 = vmatprep.subr.mxu0 0.0
        %3703 = vmatpush1.xpose.msra.mxu0 0.0
        %3704 = vmatprep.subr.mxu0 0.0
        %3705 = vmatpush1.xpose.msra.mxu0 0.0
        %3706 = vmatprep.subr.mxu0 0.0
        %3707 = vmatpush1.xpose.msra.mxu0 0.0
        %3708 = vmatprep.subr.mxu0 0.0
        %3709 = vmatpush1.xpose.msra.mxu0 0.0
        %3710 = vmatprep.subr.mxu0 0.0
        %3711 = vmatpush1.xpose.msra.mxu0 0.0
        %3712 = vmatprep.subr.mxu0 0.0
        %3713 = vmatpush1.xpose.msra.mxu0 0.0
        %3714 = vmatprep.subr.mxu0 0.0
        %3715 = vmatpush1.xpose.msra.mxu0 0.0
        %3716 = vmatprep.subr.mxu0 0.0
        %3717 = vmatpush1.xpose.msra.mxu0 0.0
        %3718 = vmatprep.subr.mxu0 0.0
        %3719 = vmatpush1.xpose.msra.mxu0 0.0
        %3720 = vmatprep.subr.mxu0 0.0
        %3721 = vmatpush1.xpose.msra.mxu0 0.0
        %3722 = vmatprep.subr.mxu0 0.0
        %3723 = vmatpush1.xpose.msra.mxu0 0.0
        %3724 = vmatprep.subr.mxu0 0.0
        %3725 = vmatpush1.xpose.msra.mxu0 0.0
        %3726 = vmatprep.subr.mxu0 0.0
        %3727 = vmatpush1.xpose.msra.mxu0 0.0
        %3728 = vmatprep.mubr.f32.mxu0 0.0
        %3729 = vmatmul.mubr.f32.gmra.mrb[0].mxu0 %v3660
        %v3730 = vpop.f32.mrb[0].mxu0
        %v3731 = vadd.f32 0.0, %v3730
        %v3732 = vpop.f32.mrb[0].mxu0
        %3733 = vdwg.mxu0
        %v3734 = vmul.f32 %v3731, 0.35355338
        %v3735 = vsel %vm1236, %v3734, -inf
        %3736 = vmax.xlane.f32.xlu0 %v3735
        %v3737 = vpop.xlane.xlu0 %3736
        %v3738 = vsub.f32 %v3734, %v3737
        %v3739 = vmul.f32 %v3738, 1.442695
        %v3740 = vpow.pop %v3739
        %v3741 = vsel %vm1236, %v3740, 0.0
        %3742 = vadd.xlane.f32.xlu0 %v3741
        %v3743 = vpop.xlane.xlu0 %3742
        %v3744 = vrcp.pop %v3743
        %v3745 = vmul.f32 %v3740, %v3744
        %3746 = vrot.lane.b32.xlu0 %v3311, 48
        %v3747 = vpop.permute.xlu0 %3746
        %v3750 = vsel %vm1236, %v3745, 0
        %3752 = vmatprep.subr.mxu0 0.0
        %3753 = vmatpush1.msra.mxu0 %v3747
        %3754 = vmatprep.subr.mxu0 0.0
        %3755 = vmatpush1.msra.mxu0 0.0
        %3756 = vmatprep.subr.mxu0 0.0
        %3757 = vmatpush1.msra.mxu0 0.0
        %3758 = vmatprep.subr.mxu0 0.0
        %3759 = vmatpush1.msra.mxu0 0.0
        %3760 = vmatprep.subr.mxu0 0.0
        %3761 = vmatpush1.msra.mxu0 0.0
        %3762 = vmatprep.subr.mxu0 0.0
        %3763 = vmatpush1.msra.mxu0 0.0
        %3764 = vmatprep.subr.mxu0 0.0
        %3765 = vmatpush1.msra.mxu0 0.0
        %3766 = vmatprep.subr.mxu0 0.0
        %3767 = vmatpush1.msra.mxu0 0.0
        %3768 = vmatprep.subr.mxu0 0.0
        %3769 = vmatpush1.msra.mxu0 0.0
        %3770 = vmatprep.subr.mxu0 0.0
        %3771 = vmatpush1.msra.mxu0 0.0
        %3772 = vmatprep.subr.mxu0 0.0
        %3773 = vmatpush1.msra.mxu0 0.0
        %3774 = vmatprep.subr.mxu0 0.0
        %3775 = vmatpush1.msra.mxu0 0.0
        %3776 = vmatprep.subr.mxu0 0.0
        %3777 = vmatpush1.msra.mxu0 0.0
        %3778 = vmatprep.subr.mxu0 0.0
        %3779 = vmatpush1.msra.mxu0 0.0
        %3780 = vmatprep.subr.mxu0 0.0
        %3781 = vmatpush1.msra.mxu0 0.0
        %3782 = vmatprep.subr.mxu0 0.0
        %3783 = vmatpush1.msra.mxu0 0.0
        %3784 = vmatprep.subr.mxu0 0.0
        %3785 = vmatpush1.msra.mxu0 0.0
        %3786 = vmatprep.subr.mxu0 0.0
        %3787 = vmatpush1.msra.mxu0 0.0
        %3788 = vmatprep.subr.mxu0 0.0
        %3789 = vmatpush1.msra.mxu0 0.0
        %3790 = vmatprep.subr.mxu0 0.0
        %3791 = vmatpush1.msra.mxu0 0.0
        %3792 = vmatprep.subr.mxu0 0.0
        %3793 = vmatpush1.msra.mxu0 0.0
        %3794 = vmatprep.subr.mxu0 0.0
        %3795 = vmatpush1.msra.mxu0 0.0
        %3796 = vmatprep.subr.mxu0 0.0
        %3797 = vmatpush1.msra.mxu0 0.0
        %3798 = vmatprep.subr.mxu0 0.0
        %3799 = vmatpush1.msra.mxu0 0.0
        %3800 = vmatprep.subr.mxu0 0.0
        %3801 = vmatpush1.msra.mxu0 0.0
        %3802 = vmatprep.subr.mxu0 0.0
        %3803 = vmatpush1.msra.mxu0 0.0
        %3804 = vmatprep.subr.mxu0 0.0
        %3805 = vmatpush1.msra.mxu0 0.0
        %3806 = vmatprep.subr.mxu0 0.0
        %3807 = vmatpush1.msra.mxu0 0.0
        %3808 = vmatprep.subr.mxu0 0.0
        %3809 = vmatpush1.msra.mxu0 0.0
        %3810 = vmatprep.subr.mxu0 0.0
        %3811 = vmatpush1.msra.mxu0 0.0
        %3812 = vmatprep.subr.mxu0 0.0
        %3813 = vmatpush1.msra.mxu0 0.0
        %3814 = vmatprep.subr.mxu0 0.0
        %3815 = vmatpush1.msra.mxu0 0.0
        %3816 = vmatprep.mubr.f32.mxu0 0.0
        %3817 = vmatmul.mubr.f32.gmra.mrb[0].mxu0 %v3750
        %v3818 = vpop.f32.mrb[0].mxu0
        %v3819 = vadd.f32 0.0, %v3818
        %v3820 = vpop.f32.mrb[0].mxu0
        %3821 = vdwg.mxu0
        %3822 = vrot.lane.b32.xlu0 %v3311, 104
        %v3823 = vpop.permute.xlu0 %3822
        %3824 = vrot.lane.b32.xlu0 %v3311, 72
        %v3825 = vpop.permute.xlu0 %3824
        %v3826 = vsel %vm1236, %v3823, 0
        %v3828 = vsel %vm1236, %v3825, 0
        %3830 = vmatprep.subr.mxu0 0.0
        %3831 = vmatpush1.xpose.msra.mxu0 %v3828
        %3832 = vmatprep.subr.mxu0 0.0
        %3833 = vmatpush1.xpose.msra.mxu0 0.0
        %3834 = vmatprep.subr.mxu0 0.0
        %3835 = vmatpush1.xpose.msra.mxu0 0.0
        %3836 = vmatprep.subr.mxu0 0.0
        %3837 = vmatpush1.xpose.msra.mxu0 0.0
        %3838 = vmatprep.subr.mxu0 0.0
        %3839 = vmatpush1.xpose.msra.mxu0 0.0
        %3840 = vmatprep.subr.mxu0 0.0
        %3841 = vmatpush1.xpose.msra.mxu0 0.0
        %3842 = vmatprep.subr.mxu0 0.0
        %3843 = vmatpush1.xpose.msra.mxu0 0.0
        %3844 = vmatprep.subr.mxu0 0.0
        %3845 = vmatpush1.xpose.msra.mxu0 0.0
        %3846 = vmatprep.subr.mxu0 0.0
        %3847 = vmatpush1.xpose.msra.mxu0 0.0
        %3848 = vmatprep.subr.mxu0 0.0
        %3849 = vmatpush1.xpose.msra.mxu0 0.0
        %3850 = vmatprep.subr.mxu0 0.0
        %3851 = vmatpush1.xpose.msra.mxu0 0.0
        %3852 = vmatprep.subr.mxu0 0.0
        %3853 = vmatpush1.xpose.msra.mxu0 0.0
        %3854 = vmatprep.subr.mxu0 0.0
        %3855 = vmatpush1.xpose.msra.mxu0 0.0
        %3856 = vmatprep.subr.mxu0 0.0
        %3857 = vmatpush1.xpose.msra.mxu0 0.0
        %3858 = vmatprep.subr.mxu0 0.0
        %3859 = vmatpush1.xpose.msra.mxu0 0.0
        %3860 = vmatprep.subr.mxu0 0.0
        %3861 = vmatpush1.xpose.msra.mxu0 0.0
        %3862 = vmatprep.subr.mxu0 0.0
        %3863 = vmatpush1.xpose.msra.mxu0 0.0
        %3864 = vmatprep.subr.mxu0 0.0
        %3865 = vmatpush1.xpose.msra.mxu0 0.0
        %3866 = vmatprep.subr.mxu0 0.0
        %3867 = vmatpush1.xpose.msra.mxu0 0.0
        %3868 = vmatprep.subr.mxu0 0.0
        %3869 = vmatpush1.xpose.msra.mxu0 0.0
        %3870 = vmatprep.subr.mxu0 0.0
        %3871 = vmatpush1.xpose.msra.mxu0 0.0
        %3872 = vmatprep.subr.mxu0 0.0
        %3873 = vmatpush1.xpose.msra.mxu0 0.0
        %3874 = vmatprep.subr.mxu0 0.0
        %3875 = vmatpush1.xpose.msra.mxu0 0.0
        %3876 = vmatprep.subr.mxu0 0.0
        %3877 = vmatpush1.xpose.msra.mxu0 0.0
        %3878 = vmatprep.subr.mxu0 0.0
        %3879 = vmatpush1.xpose.msra.mxu0 0.0
        %3880 = vmatprep.subr.mxu0 0.0
        %3881 = vmatpush1.xpose.msra.mxu0 0.0
        %3882 = vmatprep.subr.mxu0 0.0
        %3883 = vmatpush1.xpose.msra.mxu0 0.0
        %3884 = vmatprep.subr.mxu0 0.0
        %3885 = vmatpush1.xpose.msra.mxu0 0.0
        %3886 = vmatprep.subr.mxu0 0.0
        %3887 = vmatpush1.xpose.msra.mxu0 0.0
        %3888 = vmatprep.subr.mxu0 0.0
        %3889 = vmatpush1.xpose.msra.mxu0 0.0
        %3890 = vmatprep.subr.mxu0 0.0
        %3891 = vmatpush1.xpose.msra.mxu0 0.0
        %3892 = vmatprep.subr.mxu0 0.0
        %3893 = vmatpush1.xpose.msra.mxu0 0.0
        %3894 = vmatprep.mubr.f32.mxu0 0.0
        %3895 = vmatmul.mubr.f32.gmra.mrb[0].mxu0 %v3826
        %v3896 = vpop.f32.mrb[0].mxu0
        %v3897 = vadd.f32 0.0, %v3896
        %v3898 = vpop.f32.mrb[0].mxu0
        %3899 = vdwg.mxu0
        %v3900 = vmul.f32 %v3897, 0.35355338
        %v3901 = vsel %vm1236, %v3900, -inf
        %3902 = vmax.xlane.f32.xlu0 %v3901
        %v3903 = vpop.xlane.xlu0 %3902
        %v3904 = vsub.f32 %v3900, %v3903
        %v3905 = vmul.f32 %v3904, 1.442695
        %v3906 = vpow.pop %v3905
        %v3907 = vsel %vm1236, %v3906, 0.0
        %3908 = vadd.xlane.f32.xlu0 %v3907
        %v3909 = vpop.xlane.xlu0 %3908
        %v3910 = vrcp.pop %v3909
        %v3911 = vmul.f32 %v3906, %v3910
        %3912 = vrot.lane.b32.xlu0 %v3311, 40
        %v3913 = vpop.permute.xlu0 %3912
        %v3916 = vsel %vm1236, %v3911, 0
        %3918 = vmatprep.subr.mxu0 0.0
        %3919 = vmatpush1.msra.mxu0 %v3913
        %3920 = vmatprep.subr.mxu0 0.0
        %3921 = vmatpush1.msra.mxu0 0.0
        %3922 = vmatprep.subr.mxu0 0.0
        %3923 = vmatpush1.msra.mxu0 0.0
        %3924 = vmatprep.subr.mxu0 0.0
        %3925 = vmatpush1.msra.mxu0 0.0
        %3926 = vmatprep.subr.mxu0 0.0
        %3927 = vmatpush1.msra.mxu0 0.0
        %3928 = vmatprep.subr.mxu0 0.0
        %3929 = vmatpush1.msra.mxu0 0.0
        %3930 = vmatprep.subr.mxu0 0.0
        %3931 = vmatpush1.msra.mxu0 0.0
        %3932 = vmatprep.subr.mxu0 0.0
        %3933 = vmatpush1.msra.mxu0 0.0
        %3934 = vmatprep.subr.mxu0 0.0
        %3935 = vmatpush1.msra.mxu0 0.0
        %3936 = vmatprep.subr.mxu0 0.0
        %3937 = vmatpush1.msra.mxu0 0.0
        %3938 = vmatprep.subr.mxu0 0.0
        %3939 = vmatpush1.msra.mxu0 0.0
        %3940 = vmatprep.subr.mxu0 0.0
        %3941 = vmatpush1.msra.mxu0 0.0
        %3942 = vmatprep.subr.mxu0 0.0
        %3943 = vmatpush1.msra.mxu0 0.0
        %3944 = vmatprep.subr.mxu0 0.0
        %3945 = vmatpush1.msra.mxu0 0.0
        %3946 = vmatprep.subr.mxu0 0.0
        %3947 = vmatpush1.msra.mxu0 0.0
        %3948 = vmatprep.subr.mxu0 0.0
        %3949 = vmatpush1.msra.mxu0 0.0
        %3950 = vmatprep.subr.mxu0 0.0
        %3951 = vmatpush1.msra.mxu0 0.0
        %3952 = vmatprep.subr.mxu0 0.0
        %3953 = vmatpush1.msra.mxu0 0.0
        %3954 = vmatprep.subr.mxu0 0.0
        %3955 = vmatpush1.msra.mxu0 0.0
        %3956 = vmatprep.subr.mxu0 0.0
        %3957 = vmatpush1.msra.mxu0 0.0
        %3958 = vmatprep.subr.mxu0 0.0
        %3959 = vmatpush1.msra.mxu0 0.0
        %3960 = vmatprep.subr.mxu0 0.0
        %3961 = vmatpush1.msra.mxu0 0.0
        %3962 = vmatprep.subr.mxu0 0.0
        %3963 = vmatpush1.msra.mxu0 0.0
        %3964 = vmatprep.subr.mxu0 0.0
        %3965 = vmatpush1.msra.mxu0 0.0
        %3966 = vmatprep.subr.mxu0 0.0
        %3967 = vmatpush1.msra.mxu0 0.0
        %3968 = vmatprep.subr.mxu0 0.0
        %3969 = vmatpush1.msra.mxu0 0.0
        %3970 = vmatprep.subr.mxu0 0.0
        %3971 = vmatpush1.msra.mxu0 0.0
        %3972 = vmatprep.subr.mxu0 0.0
        %3973 = vmatpush1.msra.mxu0 0.0
        %3974 = vmatprep.subr.mxu0 0.0
        %3975 = vmatpush1.msra.mxu0 0.0
        %3976 = vmatprep.subr.mxu0 0.0
        %3977 = vmatpush1.msra.mxu0 0.0
        %3978 = vmatprep.subr.mxu0 0.0
        %3979 = vmatpush1.msra.mxu0 0.0
        %3980 = vmatprep.subr.mxu0 0.0
        %3981 = vmatpush1.msra.mxu0 0.0
        %3982 = vmatprep.mubr.f32.mxu0 0.0
        %3983 = vmatmul.mubr.f32.gmra.mrb[0].mxu0 %v3916
        %v3984 = vpop.f32.mrb[0].mxu0
        %v3985 = vadd.f32 0.0, %v3984
        %v3986 = vpop.f32.mrb[0].mxu0
        %3987 = vdwg.mxu0
        %3989 = vrot.lane.b32.xlu0 %v3653, 8
        %v3990 = vpop.permute.xlu0 %3989
        %3993 = vrot.lane.b32.xlu0 %v3819, 16
        %v3994 = vpop.permute.xlu0 %3993
        %3997 = vrot.lane.b32.xlu0 %v3985, 24
        %v3998 = vpop.permute.xlu0 %3997
        %v4000 = vsel %vm1236, %v3487, %v3990
        %v4001 = vsel %vm1910, %v4000, %v3994
        %v4002 = vsel %vm1912, %v4001, %v3998
        %v4004 = vlaneseq
        %v4005 = vshrl.u32 %v4004, 7
        %v4006 = vsub.s32 0, %v4005
        %v4007 = vrot.slane %v3324, %v4006
        %v4010 = vsel %vm959, %v4002, 0
        %4012 = vmatprep.subr.mxu0 0.0
        %4013 = vmatpush1.msra.mxu0 %v3319
        %4014 = vmatprep.subr.mxu0 0.0
        %4015 = vmatpush1.msra.mxu0 %v3320
        %4016 = vmatprep.subr.mxu0 0.0
        %4017 = vmatpush1.msra.mxu0 %v3321
        %4018 = vmatprep.subr.mxu0 0.0
        %4019 = vmatpush1.msra.mxu0 %v3322
        %4020 = vmatprep.subr.mxu0 0.0
        %4021 = vmatpush1.msra.mxu0 0.0
        %4022 = vmatprep.subr.mxu0 0.0
        %4023 = vmatpush1.msra.mxu0 0.0
        %4024 = vmatprep.subr.mxu0 0.0
        %4025 = vmatpush1.msra.mxu0 0.0
        %4026 = vmatprep.subr.mxu0 0.0
        %4027 = vmatpush1.msra.mxu0 0.0
        %4028 = vmatprep.subr.mxu0 0.0
        %4029 = vmatpush1.msra.mxu0 0.0
        %4030 = vmatprep.subr.mxu0 0.0
        %4031 = vmatpush1.msra.mxu0 0.0
        %4032 = vmatprep.subr.mxu0 0.0
        %4033 = vmatpush1.msra.mxu0 0.0
        %4034 = vmatprep.subr.mxu0 0.0
        %4035 = vmatpush1.msra.mxu0 0.0
        %4036 = vmatprep.subr.mxu0 0.0
        %4037 = vmatpush1.msra.mxu0 0.0
        %4038 = vmatprep.subr.mxu0 0.0
        %4039 = vmatpush1.msra.mxu0 0.0
        %4040 = vmatprep.subr.mxu0 0.0
        %4041 = vmatpush1.msra.mxu0 0.0
        %4042 = vmatprep.subr.mxu0 0.0
        %4043 = vmatpush1.msra.mxu0 0.0
        %4044 = vmatprep.subr.mxu0 0.0
        %4045 = vmatpush1.msra.mxu0 0.0
        %4046 = vmatprep.subr.mxu0 0.0
        %4047 = vmatpush1.msra.mxu0 0.0
        %4048 = vmatprep.subr.mxu0 0.0
        %4049 = vmatpush1.msra.mxu0 0.0
        %4050 = vmatprep.subr.mxu0 0.0
        %4051 = vmatpush1.msra.mxu0 0.0
        %4052 = vmatprep.subr.mxu0 0.0
        %4053 = vmatpush1.msra.mxu0 0.0
        %4054 = vmatprep.subr.mxu0 0.0
        %4055 = vmatpush1.msra.mxu0 0.0
        %4056 = vmatprep.subr.mxu0 0.0
        %4057 = vmatpush1.msra.mxu0 0.0
        %4058 = vmatprep.subr.mxu0 0.0
        %4059 = vmatpush1.msra.mxu0 0.0
        %4060 = vmatprep.subr.mxu0 0.0
        %4061 = vmatpush1.msra.mxu0 0.0
        %4062 = vmatprep.subr.mxu0 0.0
        %4063 = vmatpush1.msra.mxu0 0.0
        %4064 = vmatprep.subr.mxu0 0.0
        %4065 = vmatpush1.msra.mxu0 0.0
        %4066 = vmatprep.subr.mxu0 0.0
        %4067 = vmatpush1.msra.mxu0 0.0
        %4068 = vmatprep.subr.mxu0 0.0
        %4069 = vmatpush1.msra.mxu0 0.0
        %4070 = vmatprep.subr.mxu0 0.0
        %4071 = vmatpush1.msra.mxu0 0.0
        %4072 = vmatprep.subr.mxu0 0.0
        %4073 = vmatpush1.msra.mxu0 0.0
        %4074 = vmatprep.subr.mxu0 0.0
        %4075 = vmatpush1.msra.mxu0 0.0
        %4076 = vmatprep.mubr.f32.mxu0 0.0
        %4077 = vmatmul.mubr.f32.gmra.mrb[0].mxu0 %v4010
        %v4078 = vpop.f32.mrb[0].mxu0
        %v4079 = vadd.f32 %v4007, %v4078
        %v4080 = vpop.f32.mrb[0].mxu0
        %4081 = vdwg.mxu0
        %v4082 = vadd.f32 %v3206, %v4079
        %v4083 = vsel %vm959, %v4082, 0.0
        %4084 = vadd.xlane.f32.xlu0 %v4083
        %v4085 = vpop.xlane.xlu0 %4084
        %v4086 = vmul.f32 %v4085, %v966
        %v4087 = vsub.f32 %v4082, %v4086
        %v4088 = vmul.f32 %v4087, %v4087
        %v4089 = vsel %vm959, %v4088, 0.0
        %4090 = vadd.xlane.f32.xlu0 %v4089
        %v4091 = vpop.xlane.xlu0 %4090
        %v4092 = vmul.f32 %v4091, %v966
        %v4093 = vadd.f32 %v4092, 1e-05
        %v4094 = vrsqrt.pop %v4093
        %v4095 = vmul.f32 %v4087, %v4094
        %v4096 = vlaneseq
        %v4097 = vshrl.u32 %v4096, 7
        %v4098 = vsub.s32 2, %v4097
        %v4099 = vrot.slane %v3208, %v4098
        %v4100 = vmul.f32 %v4095, %v4099
        %v4101 = vlaneseq
        %v4102 = vshrl.u32 %v4101, 7
        %v4103 = vsub.s32 3, %v4102
        %v4104 = vrot.slane %v3208, %v4103
        %v4105 = vadd.f32 %v4100, %v4104
        %s4106 = scalar_lea.vmem %s13, 16
        %v4107 = vld [vmem:[%s4106] sm:$0xf]
        %v4108 = vld [vmem:[%s4106 + $0x4] sm:$0xf]
        %v4109 = vld [vmem:[%s4106 + $0x8] sm:$0xf]
        %v4110 = vld [vmem:[%s4106 + $0xc] sm:$0xf]
        %v4111 = vunpack.c.l.bf16 %v4107
        %v4112 = vunpack.c.l.bf16 %v4108
        %v4113 = vunpack.c.l.bf16 %v4109
        %v4114 = vunpack.c.l.bf16 %v4110
        %v4116 = vsel %vm959, %v4105, 0
        %4118 = vmatprep.subr.mxu0 0.0
        %4119 = vmatpush1.msra.mxu0 %v4111
        %4120 = vmatprep.subr.mxu0 0.0
        %4121 = vmatpush1.msra.mxu0 %v4112
        %4122 = vmatprep.subr.mxu0 0.0
        %4123 = vmatpush1.msra.mxu0 %v4113
        %4124 = vmatprep.subr.mxu0 0.0
        %4125 = vmatpush1.msra.mxu0 %v4114
        %4126 = vmatprep.subr.mxu0 0.0
        %4127 = vmatpush1.msra.mxu0 0.0
        %4128 = vmatprep.subr.mxu0 0.0
        %4129 = vmatpush1.msra.mxu0 0.0
        %4130 = vmatprep.subr.mxu0 0.0
        %4131 = vmatpush1.msra.mxu0 0.0
        %4132 = vmatprep.subr.mxu0 0.0
        %4133 = vmatpush1.msra.mxu0 0.0
        %4134 = vmatprep.subr.mxu0 0.0
        %4135 = vmatpush1.msra.mxu0 0.0
        %4136 = vmatprep.subr.mxu0 0.0
        %4137 = vmatpush1.msra.mxu0 0.0
        %4138 = vmatprep.subr.mxu0 0.0
        %4139 = vmatpush1.msra.mxu0 0.0
        %4140 = vmatprep.subr.mxu0 0.0
        %4141 = vmatpush1.msra.mxu0 0.0
        %4142 = vmatprep.subr.mxu0 0.0
        %4143 = vmatpush1.msra.mxu0 0.0
        %4144 = vmatprep.subr.mxu0 0.0
        %4145 = vmatpush1.msra.mxu0 0.0
        %4146 = vmatprep.subr.mxu0 0.0
        %4147 = vmatpush1.msra.mxu0 0.0
        %4148 = vmatprep.subr.mxu0 0.0
        %4149 = vmatpush1.msra.mxu0 0.0
        %4150 = vmatprep.subr.mxu0 0.0
        %4151 = vmatpush1.msra.mxu0 0.0
        %4152 = vmatprep.subr.mxu0 0.0
        %4153 = vmatpush1.msra.mxu0 0.0
        %4154 = vmatprep.subr.mxu0 0.0
        %4155 = vmatpush1.msra.mxu0 0.0
        %4156 = vmatprep.subr.mxu0 0.0
        %4157 = vmatpush1.msra.mxu0 0.0
        %4158 = vmatprep.subr.mxu0 0.0
        %4159 = vmatpush1.msra.mxu0 0.0
        %4160 = vmatprep.subr.mxu0 0.0
        %4161 = vmatpush1.msra.mxu0 0.0
        %4162 = vmatprep.subr.mxu0 0.0
        %4163 = vmatpush1.msra.mxu0 0.0
        %4164 = vmatprep.subr.mxu0 0.0
        %4165 = vmatpush1.msra.mxu0 0.0
        %4166 = vmatprep.subr.mxu0 0.0
        %4167 = vmatpush1.msra.mxu0 0.0
        %4168 = vmatprep.subr.mxu0 0.0
        %4169 = vmatpush1.msra.mxu0 0.0
        %4170 = vmatprep.subr.mxu0 0.0
        %4171 = vmatpush1.msra.mxu0 0.0
        %4172 = vmatprep.subr.mxu0 0.0
        %4173 = vmatpush1.msra.mxu0 0.0
        %4174 = vmatprep.subr.mxu0 0.0
        %4175 = vmatpush1.msra.mxu0 0.0
        %4176 = vmatprep.subr.mxu0 0.0
        %4177 = vmatpush1.msra.mxu0 0.0
        %4178 = vmatprep.subr.mxu0 0.0
        %4179 = vmatpush1.msra.mxu0 0.0
        %4180 = vmatprep.subr.mxu0 0.0
        %4181 = vmatpush1.msra.mxu0 0.0
        %4182 = vmatprep.mubr.f32.mxu0 0.0
        %4183 = vmatmul.mubr.f32.gmra.mrb[0].mxu0 %v4116
        %v4184 = vpop.f32.mrb[0].mxu0
        %v4185 = vadd.f32 0.0, %v4184
        %v4186 = vpop.f32.mrb[0].mxu0
        %4187 = vdwg.mxu0
        %s4188 = scalar_lea.vmem %s14, 16
        %v4189 = vld [vmem:[%s4188] sm:$0xf]
        %v4190 = vld [vmem:[%s4188 + $0x4] sm:$0xf]
        %v4191 = vld [vmem:[%s4188 + $0x8] sm:$0xf]
        %v4192 = vld [vmem:[%s4188 + $0xc] sm:$0xf]
        %v4193 = vunpack.c.l.bf16 %v4189
        %v4194 = vunpack.c.l.bf16 %v4190
        %v4195 = vunpack.c.l.bf16 %v4191
        %v4196 = vunpack.c.l.bf16 %v4192
        %4197 = vmatprep.subr.mxu0 0.0
        %4198 = vmatpush1.msra.mxu0 %v4193
        %4199 = vmatprep.subr.mxu0 0.0
        %4200 = vmatpush1.msra.mxu0 %v4194
        %4201 = vmatprep.subr.mxu0 0.0
        %4202 = vmatpush1.msra.mxu0 %v4195
        %4203 = vmatprep.subr.mxu0 0.0
        %4204 = vmatpush1.msra.mxu0 %v4196
        %4205 = vmatprep.subr.mxu0 0.0
        %4206 = vmatpush1.msra.mxu0 0.0
        %4207 = vmatprep.subr.mxu0 0.0
        %4208 = vmatpush1.msra.mxu0 0.0
        %4209 = vmatprep.subr.mxu0 0.0
        %4210 = vmatpush1.msra.mxu0 0.0
        %4211 = vmatprep.subr.mxu0 0.0
        %4212 = vmatpush1.msra.mxu0 0.0
        %4213 = vmatprep.subr.mxu0 0.0
        %4214 = vmatpush1.msra.mxu0 0.0
        %4215 = vmatprep.subr.mxu0 0.0
        %4216 = vmatpush1.msra.mxu0 0.0
        %4217 = vmatprep.subr.mxu0 0.0
        %4218 = vmatpush1.msra.mxu0 0.0
        %4219 = vmatprep.subr.mxu0 0.0
        %4220 = vmatpush1.msra.mxu0 0.0
        %4221 = vmatprep.subr.mxu0 0.0
        %4222 = vmatpush1.msra.mxu0 0.0
        %4223 = vmatprep.subr.mxu0 0.0
        %4224 = vmatpush1.msra.mxu0 0.0
        %4225 = vmatprep.subr.mxu0 0.0
        %4226 = vmatpush1.msra.mxu0 0.0
        %4227 = vmatprep.subr.mxu0 0.0
        %4228 = vmatpush1.msra.mxu0 0.0
        %4229 = vmatprep.subr.mxu0 0.0
        %4230 = vmatpush1.msra.mxu0 0.0
        %4231 = vmatprep.subr.mxu0 0.0
        %4232 = vmatpush1.msra.mxu0 0.0
        %4233 = vmatprep.subr.mxu0 0.0
        %4234 = vmatpush1.msra.mxu0 0.0
        %4235 = vmatprep.subr.mxu0 0.0
        %4236 = vmatpush1.msra.mxu0 0.0
        %4237 = vmatprep.subr.mxu0 0.0
        %4238 = vmatpush1.msra.mxu0 0.0
        %4239 = vmatprep.subr.mxu0 0.0
        %4240 = vmatpush1.msra.mxu0 0.0
        %4241 = vmatprep.subr.mxu0 0.0
        %4242 = vmatpush1.msra.mxu0 0.0
        %4243 = vmatprep.subr.mxu0 0.0
        %4244 = vmatpush1.msra.mxu0 0.0
        %4245 = vmatprep.subr.mxu0 0.0
        %4246 = vmatpush1.msra.mxu0 0.0
        %4247 = vmatprep.subr.mxu0 0.0
        %4248 = vmatpush1.msra.mxu0 0.0
        %4249 = vmatprep.subr.mxu0 0.0
        %4250 = vmatpush1.msra.mxu0 0.0
        %4251 = vmatprep.subr.mxu0 0.0
        %4252 = vmatpush1.msra.mxu0 0.0
        %4253 = vmatprep.subr.mxu0 0.0
        %4254 = vmatpush1.msra.mxu0 0.0
        %4255 = vmatprep.subr.mxu0 0.0
        %4256 = vmatpush1.msra.mxu0 0.0
        %4257 = vmatprep.subr.mxu0 0.0
        %4258 = vmatpush1.msra.mxu0 0.0
        %4259 = vmatprep.subr.mxu0 0.0
        %4260 = vmatpush1.msra.mxu0 0.0
        %4261 = vmatprep.mubr.f32.mxu0 0.0
        %4262 = vmatmul.mubr.f32.gmra.mrb[0].mxu0 %v2107
        %v4263 = vpop.f32.mrb[0].mxu0
        %v4264 = vadd.f32 0.0, %v4263
        %v4265 = vpop.f32.mrb[0].mxu0
        %4266 = vmatprep.mubr.f32.mxu0 0.0
        %4267 = vmatmul.mubr.f32.gmra.mrb[0].mxu0 %v2110
        %v4268 = vpop.f32.mrb[0].mxu0
        %v4269 = vadd.f32 0.0, %v4268
        %v4270 = vpop.f32.mrb[0].mxu0
        %4271 = vdwg.mxu0
        %s4272 = scalar_lea.vmem %s15, 16
        %v4273 = vld [vmem:[%s4272] sm:$0xf]
        %v4274 = vld [vmem:[%s4272 + $0x4] sm:$0xf]
        %v4275 = vld [vmem:[%s4272 + $0x8] sm:$0xf]
        %v4276 = vld [vmem:[%s4272 + $0xc] sm:$0xf]
        %v4277 = vunpack.c.l.bf16 %v4273
        %v4278 = vunpack.c.l.bf16 %v4274
        %v4279 = vunpack.c.l.bf16 %v4275
        %v4280 = vunpack.c.l.bf16 %v4276
        %s4281 = scalar_lea.vmem [#allocation5], 1
        %v4282 = vld [vmem:[%s4281] sm:$0x1]
        %v4284 = vsel %vm1236, %v4185, 0
        %v4287 = vsel %vm1236, %v4264, 0
        %v4290 = vsel %vm1236, %v4269, 0
        %4292 = vmatprep.subr.mxu0 0.0
        %4293 = vmatpush1.xpose.msra.mxu0 %v4287
        %4294 = vmatprep.subr.mxu0 0.0
        %4295 = vmatpush1.xpose.msra.mxu0 %v4290
        %4296 = vmatprep.subr.mxu0 0.0
        %4297 = vmatpush1.xpose.msra.mxu0 0.0
        %4298 = vmatprep.subr.mxu0 0.0
        %4299 = vmatpush1.xpose.msra.mxu0 0.0
        %4300 = vmatprep.subr.mxu0 0.0
        %4301 = vmatpush1.xpose.msra.mxu0 0.0
        %4302 = vmatprep.subr.mxu0 0.0
        %4303 = vmatpush1.xpose.msra.mxu0 0.0
        %4304 = vmatprep.subr.mxu0 0.0
        %4305 = vmatpush1.xpose.msra.mxu0 0.0
        %4306 = vmatprep.subr.mxu0 0.0
        %4307 = vmatpush1.xpose.msra.mxu0 0.0
        %4308 = vmatprep.subr.mxu0 0.0
        %4309 = vmatpush1.xpose.msra.mxu0 0.0
        %4310 = vmatprep.subr.mxu0 0.0
        %4311 = vmatpush1.xpose.msra.mxu0 0.0
        %4312 = vmatprep.subr.mxu0 0.0
        %4313 = vmatpush1.xpose.msra.mxu0 0.0
        %4314 = vmatprep.subr.mxu0 0.0
        %4315 = vmatpush1.xpose.msra.mxu0 0.0
        %4316 = vmatprep.subr.mxu0 0.0
        %4317 = vmatpush1.xpose.msra.mxu0 0.0
        %4318 = vmatprep.subr.mxu0 0.0
        %4319 = vmatpush1.xpose.msra.mxu0 0.0
        %4320 = vmatprep.subr.mxu0 0.0
        %4321 = vmatpush1.xpose.msra.mxu0 0.0
        %4322 = vmatprep.subr.mxu0 0.0
        %4323 = vmatpush1.xpose.msra.mxu0 0.0
        %4324 = vmatprep.subr.mxu0 0.0
        %4325 = vmatpush1.xpose.msra.mxu0 0.0
        %4326 = vmatprep.subr.mxu0 0.0
        %4327 = vmatpush1.xpose.msra.mxu0 0.0
        %4328 = vmatprep.subr.mxu0 0.0
        %4329 = vmatpush1.xpose.msra.mxu0 0.0
        %4330 = vmatprep.subr.mxu0 0.0
        %4331 = vmatpush1.xpose.msra.mxu0 0.0
        %4332 = vmatprep.subr.mxu0 0.0
        %4333 = vmatpush1.xpose.msra.mxu0 0.0
        %4334 = vmatprep.subr.mxu0 0.0
        %4335 = vmatpush1.xpose.msra.mxu0 0.0
        %4336 = vmatprep.subr.mxu0 0.0
        %4337 = vmatpush1.xpose.msra.mxu0 0.0
        %4338 = vmatprep.subr.mxu0 0.0
        %4339 = vmatpush1.xpose.msra.mxu0 0.0
        %4340 = vmatprep.subr.mxu0 0.0
        %4341 = vmatpush1.xpose.msra.mxu0 0.0
        %4342 = vmatprep.subr.mxu0 0.0
        %4343 = vmatpush1.xpose.msra.mxu0 0.0
        %4344 = vmatprep.subr.mxu0 0.0
        %4345 = vmatpush1.xpose.msra.mxu0 0.0
        %4346 = vmatprep.subr.mxu0 0.0
        %4347 = vmatpush1.xpose.msra.mxu0 0.0
        %4348 = vmatprep.subr.mxu0 0.0
        %4349 = vmatpush1.xpose.msra.mxu0 0.0
        %4350 = vmatprep.subr.mxu0 0.0
        %4351 = vmatpush1.xpose.msra.mxu0 0.0
        %4352 = vmatprep.subr.mxu0 0.0
        %4353 = vmatpush1.xpose.msra.mxu0 0.0
        %4354 = vmatprep.subr.mxu0 0.0
        %4355 = vmatpush1.xpose.msra.mxu0 0.0
        %4356 = vmatprep.mubr.f32.mxu0 0.0
        %4357 = vmatmul.mubr.f32.gmra.mrb[0].mxu0 %v4284
        %v4358 = vpop.f32.mrb[0].mxu0
        %v4359 = vadd.f32 0.0, %v4358
        %v4360 = vpop.f32.mrb[0].mxu0
        %4361 = vdwg.mxu0
        %v4362 = vmul.f32 %v4359, 0.35355338
        %v4363 = vsel %vm1910, %v4362, -inf
        %4364 = vmax.xlane.f32.xlu0 %v4363
        %v4365 = vpop.xlane.xlu0 %4364
        %v4366 = vsub.f32 %v4362, %v4365
        %v4367 = vmul.f32 %v4366, 1.442695
        %v4368 = vpow.pop %v4367
        %v4369 = vsel %vm1910, %v4368, 0.0
        %4370 = vadd.xlane.f32.xlu0 %v4369
        %v4371 = vpop.xlane.xlu0 %4370
        %v4372 = vrcp.pop %v4371
        %v4373 = vmul.f32 %v4368, %v4372
        %4374 = vrot.lane.b32.xlu0 %v4264, 96
        %v4375 = vpop.permute.xlu0 %4374
        %4376 = vrot.lane.b32.xlu0 %v4269, 96
        %v4377 = vpop.permute.xlu0 %4376
        %v4381 = vsel %vm1910, %v4373, 0
        %4383 = vmatprep.subr.mxu0 0.0
        %4384 = vmatpush1.msra.mxu0 %v4375
        %4385 = vmatprep.subr.mxu0 0.0
        %4386 = vmatpush1.msra.mxu0 %v4377
        %4387 = vmatprep.subr.mxu0 0.0
        %4388 = vmatpush1.msra.mxu0 0.0
        %4389 = vmatprep.subr.mxu0 0.0
        %4390 = vmatpush1.msra.mxu0 0.0
        %4391 = vmatprep.subr.mxu0 0.0
        %4392 = vmatpush1.msra.mxu0 0.0
        %4393 = vmatprep.subr.mxu0 0.0
        %4394 = vmatpush1.msra.mxu0 0.0
        %4395 = vmatprep.subr.mxu0 0.0
        %4396 = vmatpush1.msra.mxu0 0.0
        %4397 = vmatprep.subr.mxu0 0.0
        %4398 = vmatpush1.msra.mxu0 0.0
        %4399 = vmatprep.subr.mxu0 0.0
        %4400 = vmatpush1.msra.mxu0 0.0
        %4401 = vmatprep.subr.mxu0 0.0
        %4402 = vmatpush1.msra.mxu0 0.0
        %4403 = vmatprep.subr.mxu0 0.0
        %4404 = vmatpush1.msra.mxu0 0.0
        %4405 = vmatprep.subr.mxu0 0.0
        %4406 = vmatpush1.msra.mxu0 0.0
        %4407 = vmatprep.subr.mxu0 0.0
        %4408 = vmatpush1.msra.mxu0 0.0
        %4409 = vmatprep.subr.mxu0 0.0
        %4410 = vmatpush1.msra.mxu0 0.0
        %4411 = vmatprep.subr.mxu0 0.0
        %4412 = vmatpush1.msra.mxu0 0.0
        %4413 = vmatprep.subr.mxu0 0.0
        %4414 = vmatpush1.msra.mxu0 0.0
        %4415 = vmatprep.subr.mxu0 0.0
        %4416 = vmatpush1.msra.mxu0 0.0
        %4417 = vmatprep.subr.mxu0 0.0
        %4418 = vmatpush1.msra.mxu0 0.0
        %4419 = vmatprep.subr.mxu0 0.0
        %4420 = vmatpush1.msra.mxu0 0.0
        %4421 = vmatprep.subr.mxu0 0.0
        %4422 = vmatpush1.msra.mxu0 0.0
        %4423 = vmatprep.subr.mxu0 0.0
        %4424 = vmatpush1.msra.mxu0 0.0
        %4425 = vmatprep.subr.mxu0 0.0
        %4426 = vmatpush1.msra.mxu0 0.0
        %4427 = vmatprep.subr.mxu0 0.0
        %4428 = vmatpush1.msra.mxu0 0.0
        %4429 = vmatprep.subr.mxu0 0.0
        %4430 = vmatpush1.msra.mxu0 0.0
        %4431 = vmatprep.subr.mxu0 0.0
        %4432 = vmatpush1.msra.mxu0 0.0
        %4433 = vmatprep.subr.mxu0 0.0
        %4434 = vmatpush1.msra.mxu0 0.0
        %4435 = vmatprep.subr.mxu0 0.0
        %4436 = vmatpush1.msra.mxu0 0.0
        %4437 = vmatprep.subr.mxu0 0.0
        %4438 = vmatpush1.msra.mxu0 0.0
        %4439 = vmatprep.subr.mxu0 0.0
        %4440 = vmatpush1.msra.mxu0 0.0
        %4441 = vmatprep.subr.mxu0 0.0
        %4442 = vmatpush1.msra.mxu0 0.0
        %4443 = vmatprep.subr.mxu0 0.0
        %4444 = vmatpush1.msra.mxu0 0.0
        %4445 = vmatprep.subr.mxu0 0.0
        %4446 = vmatpush1.msra.mxu0 0.0
        %4447 = vmatprep.mubr.f32.mxu0 0.0
        %4448 = vmatmul.mubr.f32.gmra.mrb[0].mxu0 %v4381
        %v4449 = vpop.f32.mrb[0].mxu0
        %v4450 = vadd.f32 0.0, %v4449
        %v4451 = vpop.f32.mrb[0].mxu0
        %4452 = vdwg.mxu0
        %4453 = vrot.lane.b32.xlu0 %v4185, 120
        %v4454 = vpop.permute.xlu0 %4453
        %4455 = vrot.lane.b32.xlu0 %v4264, 120
        %v4456 = vpop.permute.xlu0 %4455
        %4457 = vrot.lane.b32.xlu0 %v4269, 120
        %v4458 = vpop.permute.xlu0 %4457
        %v4459 = vsel %vm1236, %v4454, 0
        %v4461 = vsel %vm1236, %v4456, 0
        %v4463 = vsel %vm1236, %v4458, 0
        %4465 = vmatprep.subr.mxu0 0.0
        %4466 = vmatpush1.xpose.msra.mxu0 %v4461
        %4467 = vmatprep.subr.mxu0 0.0
        %4468 = vmatpush1.xpose.msra.mxu0 %v4463
        %4469 = vmatprep.subr.mxu0 0.0
        %4470 = vmatpush1.xpose.msra.mxu0 0.0
        %4471 = vmatprep.subr.mxu0 0.0
        %4472 = vmatpush1.xpose.msra.mxu0 0.0
        %4473 = vmatprep.subr.mxu0 0.0
        %4474 = vmatpush1.xpose.msra.mxu0 0.0
        %4475 = vmatprep.subr.mxu0 0.0
        %4476 = vmatpush1.xpose.msra.mxu0 0.0
        %4477 = vmatprep.subr.mxu0 0.0
        %4478 = vmatpush1.xpose.msra.mxu0 0.0
        %4479 = vmatprep.subr.mxu0 0.0
        %4480 = vmatpush1.xpose.msra.mxu0 0.0
        %4481 = vmatprep.subr.mxu0 0.0
        %4482 = vmatpush1.xpose.msra.mxu0 0.0
        %4483 = vmatprep.subr.mxu0 0.0
        %4484 = vmatpush1.xpose.msra.mxu0 0.0
        %4485 = vmatprep.subr.mxu0 0.0
        %4486 = vmatpush1.xpose.msra.mxu0 0.0
        %4487 = vmatprep.subr.mxu0 0.0
        %4488 = vmatpush1.xpose.msra.mxu0 0.0
        %4489 = vmatprep.subr.mxu0 0.0
        %4490 = vmatpush1.xpose.msra.mxu0 0.0
        %4491 = vmatprep.subr.mxu0 0.0
        %4492 = vmatpush1.xpose.msra.mxu0 0.0
        %4493 = vmatprep.subr.mxu0 0.0
        %4494 = vmatpush1.xpose.msra.mxu0 0.0
        %4495 = vmatprep.subr.mxu0 0.0
        %4496 = vmatpush1.xpose.msra.mxu0 0.0
        %4497 = vmatprep.subr.mxu0 0.0
        %4498 = vmatpush1.xpose.msra.mxu0 0.0
        %4499 = vmatprep.subr.mxu0 0.0
        %4500 = vmatpush1.xpose.msra.mxu0 0.0
        %4501 = vmatprep.subr.mxu0 0.0
        %4502 = vmatpush1.xpose.msra.mxu0 0.0
        %4503 = vmatprep.subr.mxu0 0.0
        %4504 = vmatpush1.xpose.msra.mxu0 0.0
        %4505 = vmatprep.subr.mxu0 0.0
        %4506 = vmatpush1.xpose.msra.mxu0 0.0
        %4507 = vmatprep.subr.mxu0 0.0
        %4508 = vmatpush1.xpose.msra.mxu0 0.0
        %4509 = vmatprep.subr.mxu0 0.0
        %4510 = vmatpush1.xpose.msra.mxu0 0.0
        %4511 = vmatprep.subr.mxu0 0.0
        %4512 = vmatpush1.xpose.msra.mxu0 0.0
        %4513 = vmatprep.subr.mxu0 0.0
        %4514 = vmatpush1.xpose.msra.mxu0 0.0
        %4515 = vmatprep.subr.mxu0 0.0
        %4516 = vmatpush1.xpose.msra.mxu0 0.0
        %4517 = vmatprep.subr.mxu0 0.0
        %4518 = vmatpush1.xpose.msra.mxu0 0.0
        %4519 = vmatprep.subr.mxu0 0.0
        %4520 = vmatpush1.xpose.msra.mxu0 0.0
        %4521 = vmatprep.subr.mxu0 0.0
        %4522 = vmatpush1.xpose.msra.mxu0 0.0
        %4523 = vmatprep.subr.mxu0 0.0
        %4524 = vmatpush1.xpose.msra.mxu0 0.0
        %4525 = vmatprep.subr.mxu0 0.0
        %4526 = vmatpush1.xpose.msra.mxu0 0.0
        %4527 = vmatprep.subr.mxu0 0.0
        %4528 = vmatpush1.xpose.msra.mxu0 0.0
        %4529 = vmatprep.mubr.f32.mxu0 0.0
        %4530 = vmatmul.mubr.f32.gmra.mrb[0].mxu0 %v4459
        %v4531 = vpop.f32.mrb[0].mxu0
        %v4532 = vadd.f32 0.0, %v4531
        %v4533 = vpop.f32.mrb[0].mxu0
        %4534 = vdwg.mxu0
        %v4535 = vmul.f32 %v4532, 0.35355338
        %v4536 = vsel %vm1910, %v4535, -inf
        %4537 = vmax.xlane.f32.xlu0 %v4536
        %v4538 = vpop.xlane.xlu0 %4537
        %v4539 = vsub.f32 %v4535, %v4538
        %v4540 = vmul.f32 %v4539, 1.442695
        %v4541 = vpow.pop %v4540
        %v4542 = vsel %vm1910, %v4541, 0.0
        %4543 = vadd.xlane.f32.xlu0 %v4542
        %v4544 = vpop.xlane.xlu0 %4543
        %v4545 = vrcp.pop %v4544
        %v4546 = vmul.f32 %v4541, %v4545
        %4547 = vrot.lane.b32.xlu0 %v4264, 88
        %v4548 = vpop.permute.xlu0 %4547
        %4549 = vrot.lane.b32.xlu0 %v4269, 88
        %v4550 = vpop.permute.xlu0 %4549
        %v4554 = vsel %vm1910, %v4546, 0
        %4556 = vmatprep.subr.mxu0 0.0
        %4557 = vmatpush1.msra.mxu0 %v4548
        %4558 = vmatprep.subr.mxu0 0.0
        %4559 = vmatpush1.msra.mxu0 %v4550
        %4560 = vmatprep.subr.mxu0 0.0
        %4561 = vmatpush1.msra.mxu0 0.0
        %4562 = vmatprep.subr.mxu0 0.0
        %4563 = vmatpush1.msra.mxu0 0.0
        %4564 = vmatprep.subr.mxu0 0.0
        %4565 = vmatpush1.msra.mxu0 0.0
        %4566 = vmatprep.subr.mxu0 0.0
        %4567 = vmatpush1.msra.mxu0 0.0
        %4568 = vmatprep.subr.mxu0 0.0
        %4569 = vmatpush1.msra.mxu0 0.0
        %4570 = vmatprep.subr.mxu0 0.0
        %4571 = vmatpush1.msra.mxu0 0.0
        %4572 = vmatprep.subr.mxu0 0.0
        %4573 = vmatpush1.msra.mxu0 0.0
        %4574 = vmatprep.subr.mxu0 0.0
        %4575 = vmatpush1.msra.mxu0 0.0
        %4576 = vmatprep.subr.mxu0 0.0
        %4577 = vmatpush1.msra.mxu0 0.0
        %4578 = vmatprep.subr.mxu0 0.0
        %4579 = vmatpush1.msra.mxu0 0.0
        %4580 = vmatprep.subr.mxu0 0.0
        %4581 = vmatpush1.msra.mxu0 0.0
        %4582 = vmatprep.subr.mxu0 0.0
        %4583 = vmatpush1.msra.mxu0 0.0
        %4584 = vmatprep.subr.mxu0 0.0
        %4585 = vmatpush1.msra.mxu0 0.0
        %4586 = vmatprep.subr.mxu0 0.0
        %4587 = vmatpush1.msra.mxu0 0.0
        %4588 = vmatprep.subr.mxu0 0.0
        %4589 = vmatpush1.msra.mxu0 0.0
        %4590 = vmatprep.subr.mxu0 0.0
        %4591 = vmatpush1.msra.mxu0 0.0
        %4592 = vmatprep.subr.mxu0 0.0
        %4593 = vmatpush1.msra.mxu0 0.0
        %4594 = vmatprep.subr.mxu0 0.0
        %4595 = vmatpush1.msra.mxu0 0.0
        %4596 = vmatprep.subr.mxu0 0.0
        %4597 = vmatpush1.msra.mxu0 0.0
        %4598 = vmatprep.subr.mxu0 0.0
        %4599 = vmatpush1.msra.mxu0 0.0
        %4600 = vmatprep.subr.mxu0 0.0
        %4601 = vmatpush1.msra.mxu0 0.0
        %4602 = vmatprep.subr.mxu0 0.0
        %4603 = vmatpush1.msra.mxu0 0.0
        %4604 = vmatprep.subr.mxu0 0.0
        %4605 = vmatpush1.msra.mxu0 0.0
        %4606 = vmatprep.subr.mxu0 0.0
        %4607 = vmatpush1.msra.mxu0 0.0
        %4608 = vmatprep.subr.mxu0 0.0
        %4609 = vmatpush1.msra.mxu0 0.0
        %4610 = vmatprep.subr.mxu0 0.0
        %4611 = vmatpush1.msra.mxu0 0.0
        %4612 = vmatprep.subr.mxu0 0.0
        %4613 = vmatpush1.msra.mxu0 0.0
        %4614 = vmatprep.subr.mxu0 0.0
        %4615 = vmatpush1.msra.mxu0 0.0
        %4616 = vmatprep.subr.mxu0 0.0
        %4617 = vmatpush1.msra.mxu0 0.0
        %4618 = vmatprep.subr.mxu0 0.0
        %4619 = vmatpush1.msra.mxu0 0.0
        %4620 = vmatprep.mubr.f32.mxu0 0.0
        %4621 = vmatmul.mubr.f32.gmra.mrb[0].mxu0 %v4554
        %v4622 = vpop.f32.mrb[0].mxu0
        %v4623 = vadd.f32 0.0, %v4622
        %v4624 = vpop.f32.mrb[0].mxu0
        %4625 = vdwg.mxu0
        %4626 = vrot.lane.b32.xlu0 %v4185, 112
        %v4627 = vpop.permute.xlu0 %4626
        %4628 = vrot.lane.b32.xlu0 %v4264, 112
        %v4629 = vpop.permute.xlu0 %4628
        %4630 = vrot.lane.b32.xlu0 %v4269, 112
        %v4631 = vpop.permute.xlu0 %4630
        %v4632 = vsel %vm1236, %v4627, 0
        %v4634 = vsel %vm1236, %v4629, 0
        %v4636 = vsel %vm1236, %v4631, 0
        %4638 = vmatprep.subr.mxu0 0.0
        %4639 = vmatpush1.xpose.msra.mxu0 %v4634
        %4640 = vmatprep.subr.mxu0 0.0
        %4641 = vmatpush1.xpose.msra.mxu0 %v4636
        %4642 = vmatprep.subr.mxu0 0.0
        %4643 = vmatpush1.xpose.msra.mxu0 0.0
        %4644 = vmatprep.subr.mxu0 0.0
        %4645 = vmatpush1.xpose.msra.mxu0 0.0
        %4646 = vmatprep.subr.mxu0 0.0
        %4647 = vmatpush1.xpose.msra.mxu0 0.0
        %4648 = vmatprep.subr.mxu0 0.0
        %4649 = vmatpush1.xpose.msra.mxu0 0.0
        %4650 = vmatprep.subr.mxu0 0.0
        %4651 = vmatpush1.xpose.msra.mxu0 0.0
        %4652 = vmatprep.subr.mxu0 0.0
        %4653 = vmatpush1.xpose.msra.mxu0 0.0
        %4654 = vmatprep.subr.mxu0 0.0
        %4655 = vmatpush1.xpose.msra.mxu0 0.0
        %4656 = vmatprep.subr.mxu0 0.0
        %4657 = vmatpush1.xpose.msra.mxu0 0.0
        %4658 = vmatprep.subr.mxu0 0.0
        %4659 = vmatpush1.xpose.msra.mxu0 0.0
        %4660 = vmatprep.subr.mxu0 0.0
        %4661 = vmatpush1.xpose.msra.mxu0 0.0
        %4662 = vmatprep.subr.mxu0 0.0
        %4663 = vmatpush1.xpose.msra.mxu0 0.0
        %4664 = vmatprep.subr.mxu0 0.0
        %4665 = vmatpush1.xpose.msra.mxu0 0.0
        %4666 = vmatprep.subr.mxu0 0.0
        %4667 = vmatpush1.xpose.msra.mxu0 0.0
        %4668 = vmatprep.subr.mxu0 0.0
        %4669 = vmatpush1.xpose.msra.mxu0 0.0
        %4670 = vmatprep.subr.mxu0 0.0
        %4671 = vmatpush1.xpose.msra.mxu0 0.0
        %4672 = vmatprep.subr.mxu0 0.0
        %4673 = vmatpush1.xpose.msra.mxu0 0.0
        %4674 = vmatprep.subr.mxu0 0.0
        %4675 = vmatpush1.xpose.msra.mxu0 0.0
        %4676 = vmatprep.subr.mxu0 0.0
        %4677 = vmatpush1.xpose.msra.mxu0 0.0
        %4678 = vmatprep.subr.mxu0 0.0
        %4679 = vmatpush1.xpose.msra.mxu0 0.0
        %4680 = vmatprep.subr.mxu0 0.0
        %4681 = vmatpush1.xpose.msra.mxu0 0.0
        %4682 = vmatprep.subr.mxu0 0.0
        %4683 = vmatpush1.xpose.msra.mxu0 0.0
        %4684 = vmatprep.subr.mxu0 0.0
        %4685 = vmatpush1.xpose.msra.mxu0 0.0
        %4686 = vmatprep.subr.mxu0 0.0
        %4687 = vmatpush1.xpose.msra.mxu0 0.0
        %4688 = vmatprep.subr.mxu0 0.0
        %4689 = vmatpush1.xpose.msra.mxu0 0.0
        %4690 = vmatprep.subr.mxu0 0.0
        %4691 = vmatpush1.xpose.msra.mxu0 0.0
        %4692 = vmatprep.subr.mxu0 0.0
        %4693 = vmatpush1.xpose.msra.mxu0 0.0
        %4694 = vmatprep.subr.mxu0 0.0
        %4695 = vmatpush1.xpose.msra.mxu0 0.0
        %4696 = vmatprep.subr.mxu0 0.0
        %4697 = vmatpush1.xpose.msra.mxu0 0.0
        %4698 = vmatprep.subr.mxu0 0.0
        %4699 = vmatpush1.xpose.msra.mxu0 0.0
        %4700 = vmatprep.subr.mxu0 0.0
        %4701 = vmatpush1.xpose.msra.mxu0 0.0
        %4702 = vmatprep.mubr.f32.mxu0 0.0
        %4703 = vmatmul.mubr.f32.gmra.mrb[0].mxu0 %v4632
        %v4704 = vpop.f32.mrb[0].mxu0
        %v4705 = vadd.f32 0.0, %v4704
        %v4706 = vpop.f32.mrb[0].mxu0
        %4707 = vdwg.mxu0
        %v4708 = vmul.f32 %v4705, 0.35355338
        %v4709 = vsel %vm1910, %v4708, -inf
        %4710 = vmax.xlane.f32.xlu0 %v4709
        %v4711 = vpop.xlane.xlu0 %4710
        %v4712 = vsub.f32 %v4708, %v4711
        %v4713 = vmul.f32 %v4712, 1.442695
        %v4714 = vpow.pop %v4713
        %v4715 = vsel %vm1910, %v4714, 0.0
        %4716 = vadd.xlane.f32.xlu0 %v4715
        %v4717 = vpop.xlane.xlu0 %4716
        %v4718 = vrcp.pop %v4717
        %v4719 = vmul.f32 %v4714, %v4718
        %4720 = vrot.lane.b32.xlu0 %v4264, 80
        %v4721 = vpop.permute.xlu0 %4720
        %4722 = vrot.lane.b32.xlu0 %v4269, 80
        %v4723 = vpop.permute.xlu0 %4722
        %v4727 = vsel %vm1910, %v4719, 0
        %4729 = vmatprep.subr.mxu0 0.0
        %4730 = vmatpush1.msra.mxu0 %v4721
        %4731 = vmatprep.subr.mxu0 0.0
        %4732 = vmatpush1.msra.mxu0 %v4723
        %4733 = vmatprep.subr.mxu0 0.0
        %4734 = vmatpush1.msra.mxu0 0.0
        %4735 = vmatprep.subr.mxu0 0.0
        %4736 = vmatpush1.msra.mxu0 0.0
        %4737 = vmatprep.subr.mxu0 0.0
        %4738 = vmatpush1.msra.mxu0 0.0
        %4739 = vmatprep.subr.mxu0 0.0
        %4740 = vmatpush1.msra.mxu0 0.0
        %4741 = vmatprep.subr.mxu0 0.0
        %4742 = vmatpush1.msra.mxu0 0.0
        %4743 = vmatprep.subr.mxu0 0.0
        %4744 = vmatpush1.msra.mxu0 0.0
        %4745 = vmatprep.subr.mxu0 0.0
        %4746 = vmatpush1.msra.mxu0 0.0
        %4747 = vmatprep.subr.mxu0 0.0
        %4748 = vmatpush1.msra.mxu0 0.0
        %4749 = vmatprep.subr.mxu0 0.0
        %4750 = vmatpush1.msra.mxu0 0.0
        %4751 = vmatprep.subr.mxu0 0.0
        %4752 = vmatpush1.msra.mxu0 0.0
        %4753 = vmatprep.subr.mxu0 0.0
        %4754 = vmatpush1.msra.mxu0 0.0
        %4755 = vmatprep.subr.mxu0 0.0
        %4756 = vmatpush1.msra.mxu0 0.0
        %4757 = vmatprep.subr.mxu0 0.0
        %4758 = vmatpush1.msra.mxu0 0.0
        %4759 = vmatprep.subr.mxu0 0.0
        %4760 = vmatpush1.msra.mxu0 0.0
        %4761 = vmatprep.subr.mxu0 0.0
        %4762 = vmatpush1.msra.mxu0 0.0
        %4763 = vmatprep.subr.mxu0 0.0
        %4764 = vmatpush1.msra.mxu0 0.0
        %4765 = vmatprep.subr.mxu0 0.0
        %4766 = vmatpush1.msra.mxu0 0.0
        %4767 = vmatprep.subr.mxu0 0.0
        %4768 = vmatpush1.msra.mxu0 0.0
        %4769 = vmatprep.subr.mxu0 0.0
        %4770 = vmatpush1.msra.mxu0 0.0
        %4771 = vmatprep.subr.mxu0 0.0
        %4772 = vmatpush1.msra.mxu0 0.0
        %4773 = vmatprep.subr.mxu0 0.0
        %4774 = vmatpush1.msra.mxu0 0.0
        %4775 = vmatprep.subr.mxu0 0.0
        %4776 = vmatpush1.msra.mxu0 0.0
        %4777 = vmatprep.subr.mxu0 0.0
        %4778 = vmatpush1.msra.mxu0 0.0
        %4779 = vmatprep.subr.mxu0 0.0
        %4780 = vmatpush1.msra.mxu0 0.0
        %4781 = vmatprep.subr.mxu0 0.0
        %4782 = vmatpush1.msra.mxu0 0.0
        %4783 = vmatprep.subr.mxu0 0.0
        %4784 = vmatpush1.msra.mxu0 0.0
        %4785 = vmatprep.subr.mxu0 0.0
        %4786 = vmatpush1.msra.mxu0 0.0
        %4787 = vmatprep.subr.mxu0 0.0
        %4788 = vmatpush1.msra.mxu0 0.0
        %4789 = vmatprep.subr.mxu0 0.0
        %4790 = vmatpush1.msra.mxu0 0.0
        %4791 = vmatprep.subr.mxu0 0.0
        %4792 = vmatpush1.msra.mxu0 0.0
        %4793 = vmatprep.mubr.f32.mxu0 0.0
        %4794 = vmatmul.mubr.f32.gmra.mrb[0].mxu0 %v4727
        %v4795 = vpop.f32.mrb[0].mxu0
        %v4796 = vadd.f32 0.0, %v4795
        %v4797 = vpop.f32.mrb[0].mxu0
        %4798 = vdwg.mxu0
        %4799 = vrot.lane.b32.xlu0 %v4185, 104
        %v4800 = vpop.permute.xlu0 %4799
        %4801 = vrot.lane.b32.xlu0 %v4264, 104
        %v4802 = vpop.permute.xlu0 %4801
        %4803 = vrot.lane.b32.xlu0 %v4269, 104
        %v4804 = vpop.permute.xlu0 %4803
        %v4805 = vsel %vm1236, %v4800, 0
        %v4807 = vsel %vm1236, %v4802, 0
        %v4809 = vsel %vm1236, %v4804, 0
        %4811 = vmatprep.subr.mxu0 0.0
        %4812 = vmatpush1.xpose.msra.mxu0 %v4807
        %4813 = vmatprep.subr.mxu0 0.0
        %4814 = vmatpush1.xpose.msra.mxu0 %v4809
        %4815 = vmatprep.subr.mxu0 0.0
        %4816 = vmatpush1.xpose.msra.mxu0 0.0
        %4817 = vmatprep.subr.mxu0 0.0
        %4818 = vmatpush1.xpose.msra.mxu0 0.0
        %4819 = vmatprep.subr.mxu0 0.0
        %4820 = vmatpush1.xpose.msra.mxu0 0.0
        %4821 = vmatprep.subr.mxu0 0.0
        %4822 = vmatpush1.xpose.msra.mxu0 0.0
        %4823 = vmatprep.subr.mxu0 0.0
        %4824 = vmatpush1.xpose.msra.mxu0 0.0
        %4825 = vmatprep.subr.mxu0 0.0
        %4826 = vmatpush1.xpose.msra.mxu0 0.0
        %4827 = vmatprep.subr.mxu0 0.0
        %4828 = vmatpush1.xpose.msra.mxu0 0.0
        %4829 = vmatprep.subr.mxu0 0.0
        %4830 = vmatpush1.xpose.msra.mxu0 0.0
        %4831 = vmatprep.subr.mxu0 0.0
        %4832 = vmatpush1.xpose.msra.mxu0 0.0
        %4833 = vmatprep.subr.mxu0 0.0
        %4834 = vmatpush1.xpose.msra.mxu0 0.0
        %4835 = vmatprep.subr.mxu0 0.0
        %4836 = vmatpush1.xpose.msra.mxu0 0.0
        %4837 = vmatprep.subr.mxu0 0.0
        %4838 = vmatpush1.xpose.msra.mxu0 0.0
        %4839 = vmatprep.subr.mxu0 0.0
        %4840 = vmatpush1.xpose.msra.mxu0 0.0
        %4841 = vmatprep.subr.mxu0 0.0
        %4842 = vmatpush1.xpose.msra.mxu0 0.0
        %4843 = vmatprep.subr.mxu0 0.0
        %4844 = vmatpush1.xpose.msra.mxu0 0.0
        %4845 = vmatprep.subr.mxu0 0.0
        %4846 = vmatpush1.xpose.msra.mxu0 0.0
        %4847 = vmatprep.subr.mxu0 0.0
        %4848 = vmatpush1.xpose.msra.mxu0 0.0
        %4849 = vmatprep.subr.mxu0 0.0
        %4850 = vmatpush1.xpose.msra.mxu0 0.0
        %4851 = vmatprep.subr.mxu0 0.0
        %4852 = vmatpush1.xpose.msra.mxu0 0.0
        %4853 = vmatprep.subr.mxu0 0.0
        %4854 = vmatpush1.xpose.msra.mxu0 0.0
        %4855 = vmatprep.subr.mxu0 0.0
        %4856 = vmatpush1.xpose.msra.mxu0 0.0
        %4857 = vmatprep.subr.mxu0 0.0
        %4858 = vmatpush1.xpose.msra.mxu0 0.0
        %4859 = vmatprep.subr.mxu0 0.0
        %4860 = vmatpush1.xpose.msra.mxu0 0.0
        %4861 = vmatprep.subr.mxu0 0.0
        %4862 = vmatpush1.xpose.msra.mxu0 0.0
        %4863 = vmatprep.subr.mxu0 0.0
        %4864 = vmatpush1.xpose.msra.mxu0 0.0
        %4865 = vmatprep.subr.mxu0 0.0
        %4866 = vmatpush1.xpose.msra.mxu0 0.0
        %4867 = vmatprep.subr.mxu0 0.0
        %4868 = vmatpush1.xpose.msra.mxu0 0.0
        %4869 = vmatprep.subr.mxu0 0.0
        %4870 = vmatpush1.xpose.msra.mxu0 0.0
        %4871 = vmatprep.subr.mxu0 0.0
        %4872 = vmatpush1.xpose.msra.mxu0 0.0
        %4873 = vmatprep.subr.mxu0 0.0
        %4874 = vmatpush1.xpose.msra.mxu0 0.0
        %4875 = vmatprep.mubr.f32.mxu0 0.0
        %4876 = vmatmul.mubr.f32.gmra.mrb[0].mxu0 %v4805
        %v4877 = vpop.f32.mrb[0].mxu0
        %v4878 = vadd.f32 0.0, %v4877
        %v4879 = vpop.f32.mrb[0].mxu0
        %4880 = vdwg.mxu0
        %v4881 = vmul.f32 %v4878, 0.35355338
        %v4882 = vsel %vm1910, %v4881, -inf
        %4883 = vmax.xlane.f32.xlu0 %v4882
        %v4884 = vpop.xlane.xlu0 %4883
        %v4885 = vsub.f32 %v4881, %v4884
        %v4886 = vmul.f32 %v4885, 1.442695
        %v4887 = vpow.pop %v4886
        %v4888 = vsel %vm1910, %v4887, 0.0
        %4889 = vadd.xlane.f32.xlu0 %v4888
        %v4890 = vpop.xlane.xlu0 %4889
        %v4891 = vrcp.pop %v4890
        %v4892 = vmul.f32 %v4887, %v4891
        %4893 = vrot.lane.b32.xlu0 %v4264, 72
        %v4894 = vpop.permute.xlu0 %4893
        %4895 = vrot.lane.b32.xlu0 %v4269, 72
        %v4896 = vpop.permute.xlu0 %4895
        %v4900 = vsel %vm1910, %v4892, 0
        %4902 = vmatprep.subr.mxu0 0.0
        %4903 = vmatpush1.msra.mxu0 %v4894
        %4904 = vmatprep.subr.mxu0 0.0
        %4905 = vmatpush1.msra.mxu0 %v4896
        %4906 = vmatprep.subr.mxu0 0.0
        %4907 = vmatpush1.msra.mxu0 0.0
        %4908 = vmatprep.subr.mxu0 0.0
        %4909 = vmatpush1.msra.mxu0 0.0
        %4910 = vmatprep.subr.mxu0 0.0
        %4911 = vmatpush1.msra.mxu0 0.0
        %4912 = vmatprep.subr.mxu0 0.0
        %4913 = vmatpush1.msra.mxu0 0.0
        %4914 = vmatprep.subr.mxu0 0.0
        %4915 = vmatpush1.msra.mxu0 0.0
        %4916 = vmatprep.subr.mxu0 0.0
        %4917 = vmatpush1.msra.mxu0 0.0
        %4918 = vmatprep.subr.mxu0 0.0
        %4919 = vmatpush1.msra.mxu0 0.0
        %4920 = vmatprep.subr.mxu0 0.0
        %4921 = vmatpush1.msra.mxu0 0.0
        %4922 = vmatprep.subr.mxu0 0.0
        %4923 = vmatpush1.msra.mxu0 0.0
        %4924 = vmatprep.subr.mxu0 0.0
        %4925 = vmatpush1.msra.mxu0 0.0
        %4926 = vmatprep.subr.mxu0 0.0
        %4927 = vmatpush1.msra.mxu0 0.0
        %4928 = vmatprep.subr.mxu0 0.0
        %4929 = vmatpush1.msra.mxu0 0.0
        %4930 = vmatprep.subr.mxu0 0.0
        %4931 = vmatpush1.msra.mxu0 0.0
        %4932 = vmatprep.subr.mxu0 0.0
        %4933 = vmatpush1.msra.mxu0 0.0
        %4934 = vmatprep.subr.mxu0 0.0
        %4935 = vmatpush1.msra.mxu0 0.0
        %4936 = vmatprep.subr.mxu0 0.0
        %4937 = vmatpush1.msra.mxu0 0.0
        %4938 = vmatprep.subr.mxu0 0.0
        %4939 = vmatpush1.msra.mxu0 0.0
        %4940 = vmatprep.subr.mxu0 0.0
        %4941 = vmatpush1.msra.mxu0 0.0
        %4942 = vmatprep.subr.mxu0 0.0
        %4943 = vmatpush1.msra.mxu0 0.0
        %4944 = vmatprep.subr.mxu0 0.0
        %4945 = vmatpush1.msra.mxu0 0.0
        %4946 = vmatprep.subr.mxu0 0.0
        %4947 = vmatpush1.msra.mxu0 0.0
        %4948 = vmatprep.subr.mxu0 0.0
        %4949 = vmatpush1.msra.mxu0 0.0
        %4950 = vmatprep.subr.mxu0 0.0
        %4951 = vmatpush1.msra.mxu0 0.0
        %4952 = vmatprep.subr.mxu0 0.0
        %4953 = vmatpush1.msra.mxu0 0.0
        %4954 = vmatprep.subr.mxu0 0.0
        %4955 = vmatpush1.msra.mxu0 0.0
        %4956 = vmatprep.subr.mxu0 0.0
        %4957 = vmatpush1.msra.mxu0 0.0
        %4958 = vmatprep.subr.mxu0 0.0
        %4959 = vmatpush1.msra.mxu0 0.0
        %4960 = vmatprep.subr.mxu0 0.0
        %4961 = vmatpush1.msra.mxu0 0.0
        %4962 = vmatprep.subr.mxu0 0.0
        %4963 = vmatpush1.msra.mxu0 0.0
        %4964 = vmatprep.subr.mxu0 0.0
        %4965 = vmatpush1.msra.mxu0 0.0
        %4966 = vmatprep.mubr.f32.mxu0 0.0
        %4967 = vmatmul.mubr.f32.gmra.mrb[0].mxu0 %v4900
        %v4968 = vpop.f32.mrb[0].mxu0
        %v4969 = vadd.f32 0.0, %v4968
        %v4970 = vpop.f32.mrb[0].mxu0
        %4971 = vdwg.mxu0
        %4973 = vrot.lane.b32.xlu0 %v4623, 8
        %v4974 = vpop.permute.xlu0 %4973
        %4977 = vrot.lane.b32.xlu0 %v4796, 16
        %v4978 = vpop.permute.xlu0 %4977
        %4981 = vrot.lane.b32.xlu0 %v4969, 24
        %v4982 = vpop.permute.xlu0 %4981
        %v4984 = vsel %vm1236, %v4450, %v4974
        %v4985 = vsel %vm1910, %v4984, %v4978
        %v4986 = vsel %vm1912, %v4985, %v4982
        %v4988 = vlaneseq
        %v4989 = vshrl.u32 %v4988, 7
        %v4990 = vsub.s32 0, %v4989
        %v4991 = vrot.slane %v4282, %v4990
        %v4994 = vsel %vm959, %v4986, 0
        %4996 = vmatprep.subr.mxu0 0.0
        %4997 = vmatpush1.msra.mxu0 %v4277
        %4998 = vmatprep.subr.mxu0 0.0
        %4999 = vmatpush1.msra.mxu0 %v4278
        %5000 = vmatprep.subr.mxu0 0.0
        %5001 = vmatpush1.msra.mxu0 %v4279
        %5002 = vmatprep.subr.mxu0 0.0
        %5003 = vmatpush1.msra.mxu0 %v4280
        %5004 = vmatprep.subr.mxu0 0.0
        %5005 = vmatpush1.msra.mxu0 0.0
        %5006 = vmatprep.subr.mxu0 0.0
        %5007 = vmatpush1.msra.mxu0 0.0
        %5008 = vmatprep.subr.mxu0 0.0
        %5009 = vmatpush1.msra.mxu0 0.0
        %5010 = vmatprep.subr.mxu0 0.0
        %5011 = vmatpush1.msra.mxu0 0.0
        %5012 = vmatprep.subr.mxu0 0.0
        %5013 = vmatpush1.msra.mxu0 0.0
        %5014 = vmatprep.subr.mxu0 0.0
        %5015 = vmatpush1.msra.mxu0 0.0
        %5016 = vmatprep.subr.mxu0 0.0
        %5017 = vmatpush1.msra.mxu0 0.0
        %5018 = vmatprep.subr.mxu0 0.0
        %5019 = vmatpush1.msra.mxu0 0.0
        %5020 = vmatprep.subr.mxu0 0.0
        %5021 = vmatpush1.msra.mxu0 0.0
        %5022 = vmatprep.subr.mxu0 0.0
        %5023 = vmatpush1.msra.mxu0 0.0
        %5024 = vmatprep.subr.mxu0 0.0
        %5025 = vmatpush1.msra.mxu0 0.0
        %5026 = vmatprep.subr.mxu0 0.0
        %5027 = vmatpush1.msra.mxu0 0.0
        %5028 = vmatprep.subr.mxu0 0.0
        %5029 = vmatpush1.msra.mxu0 0.0
        %5030 = vmatprep.subr.mxu0 0.0
        %5031 = vmatpush1.msra.mxu0 0.0
        %5032 = vmatprep.subr.mxu0 0.0
        %5033 = vmatpush1.msra.mxu0 0.0
        %5034 = vmatprep.subr.mxu0 0.0
        %5035 = vmatpush1.msra.mxu0 0.0
        %5036 = vmatprep.subr.mxu0 0.0
        %5037 = vmatpush1.msra.mxu0 0.0
        %5038 = vmatprep.subr.mxu0 0.0
        %5039 = vmatpush1.msra.mxu0 0.0
        %5040 = vmatprep.subr.mxu0 0.0
        %5041 = vmatpush1.msra.mxu0 0.0
        %5042 = vmatprep.subr.mxu0 0.0
        %5043 = vmatpush1.msra.mxu0 0.0
        %5044 = vmatprep.subr.mxu0 0.0
        %5045 = vmatpush1.msra.mxu0 0.0
        %5046 = vmatprep.subr.mxu0 0.0
        %5047 = vmatpush1.msra.mxu0 0.0
        %5048 = vmatprep.subr.mxu0 0.0
        %5049 = vmatpush1.msra.mxu0 0.0
        %5050 = vmatprep.subr.mxu0 0.0
        %5051 = vmatpush1.msra.mxu0 0.0
        %5052 = vmatprep.subr.mxu0 0.0
        %5053 = vmatpush1.msra.mxu0 0.0
        %5054 = vmatprep.subr.mxu0 0.0
        %5055 = vmatpush1.msra.mxu0 0.0
        %5056 = vmatprep.subr.mxu0 0.0
        %5057 = vmatpush1.msra.mxu0 0.0
        %5058 = vmatprep.subr.mxu0 0.0
        %5059 = vmatpush1.msra.mxu0 0.0
        %5060 = vmatprep.mubr.f32.mxu0 0.0
        %5061 = vmatmul.mubr.f32.gmra.mrb[0].mxu0 %v4994
        %v5062 = vpop.f32.mrb[0].mxu0
        %v5063 = vadd.f32 %v4991, %v5062
        %v5064 = vpop.f32.mrb[0].mxu0
        %5065 = vdwg.mxu0
        %v5066 = vadd.f32 %v4082, %v5063
        %v5067 = vsel %vm959, %v5066, 0.0
        %5068 = vadd.xlane.f32.xlu0 %v5067
        %v5069 = vpop.xlane.xlu0 %5068
        %v5070 = vmul.f32 %v5069, %v966
        %v5071 = vsub.f32 %v5066, %v5070
        %v5072 = vmul.f32 %v5071, %v5071
        %v5073 = vsel %vm959, %v5072, 0.0
        %5074 = vadd.xlane.f32.xlu0 %v5073
        %v5075 = vpop.xlane.xlu0 %5074
        %v5076 = vmul.f32 %v5075, %v966
        %v5077 = vadd.f32 %v5076, 1e-05
        %v5078 = vrsqrt.pop %v5077
        %v5079 = vmul.f32 %v5071, %v5078
        %v5080 = vlaneseq
        %v5081 = vshrl.u32 %v5080, 7
        %v5082 = vsub.s32 4, %v5081
        %v5083 = vrot.slane %v3208, %v5082
        %v5084 = vmul.f32 %v5079, %v5083
        %v5085 = vlaneseq
        %v5086 = vshrl.u32 %v5085, 7
        %v5087 = vsub.s32 5, %v5086
        %v5088 = vrot.slane %v3208, %v5087
        %v5089 = vadd.f32 %v5084, %v5088
        %s5090 = scalar_lea.vmem %s17, 16
        %v5091 = vld [vmem:[%s5090] sm:$0xf]
        %v5092 = vld [vmem:[%s5090 + $0x4] sm:$0xf]
        %v5093 = vld [vmem:[%s5090 + $0x8] sm:$0xf]
        %v5094 = vld [vmem:[%s5090 + $0xc] sm:$0xf]
        %v5095 = vunpack.c.l.bf16 %v5091
        %v5096 = vunpack.c.l.bf16 %v5092
        %v5097 = vunpack.c.l.bf16 %v5093
        %v5098 = vunpack.c.l.bf16 %v5094
        %s5099 = scalar_lea.vmem [#allocation7], 1
        %v5100 = vld [vmem:[%s5099] sm:$0x1]
        %v5102 = vlaneseq
        %v5103 = vshrl.u32 %v5102, 7
        %v5104 = vsub.s32 0, %v5103
        %v5105 = vrot.slane %v5100, %v5104
        %v5108 = vsel %vm959, %v5089, 0
        %5110 = vmatprep.subr.mxu0 0.0
        %5111 = vmatpush1.msra.mxu0 %v5095
        %5112 = vmatprep.subr.mxu0 0.0
        %5113 = vmatpush1.msra.mxu0 %v5096
        %5114 = vmatprep.subr.mxu0 0.0
        %5115 = vmatpush1.msra.mxu0 %v5097
        %5116 = vmatprep.subr.mxu0 0.0
        %5117 = vmatpush1.msra.mxu0 %v5098
        %5118 = vmatprep.subr.mxu0 0.0
        %5119 = vmatpush1.msra.mxu0 0.0
        %5120 = vmatprep.subr.mxu0 0.0
        %5121 = vmatpush1.msra.mxu0 0.0
        %5122 = vmatprep.subr.mxu0 0.0
        %5123 = vmatpush1.msra.mxu0 0.0
        %5124 = vmatprep.subr.mxu0 0.0
        %5125 = vmatpush1.msra.mxu0 0.0
        %5126 = vmatprep.subr.mxu0 0.0
        %5127 = vmatpush1.msra.mxu0 0.0
        %5128 = vmatprep.subr.mxu0 0.0
        %5129 = vmatpush1.msra.mxu0 0.0
        %5130 = vmatprep.subr.mxu0 0.0
        %5131 = vmatpush1.msra.mxu0 0.0
        %5132 = vmatprep.subr.mxu0 0.0
        %5133 = vmatpush1.msra.mxu0 0.0
        %5134 = vmatprep.subr.mxu0 0.0
        %5135 = vmatpush1.msra.mxu0 0.0
        %5136 = vmatprep.subr.mxu0 0.0
        %5137 = vmatpush1.msra.mxu0 0.0
        %5138 = vmatprep.subr.mxu0 0.0
        %5139 = vmatpush1.msra.mxu0 0.0
        %5140 = vmatprep.subr.mxu0 0.0
        %5141 = vmatpush1.msra.mxu0 0.0
        %5142 = vmatprep.subr.mxu0 0.0
        %5143 = vmatpush1.msra.mxu0 0.0
        %5144 = vmatprep.subr.mxu0 0.0
        %5145 = vmatpush1.msra.mxu0 0.0
        %5146 = vmatprep.subr.mxu0 0.0
        %5147 = vmatpush1.msra.mxu0 0.0
        %5148 = vmatprep.subr.mxu0 0.0
        %5149 = vmatpush1.msra.mxu0 0.0
        %5150 = vmatprep.subr.mxu0 0.0
        %5151 = vmatpush1.msra.mxu0 0.0
        %5152 = vmatprep.subr.mxu0 0.0
        %5153 = vmatpush1.msra.mxu0 0.0
        %5154 = vmatprep.subr.mxu0 0.0
        %5155 = vmatpush1.msra.mxu0 0.0
        %5156 = vmatprep.subr.mxu0 0.0
        %5157 = vmatpush1.msra.mxu0 0.0
        %5158 = vmatprep.subr.mxu0 0.0
        %5159 = vmatpush1.msra.mxu0 0.0
        %5160 = vmatprep.subr.mxu0 0.0
        %5161 = vmatpush1.msra.mxu0 0.0
        %5162 = vmatprep.subr.mxu0 0.0
        %5163 = vmatpush1.msra.mxu0 0.0
        %5164 = vmatprep.subr.mxu0 0.0
        %5165 = vmatpush1.msra.mxu0 0.0
        %5166 = vmatprep.subr.mxu0 0.0
        %5167 = vmatpush1.msra.mxu0 0.0
        %5168 = vmatprep.subr.mxu0 0.0
        %5169 = vmatpush1.msra.mxu0 0.0
        %5170 = vmatprep.subr.mxu0 0.0
        %5171 = vmatpush1.msra.mxu0 0.0
        %5172 = vmatprep.subr.mxu0 0.0
        %5173 = vmatpush1.msra.mxu0 0.0
        %5174 = vmatprep.mubr.f32.mxu0 0.0
        %5175 = vmatmul.mubr.f32.gmra.mrb[0].mxu0 %v5108
        %v5176 = vpop.f32.mrb[0].mxu0
        %v5177 = vadd.f32 %v5105, %v5176
        %v5178 = vpop.f32.mrb[0].mxu0
        %5179 = vdwg.mxu0
        %v5180 = vmul.f32 %v5177, 0.5
        %v5181 = vmul.f32 %v5177, 0.70710677
        %v5182 = verf.f32.pop %v5181
        %v5183 = vadd.f32 %v5182, 1.0
        %v5184 = vmul.f32 %v5180, %v5183
        %s5185 = scalar_lea.vmem %s19, 64
        %v5186 = vld [vmem:[%s5185] sm:$0xf]
        %v5187 = vld [vmem:[%s5185 + $0x4] sm:$0xf]
        %v5188 = vld [vmem:[%s5185 + $0x8] sm:$0xf]
        %v5189 = vld [vmem:[%s5185 + $0xc] sm:$0xf]
        %v5190 = vld [vmem:[%s5185 + $0x10] sm:$0xf]
        %v5191 = vld [vmem:[%s5185 + $0x14] sm:$0xf]
        %v5192 = vld [vmem:[%s5185 + $0x18] sm:$0xf]
        %v5193 = vld [vmem:[%s5185 + $0x1c] sm:$0xf]
        %v5194 = vld [vmem:[%s5185 + $0x20] sm:$0xf]
        %v5195 = vld [vmem:[%s5185 + $0x24] sm:$0xf]
        %v5196 = vld [vmem:[%s5185 + $0x28] sm:$0xf]
        %v5197 = vld [vmem:[%s5185 + $0x2c] sm:$0xf]
        %v5198 = vld [vmem:[%s5185 + $0x30] sm:$0xf]
        %v5199 = vld [vmem:[%s5185 + $0x34] sm:$0xf]
        %v5200 = vld [vmem:[%s5185 + $0x38] sm:$0xf]
        %v5201 = vld [vmem:[%s5185 + $0x3c] sm:$0xf]
        %v5202 = vunpack.c.l.bf16 %v5186
        %v5203 = vunpack.c.l.bf16 %v5187
        %v5204 = vunpack.c.l.bf16 %v5188
        %v5205 = vunpack.c.l.bf16 %v5189
        %v5206 = vunpack.c.l.bf16 %v5190
        %v5207 = vunpack.c.l.bf16 %v5191
        %v5208 = vunpack.c.l.bf16 %v5192
        %v5209 = vunpack.c.l.bf16 %v5193
        %v5210 = vunpack.c.l.bf16 %v5194
        %v5211 = vunpack.c.l.bf16 %v5195
        %v5212 = vunpack.c.l.bf16 %v5196
        %v5213 = vunpack.c.l.bf16 %v5197
        %v5214 = vunpack.c.l.bf16 %v5198
        %v5215 = vunpack.c.l.bf16 %v5199
        %v5216 = vunpack.c.l.bf16 %v5200
        %v5217 = vunpack.c.l.bf16 %v5201
        %5218 = vmatprep.subr.mxu0 0.0
        %5219 = vmatpush1.msra.mxu0 %v5202
        %5220 = vmatprep.subr.mxu0 0.0
        %5221 = vmatpush1.msra.mxu0 %v5203
        %5222 = vmatprep.subr.mxu0 0.0
        %5223 = vmatpush1.msra.mxu0 %v5204
        %5224 = vmatprep.subr.mxu0 0.0
        %5225 = vmatpush1.msra.mxu0 %v5205
        %5226 = vmatprep.subr.mxu0 0.0
        %5227 = vmatpush1.msra.mxu0 %v5206
        %5228 = vmatprep.subr.mxu0 0.0
        %5229 = vmatpush1.msra.mxu0 %v5207
        %5230 = vmatprep.subr.mxu0 0.0
        %5231 = vmatpush1.msra.mxu0 %v5208
        %5232 = vmatprep.subr.mxu0 0.0
        %5233 = vmatpush1.msra.mxu0 %v5209
        %5234 = vmatprep.subr.mxu0 0.0
        %5235 = vmatpush1.msra.mxu0 %v5210
        %5236 = vmatprep.subr.mxu0 0.0
        %5237 = vmatpush1.msra.mxu0 %v5211
        %5238 = vmatprep.subr.mxu0 0.0
        %5239 = vmatpush1.msra.mxu0 %v5212
        %5240 = vmatprep.subr.mxu0 0.0
        %5241 = vmatpush1.msra.mxu0 %v5213
        %5242 = vmatprep.subr.mxu0 0.0
        %5243 = vmatpush1.msra.mxu0 %v5214
        %5244 = vmatprep.subr.mxu0 0.0
        %5245 = vmatpush1.msra.mxu0 %v5215
        %5246 = vmatprep.subr.mxu0 0.0
        %5247 = vmatpush1.msra.mxu0 %v5216
        %5248 = vmatprep.subr.mxu0 0.0
        %5249 = vmatpush1.msra.mxu0 %v5217
        %5250 = vmatprep.subr.mxu0 0.0
        %5251 = vmatpush1.msra.mxu0 0.0
        %5252 = vmatprep.subr.mxu0 0.0
        %5253 = vmatpush1.msra.mxu0 0.0
        %5254 = vmatprep.subr.mxu0 0.0
        %5255 = vmatpush1.msra.mxu0 0.0
        %5256 = vmatprep.subr.mxu0 0.0
        %5257 = vmatpush1.msra.mxu0 0.0
        %5258 = vmatprep.subr.mxu0 0.0
        %5259 = vmatpush1.msra.mxu0 0.0
        %5260 = vmatprep.subr.mxu0 0.0
        %5261 = vmatpush1.msra.mxu0 0.0
        %5262 = vmatprep.subr.mxu0 0.0
        %5263 = vmatpush1.msra.mxu0 0.0
        %5264 = vmatprep.subr.mxu0 0.0
        %5265 = vmatpush1.msra.mxu0 0.0
        %5266 = vmatprep.subr.mxu0 0.0
        %5267 = vmatpush1.msra.mxu0 0.0
        %5268 = vmatprep.subr.mxu0 0.0
        %5269 = vmatpush1.msra.mxu0 0.0
        %5270 = vmatprep.subr.mxu0 0.0
        %5271 = vmatpush1.msra.mxu0 0.0
        %5272 = vmatprep.subr.mxu0 0.0
        %5273 = vmatpush1.msra.mxu0 0.0
        %5274 = vmatprep.subr.mxu0 0.0
        %5275 = vmatpush1.msra.mxu0 0.0
        %5276 = vmatprep.subr.mxu0 0.0
        %5277 = vmatpush1.msra.mxu0 0.0
        %5278 = vmatprep.subr.mxu0 0.0
        %5279 = vmatpush1.msra.mxu0 0.0
        %5280 = vmatprep.subr.mxu0 0.0
        %5281 = vmatpush1.msra.mxu0 0.0
        %5282 = vmatprep.mubr.f32.mxu0 0.0
        %5283 = vmatmul.mubr.f32.gmra.mrb[0].mxu0 %v5184
        %v5284 = vpop.f32.mrb[0].mxu0
        %v5285 = vadd.f32 0.0, %v5284
        %v5286 = vpop.f32.mrb[0].mxu0
        %5287 = vdwg.mxu0
        %v5288 = vadd.f32 %v5066, %v5285
        %s5289 = scalar_lea.vmem [#allocation8], 1
        %v5290 = vld [vmem:[%s5289] sm:$0x1]
        %v5292 = vlaneseq
        %v5293 = vshrl.u32 %v5292, 7
        %v5294 = vsub.s32 0, %v5293
        %v5295 = vrot.slane %v5290, %v5294
        %v5297 = vadd.f32 %v5288, %v5295
        %v5298 = vld [vmem:[%s21] sm:$0x3]
        %v5299 = vsel %vm959, %v5297, 0.0
        %5300 = vadd.xlane.f32.xlu0 %v5299
        %v5301 = vpop.xlane.xlu0 %5300
        %v5302 = vmul.f32 %v5301, %v966
        %v5303 = vsub.f32 %v5297, %v5302
        %v5304 = vmul.f32 %v5303, %v5303
        %v5305 = vsel %vm959, %v5304, 0.0
        %5306 = vadd.xlane.f32.xlu0 %v5305
        %v5307 = vpop.xlane.xlu0 %5306
        %v5308 = vmul.f32 %v5307, %v966
        %v5309 = vadd.f32 %v5308, 1e-05
        %v5310 = vrsqrt.pop %v5309
        %v5311 = vmul.f32 %v5303, %v5310
        %v5312 = vlaneseq
        %v5313 = vshrl.u32 %v5312, 7
        %v5314 = vsub.s32 0, %v5313
        %v5315 = vrot.slane %v5298, %v5314
        %v5316 = vmul.f32 %v5311, %v5315
        %v5317 = vlaneseq
        %v5318 = vshrl.u32 %v5317, 7
        %v5319 = vsub.s32 1, %v5318
        %v5320 = vrot.slane %v5298, %v5319
        %v5321 = vadd.f32 %v5316, %v5320
        %v5322 = vld [vmem:[%s22] sm:$0xf]
        %v5323 = vld [vmem:[%s22 + $0x4] sm:$0xf]
        %v5324 = vld [vmem:[%s22 + $0x8] sm:$0xf]
        %v5325 = vld [vmem:[%s22 + $0xc] sm:$0xf]
        %v5326 = vunpack.c.l.bf16 %v5322
        %v5327 = vunpack.c.l.bf16 %v5323
        %v5328 = vunpack.c.l.bf16 %v5324
        %v5329 = vunpack.c.l.bf16 %v5325
        %v5330 = vld [vmem:[%s23] sm:$0x1]
        %v5332 = vlaneseq
        %v5333 = vshrl.u32 %v5332, 7
        %v5334 = vsub.s32 0, %v5333
        %v5335 = vrot.slane %v5330, %v5334
        %v5338 = vsel %vm959, %v5321, 0
        %5340 = vmatprep.subr.mxu0 0.0
        %5341 = vmatpush1.msra.mxu0 %v5326
        %5342 = vmatprep.subr.mxu0 0.0
        %5343 = vmatpush1.msra.mxu0 %v5327
        %5344 = vmatprep.subr.mxu0 0.0
        %5345 = vmatpush1.msra.mxu0 %v5328
        %5346 = vmatprep.subr.mxu0 0.0
        %5347 = vmatpush1.msra.mxu0 %v5329
        %5348 = vmatprep.subr.mxu0 0.0
        %5349 = vmatpush1.msra.mxu0 0.0
        %5350 = vmatprep.subr.mxu0 0.0
        %5351 = vmatpush1.msra.mxu0 0.0
        %5352 = vmatprep.subr.mxu0 0.0
        %5353 = vmatpush1.msra.mxu0 0.0
        %5354 = vmatprep.subr.mxu0 0.0
        %5355 = vmatpush1.msra.mxu0 0.0
        %5356 = vmatprep.subr.mxu0 0.0
        %5357 = vmatpush1.msra.mxu0 0.0
        %5358 = vmatprep.subr.mxu0 0.0
        %5359 = vmatpush1.msra.mxu0 0.0
        %5360 = vmatprep.subr.mxu0 0.0
        %5361 = vmatpush1.msra.mxu0 0.0
        %5362 = vmatprep.subr.mxu0 0.0
        %5363 = vmatpush1.msra.mxu0 0.0
        %5364 = vmatprep.subr.mxu0 0.0
        %5365 = vmatpush1.msra.mxu0 0.0
        %5366 = vmatprep.subr.mxu0 0.0
        %5367 = vmatpush1.msra.mxu0 0.0
        %5368 = vmatprep.subr.mxu0 0.0
        %5369 = vmatpush1.msra.mxu0 0.0
        %5370 = vmatprep.subr.mxu0 0.0
        %5371 = vmatpush1.msra.mxu0 0.0
        %5372 = vmatprep.subr.mxu0 0.0
        %5373 = vmatpush1.msra.mxu0 0.0
        %5374 = vmatprep.subr.mxu0 0.0
        %5375 = vmatpush1.msra.mxu0 0.0
        %5376 = vmatprep.subr.mxu0 0.0
        %5377 = vmatpush1.msra.mxu0 0.0
        %5378 = vmatprep.subr.mxu0 0.0
        %5379 = vmatpush1.msra.mxu0 0.0
        %5380 = vmatprep.subr.mxu0 0.0
        %5381 = vmatpush1.msra.mxu0 0.0
        %5382 = vmatprep.subr.mxu0 0.0
        %5383 = vmatpush1.msra.mxu0 0.0
        %5384 = vmatprep.subr.mxu0 0.0
        %5385 = vmatpush1.msra.mxu0 0.0
        %5386 = vmatprep.subr.mxu0 0.0
        %5387 = vmatpush1.msra.mxu0 0.0
        %5388 = vmatprep.subr.mxu0 0.0
        %5389 = vmatpush1.msra.mxu0 0.0
        %5390 = vmatprep.subr.mxu0 0.0
        %5391 = vmatpush1.msra.mxu0 0.0
        %5392 = vmatprep.subr.mxu0 0.0
        %5393 = vmatpush1.msra.mxu0 0.0
        %5394 = vmatprep.subr.mxu0 0.0
        %5395 = vmatpush1.msra.mxu0 0.0
        %5396 = vmatprep.subr.mxu0 0.0
        %5397 = vmatpush1.msra.mxu0 0.0
        %5398 = vmatprep.subr.mxu0 0.0
        %5399 = vmatpush1.msra.mxu0 0.0
        %5400 = vmatprep.subr.mxu0 0.0
        %5401 = vmatpush1.msra.mxu0 0.0
        %5402 = vmatprep.subr.mxu0 0.0
        %5403 = vmatpush1.msra.mxu0 0.0
        %5404 = vmatprep.mubr.f32.mxu0 0.0
        %5405 = vmatmul.mubr.f32.gmra.mrb[0].mxu0 %v5338
        %v5406 = vpop.f32.mrb[0].mxu0
        %v5407 = vadd.f32 %v5335, %v5406
        %v5408 = vpop.f32.mrb[0].mxu0
        %5409 = vdwg.mxu0
        %5410 = vst.msk [vmem:[%s800] sm:$0xff] %vm814, %v5407
        %s5411 = sand.u32 %s563, 1
        %s5412 = scalar_lea.sflag [#allocation4], %s5411
        %s5413 = sand.u32 %s563, 1
        %s5414 = smul.addr %s5413, 8
        %s5415 = scalar_lea.vmem [#allocation10], %s5414
        // Predicated region
        $region133: #{context_decoder_pallas.1} parent=115 // pred_check
          %p5416 = pneg %p573
        $region134: #{context_decoder_pallas.1} parent=115 // pred_check_branch
          %5418 = sbr.rel (%p5416) target = $region136
        $region135: #{context_decoder_pallas.1} parent=115 // pred_region
          %s5420 = ssub.s32 128, 128
          %5421 = vsyncadd %s5412, %s5420
          %s5422 = smul.addr %s41, 128
          %s5423 = scalar_lea.hbm %s24, %s5422
          %s5425 = sshll.u32 %s5415, 4
          %s5426 = int_to_ptr.vmem [resolvable:$true] %s5425
          %5428 = dma.vmem_to_hbm [thread:$0]  %s5426, 128, %s5423, %s5412
        $region136: #{context_decoder_pallas.1} parent=115 // pred_fallthru
          _
      $region116: #{context_decoder_pallas.1} parent=5 // pred_fallthru
        _
      %p5429 = scmp.le.s32.totalorder 2, %s36
      // Predicated region
      $region137: #{context_decoder_pallas.1} parent=5 // pred_check
        %p5430 = pneg %p5429
      $region138: #{context_decoder_pallas.1} parent=5 // pred_check_branch
        %5432 = sbr.rel (%p5430) target = $region140
      $region139: #{context_decoder_pallas.1} parent=5 // pred_region
        %s5433 = ssub.s32 %s36, 2
        // Predicated region
        $region141: #{context_decoder_pallas.1} parent=139 // pred_check
          %p5434 = pneg %p579
        $region142: #{context_decoder_pallas.1} parent=139 // pred_check_branch
          %5436 = sbr.rel (%p5434) target = $region144
        $region143: #{context_decoder_pallas.1} parent=139 // pred_region
          %s5437 = sand.u32 %s564, 1
          %s5438 = scalar_lea.sflag [#allocation4], %s5437
          %s5439 = sand.u32 %s564, 1
          %s5440 = smul.addr %s5439, 8
          %s5441 = scalar_lea.vmem [#allocation10], %s5440
          %5442 = dma.done %s5438, 128
        $region144: #{context_decoder_pallas.1} parent=139 // pred_fallthru
          _
      $region140: #{context_decoder_pallas.1} parent=5 // pred_fallthru
        _
    $region6: #{context_decoder_pallas.1} parent=1 // loop_footer
      %s40 = sadd.s32 1, %s36
    $region7: #{context_decoder_pallas.1} parent=1 // loop_footer_branch
      %35 = sbr.rel target = $region3
    $region8: #{context_decoder_pallas.1} parent=1 // loop_exit
      _
    %5443 = vsyncpa [#allocation3], 1
    %s5444 = scalar_lea.sflag [#allocation3], 1
    %5445 = vsyncpa %s5444, 1
    %5446 = vsyncpa [#allocation6], 1
    %5447 = vsyncpa [#allocation9], 1
    %5448 = vsyncpa [#allocation4], 1
    %s5449 = scalar_lea.sflag [#allocation4], 1
    %5450 = vsyncpa %s5449, 1

</llo_original>
